<compile_context>
chip_gen: v6e
topology: v6e:2x2x1
jax: 0.10.0
libtpu: 0.0.40
codegen_flags: <defaults>
</compile_context>

<pallas_src>
import functools

import jax
import jax.numpy as jnp
import numpy as np
from jax.experimental import pallas as pl
from jax.experimental.pallas import tpu as pltpu


def _round_up(x, m):
    return (x + m - 1) // m * m


# --------------------------------------------------------------------------
# Pallas kernel: fused gated-conv matmul (feature + gate in ONE MXU pass)
#   patches:[TM, Kp] bf16   w_cat:[Kp, 2*Cout] bf16 (= wf || wg)
#   b_cat:[1, 2*Cout] f32   (residual:[TM, Cout])   ->  out:[TM, Cout]
# --------------------------------------------------------------------------
def _gated_conv_kernel(*refs, cout, act, final, has_residual):
    if has_residual:
        p_ref, w_ref, b_ref, r_ref, o_ref = refs
    else:
        p_ref, w_ref, b_ref, o_ref = refs
        r_ref = None

    # Single matmul producing both feature and gate pre-activations.
    # For Cout=64 layers the result is 128 lanes wide (lane dense).
    acc = jnp.dot(p_ref[...], w_ref[...], preferred_element_type=jnp.float32)
    acc = acc + b_ref[...]                      # bias broadcast, f32
    feat = acc[:, :cout]
    gate = acc[:, cout:]
    if act == "lrelu":
        feat = jnp.where(feat >= 0.0, feat, 0.2 * feat)
    out = feat * jax.nn.sigmoid(gate)           # EUP sigmoid, stays f32 (v5e ok)
    if final:                                   # fused nn.Tanh() + clamp(0, 1)
        out = jnp.clip(jnp.tanh(out), 0.0, 1.0)
    if has_residual:                            # fused per-block residual add
        out = out + r_ref[...].astype(jnp.float32)
    o_ref[...] = out.astype(o_ref.dtype)


# --------------------------------------------------------------------------
# JAX glue: im2col (zero padding, stride, dilation)
# --------------------------------------------------------------------------
def _im2col(x, k, stride, pad, dil):
    """x: [N, H, W, C]  ->  ([N, OH, OW, k*k*C], OH, OW)"""
    N, H, W, C = x.shape
    xp = jnp.pad(x, ((0, 0), (pad, pad), (pad, pad), (0, 0)))
    OH = (H + 2 * pad - dil * (k - 1) - 1) // stride + 1
    OW = (W + 2 * pad - dil * (k - 1) - 1) // stride + 1
    cols = []
    for i in range(k):
        for j in range(k):
            r0, c0 = i * dil, j * dil
            cols.append(xp[:, r0:r0 + stride * (OH - 1) + 1:stride,
                              c0:c0 + stride * (OW - 1) + 1:stride, :])
    return jnp.concatenate(cols, axis=-1), OH, OW


def gated_conv2d(x, params, *, k, stride, pad, dil, act="lrelu", final=False,
                 residual=None):
    """x: [N, H, W, Cin] -> [N, OH, OW, Cout].  Hot path runs in Pallas."""
    wf, bf, wg, bg = params["wf"], params["bf"], params["wg"], params["bg"]
    Cout = wf.shape[-1]

    # bf16 activations: halves im2col / patch DMA traffic; matmul is bf16-native
    # on the MXU of v5e/v6e/v7x, accumulation stays f32 inside the kernel.
    x = x.astype(jnp.bfloat16)
    # TODO(synk): replace HBM-materialized im2col with an in-kernel halo-tile
    #             conv (and fold the 2x upsample of coarse9) to cut the k^2
    #             read amplification.
    patches, OH, OW = _im2col(x, k, stride, pad, dil)
    N = x.shape[0]
    Kdim = patches.shape[-1]
    M = N * OH * OW
    p2 = patches.reshape(M, Kdim)

    # Pad the small first-layer contraction (5*5*4 = 100) to 128 lanes.
    Kp = _round_up(Kdim, 128) if Kdim < 128 else Kdim

    # Big M tiles (up to 1024 rows) to amortize per-grid-step overhead; keep a
    # multiple of 16 for bf16 sublane packing.  VMEM use at TM=1024, K<=576,
    # bf16 is only a few MiB, comfortably inside the default 32 MiB scoped
    # limit on v5e / v6e / v7x (no vmem_limit_bytes override needed).
    M16 = _round_up(M, 16)
    TM = min(1024, M16)
    Mp = _round_up(M16, TM)

    p2 = jnp.pad(p2, ((0, Mp - M), (0, Kp - Kdim)))

    # Concatenate feature + gate weights -> single [Kp, 2*Cout] matmul.
    w_cat = jnp.concatenate(
        [wf.reshape(Kdim, Cout), wg.reshape(Kdim, Cout)], axis=-1)
    w_cat = jnp.pad(w_cat, ((0, Kp - Kdim), (0, 0))).astype(jnp.bfloat16)
    b_cat = jnp.concatenate([bf, bg]).reshape(1, 2 * Cout).astype(jnp.float32)

    in_arrays = [p2, w_cat, b_cat]
    in_specs = [
        pl.BlockSpec((TM, Kp), lambda i: (i, 0)),
        pl.BlockSpec((Kp, 2 * Cout), lambda i: (0, 0)),
        pl.BlockSpec((1, 2 * Cout), lambda i: (0, 0)),
    ]

    has_residual = residual is not None
    if has_residual:
        r2 = residual.reshape(M, Cout)
        r2 = jnp.pad(r2, ((0, Mp - M), (0, 0)))
        in_arrays.append(r2)
        in_specs.append(pl.BlockSpec((TM, Cout), lambda i: (i, 0)))

    out_dtype = jnp.float32 if final else jnp.bfloat16

    out = pl.pallas_call(
        functools.partial(_gated_conv_kernel, cout=Cout, act=act,
                          final=final, has_residual=has_residual),
        out_shape=jax.ShapeDtypeStruct((Mp, Cout), out_dtype),
        grid_spec=pltpu.PrefetchScalarGridSpec(
            num_scalar_prefetch=0,
            grid=(Mp // TM,),
            in_specs=in_specs,
            out_specs=pl.BlockSpec((TM, Cout), lambda i: (i, 0)),
        ),
        compiler_params=pltpu.CompilerParams(
            dimension_semantics=("parallel",)),
    )(*in_arrays)

    return out[:M].reshape(N, OH, OW, Cout)


def transpose_gated_conv2d(x, params, *, residual=None, **kw):
    """nearest 2x upsample + gated conv (TransposeGatedConv2d)."""
    # TODO(synk): fold the upsample into the patch gather instead of
    #             materializing the 4x larger tensor.
    x = jnp.repeat(jnp.repeat(x, 2, axis=1), 2, axis=2)
    return gated_conv2d(x, params, residual=residual, **kw)


# --------------------------------------------------------------------------
# Parameter init + network definition
# --------------------------------------------------------------------------
def _init_gc(key, cin, cout, k):
    k1, k2 = jax.random.split(key)
    scale = 1.0 / np.sqrt(k * k * cin)
    return dict(
        wf=jax.random.normal(k1, (k, k, cin, cout), jnp.float32) * scale,
        bf=jnp.zeros((cout,), jnp.float32),
        wg=jax.random.normal(k2, (k, k, cin, cout), jnp.float32) * scale,
        bg=jnp.zeros((cout,), jnp.float32),
    )


# layer cfg: (cin, cout, k, stride, pad, dil, act, transpose, final)
def _coarse_configs():
    gc = lambda ci, co, k, s, p, d=1, a="lrelu", t=False, f=False: \
        dict(cin=ci, cout=co, k=k, stride=s, pad=p, dil=d, act=a,
             transpose=t, final=f)
    return [
        # coarse1
        [gc(4, 32, 5, 2, 2), gc(32, 32, 3, 1, 1), gc(32, 64, 3, 2, 1)],
        # coarse2 .. coarse3
        [gc(64, 64, 3, 1, 1)] * 3,
        [gc(64, 64, 3, 1, 1)] * 3,
        # coarse4 .. coarse6 (dilated)
        [gc(64, 64, 3, 1, 2, 2)] * 3,
        [gc(64, 64, 3, 1, 4, 4)] * 3,
        [gc(64, 64, 3, 1, 8, 8)] * 3,
        # coarse7
        [gc(64, 64, 3, 1, 16, 16)] * 2,
        # coarse8
        [gc(64, 64, 3, 1, 1)] * 3,
        # coarse9
        [gc(64, 64, 3, 1, 1, t=True),
         gc(64, 32, 3, 1, 1, t=True),
         gc(32, 3, 3, 1, 1, a="none", f=True)],
    ]


def init_coarse_params(key):
    cfgs = _coarse_configs()
    params = []
    for block in cfgs:
        bparams = []
        for c in block:
            key, sub = jax.random.split(key)
            bparams.append(_init_gc(sub, c["cin"], c["cout"], c["k"]))
        params.append(bparams)
    return params


def coarse_forward(params, x_nchw):
    """Input [N, 4, H, W] (NCHW) -> output [N, 3, H, W] (NCHW), in [0, 1]."""
    cfgs = _coarse_configs()
    x = jnp.transpose(x_nchw, (0, 2, 3, 1)).astype(jnp.bfloat16)   # -> NHWC

    def run_block(x, bi, residual=None):
        block = cfgs[bi]
        for li, (c, p) in enumerate(zip(block, params[bi])):
            res = residual if li == len(block) - 1 else None   # fuse + x
            fn = transpose_gated_conv2d if c["transpose"] else gated_conv2d
            x = fn(x, p, k=c["k"], stride=c["stride"], pad=c["pad"],
                   dil=c["dil"], act=c["act"], final=c["final"], residual=res)
        return x

    x = run_block(x, 0)                       # coarse1
    for bi in range(1, 8):                    # coarse2..coarse8, residual fused
        x = run_block(x, bi, residual=x)
    x = run_block(x, 8)                       # coarse9 (tanh + clamp fused)
    return jnp.transpose(x, (0, 3, 1, 2))     # back to NCHW, f32


# --------------------------------------------------------------------------
if __name__ == "__main__":
    key = jax.random.PRNGKey(0)
    pkey, xkey = jax.random.split(key)

    params = init_coarse_params(pkey)
    x = jax.random.uniform(xkey, (2, 4, 16, 16), jnp.float32)  # NCHW, 4-ch in

    out = jax.jit(coarse_forward)(params, x)
    out = jax.block_until_ready(out)

    assert out.shape == (2, 3, 16, 16), out.shape
    assert bool(jnp.all(jnp.isfinite(out)))
    assert bool(jnp.all(out >= 0.0)) and bool(jnp.all(out <= 1.0))
    print("KERNEL_OK")
</pallas_src>

<mosaic_0001>
module attributes {stable_mosaic.version = 11 : i64} {
  func.func @_gated_conv_kernel(%arg0: i32, %arg1: memref<128x128xbf16, #tpu.memory_space<vmem>>, %arg2: memref<128x64xbf16, #tpu.memory_space<vmem>>, %arg3: memref<1x64xf32, #tpu.memory_space<vmem>>, %arg4: memref<128x32xbf16, #tpu.memory_space<vmem>>) attributes {dimension_semantics = [#tpu.dimension_semantics<parallel>], iteration_bounds = array<i64: 1>, scalar_prefetch = 0 : i64, scratch_operands = 0 : i64, tpu.core_type = #tpu.core_type<tc>, window_params = [{transform_indices = @transform_0, window_bounds = array<i64: 128, 128>}, {pipeline_mode = #tpu.pipeline_mode<synchronous>, transform_indices = @transform_1, window_bounds = array<i64: 128, 64>}, {pipeline_mode = #tpu.pipeline_mode<synchronous>, transform_indices = @transform_2, window_bounds = array<i64: 1, 64>}, {transform_indices = @transform_3, window_bounds = array<i64: 128, 32>}]} {
    %c0 = arith.constant 0 : index
    %c0_0 = arith.constant 0 : index
    %0 = vector.load %arg1[%c0, %c0_0] : memref<128x128xbf16, #tpu.memory_space<vmem>>, vector<128x128xbf16>
    %c0_1 = arith.constant 0 : index
    %c0_2 = arith.constant 0 : index
    %1 = vector.load %arg2[%c0_1, %c0_2] : memref<128x64xbf16, #tpu.memory_space<vmem>>, vector<128x64xbf16>
    %cst = arith.constant dense<0.000000e+00> : vector<128x64xf32>
    %2 = tpu.matmul %0, %1, %cst {dimension_numbers = #tpu.dot_dimension_numbers<[1], [0], [0], [1], [0, 0, 1, 1], [], []>} : vector<128x128xbf16>, vector<128x64xbf16>, vector<128x64xf32> -> vector<128x64xf32>
    %c0_3 = arith.constant 0 : index
    %c0_4 = arith.constant 0 : index
    %3 = vector.load %arg3[%c0_3, %c0_4] : memref<1x64xf32, #tpu.memory_space<vmem>>, vector<1x64xf32>
    %4 = vector.broadcast %3 : vector<1x64xf32> to vector<128x64xf32>
    %5 = arith.addf %2, %4 : vector<128x64xf32>
    %6 = vector.extract_strided_slice %5 {offsets = [0, 0], sizes = [128, 32], strides = [1, 1]} : vector<128x64xf32> to vector<128x32xf32>
    %7 = vector.extract_strided_slice %5 {offsets = [0, 32], sizes = [128, 32], strides = [1, 1]} : vector<128x64xf32> to vector<128x32xf32>
    %cst_5 = arith.constant 0.000000e+00 : f32
    %8 = vector.broadcast %cst_5 : f32 to vector<128x32xf32>
    %9 = arith.cmpf oge, %6, %8 : vector<128x32xf32>
    %cst_6 = arith.constant 2.000000e-01 : f32
    %10 = vector.broadcast %cst_6 : f32 to vector<128x32xf32>
    %11 = arith.mulf %10, %6 : vector<128x32xf32>
    %12 = arith.select %9, %6, %11 : vector<128x32xi1>, vector<128x32xf32>
    %13 = arith.negf %7 : vector<128x32xf32>
    %14 = math.exp %13 : vector<128x32xf32>
    %cst_7 = arith.constant 1.000000e+00 : f32
    %15 = vector.broadcast %cst_7 : f32 to vector<128x32xf32>
    %16 = arith.addf %15, %14 : vector<128x32xf32>
    %17 = arith.divf %15, %16 : vector<128x32xf32>
    %18 = arith.mulf %12, %17 : vector<128x32xf32>
    %19 = arith.truncf %18 : vector<128x32xf32> to vector<128x32xbf16>
    %c0_8 = arith.constant 0 : index
    %c0_9 = arith.constant 0 : index
    %20 = vector.load %arg4[%c0_8, %c0_9] : memref<128x32xbf16, #tpu.memory_space<vmem>>, vector<128x32xbf16>
    tpu.vector_store %arg4[%c0_8, %c0_9], %19 {strides = array<i32>} : memref<128x32xbf16, #tpu.memory_space<vmem>>, vector<128x32xbf16>,
    return
  }
  func.func @transform_0(%arg0: i32) -> (i32, i32) {
    %c0_i32 = arith.constant 0 : i32
    %c0_i32_0 = arith.constant 0 : i32
    return %arg0, %c0_i32 : i32, i32
  }
  func.func @transform_1(%arg0: i32) -> (i32, i32) {
    %c0_i32 = arith.constant 0 : i32
    %c0_i32_0 = arith.constant 0 : i32
    %c0_i32_1 = arith.constant 0 : i32
    return %c0_i32, %c0_i32_0 : i32, i32
  }
  func.func @transform_2(%arg0: i32) -> (i32, i32) {
    %c0_i32 = arith.constant 0 : i32
    %c0_i32_0 = arith.constant 0 : i32
    %c0_i32_1 = arith.constant 0 : i32
    return %c0_i32, %c0_i32_0 : i32, i32
  }
  func.func @transform_3(%arg0: i32) -> (i32, i32) {
    %c0_i32 = arith.constant 0 : i32
    %c0_i32_0 = arith.constant 0 : i32
    return %arg0, %c0_i32 : i32, i32
  }
}

module attributes {stable_mosaic.version = 11 : i64} {
  func.func @_gated_conv_kernel(%arg0: i32, %arg1: memref<128x288xbf16, #tpu.memory_space<vmem>>, %arg2: memref<288x64xbf16, #tpu.memory_space<vmem>>, %arg3: memref<1x64xf32, #tpu.memory_space<vmem>>, %arg4: memref<128x32xbf16, #tpu.memory_space<vmem>>) attributes {dimension_semantics = [#tpu.dimension_semantics<parallel>], iteration_bounds = array<i64: 1>, scalar_prefetch = 0 : i64, scratch_operands = 0 : i64, tpu.core_type = #tpu.core_type<tc>, window_params = [{transform_indices = @transform_0, window_bounds = array<i64: 128, 288>}, {pipeline_mode = #tpu.pipeline_mode<synchronous>, transform_indices = @transform_1, window_bounds = array<i64: 288, 64>}, {pipeline_mode = #tpu.pipeline_mode<synchronous>, transform_indices = @transform_2, window_bounds = array<i64: 1, 64>}, {transform_indices = @transform_3, window_bounds = array<i64: 128, 32>}]} {
    %c0 = arith.constant 0 : index
    %c0_0 = arith.constant 0 : index
    %0 = vector.load %arg1[%c0, %c0_0] : memref<128x288xbf16, #tpu.memory_space<vmem>>, vector<128x288xbf16>
    %c0_1 = arith.constant 0 : index
    %c0_2 = arith.constant 0 : index
    %1 = vector.load %arg2[%c0_1, %c0_2] : memref<288x64xbf16, #tpu.memory_space<vmem>>, vector<288x64xbf16>
    %cst = arith.constant dense<0.000000e+00> : vector<128x64xf32>
    %2 = tpu.matmul %0, %1, %cst {dimension_numbers = #tpu.dot_dimension_numbers<[1], [0], [0], [1], [0, 0, 1, 1], [], []>} : vector<128x288xbf16>, vector<288x64xbf16>, vector<128x64xf32> -> vector<128x64xf32>
    %c0_3 = arith.constant 0 : index
    %c0_4 = arith.constant 0 : index
    %3 = vector.load %arg3[%c0_3, %c0_4] : memref<1x64xf32, #tpu.memory_space<vmem>>, vector<1x64xf32>
    %4 = vector.broadcast %3 : vector<1x64xf32> to vector<128x64xf32>
    %5 = arith.addf %2, %4 : vector<128x64xf32>
    %6 = vector.extract_strided_slice %5 {offsets = [0, 0], sizes = [128, 32], strides = [1, 1]} : vector<128x64xf32> to vector<128x32xf32>
    %7 = vector.extract_strided_slice %5 {offsets = [0, 32], sizes = [128, 32], strides = [1, 1]} : vector<128x64xf32> to vector<128x32xf32>
    %cst_5 = arith.constant 0.000000e+00 : f32
    %8 = vector.broadcast %cst_5 : f32 to vector<128x32xf32>
    %9 = arith.cmpf oge, %6, %8 : vector<128x32xf32>
    %cst_6 = arith.constant 2.000000e-01 : f32
    %10 = vector.broadcast %cst_6 : f32 to vector<128x32xf32>
    %11 = arith.mulf %10, %6 : vector<128x32xf32>
    %12 = arith.select %9, %6, %11 : vector<128x32xi1>, vector<128x32xf32>
    %13 = arith.negf %7 : vector<128x32xf32>
    %14 = math.exp %13 : vector<128x32xf32>
    %cst_7 = arith.constant 1.000000e+00 : f32
    %15 = vector.broadcast %cst_7 : f32 to vector<128x32xf32>
    %16 = arith.addf %15, %14 : vector<128x32xf32>
    %17 = arith.divf %15, %16 : vector<128x32xf32>
    %18 = arith.mulf %12, %17 : vector<128x32xf32>
    %19 = arith.truncf %18 : vector<128x32xf32> to vector<128x32xbf16>
    %c0_8 = arith.constant 0 : index
    %c0_9 = arith.constant 0 : index
    %20 = vector.load %arg4[%c0_8, %c0_9] : memref<128x32xbf16, #tpu.memory_space<vmem>>, vector<128x32xbf16>
    tpu.vector_store %arg4[%c0_8, %c0_9], %19 {strides = array<i32>} : memref<128x32xbf16, #tpu.memory_space<vmem>>, vector<128x32xbf16>,
    return
  }
  func.func @transform_0(%arg0: i32) -> (i32, i32) {
    %c0_i32 = arith.constant 0 : i32
    %c0_i32_0 = arith.constant 0 : i32
    return %arg0, %c0_i32 : i32, i32
  }
  func.func @transform_1(%arg0: i32) -> (i32, i32) {
    %c0_i32 = arith.constant 0 : i32
    %c0_i32_0 = arith.constant 0 : i32
    %c0_i32_1 = arith.constant 0 : i32
    return %c0_i32, %c0_i32_0 : i32, i32
  }
  func.func @transform_2(%arg0: i32) -> (i32, i32) {
    %c0_i32 = arith.constant 0 : i32
    %c0_i32_0 = arith.constant 0 : i32
    %c0_i32_1 = arith.constant 0 : i32
    return %c0_i32, %c0_i32_0 : i32, i32
  }
  func.func @transform_3(%arg0: i32) -> (i32, i32) {
    %c0_i32 = arith.constant 0 : i32
    %c0_i32_0 = arith.constant 0 : i32
    return %arg0, %c0_i32 : i32, i32
  }
}

module attributes {stable_mosaic.version = 11 : i64} {
  func.func @_gated_conv_kernel(%arg0: i32, %arg1: memref<32x288xbf16, #tpu.memory_space<vmem>>, %arg2: memref<288x128xbf16, #tpu.memory_space<vmem>>, %arg3: memref<1x128xf32, #tpu.memory_space<vmem>>, %arg4: memref<32x64xbf16, #tpu.memory_space<vmem>>) attributes {dimension_semantics = [#tpu.dimension_semantics<parallel>], iteration_bounds = array<i64: 1>, scalar_prefetch = 0 : i64, scratch_operands = 0 : i64, tpu.core_type = #tpu.core_type<tc>, window_params = [{transform_indices = @transform_0, window_bounds = array<i64: 32, 288>}, {pipeline_mode = #tpu.pipeline_mode<synchronous>, transform_indices = @transform_1, window_bounds = array<i64: 288, 128>}, {pipeline_mode = #tpu.pipeline_mode<synchronous>, transform_indices = @transform_2, window_bounds = array<i64: 1, 128>}, {transform_indices = @transform_3, window_bounds = array<i64: 32, 64>}]} {
    %c0 = arith.constant 0 : index
    %c0_0 = arith.constant 0 : index
    %0 = vector.load %arg1[%c0, %c0_0] : memref<32x288xbf16, #tpu.memory_space<vmem>>, vector<32x288xbf16>
    %c0_1 = arith.constant 0 : index
    %c0_2 = arith.constant 0 : index
    %1 = vector.load %arg2[%c0_1, %c0_2] : memref<288x128xbf16, #tpu.memory_space<vmem>>, vector<288x128xbf16>
    %cst = arith.constant dense<0.000000e+00> : vector<32x128xf32>
    %2 = tpu.matmul %0, %1, %cst {dimension_numbers = #tpu.dot_dimension_numbers<[1], [0], [0], [1], [0, 0, 1, 1], [], []>} : vector<32x288xbf16>, vector<288x128xbf16>, vector<32x128xf32> -> vector<32x128xf32>
    %c0_3 = arith.constant 0 : index
    %c0_4 = arith.constant 0 : index
    %3 = vector.load %arg3[%c0_3, %c0_4] : memref<1x128xf32, #tpu.memory_space<vmem>>, vector<1x128xf32>
    %4 = vector.broadcast %3 : vector<1x128xf32> to vector<32x128xf32>
    %5 = arith.addf %2, %4 : vector<32x128xf32>
    %6 = vector.extract_strided_slice %5 {offsets = [0, 0], sizes = [32, 64], strides = [1, 1]} : vector<32x128xf32> to vector<32x64xf32>
    %7 = vector.extract_strided_slice %5 {offsets = [0, 64], sizes = [32, 64], strides = [1, 1]} : vector<32x128xf32> to vector<32x64xf32>
    %cst_5 = arith.constant 0.000000e+00 : f32
    %8 = vector.broadcast %cst_5 : f32 to vector<32x64xf32>
    %9 = arith.cmpf oge, %6, %8 : vector<32x64xf32>
    %cst_6 = arith.constant 2.000000e-01 : f32
    %10 = vector.broadcast %cst_6 : f32 to vector<32x64xf32>
    %11 = arith.mulf %10, %6 : vector<32x64xf32>
    %12 = arith.select %9, %6, %11 : vector<32x64xi1>, vector<32x64xf32>
    %13 = arith.negf %7 : vector<32x64xf32>
    %14 = math.exp %13 : vector<32x64xf32>
    %cst_7 = arith.constant 1.000000e+00 : f32
    %15 = vector.broadcast %cst_7 : f32 to vector<32x64xf32>
    %16 = arith.addf %15, %14 : vector<32x64xf32>
    %17 = arith.divf %15, %16 : vector<32x64xf32>
    %18 = arith.mulf %12, %17 : vector<32x64xf32>
    %19 = arith.truncf %18 : vector<32x64xf32> to vector<32x64xbf16>
    %c0_8 = arith.constant 0 : index
    %c0_9 = arith.constant 0 : index
    %20 = vector.load %arg4[%c0_8, %c0_9] : memref<32x64xbf16, #tpu.memory_space<vmem>>, vector<32x64xbf16>
    tpu.vector_store %arg4[%c0_8, %c0_9], %19 {strides = array<i32>} : memref<32x64xbf16, #tpu.memory_space<vmem>>, vector<32x64xbf16>,
    return
  }
  func.func @transform_0(%arg0: i32) -> (i32, i32) {
    %c0_i32 = arith.constant 0 : i32
    %c0_i32_0 = arith.constant 0 : i32
    return %arg0, %c0_i32 : i32, i32
  }
  func.func @transform_1(%arg0: i32) -> (i32, i32) {
    %c0_i32 = arith.constant 0 : i32
    %c0_i32_0 = arith.constant 0 : i32
    %c0_i32_1 = arith.constant 0 : i32
    return %c0_i32, %c0_i32_0 : i32, i32
  }
  func.func @transform_2(%arg0: i32) -> (i32, i32) {
    %c0_i32 = arith.constant 0 : i32
    %c0_i32_0 = arith.constant 0 : i32
    %c0_i32_1 = arith.constant 0 : i32
    return %c0_i32, %c0_i32_0 : i32, i32
  }
  func.func @transform_3(%arg0: i32) -> (i32, i32) {
    %c0_i32 = arith.constant 0 : i32
    %c0_i32_0 = arith.constant 0 : i32
    return %arg0, %c0_i32 : i32, i32
  }
}

module attributes {stable_mosaic.version = 11 : i64} {
  func.func @_gated_conv_kernel(%arg0: i32, %arg1: memref<32x576xbf16, #tpu.memory_space<vmem>>, %arg2: memref<576x128xbf16, #tpu.memory_space<vmem>>, %arg3: memref<1x128xf32, #tpu.memory_space<vmem>>, %arg4: memref<32x64xbf16, #tpu.memory_space<vmem>>) attributes {dimension_semantics = [#tpu.dimension_semantics<parallel>], iteration_bounds = array<i64: 1>, scalar_prefetch = 0 : i64, scratch_operands = 0 : i64, tpu.core_type = #tpu.core_type<tc>, window_params = [{transform_indices = @transform_0, window_bounds = array<i64: 32, 576>}, {pipeline_mode = #tpu.pipeline_mode<synchronous>, transform_indices = @transform_1, window_bounds = array<i64: 576, 128>}, {pipeline_mode = #tpu.pipeline_mode<synchronous>, transform_indices = @transform_2, window_bounds = array<i64: 1, 128>}, {transform_indices = @transform_3, window_bounds = array<i64: 32, 64>}]} {
    %c0 = arith.constant 0 : index
    %c0_0 = arith.constant 0 : index
    %0 = vector.load %arg1[%c0, %c0_0] : memref<32x576xbf16, #tpu.memory_space<vmem>>, vector<32x576xbf16>
    %c0_1 = arith.constant 0 : index
    %c0_2 = arith.constant 0 : index
    %1 = vector.load %arg2[%c0_1, %c0_2] : memref<576x128xbf16, #tpu.memory_space<vmem>>, vector<576x128xbf16>
    %cst = arith.constant dense<0.000000e+00> : vector<32x128xf32>
    %2 = tpu.matmul %0, %1, %cst {dimension_numbers = #tpu.dot_dimension_numbers<[1], [0], [0], [1], [0, 0, 1, 1], [], []>} : vector<32x576xbf16>, vector<576x128xbf16>, vector<32x128xf32> -> vector<32x128xf32>
    %c0_3 = arith.constant 0 : index
    %c0_4 = arith.constant 0 : index
    %3 = vector.load %arg3[%c0_3, %c0_4] : memref<1x128xf32, #tpu.memory_space<vmem>>, vector<1x128xf32>
    %4 = vector.broadcast %3 : vector<1x128xf32> to vector<32x128xf32>
    %5 = arith.addf %2, %4 : vector<32x128xf32>
    %6 = vector.extract_strided_slice %5 {offsets = [0, 0], sizes = [32, 64], strides = [1, 1]} : vector<32x128xf32> to vector<32x64xf32>
    %7 = vector.extract_strided_slice %5 {offsets = [0, 64], sizes = [32, 64], strides = [1, 1]} : vector<32x128xf32> to vector<32x64xf32>
    %cst_5 = arith.constant 0.000000e+00 : f32
    %8 = vector.broadcast %cst_5 : f32 to vector<32x64xf32>
    %9 = arith.cmpf oge, %6, %8 : vector<32x64xf32>
    %cst_6 = arith.constant 2.000000e-01 : f32
    %10 = vector.broadcast %cst_6 : f32 to vector<32x64xf32>
    %11 = arith.mulf %10, %6 : vector<32x64xf32>
    %12 = arith.select %9, %6, %11 : vector<32x64xi1>, vector<32x64xf32>
    %13 = arith.negf %7 : vector<32x64xf32>
    %14 = math.exp %13 : vector<32x64xf32>
    %cst_7 = arith.constant 1.000000e+00 : f32
    %15 = vector.broadcast %cst_7 : f32 to vector<32x64xf32>
    %16 = arith.addf %15, %14 : vector<32x64xf32>
    %17 = arith.divf %15, %16 : vector<32x64xf32>
    %18 = arith.mulf %12, %17 : vector<32x64xf32>
    %19 = arith.truncf %18 : vector<32x64xf32> to vector<32x64xbf16>
    %c0_8 = arith.constant 0 : index
    %c0_9 = arith.constant 0 : index
    %20 = vector.load %arg4[%c0_8, %c0_9] : memref<32x64xbf16, #tpu.memory_space<vmem>>, vector<32x64xbf16>
    tpu.vector_store %arg4[%c0_8, %c0_9], %19 {strides = array<i32>} : memref<32x64xbf16, #tpu.memory_space<vmem>>, vector<32x64xbf16>,
    return
  }
  func.func @transform_0(%arg0: i32) -> (i32, i32) {
    %c0_i32 = arith.constant 0 : i32
    %c0_i32_0 = arith.constant 0 : i32
    return %arg0, %c0_i32 : i32, i32
  }
  func.func @transform_1(%arg0: i32) -> (i32, i32) {
    %c0_i32 = arith.constant 0 : i32
    %c0_i32_0 = arith.constant 0 : i32
    %c0_i32_1 = arith.constant 0 : i32
    return %c0_i32, %c0_i32_0 : i32, i32
  }
  func.func @transform_2(%arg0: i32) -> (i32, i32) {
    %c0_i32 = arith.constant 0 : i32
    %c0_i32_0 = arith.constant 0 : i32
    %c0_i32_1 = arith.constant 0 : i32
    return %c0_i32, %c0_i32_0 : i32, i32
  }
  func.func @transform_3(%arg0: i32) -> (i32, i32) {
    %c0_i32 = arith.constant 0 : i32
    %c0_i32_0 = arith.constant 0 : i32
    return %arg0, %c0_i32 : i32, i32
  }
}

module attributes {stable_mosaic.version = 11 : i64} {
  func.func @_gated_conv_kernel(%arg0: i32, %arg1: memref<32x576xbf16, #tpu.memory_space<vmem>>, %arg2: memref<576x128xbf16, #tpu.memory_space<vmem>>, %arg3: memref<1x128xf32, #tpu.memory_space<vmem>>, %arg4: memref<32x64xbf16, #tpu.memory_space<vmem>>, %arg5: memref<32x64xbf16, #tpu.memory_space<vmem>>) attributes {dimension_semantics = [#tpu.dimension_semantics<parallel>], iteration_bounds = array<i64: 1>, scalar_prefetch = 0 : i64, scratch_operands = 0 : i64, tpu.core_type = #tpu.core_type<tc>, window_params = [{transform_indices = @transform_0, window_bounds = array<i64: 32, 576>}, {pipeline_mode = #tpu.pipeline_mode<synchronous>, transform_indices = @transform_1, window_bounds = array<i64: 576, 128>}, {pipeline_mode = #tpu.pipeline_mode<synchronous>, transform_indices = @transform_2, window_bounds = array<i64: 1, 128>}, {transform_indices = @transform_3, window_bounds = array<i64: 32, 64>}, {transform_indices = @transform_4, window_bounds = array<i64: 32, 64>}]} {
    %c0 = arith.constant 0 : index
    %c0_0 = arith.constant 0 : index
    %0 = vector.load %arg1[%c0, %c0_0] : memref<32x576xbf16, #tpu.memory_space<vmem>>, vector<32x576xbf16>
    %c0_1 = arith.constant 0 : index
    %c0_2 = arith.constant 0 : index
    %1 = vector.load %arg2[%c0_1, %c0_2] : memref<576x128xbf16, #tpu.memory_space<vmem>>, vector<576x128xbf16>
    %cst = arith.constant dense<0.000000e+00> : vector<32x128xf32>
    %2 = tpu.matmul %0, %1, %cst {dimension_numbers = #tpu.dot_dimension_numbers<[1], [0], [0], [1], [0, 0, 1, 1], [], []>} : vector<32x576xbf16>, vector<576x128xbf16>, vector<32x128xf32> -> vector<32x128xf32>
    %c0_3 = arith.constant 0 : index
    %c0_4 = arith.constant 0 : index
    %3 = vector.load %arg3[%c0_3, %c0_4] : memref<1x128xf32, #tpu.memory_space<vmem>>, vector<1x128xf32>
    %4 = vector.broadcast %3 : vector<1x128xf32> to vector<32x128xf32>
    %5 = arith.addf %2, %4 : vector<32x128xf32>
    %6 = vector.extract_strided_slice %5 {offsets = [0, 0], sizes = [32, 64], strides = [1, 1]} : vector<32x128xf32> to vector<32x64xf32>
    %7 = vector.extract_strided_slice %5 {offsets = [0, 64], sizes = [32, 64], strides = [1, 1]} : vector<32x128xf32> to vector<32x64xf32>
    %cst_5 = arith.constant 0.000000e+00 : f32
    %8 = vector.broadcast %cst_5 : f32 to vector<32x64xf32>
    %9 = arith.cmpf oge, %6, %8 : vector<32x64xf32>
    %cst_6 = arith.constant 2.000000e-01 : f32
    %10 = vector.broadcast %cst_6 : f32 to vector<32x64xf32>
    %11 = arith.mulf %10, %6 : vector<32x64xf32>
    %12 = arith.select %9, %6, %11 : vector<32x64xi1>, vector<32x64xf32>
    %13 = arith.negf %7 : vector<32x64xf32>
    %14 = math.exp %13 : vector<32x64xf32>
    %cst_7 = arith.constant 1.000000e+00 : f32
    %15 = vector.broadcast %cst_7 : f32 to vector<32x64xf32>
    %16 = arith.addf %15, %14 : vector<32x64xf32>
    %17 = arith.divf %15, %16 : vector<32x64xf32>
    %18 = arith.mulf %12, %17 : vector<32x64xf32>
    %c0_8 = arith.constant 0 : index
    %c0_9 = arith.constant 0 : index
    %19 = vector.load %arg4[%c0_8, %c0_9] : memref<32x64xbf16, #tpu.memory_space<vmem>>, vector<32x64xbf16>
    %20 = arith.extf %19 : vector<32x64xbf16> to vector<32x64xf32>
    %21 = arith.addf %18, %20 : vector<32x64xf32>
    %22 = arith.truncf %21 : vector<32x64xf32> to vector<32x64xbf16>
    %c0_10 = arith.constant 0 : index
    %c0_11 = arith.constant 0 : index
    %23 = vector.load %arg5[%c0_10, %c0_11] : memref<32x64xbf16, #tpu.memory_space<vmem>>, vector<32x64xbf16>
    tpu.vector_store %arg5[%c0_10, %c0_11], %22 {strides = array<i32>} : memref<32x64xbf16, #tpu.memory_space<vmem>>, vector<32x64xbf16>,
    return
  }
  func.func @transform_0(%arg0: i32) -> (i32, i32) {
    %c0_i32 = arith.constant 0 : i32
    %c0_i32_0 = arith.constant 0 : i32
    return %arg0, %c0_i32 : i32, i32
  }
  func.func @transform_1(%arg0: i32) -> (i32, i32) {
    %c0_i32 = arith.constant 0 : i32
    %c0_i32_0 = arith.constant 0 : i32
    %c0_i32_1 = arith.constant 0 : i32
    return %c0_i32, %c0_i32_0 : i32, i32
  }
  func.func @transform_2(%arg0: i32) -> (i32, i32) {
    %c0_i32 = arith.constant 0 : i32
    %c0_i32_0 = arith.constant 0 : i32
    %c0_i32_1 = arith.constant 0 : i32
    return %c0_i32, %c0_i32_0 : i32, i32
  }
  func.func @transform_3(%arg0: i32) -> (i32, i32) {
    %c0_i32 = arith.constant 0 : i32
    %c0_i32_0 = arith.constant 0 : i32
    return %arg0, %c0_i32 : i32, i32
  }
  func.func @transform_4(%arg0: i32) -> (i32, i32) {
    %c0_i32 = arith.constant 0 : i32
    %c0_i32_0 = arith.constant 0 : i32
    return %arg0, %c0_i32 : i32, i32
  }
}

module attributes {stable_mosaic.version = 11 : i64} {
  func.func @_gated_conv_kernel(%arg0: i32, %arg1: memref<128x576xbf16, #tpu.memory_space<vmem>>, %arg2: memref<576x128xbf16, #tpu.memory_space<vmem>>, %arg3: memref<1x128xf32, #tpu.memory_space<vmem>>, %arg4: memref<128x64xbf16, #tpu.memory_space<vmem>>) attributes {dimension_semantics = [#tpu.dimension_semantics<parallel>], iteration_bounds = array<i64: 1>, scalar_prefetch = 0 : i64, scratch_operands = 0 : i64, tpu.core_type = #tpu.core_type<tc>, window_params = [{transform_indices = @transform_0, window_bounds = array<i64: 128, 576>}, {pipeline_mode = #tpu.pipeline_mode<synchronous>, transform_indices = @transform_1, window_bounds = array<i64: 576, 128>}, {pipeline_mode = #tpu.pipeline_mode<synchronous>, transform_indices = @transform_2, window_bounds = array<i64: 1, 128>}, {transform_indices = @transform_3, window_bounds = array<i64: 128, 64>}]} {
    %c0 = arith.constant 0 : index
    %c0_0 = arith.constant 0 : index
    %0 = vector.load %arg1[%c0, %c0_0] : memref<128x576xbf16, #tpu.memory_space<vmem>>, vector<128x576xbf16>
    %c0_1 = arith.constant 0 : index
    %c0_2 = arith.constant 0 : index
    %1 = vector.load %arg2[%c0_1, %c0_2] : memref<576x128xbf16, #tpu.memory_space<vmem>>, vector<576x128xbf16>
    %cst = arith.constant dense<0.000000e+00> : vector<128x128xf32>
    %2 = tpu.matmul %0, %1, %cst {dimension_numbers = #tpu.dot_dimension_numbers<[1], [0], [0], [1], [0, 0, 1, 1], [], []>} : vector<128x576xbf16>, vector<576x128xbf16>, vector<128x128xf32> -> vector<128x128xf32>
    %c0_3 = arith.constant 0 : index
    %c0_4 = arith.constant 0 : index
    %3 = vector.load %arg3[%c0_3, %c0_4] : memref<1x128xf32, #tpu.memory_space<vmem>>, vector<1x128xf32>
    %4 = vector.broadcast %3 : vector<1x128xf32> to vector<128x128xf32>
    %5 = arith.addf %2, %4 : vector<128x128xf32>
    %6 = vector.extract_strided_slice %5 {offsets = [0, 0], sizes = [128, 64], strides = [1, 1]} : vector<128x128xf32> to vector<128x64xf32>
    %7 = vector.extract_strided_slice %5 {offsets = [0, 64], sizes = [128, 64], strides = [1, 1]} : vector<128x128xf32> to vector<128x64xf32>
    %cst_5 = arith.constant 0.000000e+00 : f32
    %8 = vector.broadcast %cst_5 : f32 to vector<128x64xf32>
    %9 = arith.cmpf oge, %6, %8 : vector<128x64xf32>
    %cst_6 = arith.constant 2.000000e-01 : f32
    %10 = vector.broadcast %cst_6 : f32 to vector<128x64xf32>
    %11 = arith.mulf %10, %6 : vector<128x64xf32>
    %12 = arith.select %9, %6, %11 : vector<128x64xi1>, vector<128x64xf32>
    %13 = arith.negf %7 : vector<128x64xf32>
    %14 = math.exp %13 : vector<128x64xf32>
    %cst_7 = arith.constant 1.000000e+00 : f32
    %15 = vector.broadcast %cst_7 : f32 to vector<128x64xf32>
    %16 = arith.addf %15, %14 : vector<128x64xf32>
    %17 = arith.divf %15, %16 : vector<128x64xf32>
    %18 = arith.mulf %12, %17 : vector<128x64xf32>
    %19 = arith.truncf %18 : vector<128x64xf32> to vector<128x64xbf16>
    %c0_8 = arith.constant 0 : index
    %c0_9 = arith.constant 0 : index
    %20 = vector.load %arg4[%c0_8, %c0_9] : memref<128x64xbf16, #tpu.memory_space<vmem>>, vector<128x64xbf16>
    tpu.vector_store %arg4[%c0_8, %c0_9], %19 {strides = array<i32>} : memref<128x64xbf16, #tpu.memory_space<vmem>>, vector<128x64xbf16>,
    return
  }
  func.func @transform_0(%arg0: i32) -> (i32, i32) {
    %c0_i32 = arith.constant 0 : i32
    %c0_i32_0 = arith.constant 0 : i32
    return %arg0, %c0_i32 : i32, i32
  }
  func.func @transform_1(%arg0: i32) -> (i32, i32) {
    %c0_i32 = arith.constant 0 : i32
    %c0_i32_0 = arith.constant 0 : i32
    %c0_i32_1 = arith.constant 0 : i32
    return %c0_i32, %c0_i32_0 : i32, i32
  }
  func.func @transform_2(%arg0: i32) -> (i32, i32) {
    %c0_i32 = arith.constant 0 : i32
    %c0_i32_0 = arith.constant 0 : i32
    %c0_i32_1 = arith.constant 0 : i32
    return %c0_i32, %c0_i32_0 : i32, i32
  }
  func.func @transform_3(%arg0: i32) -> (i32, i32) {
    %c0_i32 = arith.constant 0 : i32
    %c0_i32_0 = arith.constant 0 : i32
    return %arg0, %c0_i32 : i32, i32
  }
}

module attributes {stable_mosaic.version = 11 : i64} {
  func.func @_gated_conv_kernel(%arg0: i32, %arg1: memref<512x576xbf16, #tpu.memory_space<vmem>>, %arg2: memref<576x64xbf16, #tpu.memory_space<vmem>>, %arg3: memref<1x64xf32, #tpu.memory_space<vmem>>, %arg4: memref<512x32xbf16, #tpu.memory_space<vmem>>) attributes {dimension_semantics = [#tpu.dimension_semantics<parallel>], iteration_bounds = array<i64: 1>, scalar_prefetch = 0 : i64, scratch_operands = 0 : i64, tpu.core_type = #tpu.core_type<tc>, window_params = [{transform_indices = @transform_0, window_bounds = array<i64: 512, 576>}, {pipeline_mode = #tpu.pipeline_mode<synchronous>, transform_indices = @transform_1, window_bounds = array<i64: 576, 64>}, {pipeline_mode = #tpu.pipeline_mode<synchronous>, transform_indices = @transform_2, window_bounds = array<i64: 1, 64>}, {transform_indices = @transform_3, window_bounds = array<i64: 512, 32>}]} {
    %c0 = arith.constant 0 : index
    %c0_0 = arith.constant 0 : index
    %0 = vector.load %arg1[%c0, %c0_0] : memref<512x576xbf16, #tpu.memory_space<vmem>>, vector<512x576xbf16>
    %c0_1 = arith.constant 0 : index
    %c0_2 = arith.constant 0 : index
    %1 = vector.load %arg2[%c0_1, %c0_2] : memref<576x64xbf16, #tpu.memory_space<vmem>>, vector<576x64xbf16>
    %cst = arith.constant dense<0.000000e+00> : vector<512x64xf32>
    %2 = tpu.matmul %0, %1, %cst {dimension_numbers = #tpu.dot_dimension_numbers<[1], [0], [0], [1], [0, 0, 1, 1], [], []>} : vector<512x576xbf16>, vector<576x64xbf16>, vector<512x64xf32> -> vector<512x64xf32>
    %c0_3 = arith.constant 0 : index
    %c0_4 = arith.constant 0 : index
    %3 = vector.load %arg3[%c0_3, %c0_4] : memref<1x64xf32, #tpu.memory_space<vmem>>, vector<1x64xf32>
    %4 = vector.broadcast %3 : vector<1x64xf32> to vector<512x64xf32>
    %5 = arith.addf %2, %4 : vector<512x64xf32>
    %6 = vector.extract_strided_slice %5 {offsets = [0, 0], sizes = [512, 32], strides = [1, 1]} : vector<512x64xf32> to vector<512x32xf32>
    %7 = vector.extract_strided_slice %5 {offsets = [0, 32], sizes = [512, 32], strides = [1, 1]} : vector<512x64xf32> to vector<512x32xf32>
    %cst_5 = arith.constant 0.000000e+00 : f32
    %8 = vector.broadcast %cst_5 : f32 to vector<512x32xf32>
    %9 = arith.cmpf oge, %6, %8 : vector<512x32xf32>
    %cst_6 = arith.constant 2.000000e-01 : f32
    %10 = vector.broadcast %cst_6 : f32 to vector<512x32xf32>
    %11 = arith.mulf %10, %6 : vector<512x32xf32>
    %12 = arith.select %9, %6, %11 : vector<512x32xi1>, vector<512x32xf32>
    %13 = arith.negf %7 : vector<512x32xf32>
    %14 = math.exp %13 : vector<512x32xf32>
    %cst_7 = arith.constant 1.000000e+00 : f32
    %15 = vector.broadcast %cst_7 : f32 to vector<512x32xf32>
    %16 = arith.addf %15, %14 : vector<512x32xf32>
    %17 = arith.divf %15, %16 : vector<512x32xf32>
    %18 = arith.mulf %12, %17 : vector<512x32xf32>
    %19 = arith.truncf %18 : vector<512x32xf32> to vector<512x32xbf16>
    %c0_8 = arith.constant 0 : index
    %c0_9 = arith.constant 0 : index
    %20 = vector.load %arg4[%c0_8, %c0_9] : memref<512x32xbf16, #tpu.memory_space<vmem>>, vector<512x32xbf16>
    tpu.vector_store %arg4[%c0_8, %c0_9], %19 {strides = array<i32>} : memref<512x32xbf16, #tpu.memory_space<vmem>>, vector<512x32xbf16>,
    return
  }
  func.func @transform_0(%arg0: i32) -> (i32, i32) {
    %c0_i32 = arith.constant 0 : i32
    %c0_i32_0 = arith.constant 0 : i32
    return %arg0, %c0_i32 : i32, i32
  }
  func.func @transform_1(%arg0: i32) -> (i32, i32) {
    %c0_i32 = arith.constant 0 : i32
    %c0_i32_0 = arith.constant 0 : i32
    %c0_i32_1 = arith.constant 0 : i32
    return %c0_i32, %c0_i32_0 : i32, i32
  }
  func.func @transform_2(%arg0: i32) -> (i32, i32) {
    %c0_i32 = arith.constant 0 : i32
    %c0_i32_0 = arith.constant 0 : i32
    %c0_i32_1 = arith.constant 0 : i32
    return %c0_i32, %c0_i32_0 : i32, i32
  }
  func.func @transform_3(%arg0: i32) -> (i32, i32) {
    %c0_i32 = arith.constant 0 : i32
    %c0_i32_0 = arith.constant 0 : i32
    return %arg0, %c0_i32 : i32, i32
  }
}

module attributes {stable_mosaic.version = 11 : i64} {
  func.func @_gated_conv_kernel(%arg0: i32, %arg1: memref<512x288xbf16, #tpu.memory_space<vmem>>, %arg2: memref<288x6xbf16, #tpu.memory_space<vmem>>, %arg3: memref<1x6xf32, #tpu.memory_space<vmem>>, %arg4: memref<512x3xf32, #tpu.memory_space<vmem>>) attributes {dimension_semantics = [#tpu.dimension_semantics<parallel>], iteration_bounds = array<i64: 1>, scalar_prefetch = 0 : i64, scratch_operands = 0 : i64, tpu.core_type = #tpu.core_type<tc>, window_params = [{transform_indices = @transform_0, window_bounds = array<i64: 512, 288>}, {pipeline_mode = #tpu.pipeline_mode<synchronous>, transform_indices = @transform_1, window_bounds = array<i64: 288, 6>}, {pipeline_mode = #tpu.pipeline_mode<synchronous>, transform_indices = @transform_2, window_bounds = array<i64: 1, 6>}, {transform_indices = @transform_3, window_bounds = array<i64: 512, 3>}]} {
    %c0 = arith.constant 0 : index
    %c0_0 = arith.constant 0 : index
    %0 = vector.load %arg1[%c0, %c0_0] : memref<512x288xbf16, #tpu.memory_space<vmem>>, vector<512x288xbf16>
    %c0_1 = arith.constant 0 : index
    %c0_2 = arith.constant 0 : index
    %1 = vector.load %arg2[%c0_1, %c0_2] : memref<288x6xbf16, #tpu.memory_space<vmem>>, vector<288x6xbf16>
    %cst = arith.constant dense<0.000000e+00> : vector<512x6xf32>
    %2 = tpu.matmul %0, %1, %cst {dimension_numbers = #tpu.dot_dimension_numbers<[1], [0], [0], [1], [0, 0, 1, 1], [], []>} : vector<512x288xbf16>, vector<288x6xbf16>, vector<512x6xf32> -> vector<512x6xf32>
    %c0_3 = arith.constant 0 : index
    %c0_4 = arith.constant 0 : index
    %3 = vector.load %arg3[%c0_3, %c0_4] : memref<1x6xf32, #tpu.memory_space<vmem>>, vector<1x6xf32>
    %4 = vector.broadcast %3 : vector<1x6xf32> to vector<512x6xf32>
    %5 = arith.addf %2, %4 : vector<512x6xf32>
    %6 = vector.extract_strided_slice %5 {offsets = [0, 0], sizes = [512, 3], strides = [1, 1]} : vector<512x6xf32> to vector<512x3xf32>
    %7 = vector.extract_strided_slice %5 {offsets = [0, 3], sizes = [512, 3], strides = [1, 1]} : vector<512x6xf32> to vector<512x3xf32>
    %8 = arith.negf %7 : vector<512x3xf32>
    %9 = math.exp %8 : vector<512x3xf32>
    %cst_5 = arith.constant 1.000000e+00 : f32
    %10 = vector.broadcast %cst_5 : f32 to vector<512x3xf32>
    %11 = arith.addf %10, %9 : vector<512x3xf32>
    %12 = arith.divf %10, %11 : vector<512x3xf32>
    %13 = arith.mulf %6, %12 : vector<512x3xf32>
    %14 = math.tanh %13 : vector<512x3xf32>
    %cst_6 = arith.constant 0.000000e+00 : f32
    %cst_7 = arith.constant 1.000000e+00 : f32
    %15 = vector.broadcast %cst_6 : f32 to vector<512x3xf32>
    %16 = arith.maximumf %15, %14 : vector<512x3xf32>
    %17 = vector.broadcast %cst_7 : f32 to vector<512x3xf32>
    %18 = arith.minimumf %17, %16 : vector<512x3xf32>
    %c0_8 = arith.constant 0 : index
    %c0_9 = arith.constant 0 : index
    %19 = vector.load %arg4[%c0_8, %c0_9] : memref<512x3xf32, #tpu.memory_space<vmem>>, vector<512x3xf32>
    tpu.vector_store %arg4[%c0_8, %c0_9], %18 {strides = array<i32>} : memref<512x3xf32, #tpu.memory_space<vmem>>, vector<512x3xf32>,
    return
  }
  func.func @transform_0(%arg0: i32) -> (i32, i32) {
    %c0_i32 = arith.constant 0 : i32
    %c0_i32_0 = arith.constant 0 : i32
    return %arg0, %c0_i32 : i32, i32
  }
  func.func @transform_1(%arg0: i32) -> (i32, i32) {
    %c0_i32 = arith.constant 0 : i32
    %c0_i32_0 = arith.constant 0 : i32
    %c0_i32_1 = arith.constant 0 : i32
    return %c0_i32, %c0_i32_0 : i32, i32
  }
  func.func @transform_2(%arg0: i32) -> (i32, i32) {
    %c0_i32 = arith.constant 0 : i32
    %c0_i32_0 = arith.constant 0 : i32
    %c0_i32_1 = arith.constant 0 : i32
    return %c0_i32, %c0_i32_0 : i32, i32
  }
  func.func @transform_3(%arg0: i32) -> (i32, i32) {
    %c0_i32 = arith.constant 0 : i32
    %c0_i32_0 = arith.constant 0 : i32
    return %arg0, %c0_i32 : i32, i32
  }
}

</mosaic_0001>

<llo_original>
// kernel: coarse_forward.26
$region0: #{coarse_forward.26}
  #allocation0 [shape = 'u32[]', space=smem, size = 0x4, offset = 0x4, fixed_abs, tag = 'smem constant byte address 0x4 - core index']
  #allocation1 [shape = 'u32[144,128]{1,0:T(1,128)}', space=vmem, size = 0x12000, scoped, tag = 'internal scratch']
  %s0 = inlined_call_operand.vmem [shape: bf16[128,128], index: 0, kind: input, shape index: {}]
  %s1 = inlined_call_operand.vmem [shape: bf16[128,64], index: 1, kind: input, shape index: {}]
  %s2 = inlined_call_operand.vmem [shape: f32[1,64], index: 2, kind: input, shape index: {}]
  %s3 = inlined_call_operand.vmem [shape: bf16[128,32], index: 3, kind: output, shape index: {}]
  %s4 = sld [smem:[#allocation0]]
  $region22: #{coarse_forward.26} parent=0
    _
  %s6 = ssub.s32 1, %s4
  %s7 = scalar_select 0, %s6, %s4
  // Predicated region
  $region2: #{coarse_forward.26} parent=0 // pred_check
    _
  $region3: #{coarse_forward.26} parent=0 // pred_check_branch
    %9 = sbr.rel (0) target = $region5
  $region4: #{coarse_forward.26} parent=0 // pred_region
    _
  $region5: #{coarse_forward.26} parent=0 // pred_fallthru
    _
  // Predicated region
  $region6: #{coarse_forward.26} parent=0 // pred_check
    _
  $region7: #{coarse_forward.26} parent=0 // pred_check_branch
    %11 = sbr.rel (0) target = $region9
  $region8: #{coarse_forward.26} parent=0 // pred_region
    _
  $region9: #{coarse_forward.26} parent=0 // pred_fallthru
    _
  // Predicated region
  $region10: #{coarse_forward.26} parent=0 // pred_check
    _
  $region11: #{coarse_forward.26} parent=0 // pred_check_branch
    %13 = sbr.rel (0) target = $region13
  $region12: #{coarse_forward.26} parent=0 // pred_region
    _
  $region13: #{coarse_forward.26} parent=0 // pred_fallthru
    _
  %v15 = vld [vmem:[%s0] sm:$0xf]
  %v16 = vld [vmem:[%s0 + $0x4] sm:$0xf]
  %v17 = vld [vmem:[%s0 + $0x8] sm:$0xf]
  %v18 = vld [vmem:[%s0 + $0xc] sm:$0xf]
  %v19 = vld [vmem:[%s0 + $0x10] sm:$0xf]
  %v20 = vld [vmem:[%s0 + $0x14] sm:$0xf]
  %v21 = vld [vmem:[%s0 + $0x18] sm:$0xf]
  %v22 = vld [vmem:[%s0 + $0x1c] sm:$0xf]
  %v23 = vld [vmem:[%s0 + $0x20] sm:$0xf]
  %v24 = vld [vmem:[%s0 + $0x24] sm:$0xf]
  %v25 = vld [vmem:[%s0 + $0x28] sm:$0xf]
  %v26 = vld [vmem:[%s0 + $0x2c] sm:$0xf]
  %v27 = vld [vmem:[%s0 + $0x30] sm:$0xf]
  %v28 = vld [vmem:[%s0 + $0x34] sm:$0xf]
  %v29 = vld [vmem:[%s0 + $0x38] sm:$0xf]
  %v30 = vld [vmem:[%s0 + $0x3c] sm:$0xf]
  %v31 = vld [vmem:[%s1] sm:$0xf]
  %v32 = vld [vmem:[%s1 + $0x4] sm:$0xf]
  %v33 = vld [vmem:[%s1 + $0x8] sm:$0xf]
  %v34 = vld [vmem:[%s1 + $0xc] sm:$0xf]
  %v35 = vld [vmem:[%s1 + $0x10] sm:$0xf]
  %v36 = vld [vmem:[%s1 + $0x14] sm:$0xf]
  %v37 = vld [vmem:[%s1 + $0x18] sm:$0xf]
  %v38 = vld [vmem:[%s1 + $0x1c] sm:$0xf]
  %v39 = vld [vmem:[%s1 + $0x20] sm:$0xf]
  %v40 = vld [vmem:[%s1 + $0x24] sm:$0xf]
  %v41 = vld [vmem:[%s1 + $0x28] sm:$0xf]
  %v42 = vld [vmem:[%s1 + $0x2c] sm:$0xf]
  %v43 = vld [vmem:[%s1 + $0x30] sm:$0xf]
  %v44 = vld [vmem:[%s1 + $0x34] sm:$0xf]
  %v45 = vld [vmem:[%s1 + $0x38] sm:$0xf]
  %v46 = vld [vmem:[%s1 + $0x3c] sm:$0xf]
  %v47 = vld [vmem:[%s2] sm:$0x1]
  %v49 = vlaneseq
  %v50 = vshrl.u32 %v49, 7
  %v51 = vsub.s32 0, %v50
  %v52 = vrot.slane %v47, %v51
  %v70 = vunpack.c.l.b16 %v15
  %v71 = vunpack.c.l.b16 %v16
  %v72 = vunpack.c.l.b16 %v17
  %v73 = vunpack.c.l.b16 %v18
  %v74 = vunpack.c.l.b16 %v19
  %v75 = vunpack.c.l.b16 %v20
  %v76 = vunpack.c.l.b16 %v21
  %v77 = vunpack.c.l.b16 %v22
  %v78 = vunpack.c.l.b16 %v23
  %v79 = vunpack.c.l.b16 %v24
  %v80 = vunpack.c.l.b16 %v25
  %v81 = vunpack.c.l.b16 %v26
  %v82 = vunpack.c.l.b16 %v27
  %v83 = vunpack.c.l.b16 %v28
  %v84 = vunpack.c.l.b16 %v29
  %v85 = vunpack.c.l.b16 %v30
  %v86 = vpack.c.b16 %v71, %v70
  %v87 = vpack.c.b16 %v73, %v72
  %v88 = vpack.c.b16 %v75, %v74
  %v89 = vpack.c.b16 %v77, %v76
  %v90 = vpack.c.b16 %v79, %v78
  %v91 = vpack.c.b16 %v81, %v80
  %v92 = vpack.c.b16 %v83, %v82
  %v93 = vpack.c.b16 %v85, %v84
  %v118 = vunpack.c.l.b16 %v31
  %v119 = vunpack.c.l.b16 %v32
  %v120 = vunpack.c.l.b16 %v33
  %v121 = vunpack.c.l.b16 %v34
  %v122 = vunpack.c.l.b16 %v35
  %v123 = vunpack.c.l.b16 %v36
  %v124 = vunpack.c.l.b16 %v37
  %v125 = vunpack.c.l.b16 %v38
  %v126 = vunpack.c.l.b16 %v39
  %v127 = vunpack.c.l.b16 %v40
  %v128 = vunpack.c.l.b16 %v41
  %v129 = vunpack.c.l.b16 %v42
  %v130 = vunpack.c.l.b16 %v43
  %v131 = vunpack.c.l.b16 %v44
  %v132 = vunpack.c.l.b16 %v45
  %v133 = vunpack.c.l.b16 %v46
  %v134 = vpack.c.b16 %v119, %v118
  %v135 = vpack.c.b16 %v121, %v120
  %v136 = vpack.c.b16 %v123, %v122
  %v137 = vpack.c.b16 %v125, %v124
  %v138 = vpack.c.b16 %v127, %v126
  %v139 = vpack.c.b16 %v129, %v128
  %v140 = vpack.c.b16 %v131, %v130
  %v141 = vpack.c.b16 %v133, %v132
  %150 = vmatprep.subr.bf16.mxu0 0
  %151 = vmatpush1.bf16.msra.mxu0 %v141
  %152 = vmatprep.subr.bf16.mxu0 0
  %153 = vmatpush1.bf16.msra.mxu0 %v140
  %154 = vmatprep.subr.bf16.mxu0 0
  %155 = vmatpush1.bf16.msra.mxu0 %v139
  %156 = vmatprep.subr.bf16.mxu0 0
  %157 = vmatpush1.bf16.msra.mxu0 %v138
  %158 = vmatprep.subr.bf16.mxu0 0
  %159 = vmatpush1.bf16.msra.mxu0 %v137
  %160 = vmatprep.subr.bf16.mxu0 0
  %161 = vmatpush1.bf16.msra.mxu0 %v136
  %162 = vmatprep.subr.bf16.mxu0 0
  %163 = vmatpush1.bf16.msra.mxu0 %v135
  %164 = vmatprep.subr.bf16.mxu0 0
  %165 = vmatpush1.bf16.msra.mxu0 %v134
  %166 = vmatprep.subr.bf16.mxu0 0
  %167 = vmatpush2.bf16.msra.mxu0 0
  %168 = vmatprep.subr.bf16.mxu0 0
  %169 = vmatpush2.bf16.msra.mxu0 0
  %170 = vmatprep.subr.bf16.mxu0 0
  %171 = vmatpush2.bf16.msra.mxu0 0
  %172 = vmatprep.subr.bf16.mxu0 0
  %173 = vmatpush2.bf16.msra.mxu0 0
  %174 = vmatprep.subr.bf16.mxu0 0
  %175 = vmatpush2.bf16.msra.mxu0 0
  %176 = vmatprep.subr.bf16.mxu0 0
  %177 = vmatpush2.bf16.msra.mxu0 0
  %178 = vmatprep.subr.bf16.mxu0 0
  %179 = vmatpush2.bf16.msra.mxu0 0
  %180 = vmatprep.subr.bf16.mxu0 0
  %181 = vmatpush2.bf16.msra.mxu0 0
  %182 = vmatprep.mubr.bf16.mxu0 0
  %183 = vmatmul.mubr.bf16.gmra.mxu0 %v86
  %v184 = vpop.f32.mrf.mxu0
  %v185 = vadd.f32 %v52, %v184
  %v186 = vpop.f32.mrf.mxu0
  %v187 = vpop.f32.mrf.mxu0
  %v188 = vadd.f32 %v52, %v187
  %v189 = vpop.f32.mrf.mxu0
  %190 = vmatprep.mubr.bf16.mxu0 0
  %191 = vmatmul.mubr.bf16.gmra.mxu0 %v87
  %v192 = vpop.f32.mrf.mxu0
  %v193 = vadd.f32 %v52, %v192
  %v194 = vpop.f32.mrf.mxu0
  %v195 = vpop.f32.mrf.mxu0
  %v196 = vadd.f32 %v52, %v195
  %v197 = vpop.f32.mrf.mxu0
  %198 = vmatprep.mubr.bf16.mxu0 0
  %199 = vmatmul.mubr.bf16.gmra.mxu0 %v88
  %v200 = vpop.f32.mrf.mxu0
  %v201 = vadd.f32 %v52, %v200
  %v202 = vpop.f32.mrf.mxu0
  %v203 = vpop.f32.mrf.mxu0
  %v204 = vadd.f32 %v52, %v203
  %v205 = vpop.f32.mrf.mxu0
  %206 = vmatprep.mubr.bf16.mxu0 0
  %207 = vmatmul.mubr.bf16.gmra.mxu0 %v89
  %v208 = vpop.f32.mrf.mxu0
  %v209 = vadd.f32 %v52, %v208
  %v210 = vpop.f32.mrf.mxu0
  %v211 = vpop.f32.mrf.mxu0
  %v212 = vadd.f32 %v52, %v211
  %v213 = vpop.f32.mrf.mxu0
  %214 = vmatprep.mubr.bf16.mxu0 0
  %215 = vmatmul.mubr.bf16.gmra.mxu0 %v90
  %v216 = vpop.f32.mrf.mxu0
  %v217 = vadd.f32 %v52, %v216
  %v218 = vpop.f32.mrf.mxu0
  %v219 = vpop.f32.mrf.mxu0
  %v220 = vadd.f32 %v52, %v219
  %v221 = vpop.f32.mrf.mxu0
  %222 = vmatprep.mubr.bf16.mxu0 0
  %223 = vmatmul.mubr.bf16.gmra.mxu0 %v91
  %v224 = vpop.f32.mrf.mxu0
  %v225 = vadd.f32 %v52, %v224
  %v226 = vpop.f32.mrf.mxu0
  %v227 = vpop.f32.mrf.mxu0
  %v228 = vadd.f32 %v52, %v227
  %v229 = vpop.f32.mrf.mxu0
  %230 = vmatprep.mubr.bf16.mxu0 0
  %231 = vmatmul.mubr.bf16.gmra.mxu0 %v92
  %v232 = vpop.f32.mrf.mxu0
  %v233 = vadd.f32 %v52, %v232
  %v234 = vpop.f32.mrf.mxu0
  %v235 = vpop.f32.mrf.mxu0
  %v236 = vadd.f32 %v52, %v235
  %v237 = vpop.f32.mrf.mxu0
  %238 = vmatprep.mubr.bf16.mxu0 0
  %239 = vmatmul.mubr.bf16.gmra.mxu0 %v93
  %v240 = vpop.f32.mrf.mxu0
  %v241 = vadd.f32 %v52, %v240
  %v242 = vpop.f32.mrf.mxu0
  %v243 = vpop.f32.mrf.mxu0
  %v244 = vadd.f32 %v52, %v243
  %v245 = vpop.f32.mrf.mxu0
  %246 = vdwg.mxu0
  %vm247 = vcmp.ge.f32.partialorder %v185, 0.0
  %vm248 = vcmp.ge.f32.partialorder %v188, 0.0
  %vm249 = vcmp.ge.f32.partialorder %v193, 0.0
  %vm250 = vcmp.ge.f32.partialorder %v196, 0.0
  %vm251 = vcmp.ge.f32.partialorder %v201, 0.0
  %vm252 = vcmp.ge.f32.partialorder %v204, 0.0
  %vm253 = vcmp.ge.f32.partialorder %v209, 0.0
  %vm254 = vcmp.ge.f32.partialorder %v212, 0.0
  %vm255 = vcmp.ge.f32.partialorder %v217, 0.0
  %vm256 = vcmp.ge.f32.partialorder %v220, 0.0
  %vm257 = vcmp.ge.f32.partialorder %v225, 0.0
  %vm258 = vcmp.ge.f32.partialorder %v228, 0.0
  %vm259 = vcmp.ge.f32.partialorder %v233, 0.0
  %vm260 = vcmp.ge.f32.partialorder %v236, 0.0
  %vm261 = vcmp.ge.f32.partialorder %v241, 0.0
  %vm262 = vcmp.ge.f32.partialorder %v244, 0.0
  %v263 = vmul.f32 %v185, 0.2
  %v264 = vmul.f32 %v188, 0.2
  %v265 = vmul.f32 %v193, 0.2
  %v266 = vmul.f32 %v196, 0.2
  %v267 = vmul.f32 %v201, 0.2
  %v268 = vmul.f32 %v204, 0.2
  %v269 = vmul.f32 %v209, 0.2
  %v270 = vmul.f32 %v212, 0.2
  %v271 = vmul.f32 %v217, 0.2
  %v272 = vmul.f32 %v220, 0.2
  %v273 = vmul.f32 %v225, 0.2
  %v274 = vmul.f32 %v228, 0.2
  %v275 = vmul.f32 %v233, 0.2
  %v276 = vmul.f32 %v236, 0.2
  %v277 = vmul.f32 %v241, 0.2
  %v278 = vmul.f32 %v244, 0.2
  %v279 = vsel %vm247, %v185, %v263
  %v280 = vsel %vm248, %v188, %v264
  %v281 = vsel %vm249, %v193, %v265
  %v282 = vsel %vm250, %v196, %v266
  %v283 = vsel %vm251, %v201, %v267
  %v284 = vsel %vm252, %v204, %v268
  %v285 = vsel %vm253, %v209, %v269
  %v286 = vsel %vm254, %v212, %v270
  %v287 = vsel %vm255, %v217, %v271
  %v288 = vsel %vm256, %v220, %v272
  %v289 = vsel %vm257, %v225, %v273
  %v290 = vsel %vm258, %v228, %v274
  %v291 = vsel %vm259, %v233, %v275
  %v292 = vsel %vm260, %v236, %v276
  %v293 = vsel %vm261, %v241, %v277
  %v294 = vsel %vm262, %v244, %v278
  %v295 = vxor.u32 %v185, 2147483648
  %v296 = vxor.u32 %v188, 2147483648
  %v297 = vxor.u32 %v193, 2147483648
  %v298 = vxor.u32 %v196, 2147483648
  %v299 = vxor.u32 %v201, 2147483648
  %v300 = vxor.u32 %v204, 2147483648
  %v301 = vxor.u32 %v209, 2147483648
  %v302 = vxor.u32 %v212, 2147483648
  %v303 = vxor.u32 %v217, 2147483648
  %v304 = vxor.u32 %v220, 2147483648
  %v305 = vxor.u32 %v225, 2147483648
  %v306 = vxor.u32 %v228, 2147483648
  %v307 = vxor.u32 %v233, 2147483648
  %v308 = vxor.u32 %v236, 2147483648
  %v309 = vxor.u32 %v241, 2147483648
  %v310 = vxor.u32 %v244, 2147483648
  %v311 = vmul.f32 %v295, 1.442695
  %v312 = vpow.pop %v311
  %v313 = vmul.f32 %v296, 1.442695
  %v314 = vpow.pop %v313
  %v315 = vmul.f32 %v297, 1.442695
  %v316 = vpow.pop %v315
  %v317 = vmul.f32 %v298, 1.442695
  %v318 = vpow.pop %v317
  %v319 = vmul.f32 %v299, 1.442695
  %v320 = vpow.pop %v319
  %v321 = vmul.f32 %v300, 1.442695
  %v322 = vpow.pop %v321
  %v323 = vmul.f32 %v301, 1.442695
  %v324 = vpow.pop %v323
  %v325 = vmul.f32 %v302, 1.442695
  %v326 = vpow.pop %v325
  %v327 = vmul.f32 %v303, 1.442695
  %v328 = vpow.pop %v327
  %v329 = vmul.f32 %v304, 1.442695
  %v330 = vpow.pop %v329
  %v331 = vmul.f32 %v305, 1.442695
  %v332 = vpow.pop %v331
  %v333 = vmul.f32 %v306, 1.442695
  %v334 = vpow.pop %v333
  %v335 = vmul.f32 %v307, 1.442695
  %v336 = vpow.pop %v335
  %v337 = vmul.f32 %v308, 1.442695
  %v338 = vpow.pop %v337
  %v339 = vmul.f32 %v309, 1.442695
  %v340 = vpow.pop %v339
  %v341 = vmul.f32 %v310, 1.442695
  %v342 = vpow.pop %v341
  %v343 = vadd.f32 %v312, 1.0
  %v344 = vadd.f32 %v314, 1.0
  %v345 = vadd.f32 %v316, 1.0
  %v346 = vadd.f32 %v318, 1.0
  %v347 = vadd.f32 %v320, 1.0
  %v348 = vadd.f32 %v322, 1.0
  %v349 = vadd.f32 %v324, 1.0
  %v350 = vadd.f32 %v326, 1.0
  %v351 = vadd.f32 %v328, 1.0
  %v352 = vadd.f32 %v330, 1.0
  %v353 = vadd.f32 %v332, 1.0
  %v354 = vadd.f32 %v334, 1.0
  %v355 = vadd.f32 %v336, 1.0
  %v356 = vadd.f32 %v338, 1.0
  %v357 = vadd.f32 %v340, 1.0
  %v358 = vadd.f32 %v342, 1.0
  %v359 = vrcp.pop %v343
  %v360 = vmul.f32 1.0, %v359
  %v361 = vrcp.pop %v344
  %v362 = vmul.f32 1.0, %v361
  %v363 = vrcp.pop %v345
  %v364 = vmul.f32 1.0, %v363
  %v365 = vrcp.pop %v346
  %v366 = vmul.f32 1.0, %v365
  %v367 = vrcp.pop %v347
  %v368 = vmul.f32 1.0, %v367
  %v369 = vrcp.pop %v348
  %v370 = vmul.f32 1.0, %v369
  %v371 = vrcp.pop %v349
  %v372 = vmul.f32 1.0, %v371
  %v373 = vrcp.pop %v350
  %v374 = vmul.f32 1.0, %v373
  %v375 = vrcp.pop %v351
  %v376 = vmul.f32 1.0, %v375
  %v377 = vrcp.pop %v352
  %v378 = vmul.f32 1.0, %v377
  %v379 = vrcp.pop %v353
  %v380 = vmul.f32 1.0, %v379
  %v381 = vrcp.pop %v354
  %v382 = vmul.f32 1.0, %v381
  %v383 = vrcp.pop %v355
  %v384 = vmul.f32 1.0, %v383
  %v385 = vrcp.pop %v356
  %v386 = vmul.f32 1.0, %v385
  %v387 = vrcp.pop %v357
  %v388 = vmul.f32 1.0, %v387
  %v389 = vrcp.pop %v358
  %v390 = vmul.f32 1.0, %v389
  %407 = vrot.lane.b32.xlu0 %v360, 96
  %v408 = vpop.permute.xlu0 %407
  %409 = vrot.lane.b32.xlu0 %v362, 96
  %v410 = vpop.permute.xlu0 %409
  %411 = vrot.lane.b32.xlu0 %v364, 96
  %v412 = vpop.permute.xlu0 %411
  %413 = vrot.lane.b32.xlu0 %v366, 96
  %v414 = vpop.permute.xlu0 %413
  %415 = vrot.lane.b32.xlu0 %v368, 96
  %v416 = vpop.permute.xlu0 %415
  %417 = vrot.lane.b32.xlu0 %v370, 96
  %v418 = vpop.permute.xlu0 %417
  %419 = vrot.lane.b32.xlu0 %v372, 96
  %v420 = vpop.permute.xlu0 %419
  %421 = vrot.lane.b32.xlu0 %v374, 96
  %v422 = vpop.permute.xlu0 %421
  %423 = vrot.lane.b32.xlu0 %v376, 96
  %v424 = vpop.permute.xlu0 %423
  %425 = vrot.lane.b32.xlu0 %v378, 96
  %v426 = vpop.permute.xlu0 %425
  %427 = vrot.lane.b32.xlu0 %v380, 96
  %v428 = vpop.permute.xlu0 %427
  %429 = vrot.lane.b32.xlu0 %v382, 96
  %v430 = vpop.permute.xlu0 %429
  %431 = vrot.lane.b32.xlu0 %v384, 96
  %v432 = vpop.permute.xlu0 %431
  %433 = vrot.lane.b32.xlu0 %v386, 96
  %v434 = vpop.permute.xlu0 %433
  %435 = vrot.lane.b32.xlu0 %v388, 96
  %v436 = vpop.permute.xlu0 %435
  %437 = vrot.lane.b32.xlu0 %v390, 96
  %v438 = vpop.permute.xlu0 %437
  %v455 = vmul.f32 %v279, %v408
  %v456 = vmul.f32 %v280, %v410
  %v457 = vmul.f32 %v281, %v412
  %v458 = vmul.f32 %v282, %v414
  %v459 = vmul.f32 %v283, %v416
  %v460 = vmul.f32 %v284, %v418
  %v461 = vmul.f32 %v285, %v420
  %v462 = vmul.f32 %v286, %v422
  %v463 = vmul.f32 %v287, %v424
  %v464 = vmul.f32 %v288, %v426
  %v465 = vmul.f32 %v289, %v428
  %v466 = vmul.f32 %v290, %v430
  %v467 = vmul.f32 %v291, %v432
  %v468 = vmul.f32 %v292, %v434
  %v469 = vmul.f32 %v293, %v436
  %v470 = vmul.f32 %v294, %v438
  %v471 = vpack.c.bf16 %v456, %v455
  %v472 = vpack.c.bf16 %v458, %v457
  %v473 = vpack.c.bf16 %v460, %v459
  %v474 = vpack.c.bf16 %v462, %v461
  %v475 = vpack.c.bf16 %v464, %v463
  %v476 = vpack.c.bf16 %v466, %v465
  %v477 = vpack.c.bf16 %v468, %v467
  %v478 = vpack.c.bf16 %v470, %v469
  %v487 = vunpack.c.l.b16 %v471
  %v488 = vunpack.c.h.b16 %v471
  %v489 = vunpack.c.l.b16 %v472
  %v490 = vunpack.c.h.b16 %v472
  %v491 = vunpack.c.l.b16 %v473
  %v492 = vunpack.c.h.b16 %v473
  %v493 = vunpack.c.l.b16 %v474
  %v494 = vunpack.c.h.b16 %v474
  %v495 = vunpack.c.l.b16 %v475
  %v496 = vunpack.c.h.b16 %v475
  %v497 = vunpack.c.l.b16 %v476
  %v498 = vunpack.c.h.b16 %v476
  %v499 = vunpack.c.l.b16 %v477
  %v500 = vunpack.c.h.b16 %v477
  %v501 = vunpack.c.l.b16 %v478
  %v502 = vunpack.c.h.b16 %v478
  %v503 = vpack.c.b16 %v487, %v487
  %v504 = vpack.c.b16 %v488, %v488
  %v505 = vpack.c.b16 %v489, %v489
  %v506 = vpack.c.b16 %v490, %v490
  %v507 = vpack.c.b16 %v491, %v491
  %v508 = vpack.c.b16 %v492, %v492
  %v509 = vpack.c.b16 %v493, %v493
  %v510 = vpack.c.b16 %v494, %v494
  %v511 = vpack.c.b16 %v495, %v495
  %v512 = vpack.c.b16 %v496, %v496
  %v513 = vpack.c.b16 %v497, %v497
  %v514 = vpack.c.b16 %v498, %v498
  %v515 = vpack.c.b16 %v499, %v499
  %v516 = vpack.c.b16 %v500, %v500
  %v517 = vpack.c.b16 %v501, %v501
  %v518 = vpack.c.b16 %v502, %v502
  %vm535 = vcmask 257024
  %536 = vst.msk [vmem:[%s3] sm:$0xf] %vm535, %v503
  %537 = vst.msk [vmem:[%s3 + $0x4] sm:$0xf] %vm535, %v504
  %538 = vst.msk [vmem:[%s3 + $0x8] sm:$0xf] %vm535, %v505
  %539 = vst.msk [vmem:[%s3 + $0xc] sm:$0xf] %vm535, %v506
  %540 = vst.msk [vmem:[%s3 + $0x10] sm:$0xf] %vm535, %v507
  %541 = vst.msk [vmem:[%s3 + $0x14] sm:$0xf] %vm535, %v508
  %542 = vst.msk [vmem:[%s3 + $0x18] sm:$0xf] %vm535, %v509
  %543 = vst.msk [vmem:[%s3 + $0x1c] sm:$0xf] %vm535, %v510
  %544 = vst.msk [vmem:[%s3 + $0x20] sm:$0xf] %vm535, %v511
  %545 = vst.msk [vmem:[%s3 + $0x24] sm:$0xf] %vm535, %v512
  %546 = vst.msk [vmem:[%s3 + $0x28] sm:$0xf] %vm535, %v513
  %547 = vst.msk [vmem:[%s3 + $0x2c] sm:$0xf] %vm535, %v514
  %548 = vst.msk [vmem:[%s3 + $0x30] sm:$0xf] %vm535, %v515
  %549 = vst.msk [vmem:[%s3 + $0x34] sm:$0xf] %vm535, %v516
  %550 = vst.msk [vmem:[%s3 + $0x38] sm:$0xf] %vm535, %v517
  %551 = vst.msk [vmem:[%s3 + $0x3c] sm:$0xf] %vm535, %v518
  // Predicated region
  $region14: #{coarse_forward.26} parent=0 // pred_check
    _
  $region15: #{coarse_forward.26} parent=0 // pred_check_branch
    %553 = sbr.rel (0) target = $region17
  $region16: #{coarse_forward.26} parent=0 // pred_region
    _
  $region17: #{coarse_forward.26} parent=0 // pred_fallthru
    _
  // Predicated region
  $region18: #{coarse_forward.26} parent=0 // pred_check
    _
  $region19: #{coarse_forward.26} parent=0 // pred_check_branch
    %555 = sbr.rel (0) target = $region21
  $region20: #{coarse_forward.26} parent=0 // pred_region
    _
  $region21: #{coarse_forward.26} parent=0 // pred_fallthru
    _

// kernel: coarse_forward.27
$region0: #{coarse_forward.27}
  #allocation0 [shape = 'u32[]', space=smem, size = 0x4, offset = 0x4, fixed_abs, tag = 'smem constant byte address 0x4 - core index']
  #allocation1 [shape = 'u32[144,128]{1,0:T(1,128)}', space=vmem, size = 0x12000, scoped, tag = 'internal scratch']
  %s0 = inlined_call_operand.vmem [shape: bf16[128,288], index: 0, kind: input, shape index: {}]
  %s1 = inlined_call_operand.vmem [shape: bf16[288,64], index: 1, kind: input, shape index: {}]
  %s2 = inlined_call_operand.vmem [shape: f32[1,64], index: 2, kind: input, shape index: {}]
  %s3 = inlined_call_operand.vmem [shape: bf16[128,32], index: 3, kind: output, shape index: {}]
  %s4 = sld [smem:[#allocation0]]
  $region22: #{coarse_forward.27} parent=0
    _
  %s6 = ssub.s32 1, %s4
  %s7 = scalar_select 0, %s6, %s4
  // Predicated region
  $region2: #{coarse_forward.27} parent=0 // pred_check
    _
  $region3: #{coarse_forward.27} parent=0 // pred_check_branch
    %9 = sbr.rel (0) target = $region5
  $region4: #{coarse_forward.27} parent=0 // pred_region
    _
  $region5: #{coarse_forward.27} parent=0 // pred_fallthru
    _
  // Predicated region
  $region6: #{coarse_forward.27} parent=0 // pred_check
    _
  $region7: #{coarse_forward.27} parent=0 // pred_check_branch
    %11 = sbr.rel (0) target = $region9
  $region8: #{coarse_forward.27} parent=0 // pred_region
    _
  $region9: #{coarse_forward.27} parent=0 // pred_fallthru
    _
  // Predicated region
  $region10: #{coarse_forward.27} parent=0 // pred_check
    _
  $region11: #{coarse_forward.27} parent=0 // pred_check_branch
    %13 = sbr.rel (0) target = $region13
  $region12: #{coarse_forward.27} parent=0 // pred_region
    _
  $region13: #{coarse_forward.27} parent=0 // pred_fallthru
    _
  %v15 = vld [vmem:[%s0] sm:$0xff]
  %v16 = vld [vmem:[%s0 + $0x8] sm:$0xf]
  %v17 = vld [vmem:[%s0 + $0xc] sm:$0xff]
  %v18 = vld [vmem:[%s0 + $0x14] sm:$0xf]
  %v19 = vld [vmem:[%s0 + $0x18] sm:$0xff]
  %v20 = vld [vmem:[%s0 + $0x20] sm:$0xf]
  %v21 = vld [vmem:[%s0 + $0x24] sm:$0xff]
  %v22 = vld [vmem:[%s0 + $0x2c] sm:$0xf]
  %v23 = vld [vmem:[%s0 + $0x30] sm:$0xff]
  %v24 = vld [vmem:[%s0 + $0x38] sm:$0xf]
  %v25 = vld [vmem:[%s0 + $0x3c] sm:$0xff]
  %v26 = vld [vmem:[%s0 + $0x44] sm:$0xf]
  %v27 = vld [vmem:[%s0 + $0x48] sm:$0xff]
  %v28 = vld [vmem:[%s0 + $0x50] sm:$0xf]
  %v29 = vld [vmem:[%s0 + $0x54] sm:$0xff]
  %v30 = vld [vmem:[%s0 + $0x5c] sm:$0xf]
  %v31 = vld [vmem:[%s0 + $0x60] sm:$0xff]
  %v32 = vld [vmem:[%s0 + $0x68] sm:$0xf]
  %v33 = vld [vmem:[%s0 + $0x6c] sm:$0xff]
  %v34 = vld [vmem:[%s0 + $0x74] sm:$0xf]
  %v35 = vld [vmem:[%s0 + $0x78] sm:$0xff]
  %v36 = vld [vmem:[%s0 + $0x80] sm:$0xf]
  %v37 = vld [vmem:[%s0 + $0x84] sm:$0xff]
  %v38 = vld [vmem:[%s0 + $0x8c] sm:$0xf]
  %v39 = vld [vmem:[%s0 + $0x90] sm:$0xff]
  %v40 = vld [vmem:[%s0 + $0x98] sm:$0xf]
  %v41 = vld [vmem:[%s0 + $0x9c] sm:$0xff]
  %v42 = vld [vmem:[%s0 + $0xa4] sm:$0xf]
  %v43 = vld [vmem:[%s0 + $0xa8] sm:$0xff]
  %v44 = vld [vmem:[%s0 + $0xb0] sm:$0xf]
  %v45 = vld [vmem:[%s0 + $0xb4] sm:$0xff]
  %v46 = vld [vmem:[%s0 + $0xbc] sm:$0xf]
  %v47 = vld [vmem:[%s1] sm:$0xf]
  %v48 = vld [vmem:[%s1 + $0x4] sm:$0xf]
  %v49 = vld [vmem:[%s1 + $0x8] sm:$0xf]
  %v50 = vld [vmem:[%s1 + $0xc] sm:$0xf]
  %v51 = vld [vmem:[%s1 + $0x10] sm:$0xf]
  %v52 = vld [vmem:[%s1 + $0x14] sm:$0xf]
  %v53 = vld [vmem:[%s1 + $0x18] sm:$0xf]
  %v54 = vld [vmem:[%s1 + $0x1c] sm:$0xf]
  %v55 = vld [vmem:[%s1 + $0x20] sm:$0xf]
  %v56 = vld [vmem:[%s1 + $0x24] sm:$0xf]
  %v57 = vld [vmem:[%s1 + $0x28] sm:$0xf]
  %v58 = vld [vmem:[%s1 + $0x2c] sm:$0xf]
  %v59 = vld [vmem:[%s1 + $0x30] sm:$0xf]
  %v60 = vld [vmem:[%s1 + $0x34] sm:$0xf]
  %v61 = vld [vmem:[%s1 + $0x38] sm:$0xf]
  %v62 = vld [vmem:[%s1 + $0x3c] sm:$0xf]
  %v63 = vld [vmem:[%s1 + $0x40] sm:$0xf]
  %v64 = vld [vmem:[%s1 + $0x44] sm:$0xf]
  %v65 = vld [vmem:[%s1 + $0x48] sm:$0xf]
  %v66 = vld [vmem:[%s1 + $0x4c] sm:$0xf]
  %v67 = vld [vmem:[%s1 + $0x50] sm:$0xf]
  %v68 = vld [vmem:[%s1 + $0x54] sm:$0xf]
  %v69 = vld [vmem:[%s1 + $0x58] sm:$0xf]
  %v70 = vld [vmem:[%s1 + $0x5c] sm:$0xf]
  %v71 = vld [vmem:[%s1 + $0x60] sm:$0xf]
  %v72 = vld [vmem:[%s1 + $0x64] sm:$0xf]
  %v73 = vld [vmem:[%s1 + $0x68] sm:$0xf]
  %v74 = vld [vmem:[%s1 + $0x6c] sm:$0xf]
  %v75 = vld [vmem:[%s1 + $0x70] sm:$0xf]
  %v76 = vld [vmem:[%s1 + $0x74] sm:$0xf]
  %v77 = vld [vmem:[%s1 + $0x78] sm:$0xf]
  %v78 = vld [vmem:[%s1 + $0x7c] sm:$0xf]
  %v79 = vld [vmem:[%s1 + $0x80] sm:$0xf]
  %v80 = vld [vmem:[%s1 + $0x84] sm:$0xf]
  %v81 = vld [vmem:[%s1 + $0x88] sm:$0xf]
  %v82 = vld [vmem:[%s1 + $0x8c] sm:$0xf]
  %v83 = vld [vmem:[%s2] sm:$0x1]
  %v85 = vlaneseq
  %v86 = vshrl.u32 %v85, 7
  %v87 = vsub.s32 0, %v86
  %v88 = vrot.slane %v83, %v87
  %v122 = vunpack.c.l.b16 %v15
  %v123 = vunpack.c.h.b16 %v15
  %v124 = vunpack.c.l.b16 %v16
  %v125 = vunpack.c.l.b16 %v17
  %v126 = vunpack.c.h.b16 %v17
  %v127 = vunpack.c.l.b16 %v18
  %v128 = vunpack.c.l.b16 %v19
  %v129 = vunpack.c.h.b16 %v19
  %v130 = vunpack.c.l.b16 %v20
  %v131 = vunpack.c.l.b16 %v21
  %v132 = vunpack.c.h.b16 %v21
  %v133 = vunpack.c.l.b16 %v22
  %v134 = vunpack.c.l.b16 %v23
  %v135 = vunpack.c.h.b16 %v23
  %v136 = vunpack.c.l.b16 %v24
  %v137 = vunpack.c.l.b16 %v25
  %v138 = vunpack.c.h.b16 %v25
  %v139 = vunpack.c.l.b16 %v26
  %v140 = vunpack.c.l.b16 %v27
  %v141 = vunpack.c.h.b16 %v27
  %v142 = vunpack.c.l.b16 %v28
  %v143 = vunpack.c.l.b16 %v29
  %v144 = vunpack.c.h.b16 %v29
  %v145 = vunpack.c.l.b16 %v30
  %v146 = vunpack.c.l.b16 %v31
  %v147 = vunpack.c.h.b16 %v31
  %v148 = vunpack.c.l.b16 %v32
  %v149 = vunpack.c.l.b16 %v33
  %v150 = vunpack.c.h.b16 %v33
  %v151 = vunpack.c.l.b16 %v34
  %v152 = vunpack.c.l.b16 %v35
  %v153 = vunpack.c.h.b16 %v35
  %v154 = vunpack.c.l.b16 %v36
  %v155 = vunpack.c.l.b16 %v37
  %v156 = vunpack.c.h.b16 %v37
  %v157 = vunpack.c.l.b16 %v38
  %v158 = vunpack.c.l.b16 %v39
  %v159 = vunpack.c.h.b16 %v39
  %v160 = vunpack.c.l.b16 %v40
  %v161 = vunpack.c.l.b16 %v41
  %v162 = vunpack.c.h.b16 %v41
  %v163 = vunpack.c.l.b16 %v42
  %v164 = vunpack.c.l.b16 %v43
  %v165 = vunpack.c.h.b16 %v43
  %v166 = vunpack.c.l.b16 %v44
  %v167 = vunpack.c.l.b16 %v45
  %v168 = vunpack.c.h.b16 %v45
  %v169 = vunpack.c.l.b16 %v46
  %v170 = vpack.c.b16 %v125, %v122
  %v171 = vpack.c.b16 %v126, %v123
  %v172 = vpack.c.b16 %v127, %v124
  %v173 = vpack.c.b16 %v131, %v128
  %v174 = vpack.c.b16 %v132, %v129
  %v175 = vpack.c.b16 %v133, %v130
  %v176 = vpack.c.b16 %v137, %v134
  %v177 = vpack.c.b16 %v138, %v135
  %v178 = vpack.c.b16 %v139, %v136
  %v179 = vpack.c.b16 %v143, %v140
  %v180 = vpack.c.b16 %v144, %v141
  %v181 = vpack.c.b16 %v145, %v142
  %v182 = vpack.c.b16 %v149, %v146
  %v183 = vpack.c.b16 %v150, %v147
  %v184 = vpack.c.b16 %v151, %v148
  %v185 = vpack.c.b16 %v155, %v152
  %v186 = vpack.c.b16 %v156, %v153
  %v187 = vpack.c.b16 %v157, %v154
  %v188 = vpack.c.b16 %v161, %v158
  %v189 = vpack.c.b16 %v162, %v159
  %v190 = vpack.c.b16 %v163, %v160
  %v191 = vpack.c.b16 %v167, %v164
  %v192 = vpack.c.b16 %v168, %v165
  %v193 = vpack.c.b16 %v169, %v166
  %v246 = vunpack.c.l.b16 %v47
  %v247 = vunpack.c.l.b16 %v48
  %v248 = vunpack.c.l.b16 %v49
  %v249 = vunpack.c.l.b16 %v50
  %v250 = vunpack.c.l.b16 %v51
  %v251 = vunpack.c.l.b16 %v52
  %v252 = vunpack.c.l.b16 %v53
  %v253 = vunpack.c.l.b16 %v54
  %v254 = vunpack.c.l.b16 %v55
  %v255 = vunpack.c.l.b16 %v56
  %v256 = vunpack.c.l.b16 %v57
  %v257 = vunpack.c.l.b16 %v58
  %v258 = vunpack.c.l.b16 %v59
  %v259 = vunpack.c.l.b16 %v60
  %v260 = vunpack.c.l.b16 %v61
  %v261 = vunpack.c.l.b16 %v62
  %v262 = vunpack.c.l.b16 %v63
  %v263 = vunpack.c.l.b16 %v64
  %v264 = vunpack.c.l.b16 %v65
  %v265 = vunpack.c.l.b16 %v66
  %v266 = vunpack.c.l.b16 %v67
  %v267 = vunpack.c.l.b16 %v68
  %v268 = vunpack.c.l.b16 %v69
  %v269 = vunpack.c.l.b16 %v70
  %v270 = vunpack.c.l.b16 %v71
  %v271 = vunpack.c.l.b16 %v72
  %v272 = vunpack.c.l.b16 %v73
  %v273 = vunpack.c.l.b16 %v74
  %v274 = vunpack.c.l.b16 %v75
  %v275 = vunpack.c.l.b16 %v76
  %v276 = vunpack.c.l.b16 %v77
  %v277 = vunpack.c.l.b16 %v78
  %v278 = vunpack.c.l.b16 %v79
  %v279 = vunpack.c.l.b16 %v80
  %v280 = vunpack.c.l.b16 %v81
  %v281 = vunpack.c.l.b16 %v82
  %v282 = vpack.c.b16 %v247, %v246
  %v283 = vpack.c.b16 %v249, %v248
  %v284 = vpack.c.b16 %v251, %v250
  %v285 = vpack.c.b16 %v253, %v252
  %v286 = vpack.c.b16 %v255, %v254
  %v287 = vpack.c.b16 %v257, %v256
  %v288 = vpack.c.b16 %v259, %v258
  %v289 = vpack.c.b16 %v261, %v260
  %v290 = vpack.c.b16 %v263, %v262
  %v291 = vpack.c.b16 %v265, %v264
  %v292 = vpack.c.b16 %v267, %v266
  %v293 = vpack.c.b16 %v269, %v268
  %v294 = vpack.c.b16 %v271, %v270
  %v295 = vpack.c.b16 %v273, %v272
  %v296 = vpack.c.b16 %v275, %v274
  %v297 = vpack.c.b16 %v277, %v276
  %v298 = vpack.c.b16 %v279, %v278
  %v299 = vpack.c.b16 %v281, %v280
  %vm318 = vcmask 261120
  %v320 = vsel %vm318, %v172, 0
  %v323 = vsel %vm318, %v175, 0
  %v326 = vsel %vm318, %v178, 0
  %v329 = vsel %vm318, %v181, 0
  %v332 = vsel %vm318, %v184, 0
  %v335 = vsel %vm318, %v187, 0
  %v338 = vsel %vm318, %v190, 0
  %v341 = vsel %vm318, %v193, 0
  %343 = vmatprep.subr.bf16.mxu0 0
  %344 = vmatpush1.bf16.msra.mxu0 %v289
  %345 = vmatprep.subr.bf16.mxu0 0
  %346 = vmatpush1.bf16.msra.mxu0 %v288
  %347 = vmatprep.subr.bf16.mxu0 0
  %348 = vmatpush1.bf16.msra.mxu0 %v287
  %349 = vmatprep.subr.bf16.mxu0 0
  %350 = vmatpush1.bf16.msra.mxu0 %v286
  %351 = vmatprep.subr.bf16.mxu0 0
  %352 = vmatpush1.bf16.msra.mxu0 %v285
  %353 = vmatprep.subr.bf16.mxu0 0
  %354 = vmatpush1.bf16.msra.mxu0 %v284
  %355 = vmatprep.subr.bf16.mxu0 0
  %356 = vmatpush1.bf16.msra.mxu0 %v283
  %357 = vmatprep.subr.bf16.mxu0 0
  %358 = vmatpush1.bf16.msra.mxu0 %v282
  %359 = vmatprep.subr.bf16.mxu0 0
  %360 = vmatpush2.bf16.msra.mxu0 %v297
  %361 = vmatprep.subr.bf16.mxu0 0
  %362 = vmatpush2.bf16.msra.mxu0 %v296
  %363 = vmatprep.subr.bf16.mxu0 0
  %364 = vmatpush2.bf16.msra.mxu0 %v295
  %365 = vmatprep.subr.bf16.mxu0 0
  %366 = vmatpush2.bf16.msra.mxu0 %v294
  %367 = vmatprep.subr.bf16.mxu0 0
  %368 = vmatpush2.bf16.msra.mxu0 %v293
  %369 = vmatprep.subr.bf16.mxu0 0
  %370 = vmatpush2.bf16.msra.mxu0 %v292
  %371 = vmatprep.subr.bf16.mxu0 0
  %372 = vmatpush2.bf16.msra.mxu0 %v291
  %373 = vmatprep.subr.bf16.mxu0 0
  %374 = vmatpush2.bf16.msra.mxu0 %v290
  %375 = vmatprep.mubr.bf16.mxu0 %v171
  %376 = vmatmul.mubr.bf16.gmra.mxu0 %v170
  %v377 = vpop.f32.mrf.mxu0
  %v378 = vadd.f32 %v88, %v377
  %v379 = vpop.f32.mrf.mxu0
  %v380 = vpop.f32.mrf.mxu0
  %v381 = vadd.f32 %v88, %v380
  %v382 = vpop.f32.mrf.mxu0
  %383 = vmatprep.mubr.bf16.mxu0 %v174
  %384 = vmatmul.mubr.bf16.gmra.mxu0 %v173
  %v385 = vpop.f32.mrf.mxu0
  %v386 = vadd.f32 %v88, %v385
  %v387 = vpop.f32.mrf.mxu0
  %v388 = vpop.f32.mrf.mxu0
  %v389 = vadd.f32 %v88, %v388
  %v390 = vpop.f32.mrf.mxu0
  %391 = vmatprep.mubr.bf16.mxu0 %v177
  %392 = vmatmul.mubr.bf16.gmra.mxu0 %v176
  %v393 = vpop.f32.mrf.mxu0
  %v394 = vadd.f32 %v88, %v393
  %v395 = vpop.f32.mrf.mxu0
  %v396 = vpop.f32.mrf.mxu0
  %v397 = vadd.f32 %v88, %v396
  %v398 = vpop.f32.mrf.mxu0
  %399 = vmatprep.mubr.bf16.mxu0 %v180
  %400 = vmatmul.mubr.bf16.gmra.mxu0 %v179
  %v401 = vpop.f32.mrf.mxu0
  %v402 = vadd.f32 %v88, %v401
  %v403 = vpop.f32.mrf.mxu0
  %v404 = vpop.f32.mrf.mxu0
  %v405 = vadd.f32 %v88, %v404
  %v406 = vpop.f32.mrf.mxu0
  %407 = vmatprep.mubr.bf16.mxu0 %v183
  %408 = vmatmul.mubr.bf16.gmra.mxu0 %v182
  %v409 = vpop.f32.mrf.mxu0
  %v410 = vadd.f32 %v88, %v409
  %v411 = vpop.f32.mrf.mxu0
  %v412 = vpop.f32.mrf.mxu0
  %v413 = vadd.f32 %v88, %v412
  %v414 = vpop.f32.mrf.mxu0
  %415 = vmatprep.mubr.bf16.mxu0 %v186
  %416 = vmatmul.mubr.bf16.gmra.mxu0 %v185
  %v417 = vpop.f32.mrf.mxu0
  %v418 = vadd.f32 %v88, %v417
  %v419 = vpop.f32.mrf.mxu0
  %v420 = vpop.f32.mrf.mxu0
  %v421 = vadd.f32 %v88, %v420
  %v422 = vpop.f32.mrf.mxu0
  %423 = vmatprep.mubr.bf16.mxu0 %v189
  %424 = vmatmul.mubr.bf16.gmra.mxu0 %v188
  %v425 = vpop.f32.mrf.mxu0
  %v426 = vadd.f32 %v88, %v425
  %v427 = vpop.f32.mrf.mxu0
  %v428 = vpop.f32.mrf.mxu0
  %v429 = vadd.f32 %v88, %v428
  %v430 = vpop.f32.mrf.mxu0
  %431 = vmatprep.mubr.bf16.mxu0 %v192
  %432 = vmatmul.mubr.bf16.gmra.mxu0 %v191
  %v433 = vpop.f32.mrf.mxu0
  %v434 = vadd.f32 %v88, %v433
  %v435 = vpop.f32.mrf.mxu0
  %v436 = vpop.f32.mrf.mxu0
  %v437 = vadd.f32 %v88, %v436
  %v438 = vpop.f32.mrf.mxu0
  %439 = vdwg.mxu0
  %440 = vmatprep.subr.bf16.mxu0 0
  %441 = vmatpush1.bf16.msra.mxu0 0
  %442 = vmatprep.subr.bf16.mxu0 0
  %443 = vmatpush1.bf16.msra.mxu0 0
  %444 = vmatprep.subr.bf16.mxu0 0
  %445 = vmatpush1.bf16.msra.mxu0 0
  %446 = vmatprep.subr.bf16.mxu0 0
  %447 = vmatpush1.bf16.msra.mxu0 0
  %448 = vmatprep.subr.bf16.mxu0 0
  %449 = vmatpush1.bf16.msra.mxu0 0
  %450 = vmatprep.subr.bf16.mxu0 0
  %451 = vmatpush1.bf16.msra.mxu0 0
  %452 = vmatprep.subr.bf16.mxu0 0
  %453 = vmatpush1.bf16.msra.mxu0 %v299
  %454 = vmatprep.subr.bf16.mxu0 0
  %455 = vmatpush1.bf16.msra.mxu0 %v298
  %456 = vmatprep.subr.bf16.mxu0 0
  %457 = vmatpush2.bf16.msra.mxu0 0
  %458 = vmatprep.subr.bf16.mxu0 0
  %459 = vmatpush2.bf16.msra.mxu0 0
  %460 = vmatprep.subr.bf16.mxu0 0
  %461 = vmatpush2.bf16.msra.mxu0 0
  %462 = vmatprep.subr.bf16.mxu0 0
  %463 = vmatpush2.bf16.msra.mxu0 0
  %464 = vmatprep.subr.bf16.mxu0 0
  %465 = vmatpush2.bf16.msra.mxu0 0
  %466 = vmatprep.subr.bf16.mxu0 0
  %467 = vmatpush2.bf16.msra.mxu0 0
  %468 = vmatprep.subr.bf16.mxu0 0
  %469 = vmatpush2.bf16.msra.mxu0 0
  %470 = vmatprep.subr.bf16.mxu0 0
  %471 = vmatpush2.bf16.msra.mxu0 0
  %472 = vmatprep.mubr.bf16.mxu0 0
  %473 = vmatmul.mubr.bf16.gmra.mxu0 %v320
  %v474 = vpop.f32.mrf.mxu0
  %v475 = vadd.f32 %v378, %v474
  %v476 = vpop.f32.mrf.mxu0
  %v477 = vpop.f32.mrf.mxu0
  %v478 = vadd.f32 %v381, %v477
  %v479 = vpop.f32.mrf.mxu0
  %480 = vmatprep.mubr.bf16.mxu0 0
  %481 = vmatmul.mubr.bf16.gmra.mxu0 %v323
  %v482 = vpop.f32.mrf.mxu0
  %v483 = vadd.f32 %v386, %v482
  %v484 = vpop.f32.mrf.mxu0
  %v485 = vpop.f32.mrf.mxu0
  %v486 = vadd.f32 %v389, %v485
  %v487 = vpop.f32.mrf.mxu0
  %488 = vmatprep.mubr.bf16.mxu0 0
  %489 = vmatmul.mubr.bf16.gmra.mxu0 %v326
  %v490 = vpop.f32.mrf.mxu0
  %v491 = vadd.f32 %v394, %v490
  %v492 = vpop.f32.mrf.mxu0
  %v493 = vpop.f32.mrf.mxu0
  %v494 = vadd.f32 %v397, %v493
  %v495 = vpop.f32.mrf.mxu0
  %496 = vmatprep.mubr.bf16.mxu0 0
  %497 = vmatmul.mubr.bf16.gmra.mxu0 %v329
  %v498 = vpop.f32.mrf.mxu0
  %v499 = vadd.f32 %v402, %v498
  %v500 = vpop.f32.mrf.mxu0
  %v501 = vpop.f32.mrf.mxu0
  %v502 = vadd.f32 %v405, %v501
  %v503 = vpop.f32.mrf.mxu0
  %504 = vmatprep.mubr.bf16.mxu0 0
  %505 = vmatmul.mubr.bf16.gmra.mxu0 %v332
  %v506 = vpop.f32.mrf.mxu0
  %v507 = vadd.f32 %v410, %v506
  %v508 = vpop.f32.mrf.mxu0
  %v509 = vpop.f32.mrf.mxu0
  %v510 = vadd.f32 %v413, %v509
  %v511 = vpop.f32.mrf.mxu0
  %512 = vmatprep.mubr.bf16.mxu0 0
  %513 = vmatmul.mubr.bf16.gmra.mxu0 %v335
  %v514 = vpop.f32.mrf.mxu0
  %v515 = vadd.f32 %v418, %v514
  %v516 = vpop.f32.mrf.mxu0
  %v517 = vpop.f32.mrf.mxu0
  %v518 = vadd.f32 %v421, %v517
  %v519 = vpop.f32.mrf.mxu0
  %520 = vmatprep.mubr.bf16.mxu0 0
  %521 = vmatmul.mubr.bf16.gmra.mxu0 %v338
  %v522 = vpop.f32.mrf.mxu0
  %v523 = vadd.f32 %v426, %v522
  %v524 = vpop.f32.mrf.mxu0
  %v525 = vpop.f32.mrf.mxu0
  %v526 = vadd.f32 %v429, %v525
  %v527 = vpop.f32.mrf.mxu0
  %528 = vmatprep.mubr.bf16.mxu0 0
  %529 = vmatmul.mubr.bf16.gmra.mxu0 %v341
  %v530 = vpop.f32.mrf.mxu0
  %v531 = vadd.f32 %v434, %v530
  %v532 = vpop.f32.mrf.mxu0
  %v533 = vpop.f32.mrf.mxu0
  %v534 = vadd.f32 %v437, %v533
  %v535 = vpop.f32.mrf.mxu0
  %536 = vdwg.mxu0
  %vm537 = vcmp.ge.f32.partialorder %v475, 0.0
  %vm538 = vcmp.ge.f32.partialorder %v478, 0.0
  %vm539 = vcmp.ge.f32.partialorder %v483, 0.0
  %vm540 = vcmp.ge.f32.partialorder %v486, 0.0
  %vm541 = vcmp.ge.f32.partialorder %v491, 0.0
  %vm542 = vcmp.ge.f32.partialorder %v494, 0.0
  %vm543 = vcmp.ge.f32.partialorder %v499, 0.0
  %vm544 = vcmp.ge.f32.partialorder %v502, 0.0
  %vm545 = vcmp.ge.f32.partialorder %v507, 0.0
  %vm546 = vcmp.ge.f32.partialorder %v510, 0.0
  %vm547 = vcmp.ge.f32.partialorder %v515, 0.0
  %vm548 = vcmp.ge.f32.partialorder %v518, 0.0
  %vm549 = vcmp.ge.f32.partialorder %v523, 0.0
  %vm550 = vcmp.ge.f32.partialorder %v526, 0.0
  %vm551 = vcmp.ge.f32.partialorder %v531, 0.0
  %vm552 = vcmp.ge.f32.partialorder %v534, 0.0
  %v553 = vmul.f32 %v475, 0.2
  %v554 = vmul.f32 %v478, 0.2
  %v555 = vmul.f32 %v483, 0.2
  %v556 = vmul.f32 %v486, 0.2
  %v557 = vmul.f32 %v491, 0.2
  %v558 = vmul.f32 %v494, 0.2
  %v559 = vmul.f32 %v499, 0.2
  %v560 = vmul.f32 %v502, 0.2
  %v561 = vmul.f32 %v507, 0.2
  %v562 = vmul.f32 %v510, 0.2
  %v563 = vmul.f32 %v515, 0.2
  %v564 = vmul.f32 %v518, 0.2
  %v565 = vmul.f32 %v523, 0.2
  %v566 = vmul.f32 %v526, 0.2
  %v567 = vmul.f32 %v531, 0.2
  %v568 = vmul.f32 %v534, 0.2
  %v569 = vsel %vm537, %v475, %v553
  %v570 = vsel %vm538, %v478, %v554
  %v571 = vsel %vm539, %v483, %v555
  %v572 = vsel %vm540, %v486, %v556
  %v573 = vsel %vm541, %v491, %v557
  %v574 = vsel %vm542, %v494, %v558
  %v575 = vsel %vm543, %v499, %v559
  %v576 = vsel %vm544, %v502, %v560
  %v577 = vsel %vm545, %v507, %v561
  %v578 = vsel %vm546, %v510, %v562
  %v579 = vsel %vm547, %v515, %v563
  %v580 = vsel %vm548, %v518, %v564
  %v581 = vsel %vm549, %v523, %v565
  %v582 = vsel %vm550, %v526, %v566
  %v583 = vsel %vm551, %v531, %v567
  %v584 = vsel %vm552, %v534, %v568
  %v585 = vxor.u32 %v475, 2147483648
  %v586 = vxor.u32 %v478, 2147483648
  %v587 = vxor.u32 %v483, 2147483648
  %v588 = vxor.u32 %v486, 2147483648
  %v589 = vxor.u32 %v491, 2147483648
  %v590 = vxor.u32 %v494, 2147483648
  %v591 = vxor.u32 %v499, 2147483648
  %v592 = vxor.u32 %v502, 2147483648
  %v593 = vxor.u32 %v507, 2147483648
  %v594 = vxor.u32 %v510, 2147483648
  %v595 = vxor.u32 %v515, 2147483648
  %v596 = vxor.u32 %v518, 2147483648
  %v597 = vxor.u32 %v523, 2147483648
  %v598 = vxor.u32 %v526, 2147483648
  %v599 = vxor.u32 %v531, 2147483648
  %v600 = vxor.u32 %v534, 2147483648
  %v601 = vmul.f32 %v585, 1.442695
  %v602 = vpow.pop %v601
  %v603 = vmul.f32 %v586, 1.442695
  %v604 = vpow.pop %v603
  %v605 = vmul.f32 %v587, 1.442695
  %v606 = vpow.pop %v605
  %v607 = vmul.f32 %v588, 1.442695
  %v608 = vpow.pop %v607
  %v609 = vmul.f32 %v589, 1.442695
  %v610 = vpow.pop %v609
  %v611 = vmul.f32 %v590, 1.442695
  %v612 = vpow.pop %v611
  %v613 = vmul.f32 %v591, 1.442695
  %v614 = vpow.pop %v613
  %v615 = vmul.f32 %v592, 1.442695
  %v616 = vpow.pop %v615
  %v617 = vmul.f32 %v593, 1.442695
  %v618 = vpow.pop %v617
  %v619 = vmul.f32 %v594, 1.442695
  %v620 = vpow.pop %v619
  %v621 = vmul.f32 %v595, 1.442695
  %v622 = vpow.pop %v621
  %v623 = vmul.f32 %v596, 1.442695
  %v624 = vpow.pop %v623
  %v625 = vmul.f32 %v597, 1.442695
  %v626 = vpow.pop %v625
  %v627 = vmul.f32 %v598, 1.442695
  %v628 = vpow.pop %v627
  %v629 = vmul.f32 %v599, 1.442695
  %v630 = vpow.pop %v629
  %v631 = vmul.f32 %v600, 1.442695
  %v632 = vpow.pop %v631
  %v633 = vadd.f32 %v602, 1.0
  %v634 = vadd.f32 %v604, 1.0
  %v635 = vadd.f32 %v606, 1.0
  %v636 = vadd.f32 %v608, 1.0
  %v637 = vadd.f32 %v610, 1.0
  %v638 = vadd.f32 %v612, 1.0
  %v639 = vadd.f32 %v614, 1.0
  %v640 = vadd.f32 %v616, 1.0
  %v641 = vadd.f32 %v618, 1.0
  %v642 = vadd.f32 %v620, 1.0
  %v643 = vadd.f32 %v622, 1.0
  %v644 = vadd.f32 %v624, 1.0
  %v645 = vadd.f32 %v626, 1.0
  %v646 = vadd.f32 %v628, 1.0
  %v647 = vadd.f32 %v630, 1.0
  %v648 = vadd.f32 %v632, 1.0
  %v649 = vrcp.pop %v633
  %v650 = vmul.f32 1.0, %v649
  %v651 = vrcp.pop %v634
  %v652 = vmul.f32 1.0, %v651
  %v653 = vrcp.pop %v635
  %v654 = vmul.f32 1.0, %v653
  %v655 = vrcp.pop %v636
  %v656 = vmul.f32 1.0, %v655
  %v657 = vrcp.pop %v637
  %v658 = vmul.f32 1.0, %v657
  %v659 = vrcp.pop %v638
  %v660 = vmul.f32 1.0, %v659
  %v661 = vrcp.pop %v639
  %v662 = vmul.f32 1.0, %v661
  %v663 = vrcp.pop %v640
  %v664 = vmul.f32 1.0, %v663
  %v665 = vrcp.pop %v641
  %v666 = vmul.f32 1.0, %v665
  %v667 = vrcp.pop %v642
  %v668 = vmul.f32 1.0, %v667
  %v669 = vrcp.pop %v643
  %v670 = vmul.f32 1.0, %v669
  %v671 = vrcp.pop %v644
  %v672 = vmul.f32 1.0, %v671
  %v673 = vrcp.pop %v645
  %v674 = vmul.f32 1.0, %v673
  %v675 = vrcp.pop %v646
  %v676 = vmul.f32 1.0, %v675
  %v677 = vrcp.pop %v647
  %v678 = vmul.f32 1.0, %v677
  %v679 = vrcp.pop %v648
  %v680 = vmul.f32 1.0, %v679
  %697 = vrot.lane.b32.xlu0 %v650, 96
  %v698 = vpop.permute.xlu0 %697
  %699 = vrot.lane.b32.xlu0 %v652, 96
  %v700 = vpop.permute.xlu0 %699
  %701 = vrot.lane.b32.xlu0 %v654, 96
  %v702 = vpop.permute.xlu0 %701
  %703 = vrot.lane.b32.xlu0 %v656, 96
  %v704 = vpop.permute.xlu0 %703
  %705 = vrot.lane.b32.xlu0 %v658, 96
  %v706 = vpop.permute.xlu0 %705
  %707 = vrot.lane.b32.xlu0 %v660, 96
  %v708 = vpop.permute.xlu0 %707
  %709 = vrot.lane.b32.xlu0 %v662, 96
  %v710 = vpop.permute.xlu0 %709
  %711 = vrot.lane.b32.xlu0 %v664, 96
  %v712 = vpop.permute.xlu0 %711
  %713 = vrot.lane.b32.xlu0 %v666, 96
  %v714 = vpop.permute.xlu0 %713
  %715 = vrot.lane.b32.xlu0 %v668, 96
  %v716 = vpop.permute.xlu0 %715
  %717 = vrot.lane.b32.xlu0 %v670, 96
  %v718 = vpop.permute.xlu0 %717
  %719 = vrot.lane.b32.xlu0 %v672, 96
  %v720 = vpop.permute.xlu0 %719
  %721 = vrot.lane.b32.xlu0 %v674, 96
  %v722 = vpop.permute.xlu0 %721
  %723 = vrot.lane.b32.xlu0 %v676, 96
  %v724 = vpop.permute.xlu0 %723
  %725 = vrot.lane.b32.xlu0 %v678, 96
  %v726 = vpop.permute.xlu0 %725
  %727 = vrot.lane.b32.xlu0 %v680, 96
  %v728 = vpop.permute.xlu0 %727
  %v745 = vmul.f32 %v569, %v698
  %v746 = vmul.f32 %v570, %v700
  %v747 = vmul.f32 %v571, %v702
  %v748 = vmul.f32 %v572, %v704
  %v749 = vmul.f32 %v573, %v706
  %v750 = vmul.f32 %v574, %v708
  %v751 = vmul.f32 %v575, %v710
  %v752 = vmul.f32 %v576, %v712
  %v753 = vmul.f32 %v577, %v714
  %v754 = vmul.f32 %v578, %v716
  %v755 = vmul.f32 %v579, %v718
  %v756 = vmul.f32 %v580, %v720
  %v757 = vmul.f32 %v581, %v722
  %v758 = vmul.f32 %v582, %v724
  %v759 = vmul.f32 %v583, %v726
  %v760 = vmul.f32 %v584, %v728
  %v761 = vpack.c.bf16 %v746, %v745
  %v762 = vpack.c.bf16 %v748, %v747
  %v763 = vpack.c.bf16 %v750, %v749
  %v764 = vpack.c.bf16 %v752, %v751
  %v765 = vpack.c.bf16 %v754, %v753
  %v766 = vpack.c.bf16 %v756, %v755
  %v767 = vpack.c.bf16 %v758, %v757
  %v768 = vpack.c.bf16 %v760, %v759
  %v777 = vunpack.c.l.b16 %v761
  %v778 = vunpack.c.h.b16 %v761
  %v779 = vunpack.c.l.b16 %v762
  %v780 = vunpack.c.h.b16 %v762
  %v781 = vunpack.c.l.b16 %v763
  %v782 = vunpack.c.h.b16 %v763
  %v783 = vunpack.c.l.b16 %v764
  %v784 = vunpack.c.h.b16 %v764
  %v785 = vunpack.c.l.b16 %v765
  %v786 = vunpack.c.h.b16 %v765
  %v787 = vunpack.c.l.b16 %v766
  %v788 = vunpack.c.h.b16 %v766
  %v789 = vunpack.c.l.b16 %v767
  %v790 = vunpack.c.h.b16 %v767
  %v791 = vunpack.c.l.b16 %v768
  %v792 = vunpack.c.h.b16 %v768
  %v793 = vpack.c.b16 %v777, %v777
  %v794 = vpack.c.b16 %v778, %v778
  %v795 = vpack.c.b16 %v779, %v779
  %v796 = vpack.c.b16 %v780, %v780
  %v797 = vpack.c.b16 %v781, %v781
  %v798 = vpack.c.b16 %v782, %v782
  %v799 = vpack.c.b16 %v783, %v783
  %v800 = vpack.c.b16 %v784, %v784
  %v801 = vpack.c.b16 %v785, %v785
  %v802 = vpack.c.b16 %v786, %v786
  %v803 = vpack.c.b16 %v787, %v787
  %v804 = vpack.c.b16 %v788, %v788
  %v805 = vpack.c.b16 %v789, %v789
  %v806 = vpack.c.b16 %v790, %v790
  %v807 = vpack.c.b16 %v791, %v791
  %v808 = vpack.c.b16 %v792, %v792
  %vm825 = vcmask 257024
  %826 = vst.msk [vmem:[%s3] sm:$0xf] %vm825, %v793
  %827 = vst.msk [vmem:[%s3 + $0x4] sm:$0xf] %vm825, %v794
  %828 = vst.msk [vmem:[%s3 + $0x8] sm:$0xf] %vm825, %v795
  %829 = vst.msk [vmem:[%s3 + $0xc] sm:$0xf] %vm825, %v796
  %830 = vst.msk [vmem:[%s3 + $0x10] sm:$0xf] %vm825, %v797
  %831 = vst.msk [vmem:[%s3 + $0x14] sm:$0xf] %vm825, %v798
  %832 = vst.msk [vmem:[%s3 + $0x18] sm:$0xf] %vm825, %v799
  %833 = vst.msk [vmem:[%s3 + $0x1c] sm:$0xf] %vm825, %v800
  %834 = vst.msk [vmem:[%s3 + $0x20] sm:$0xf] %vm825, %v801
  %835 = vst.msk [vmem:[%s3 + $0x24] sm:$0xf] %vm825, %v802
  %836 = vst.msk [vmem:[%s3 + $0x28] sm:$0xf] %vm825, %v803
  %837 = vst.msk [vmem:[%s3 + $0x2c] sm:$0xf] %vm825, %v804
  %838 = vst.msk [vmem:[%s3 + $0x30] sm:$0xf] %vm825, %v805
  %839 = vst.msk [vmem:[%s3 + $0x34] sm:$0xf] %vm825, %v806
  %840 = vst.msk [vmem:[%s3 + $0x38] sm:$0xf] %vm825, %v807
  %841 = vst.msk [vmem:[%s3 + $0x3c] sm:$0xf] %vm825, %v808
  // Predicated region
  $region14: #{coarse_forward.27} parent=0 // pred_check
    _
  $region15: #{coarse_forward.27} parent=0 // pred_check_branch
    %843 = sbr.rel (0) target = $region17
  $region16: #{coarse_forward.27} parent=0 // pred_region
    _
  $region17: #{coarse_forward.27} parent=0 // pred_fallthru
    _
  // Predicated region
  $region18: #{coarse_forward.27} parent=0 // pred_check
    _
  $region19: #{coarse_forward.27} parent=0 // pred_check_branch
    %845 = sbr.rel (0) target = $region21
  $region20: #{coarse_forward.27} parent=0 // pred_region
    _
  $region21: #{coarse_forward.27} parent=0 // pred_fallthru
    _

// kernel: coarse_forward.28
$region0: #{coarse_forward.28}
  #allocation0 [shape = 'u32[]', space=smem, size = 0x4, offset = 0x4, fixed_abs, tag = 'smem constant byte address 0x4 - core index']
  #allocation1 [shape = 'u32[144,128]{1,0:T(1,128)}', space=vmem, size = 0x12000, scoped, tag = 'internal scratch']
  %s0 = inlined_call_operand.vmem [shape: bf16[32,288], index: 0, kind: input, shape index: {}]
  %s1 = inlined_call_operand.vmem [shape: bf16[288,128], index: 1, kind: input, shape index: {}]
  %s2 = inlined_call_operand.vmem [shape: f32[1,128], index: 2, kind: input, shape index: {}]
  %s3 = inlined_call_operand.vmem [shape: bf16[32,64], index: 3, kind: output, shape index: {}]
  %s4 = sld [smem:[#allocation0]]
  $region22: #{coarse_forward.28} parent=0
    _
  %s6 = ssub.s32 1, %s4
  %s7 = scalar_select 0, %s6, %s4
  // Predicated region
  $region2: #{coarse_forward.28} parent=0 // pred_check
    _
  $region3: #{coarse_forward.28} parent=0 // pred_check_branch
    %9 = sbr.rel (0) target = $region5
  $region4: #{coarse_forward.28} parent=0 // pred_region
    _
  $region5: #{coarse_forward.28} parent=0 // pred_fallthru
    _
  // Predicated region
  $region6: #{coarse_forward.28} parent=0 // pred_check
    _
  $region7: #{coarse_forward.28} parent=0 // pred_check_branch
    %11 = sbr.rel (0) target = $region9
  $region8: #{coarse_forward.28} parent=0 // pred_region
    _
  $region9: #{coarse_forward.28} parent=0 // pred_fallthru
    _
  // Predicated region
  $region10: #{coarse_forward.28} parent=0 // pred_check
    _
  $region11: #{coarse_forward.28} parent=0 // pred_check_branch
    %13 = sbr.rel (0) target = $region13
  $region12: #{coarse_forward.28} parent=0 // pred_region
    _
  $region13: #{coarse_forward.28} parent=0 // pred_fallthru
    _
  %v15 = vld [vmem:[%s0] sm:$0xff]
  %v16 = vld [vmem:[%s0 + $0x8] sm:$0xf]
  %v17 = vld [vmem:[%s0 + $0xc] sm:$0xff]
  %v18 = vld [vmem:[%s0 + $0x14] sm:$0xf]
  %v19 = vld [vmem:[%s0 + $0x18] sm:$0xff]
  %v20 = vld [vmem:[%s0 + $0x20] sm:$0xf]
  %v21 = vld [vmem:[%s0 + $0x24] sm:$0xff]
  %v22 = vld [vmem:[%s0 + $0x2c] sm:$0xf]
  %v23 = vld [vmem:[%s1] sm:$0xf]
  %v24 = vld [vmem:[%s1 + $0x4] sm:$0xf]
  %v25 = vld [vmem:[%s1 + $0x8] sm:$0xf]
  %v26 = vld [vmem:[%s1 + $0xc] sm:$0xf]
  %v27 = vld [vmem:[%s1 + $0x10] sm:$0xf]
  %v28 = vld [vmem:[%s1 + $0x14] sm:$0xf]
  %v29 = vld [vmem:[%s1 + $0x18] sm:$0xf]
  %v30 = vld [vmem:[%s1 + $0x1c] sm:$0xf]
  %v31 = vld [vmem:[%s1 + $0x20] sm:$0xf]
  %v32 = vld [vmem:[%s1 + $0x24] sm:$0xf]
  %v33 = vld [vmem:[%s1 + $0x28] sm:$0xf]
  %v34 = vld [vmem:[%s1 + $0x2c] sm:$0xf]
  %v35 = vld [vmem:[%s1 + $0x30] sm:$0xf]
  %v36 = vld [vmem:[%s1 + $0x34] sm:$0xf]
  %v37 = vld [vmem:[%s1 + $0x38] sm:$0xf]
  %v38 = vld [vmem:[%s1 + $0x3c] sm:$0xf]
  %v39 = vld [vmem:[%s1 + $0x40] sm:$0xf]
  %v40 = vld [vmem:[%s1 + $0x44] sm:$0xf]
  %v41 = vld [vmem:[%s1 + $0x48] sm:$0xf]
  %v42 = vld [vmem:[%s1 + $0x4c] sm:$0xf]
  %v43 = vld [vmem:[%s1 + $0x50] sm:$0xf]
  %v44 = vld [vmem:[%s1 + $0x54] sm:$0xf]
  %v45 = vld [vmem:[%s1 + $0x58] sm:$0xf]
  %v46 = vld [vmem:[%s1 + $0x5c] sm:$0xf]
  %v47 = vld [vmem:[%s1 + $0x60] sm:$0xf]
  %v48 = vld [vmem:[%s1 + $0x64] sm:$0xf]
  %v49 = vld [vmem:[%s1 + $0x68] sm:$0xf]
  %v50 = vld [vmem:[%s1 + $0x6c] sm:$0xf]
  %v51 = vld [vmem:[%s1 + $0x70] sm:$0xf]
  %v52 = vld [vmem:[%s1 + $0x74] sm:$0xf]
  %v53 = vld [vmem:[%s1 + $0x78] sm:$0xf]
  %v54 = vld [vmem:[%s1 + $0x7c] sm:$0xf]
  %v55 = vld [vmem:[%s1 + $0x80] sm:$0xf]
  %v56 = vld [vmem:[%s1 + $0x84] sm:$0xf]
  %v57 = vld [vmem:[%s1 + $0x88] sm:$0xf]
  %v58 = vld [vmem:[%s1 + $0x8c] sm:$0xf]
  %v59 = vld [vmem:[%s2] sm:$0x1]
  %v61 = vlaneseq
  %v62 = vshrl.u32 %v61, 7
  %v63 = vsub.s32 0, %v62
  %v64 = vrot.slane %v59, %v63
  %v74 = vunpack.c.l.b16 %v15
  %v75 = vunpack.c.h.b16 %v15
  %v76 = vunpack.c.l.b16 %v16
  %v77 = vunpack.c.l.b16 %v17
  %v78 = vunpack.c.h.b16 %v17
  %v79 = vunpack.c.l.b16 %v18
  %v80 = vunpack.c.l.b16 %v19
  %v81 = vunpack.c.h.b16 %v19
  %v82 = vunpack.c.l.b16 %v20
  %v83 = vunpack.c.l.b16 %v21
  %v84 = vunpack.c.h.b16 %v21
  %v85 = vunpack.c.l.b16 %v22
  %v86 = vpack.c.b16 %v77, %v74
  %v87 = vpack.c.b16 %v78, %v75
  %v88 = vpack.c.b16 %v79, %v76
  %v89 = vpack.c.b16 %v83, %v80
  %v90 = vpack.c.b16 %v84, %v81
  %v91 = vpack.c.b16 %v85, %v82
  %v132 = vunpack.c.l.b16 %v23
  %v133 = vunpack.c.l.b16 %v24
  %v134 = vunpack.c.l.b16 %v25
  %v135 = vunpack.c.l.b16 %v26
  %v136 = vunpack.c.l.b16 %v27
  %v137 = vunpack.c.l.b16 %v28
  %v138 = vunpack.c.l.b16 %v29
  %v139 = vunpack.c.l.b16 %v30
  %v140 = vunpack.c.l.b16 %v31
  %v141 = vunpack.c.l.b16 %v32
  %v142 = vunpack.c.l.b16 %v33
  %v143 = vunpack.c.l.b16 %v34
  %v144 = vunpack.c.l.b16 %v35
  %v145 = vunpack.c.l.b16 %v36
  %v146 = vunpack.c.l.b16 %v37
  %v147 = vunpack.c.l.b16 %v38
  %v148 = vunpack.c.l.b16 %v39
  %v149 = vunpack.c.l.b16 %v40
  %v150 = vunpack.c.l.b16 %v41
  %v151 = vunpack.c.l.b16 %v42
  %v152 = vunpack.c.l.b16 %v43
  %v153 = vunpack.c.l.b16 %v44
  %v154 = vunpack.c.l.b16 %v45
  %v155 = vunpack.c.l.b16 %v46
  %v156 = vunpack.c.l.b16 %v47
  %v157 = vunpack.c.l.b16 %v48
  %v158 = vunpack.c.l.b16 %v49
  %v159 = vunpack.c.l.b16 %v50
  %v160 = vunpack.c.l.b16 %v51
  %v161 = vunpack.c.l.b16 %v52
  %v162 = vunpack.c.l.b16 %v53
  %v163 = vunpack.c.l.b16 %v54
  %v164 = vunpack.c.l.b16 %v55
  %v165 = vunpack.c.l.b16 %v56
  %v166 = vunpack.c.l.b16 %v57
  %v167 = vunpack.c.l.b16 %v58
  %v168 = vpack.c.b16 %v133, %v132
  %v169 = vpack.c.b16 %v135, %v134
  %v170 = vpack.c.b16 %v137, %v136
  %v171 = vpack.c.b16 %v139, %v138
  %v172 = vpack.c.b16 %v141, %v140
  %v173 = vpack.c.b16 %v143, %v142
  %v174 = vpack.c.b16 %v145, %v144
  %v175 = vpack.c.b16 %v147, %v146
  %v176 = vpack.c.b16 %v149, %v148
  %v177 = vpack.c.b16 %v151, %v150
  %v178 = vpack.c.b16 %v153, %v152
  %v179 = vpack.c.b16 %v155, %v154
  %v180 = vpack.c.b16 %v157, %v156
  %v181 = vpack.c.b16 %v159, %v158
  %v182 = vpack.c.b16 %v161, %v160
  %v183 = vpack.c.b16 %v163, %v162
  %v184 = vpack.c.b16 %v165, %v164
  %v185 = vpack.c.b16 %v167, %v166
  %vm204 = vcmask 261120
  %v206 = vsel %vm204, %v88, 0
  %v209 = vsel %vm204, %v91, 0
  %211 = vmatprep.subr.bf16.mxu0 0
  %212 = vmatpush1.bf16.msra.mxu0 %v175
  %213 = vmatprep.subr.bf16.mxu0 0
  %214 = vmatpush1.bf16.msra.mxu0 %v174
  %215 = vmatprep.subr.bf16.mxu0 0
  %216 = vmatpush1.bf16.msra.mxu0 %v173
  %217 = vmatprep.subr.bf16.mxu0 0
  %218 = vmatpush1.bf16.msra.mxu0 %v172
  %219 = vmatprep.subr.bf16.mxu0 0
  %220 = vmatpush1.bf16.msra.mxu0 %v171
  %221 = vmatprep.subr.bf16.mxu0 0
  %222 = vmatpush1.bf16.msra.mxu0 %v170
  %223 = vmatprep.subr.bf16.mxu0 0
  %224 = vmatpush1.bf16.msra.mxu0 %v169
  %225 = vmatprep.subr.bf16.mxu0 0
  %226 = vmatpush1.bf16.msra.mxu0 %v168
  %227 = vmatprep.subr.bf16.mxu0 0
  %228 = vmatpush2.bf16.msra.mxu0 %v183
  %229 = vmatprep.subr.bf16.mxu0 0
  %230 = vmatpush2.bf16.msra.mxu0 %v182
  %231 = vmatprep.subr.bf16.mxu0 0
  %232 = vmatpush2.bf16.msra.mxu0 %v181
  %233 = vmatprep.subr.bf16.mxu0 0
  %234 = vmatpush2.bf16.msra.mxu0 %v180
  %235 = vmatprep.subr.bf16.mxu0 0
  %236 = vmatpush2.bf16.msra.mxu0 %v179
  %237 = vmatprep.subr.bf16.mxu0 0
  %238 = vmatpush2.bf16.msra.mxu0 %v178
  %239 = vmatprep.subr.bf16.mxu0 0
  %240 = vmatpush2.bf16.msra.mxu0 %v177
  %241 = vmatprep.subr.bf16.mxu0 0
  %242 = vmatpush2.bf16.msra.mxu0 %v176
  %243 = vmatprep.mubr.bf16.mxu0 %v87
  %244 = vmatmul.mubr.bf16.gmra.mxu0 %v86
  %v245 = vpop.f32.mrf.mxu0
  %v246 = vadd.f32 %v64, %v245
  %v247 = vpop.f32.mrf.mxu0
  %v248 = vpop.f32.mrf.mxu0
  %v249 = vadd.f32 %v64, %v248
  %v250 = vpop.f32.mrf.mxu0
  %251 = vmatprep.mubr.bf16.mxu0 %v90
  %252 = vmatmul.mubr.bf16.gmra.mxu0 %v89
  %v253 = vpop.f32.mrf.mxu0
  %v254 = vadd.f32 %v64, %v253
  %v255 = vpop.f32.mrf.mxu0
  %v256 = vpop.f32.mrf.mxu0
  %v257 = vadd.f32 %v64, %v256
  %v258 = vpop.f32.mrf.mxu0
  %259 = vdwg.mxu0
  %260 = vmatprep.subr.bf16.mxu0 0
  %261 = vmatpush1.bf16.msra.mxu0 0
  %262 = vmatprep.subr.bf16.mxu0 0
  %263 = vmatpush1.bf16.msra.mxu0 0
  %264 = vmatprep.subr.bf16.mxu0 0
  %265 = vmatpush1.bf16.msra.mxu0 0
  %266 = vmatprep.subr.bf16.mxu0 0
  %267 = vmatpush1.bf16.msra.mxu0 0
  %268 = vmatprep.subr.bf16.mxu0 0
  %269 = vmatpush1.bf16.msra.mxu0 0
  %270 = vmatprep.subr.bf16.mxu0 0
  %271 = vmatpush1.bf16.msra.mxu0 0
  %272 = vmatprep.subr.bf16.mxu0 0
  %273 = vmatpush1.bf16.msra.mxu0 %v185
  %274 = vmatprep.subr.bf16.mxu0 0
  %275 = vmatpush1.bf16.msra.mxu0 %v184
  %276 = vmatprep.subr.bf16.mxu0 0
  %277 = vmatpush2.bf16.msra.mxu0 0
  %278 = vmatprep.subr.bf16.mxu0 0
  %279 = vmatpush2.bf16.msra.mxu0 0
  %280 = vmatprep.subr.bf16.mxu0 0
  %281 = vmatpush2.bf16.msra.mxu0 0
  %282 = vmatprep.subr.bf16.mxu0 0
  %283 = vmatpush2.bf16.msra.mxu0 0
  %284 = vmatprep.subr.bf16.mxu0 0
  %285 = vmatpush2.bf16.msra.mxu0 0
  %286 = vmatprep.subr.bf16.mxu0 0
  %287 = vmatpush2.bf16.msra.mxu0 0
  %288 = vmatprep.subr.bf16.mxu0 0
  %289 = vmatpush2.bf16.msra.mxu0 0
  %290 = vmatprep.subr.bf16.mxu0 0
  %291 = vmatpush2.bf16.msra.mxu0 0
  %292 = vmatprep.mubr.bf16.mxu0 0
  %293 = vmatmul.mubr.bf16.gmra.mxu0 %v206
  %v294 = vpop.f32.mrf.mxu0
  %v295 = vadd.f32 %v246, %v294
  %v296 = vpop.f32.mrf.mxu0
  %v297 = vpop.f32.mrf.mxu0
  %v298 = vadd.f32 %v249, %v297
  %v299 = vpop.f32.mrf.mxu0
  %300 = vmatprep.mubr.bf16.mxu0 0
  %301 = vmatmul.mubr.bf16.gmra.mxu0 %v209
  %v302 = vpop.f32.mrf.mxu0
  %v303 = vadd.f32 %v254, %v302
  %v304 = vpop.f32.mrf.mxu0
  %v305 = vpop.f32.mrf.mxu0
  %v306 = vadd.f32 %v257, %v305
  %v307 = vpop.f32.mrf.mxu0
  %308 = vdwg.mxu0
  %vm309 = vcmp.ge.f32.partialorder %v295, 0.0
  %vm310 = vcmp.ge.f32.partialorder %v298, 0.0
  %vm311 = vcmp.ge.f32.partialorder %v303, 0.0
  %vm312 = vcmp.ge.f32.partialorder %v306, 0.0
  %v313 = vmul.f32 %v295, 0.2
  %v314 = vmul.f32 %v298, 0.2
  %v315 = vmul.f32 %v303, 0.2
  %v316 = vmul.f32 %v306, 0.2
  %v317 = vsel %vm309, %v295, %v313
  %v318 = vsel %vm310, %v298, %v314
  %v319 = vsel %vm311, %v303, %v315
  %v320 = vsel %vm312, %v306, %v316
  %v321 = vxor.u32 %v295, 2147483648
  %v322 = vxor.u32 %v298, 2147483648
  %v323 = vxor.u32 %v303, 2147483648
  %v324 = vxor.u32 %v306, 2147483648
  %v325 = vmul.f32 %v321, 1.442695
  %v326 = vpow.pop %v325
  %v327 = vmul.f32 %v322, 1.442695
  %v328 = vpow.pop %v327
  %v329 = vmul.f32 %v323, 1.442695
  %v330 = vpow.pop %v329
  %v331 = vmul.f32 %v324, 1.442695
  %v332 = vpow.pop %v331
  %v333 = vadd.f32 %v326, 1.0
  %v334 = vadd.f32 %v328, 1.0
  %v335 = vadd.f32 %v330, 1.0
  %v336 = vadd.f32 %v332, 1.0
  %v337 = vrcp.pop %v333
  %v338 = vmul.f32 1.0, %v337
  %v339 = vrcp.pop %v334
  %v340 = vmul.f32 1.0, %v339
  %v341 = vrcp.pop %v335
  %v342 = vmul.f32 1.0, %v341
  %v343 = vrcp.pop %v336
  %v344 = vmul.f32 1.0, %v343
  %349 = vrot.lane.b32.xlu0 %v338, 64
  %v350 = vpop.permute.xlu0 %349
  %351 = vrot.lane.b32.xlu0 %v340, 64
  %v352 = vpop.permute.xlu0 %351
  %353 = vrot.lane.b32.xlu0 %v342, 64
  %v354 = vpop.permute.xlu0 %353
  %355 = vrot.lane.b32.xlu0 %v344, 64
  %v356 = vpop.permute.xlu0 %355
  %v361 = vmul.f32 %v317, %v350
  %v362 = vmul.f32 %v318, %v352
  %v363 = vmul.f32 %v319, %v354
  %v364 = vmul.f32 %v320, %v356
  %v365 = vpack.c.bf16 %v362, %v361
  %v366 = vpack.c.bf16 %v364, %v363
  %v369 = vunpack.c.l.b16 %v365
  %v370 = vunpack.c.h.b16 %v365
  %v371 = vunpack.c.l.b16 %v366
  %v372 = vunpack.c.h.b16 %v366
  %v373 = vpack.c.b16 %v369, %v369
  %v374 = vpack.c.b16 %v370, %v370
  %v375 = vpack.c.b16 %v371, %v371
  %v376 = vpack.c.b16 %v372, %v372
  %vm381 = vcmask 519168
  %382 = vst.msk [vmem:[%s3] sm:$0xf] %vm381, %v373
  %383 = vst.msk [vmem:[%s3 + $0x4] sm:$0xf] %vm381, %v374
  %384 = vst.msk [vmem:[%s3 + $0x8] sm:$0xf] %vm381, %v375
  %385 = vst.msk [vmem:[%s3 + $0xc] sm:$0xf] %vm381, %v376
  // Predicated region
  $region14: #{coarse_forward.28} parent=0 // pred_check
    _
  $region15: #{coarse_forward.28} parent=0 // pred_check_branch
    %387 = sbr.rel (0) target = $region17
  $region16: #{coarse_forward.28} parent=0 // pred_region
    _
  $region17: #{coarse_forward.28} parent=0 // pred_fallthru
    _
  // Predicated region
  $region18: #{coarse_forward.28} parent=0 // pred_check
    _
  $region19: #{coarse_forward.28} parent=0 // pred_check_branch
    %389 = sbr.rel (0) target = $region21
  $region20: #{coarse_forward.28} parent=0 // pred_region
    _
  $region21: #{coarse_forward.28} parent=0 // pred_fallthru
    _

// kernel: coarse_forward.31
$region0: #{coarse_forward.31}
  #allocation0 [shape = 'u32[]', space=smem, size = 0x4, offset = 0x4, fixed_abs, tag = 'smem constant byte address 0x4 - core index']
  #allocation1 [shape = 'u32[144,128]{1,0:T(1,128)}', space=vmem, size = 0x12000, scoped, tag = 'internal scratch']
  %s0 = inlined_call_operand.vmem [shape: bf16[32,576], index: 0, kind: input, shape index: {}]
  %s1 = inlined_call_operand.vmem [shape: bf16[576,128], index: 1, kind: input, shape index: {}]
  %s2 = inlined_call_operand.vmem [shape: f32[1,128], index: 2, kind: input, shape index: {}]
  %s3 = inlined_call_operand.vmem [shape: bf16[32,64], index: 3, kind: input, shape index: {}]
  %s4 = inlined_call_operand.vmem [shape: bf16[32,64], index: 4, kind: output, shape index: {}]
  %s5 = sld [smem:[#allocation0]]
  $region26: #{coarse_forward.31} parent=0
    _
  %s7 = ssub.s32 1, %s5
  %s8 = scalar_select 0, %s7, %s5
  // Predicated region
  $region2: #{coarse_forward.31} parent=0 // pred_check
    _
  $region3: #{coarse_forward.31} parent=0 // pred_check_branch
    %10 = sbr.rel (0) target = $region5
  $region4: #{coarse_forward.31} parent=0 // pred_region
    _
  $region5: #{coarse_forward.31} parent=0 // pred_fallthru
    _
  // Predicated region
  $region6: #{coarse_forward.31} parent=0 // pred_check
    _
  $region7: #{coarse_forward.31} parent=0 // pred_check_branch
    %12 = sbr.rel (0) target = $region9
  $region8: #{coarse_forward.31} parent=0 // pred_region
    _
  $region9: #{coarse_forward.31} parent=0 // pred_fallthru
    _
  // Predicated region
  $region10: #{coarse_forward.31} parent=0 // pred_check
    _
  $region11: #{coarse_forward.31} parent=0 // pred_check_branch
    %14 = sbr.rel (0) target = $region13
  $region12: #{coarse_forward.31} parent=0 // pred_region
    _
  $region13: #{coarse_forward.31} parent=0 // pred_fallthru
    _
  // Predicated region
  $region14: #{coarse_forward.31} parent=0 // pred_check
    _
  $region15: #{coarse_forward.31} parent=0 // pred_check_branch
    %16 = sbr.rel (0) target = $region17
  $region16: #{coarse_forward.31} parent=0 // pred_region
    _
  $region17: #{coarse_forward.31} parent=0 // pred_fallthru
    _
  %v18 = vld [vmem:[%s0] sm:$0xff]
  %v19 = vld [vmem:[%s0 + $0x8] sm:$0xff]
  %v20 = vld [vmem:[%s0 + $0x10] sm:$0xf]
  %v21 = vld [vmem:[%s0 + $0x14] sm:$0xff]
  %v22 = vld [vmem:[%s0 + $0x1c] sm:$0xff]
  %v23 = vld [vmem:[%s0 + $0x24] sm:$0xf]
  %v24 = vld [vmem:[%s0 + $0x28] sm:$0xff]
  %v25 = vld [vmem:[%s0 + $0x30] sm:$0xff]
  %v26 = vld [vmem:[%s0 + $0x38] sm:$0xf]
  %v27 = vld [vmem:[%s0 + $0x3c] sm:$0xff]
  %v28 = vld [vmem:[%s0 + $0x44] sm:$0xff]
  %v29 = vld [vmem:[%s0 + $0x4c] sm:$0xf]
  %v30 = vld [vmem:[%s1] sm:$0xf]
  %v31 = vld [vmem:[%s1 + $0x4] sm:$0xf]
  %v32 = vld [vmem:[%s1 + $0x8] sm:$0xf]
  %v33 = vld [vmem:[%s1 + $0xc] sm:$0xf]
  %v34 = vld [vmem:[%s1 + $0x10] sm:$0xf]
  %v35 = vld [vmem:[%s1 + $0x14] sm:$0xf]
  %v36 = vld [vmem:[%s1 + $0x18] sm:$0xf]
  %v37 = vld [vmem:[%s1 + $0x1c] sm:$0xf]
  %v38 = vld [vmem:[%s1 + $0x20] sm:$0xf]
  %v39 = vld [vmem:[%s1 + $0x24] sm:$0xf]
  %v40 = vld [vmem:[%s1 + $0x28] sm:$0xf]
  %v41 = vld [vmem:[%s1 + $0x2c] sm:$0xf]
  %v42 = vld [vmem:[%s1 + $0x30] sm:$0xf]
  %v43 = vld [vmem:[%s1 + $0x34] sm:$0xf]
  %v44 = vld [vmem:[%s1 + $0x38] sm:$0xf]
  %v45 = vld [vmem:[%s1 + $0x3c] sm:$0xf]
  %v46 = vld [vmem:[%s1 + $0x40] sm:$0xf]
  %v47 = vld [vmem:[%s1 + $0x44] sm:$0xf]
  %v48 = vld [vmem:[%s1 + $0x48] sm:$0xf]
  %v49 = vld [vmem:[%s1 + $0x4c] sm:$0xf]
  %v50 = vld [vmem:[%s1 + $0x50] sm:$0xf]
  %v51 = vld [vmem:[%s1 + $0x54] sm:$0xf]
  %v52 = vld [vmem:[%s1 + $0x58] sm:$0xf]
  %v53 = vld [vmem:[%s1 + $0x5c] sm:$0xf]
  %v54 = vld [vmem:[%s1 + $0x60] sm:$0xf]
  %v55 = vld [vmem:[%s1 + $0x64] sm:$0xf]
  %v56 = vld [vmem:[%s1 + $0x68] sm:$0xf]
  %v57 = vld [vmem:[%s1 + $0x6c] sm:$0xf]
  %v58 = vld [vmem:[%s1 + $0x70] sm:$0xf]
  %v59 = vld [vmem:[%s1 + $0x74] sm:$0xf]
  %v60 = vld [vmem:[%s1 + $0x78] sm:$0xf]
  %v61 = vld [vmem:[%s1 + $0x7c] sm:$0xf]
  %v62 = vld [vmem:[%s1 + $0x80] sm:$0xf]
  %v63 = vld [vmem:[%s1 + $0x84] sm:$0xf]
  %v64 = vld [vmem:[%s1 + $0x88] sm:$0xf]
  %v65 = vld [vmem:[%s1 + $0x8c] sm:$0xf]
  %v66 = vld [vmem:[%s1 + $0x90] sm:$0xf]
  %v67 = vld [vmem:[%s1 + $0x94] sm:$0xf]
  %v68 = vld [vmem:[%s1 + $0x98] sm:$0xf]
  %v69 = vld [vmem:[%s1 + $0x9c] sm:$0xf]
  %v70 = vld [vmem:[%s1 + $0xa0] sm:$0xf]
  %v71 = vld [vmem:[%s1 + $0xa4] sm:$0xf]
  %v72 = vld [vmem:[%s1 + $0xa8] sm:$0xf]
  %v73 = vld [vmem:[%s1 + $0xac] sm:$0xf]
  %v74 = vld [vmem:[%s1 + $0xb0] sm:$0xf]
  %v75 = vld [vmem:[%s1 + $0xb4] sm:$0xf]
  %v76 = vld [vmem:[%s1 + $0xb8] sm:$0xf]
  %v77 = vld [vmem:[%s1 + $0xbc] sm:$0xf]
  %v78 = vld [vmem:[%s1 + $0xc0] sm:$0xf]
  %v79 = vld [vmem:[%s1 + $0xc4] sm:$0xf]
  %v80 = vld [vmem:[%s1 + $0xc8] sm:$0xf]
  %v81 = vld [vmem:[%s1 + $0xcc] sm:$0xf]
  %v82 = vld [vmem:[%s1 + $0xd0] sm:$0xf]
  %v83 = vld [vmem:[%s1 + $0xd4] sm:$0xf]
  %v84 = vld [vmem:[%s1 + $0xd8] sm:$0xf]
  %v85 = vld [vmem:[%s1 + $0xdc] sm:$0xf]
  %v86 = vld [vmem:[%s1 + $0xe0] sm:$0xf]
  %v87 = vld [vmem:[%s1 + $0xe4] sm:$0xf]
  %v88 = vld [vmem:[%s1 + $0xe8] sm:$0xf]
  %v89 = vld [vmem:[%s1 + $0xec] sm:$0xf]
  %v90 = vld [vmem:[%s1 + $0xf0] sm:$0xf]
  %v91 = vld [vmem:[%s1 + $0xf4] sm:$0xf]
  %v92 = vld [vmem:[%s1 + $0xf8] sm:$0xf]
  %v93 = vld [vmem:[%s1 + $0xfc] sm:$0xf]
  %v94 = vld [vmem:[%s1 + $0x100] sm:$0xf]
  %v95 = vld [vmem:[%s1 + $0x104] sm:$0xf]
  %v96 = vld [vmem:[%s1 + $0x108] sm:$0xf]
  %v97 = vld [vmem:[%s1 + $0x10c] sm:$0xf]
  %v98 = vld [vmem:[%s1 + $0x110] sm:$0xf]
  %v99 = vld [vmem:[%s1 + $0x114] sm:$0xf]
  %v100 = vld [vmem:[%s1 + $0x118] sm:$0xf]
  %v101 = vld [vmem:[%s1 + $0x11c] sm:$0xf]
  %v102 = vld [vmem:[%s2] sm:$0x1]
  %v104 = vlaneseq
  %v105 = vshrl.u32 %v104, 7
  %v106 = vsub.s32 0, %v105
  %v107 = vrot.slane %v102, %v106
  %v121 = vunpack.c.l.b16 %v18
  %v122 = vunpack.c.h.b16 %v18
  %v123 = vunpack.c.l.b16 %v19
  %v124 = vunpack.c.h.b16 %v19
  %v125 = vunpack.c.l.b16 %v20
  %v126 = vunpack.c.l.b16 %v21
  %v127 = vunpack.c.h.b16 %v21
  %v128 = vunpack.c.l.b16 %v22
  %v129 = vunpack.c.h.b16 %v22
  %v130 = vunpack.c.l.b16 %v23
  %v131 = vunpack.c.l.b16 %v24
  %v132 = vunpack.c.h.b16 %v24
  %v133 = vunpack.c.l.b16 %v25
  %v134 = vunpack.c.h.b16 %v25
  %v135 = vunpack.c.l.b16 %v26
  %v136 = vunpack.c.l.b16 %v27
  %v137 = vunpack.c.h.b16 %v27
  %v138 = vunpack.c.l.b16 %v28
  %v139 = vunpack.c.h.b16 %v28
  %v140 = vunpack.c.l.b16 %v29
  %v141 = vpack.c.b16 %v126, %v121
  %v142 = vpack.c.b16 %v127, %v122
  %v143 = vpack.c.b16 %v128, %v123
  %v144 = vpack.c.b16 %v129, %v124
  %v145 = vpack.c.b16 %v130, %v125
  %v146 = vpack.c.b16 %v136, %v131
  %v147 = vpack.c.b16 %v137, %v132
  %v148 = vpack.c.b16 %v138, %v133
  %v149 = vpack.c.b16 %v139, %v134
  %v150 = vpack.c.b16 %v140, %v135
  %v231 = vunpack.c.l.b16 %v30
  %v232 = vunpack.c.l.b16 %v31
  %v233 = vunpack.c.l.b16 %v32
  %v234 = vunpack.c.l.b16 %v33
  %v235 = vunpack.c.l.b16 %v34
  %v236 = vunpack.c.l.b16 %v35
  %v237 = vunpack.c.l.b16 %v36
  %v238 = vunpack.c.l.b16 %v37
  %v239 = vunpack.c.l.b16 %v38
  %v240 = vunpack.c.l.b16 %v39
  %v241 = vunpack.c.l.b16 %v40
  %v242 = vunpack.c.l.b16 %v41
  %v243 = vunpack.c.l.b16 %v42
  %v244 = vunpack.c.l.b16 %v43
  %v245 = vunpack.c.l.b16 %v44
  %v246 = vunpack.c.l.b16 %v45
  %v247 = vunpack.c.l.b16 %v46
  %v248 = vunpack.c.l.b16 %v47
  %v249 = vunpack.c.l.b16 %v48
  %v250 = vunpack.c.l.b16 %v49
  %v251 = vunpack.c.l.b16 %v50
  %v252 = vunpack.c.l.b16 %v51
  %v253 = vunpack.c.l.b16 %v52
  %v254 = vunpack.c.l.b16 %v53
  %v255 = vunpack.c.l.b16 %v54
  %v256 = vunpack.c.l.b16 %v55
  %v257 = vunpack.c.l.b16 %v56
  %v258 = vunpack.c.l.b16 %v57
  %v259 = vunpack.c.l.b16 %v58
  %v260 = vunpack.c.l.b16 %v59
  %v261 = vunpack.c.l.b16 %v60
  %v262 = vunpack.c.l.b16 %v61
  %v263 = vunpack.c.l.b16 %v62
  %v264 = vunpack.c.l.b16 %v63
  %v265 = vunpack.c.l.b16 %v64
  %v266 = vunpack.c.l.b16 %v65
  %v267 = vunpack.c.l.b16 %v66
  %v268 = vunpack.c.l.b16 %v67
  %v269 = vunpack.c.l.b16 %v68
  %v270 = vunpack.c.l.b16 %v69
  %v271 = vunpack.c.l.b16 %v70
  %v272 = vunpack.c.l.b16 %v71
  %v273 = vunpack.c.l.b16 %v72
  %v274 = vunpack.c.l.b16 %v73
  %v275 = vunpack.c.l.b16 %v74
  %v276 = vunpack.c.l.b16 %v75
  %v277 = vunpack.c.l.b16 %v76
  %v278 = vunpack.c.l.b16 %v77
  %v279 = vunpack.c.l.b16 %v78
  %v280 = vunpack.c.l.b16 %v79
  %v281 = vunpack.c.l.b16 %v80
  %v282 = vunpack.c.l.b16 %v81
  %v283 = vunpack.c.l.b16 %v82
  %v284 = vunpack.c.l.b16 %v83
  %v285 = vunpack.c.l.b16 %v84
  %v286 = vunpack.c.l.b16 %v85
  %v287 = vunpack.c.l.b16 %v86
  %v288 = vunpack.c.l.b16 %v87
  %v289 = vunpack.c.l.b16 %v88
  %v290 = vunpack.c.l.b16 %v89
  %v291 = vunpack.c.l.b16 %v90
  %v292 = vunpack.c.l.b16 %v91
  %v293 = vunpack.c.l.b16 %v92
  %v294 = vunpack.c.l.b16 %v93
  %v295 = vunpack.c.l.b16 %v94
  %v296 = vunpack.c.l.b16 %v95
  %v297 = vunpack.c.l.b16 %v96
  %v298 = vunpack.c.l.b16 %v97
  %v299 = vunpack.c.l.b16 %v98
  %v300 = vunpack.c.l.b16 %v99
  %v301 = vunpack.c.l.b16 %v100
  %v302 = vunpack.c.l.b16 %v101
  %v303 = vpack.c.b16 %v232, %v231
  %v304 = vpack.c.b16 %v234, %v233
  %v305 = vpack.c.b16 %v236, %v235
  %v306 = vpack.c.b16 %v238, %v237
  %v307 = vpack.c.b16 %v240, %v239
  %v308 = vpack.c.b16 %v242, %v241
  %v309 = vpack.c.b16 %v244, %v243
  %v310 = vpack.c.b16 %v246, %v245
  %v311 = vpack.c.b16 %v248, %v247
  %v312 = vpack.c.b16 %v250, %v249
  %v313 = vpack.c.b16 %v252, %v251
  %v314 = vpack.c.b16 %v254, %v253
  %v315 = vpack.c.b16 %v256, %v255
  %v316 = vpack.c.b16 %v258, %v257
  %v317 = vpack.c.b16 %v260, %v259
  %v318 = vpack.c.b16 %v262, %v261
  %v319 = vpack.c.b16 %v264, %v263
  %v320 = vpack.c.b16 %v266, %v265
  %v321 = vpack.c.b16 %v268, %v267
  %v322 = vpack.c.b16 %v270, %v269
  %v323 = vpack.c.b16 %v272, %v271
  %v324 = vpack.c.b16 %v274, %v273
  %v325 = vpack.c.b16 %v276, %v275
  %v326 = vpack.c.b16 %v278, %v277
  %v327 = vpack.c.b16 %v280, %v279
  %v328 = vpack.c.b16 %v282, %v281
  %v329 = vpack.c.b16 %v284, %v283
  %v330 = vpack.c.b16 %v286, %v285
  %v331 = vpack.c.b16 %v288, %v287
  %v332 = vpack.c.b16 %v290, %v289
  %v333 = vpack.c.b16 %v292, %v291
  %v334 = vpack.c.b16 %v294, %v293
  %v335 = vpack.c.b16 %v296, %v295
  %v336 = vpack.c.b16 %v298, %v297
  %v337 = vpack.c.b16 %v300, %v299
  %v338 = vpack.c.b16 %v302, %v301
  %vm375 = vcmask 523264
  %v377 = vsel %vm375, %v145, 0
  %v380 = vsel %vm375, %v150, 0
  %382 = vmatprep.subr.bf16.mxu0 0
  %383 = vmatpush1.bf16.msra.mxu0 %v310
  %384 = vmatprep.subr.bf16.mxu0 0
  %385 = vmatpush1.bf16.msra.mxu0 %v309
  %386 = vmatprep.subr.bf16.mxu0 0
  %387 = vmatpush1.bf16.msra.mxu0 %v308
  %388 = vmatprep.subr.bf16.mxu0 0
  %389 = vmatpush1.bf16.msra.mxu0 %v307
  %390 = vmatprep.subr.bf16.mxu0 0
  %391 = vmatpush1.bf16.msra.mxu0 %v306
  %392 = vmatprep.subr.bf16.mxu0 0
  %393 = vmatpush1.bf16.msra.mxu0 %v305
  %394 = vmatprep.subr.bf16.mxu0 0
  %395 = vmatpush1.bf16.msra.mxu0 %v304
  %396 = vmatprep.subr.bf16.mxu0 0
  %397 = vmatpush1.bf16.msra.mxu0 %v303
  %398 = vmatprep.subr.bf16.mxu0 0
  %399 = vmatpush2.bf16.msra.mxu0 %v318
  %400 = vmatprep.subr.bf16.mxu0 0
  %401 = vmatpush2.bf16.msra.mxu0 %v317
  %402 = vmatprep.subr.bf16.mxu0 0
  %403 = vmatpush2.bf16.msra.mxu0 %v316
  %404 = vmatprep.subr.bf16.mxu0 0
  %405 = vmatpush2.bf16.msra.mxu0 %v315
  %406 = vmatprep.subr.bf16.mxu0 0
  %407 = vmatpush2.bf16.msra.mxu0 %v314
  %408 = vmatprep.subr.bf16.mxu0 0
  %409 = vmatpush2.bf16.msra.mxu0 %v313
  %410 = vmatprep.subr.bf16.mxu0 0
  %411 = vmatpush2.bf16.msra.mxu0 %v312
  %412 = vmatprep.subr.bf16.mxu0 0
  %413 = vmatpush2.bf16.msra.mxu0 %v311
  %414 = vmatprep.mubr.bf16.mxu0 %v142
  %415 = vmatmul.mubr.bf16.gmra.mxu0 %v141
  %v416 = vpop.f32.mrf.mxu0
  %v417 = vadd.f32 %v107, %v416
  %v418 = vpop.f32.mrf.mxu0
  %v419 = vpop.f32.mrf.mxu0
  %v420 = vadd.f32 %v107, %v419
  %v421 = vpop.f32.mrf.mxu0
  %422 = vmatprep.mubr.bf16.mxu0 %v147
  %423 = vmatmul.mubr.bf16.gmra.mxu0 %v146
  %v424 = vpop.f32.mrf.mxu0
  %v425 = vadd.f32 %v107, %v424
  %v426 = vpop.f32.mrf.mxu0
  %v427 = vpop.f32.mrf.mxu0
  %v428 = vadd.f32 %v107, %v427
  %v429 = vpop.f32.mrf.mxu0
  %430 = vdwg.mxu0
  %431 = vmatprep.subr.bf16.mxu0 0
  %432 = vmatpush1.bf16.msra.mxu0 %v326
  %433 = vmatprep.subr.bf16.mxu0 0
  %434 = vmatpush1.bf16.msra.mxu0 %v325
  %435 = vmatprep.subr.bf16.mxu0 0
  %436 = vmatpush1.bf16.msra.mxu0 %v324
  %437 = vmatprep.subr.bf16.mxu0 0
  %438 = vmatpush1.bf16.msra.mxu0 %v323
  %439 = vmatprep.subr.bf16.mxu0 0
  %440 = vmatpush1.bf16.msra.mxu0 %v322
  %441 = vmatprep.subr.bf16.mxu0 0
  %442 = vmatpush1.bf16.msra.mxu0 %v321
  %443 = vmatprep.subr.bf16.mxu0 0
  %444 = vmatpush1.bf16.msra.mxu0 %v320
  %445 = vmatprep.subr.bf16.mxu0 0
  %446 = vmatpush1.bf16.msra.mxu0 %v319
  %447 = vmatprep.subr.bf16.mxu0 0
  %448 = vmatpush2.bf16.msra.mxu0 %v334
  %449 = vmatprep.subr.bf16.mxu0 0
  %450 = vmatpush2.bf16.msra.mxu0 %v333
  %451 = vmatprep.subr.bf16.mxu0 0
  %452 = vmatpush2.bf16.msra.mxu0 %v332
  %453 = vmatprep.subr.bf16.mxu0 0
  %454 = vmatpush2.bf16.msra.mxu0 %v331
  %455 = vmatprep.subr.bf16.mxu0 0
  %456 = vmatpush2.bf16.msra.mxu0 %v330
  %457 = vmatprep.subr.bf16.mxu0 0
  %458 = vmatpush2.bf16.msra.mxu0 %v329
  %459 = vmatprep.subr.bf16.mxu0 0
  %460 = vmatpush2.bf16.msra.mxu0 %v328
  %461 = vmatprep.subr.bf16.mxu0 0
  %462 = vmatpush2.bf16.msra.mxu0 %v327
  %463 = vmatprep.mubr.bf16.mxu0 %v144
  %464 = vmatmul.mubr.bf16.gmra.mxu0 %v143
  %v465 = vpop.f32.mrf.mxu0
  %v466 = vadd.f32 %v417, %v465
  %v467 = vpop.f32.mrf.mxu0
  %v468 = vpop.f32.mrf.mxu0
  %v469 = vadd.f32 %v420, %v468
  %v470 = vpop.f32.mrf.mxu0
  %471 = vmatprep.mubr.bf16.mxu0 %v149
  %472 = vmatmul.mubr.bf16.gmra.mxu0 %v148
  %v473 = vpop.f32.mrf.mxu0
  %v474 = vadd.f32 %v425, %v473
  %v475 = vpop.f32.mrf.mxu0
  %v476 = vpop.f32.mrf.mxu0
  %v477 = vadd.f32 %v428, %v476
  %v478 = vpop.f32.mrf.mxu0
  %479 = vdwg.mxu0
  %480 = vmatprep.subr.bf16.mxu0 0
  %481 = vmatpush1.bf16.msra.mxu0 0
  %482 = vmatprep.subr.bf16.mxu0 0
  %483 = vmatpush1.bf16.msra.mxu0 0
  %484 = vmatprep.subr.bf16.mxu0 0
  %485 = vmatpush1.bf16.msra.mxu0 0
  %486 = vmatprep.subr.bf16.mxu0 0
  %487 = vmatpush1.bf16.msra.mxu0 0
  %488 = vmatprep.subr.bf16.mxu0 0
  %489 = vmatpush1.bf16.msra.mxu0 %v338
  %490 = vmatprep.subr.bf16.mxu0 0
  %491 = vmatpush1.bf16.msra.mxu0 %v337
  %492 = vmatprep.subr.bf16.mxu0 0
  %493 = vmatpush1.bf16.msra.mxu0 %v336
  %494 = vmatprep.subr.bf16.mxu0 0
  %495 = vmatpush1.bf16.msra.mxu0 %v335
  %496 = vmatprep.subr.bf16.mxu0 0
  %497 = vmatpush2.bf16.msra.mxu0 0
  %498 = vmatprep.subr.bf16.mxu0 0
  %499 = vmatpush2.bf16.msra.mxu0 0
  %500 = vmatprep.subr.bf16.mxu0 0
  %501 = vmatpush2.bf16.msra.mxu0 0
  %502 = vmatprep.subr.bf16.mxu0 0
  %503 = vmatpush2.bf16.msra.mxu0 0
  %504 = vmatprep.subr.bf16.mxu0 0
  %505 = vmatpush2.bf16.msra.mxu0 0
  %506 = vmatprep.subr.bf16.mxu0 0
  %507 = vmatpush2.bf16.msra.mxu0 0
  %508 = vmatprep.subr.bf16.mxu0 0
  %509 = vmatpush2.bf16.msra.mxu0 0
  %510 = vmatprep.subr.bf16.mxu0 0
  %511 = vmatpush2.bf16.msra.mxu0 0
  %512 = vmatprep.mubr.bf16.mxu0 0
  %513 = vmatmul.mubr.bf16.gmra.mxu0 %v377
  %v514 = vpop.f32.mrf.mxu0
  %v515 = vadd.f32 %v466, %v514
  %v516 = vpop.f32.mrf.mxu0
  %v517 = vpop.f32.mrf.mxu0
  %v518 = vadd.f32 %v469, %v517
  %v519 = vpop.f32.mrf.mxu0
  %520 = vmatprep.mubr.bf16.mxu0 0
  %521 = vmatmul.mubr.bf16.gmra.mxu0 %v380
  %v522 = vpop.f32.mrf.mxu0
  %v523 = vadd.f32 %v474, %v522
  %v524 = vpop.f32.mrf.mxu0
  %v525 = vpop.f32.mrf.mxu0
  %v526 = vadd.f32 %v477, %v525
  %v527 = vpop.f32.mrf.mxu0
  %528 = vdwg.mxu0
  %vm529 = vcmp.ge.f32.partialorder %v515, 0.0
  %vm530 = vcmp.ge.f32.partialorder %v518, 0.0
  %vm531 = vcmp.ge.f32.partialorder %v523, 0.0
  %vm532 = vcmp.ge.f32.partialorder %v526, 0.0
  %v533 = vmul.f32 %v515, 0.2
  %v534 = vmul.f32 %v518, 0.2
  %v535 = vmul.f32 %v523, 0.2
  %v536 = vmul.f32 %v526, 0.2
  %v537 = vsel %vm529, %v515, %v533
  %v538 = vsel %vm530, %v518, %v534
  %v539 = vsel %vm531, %v523, %v535
  %v540 = vsel %vm532, %v526, %v536
  %v541 = vxor.u32 %v515, 2147483648
  %v542 = vxor.u32 %v518, 2147483648
  %v543 = vxor.u32 %v523, 2147483648
  %v544 = vxor.u32 %v526, 2147483648
  %v545 = vmul.f32 %v541, 1.442695
  %v546 = vpow.pop %v545
  %v547 = vmul.f32 %v542, 1.442695
  %v548 = vpow.pop %v547
  %v549 = vmul.f32 %v543, 1.442695
  %v550 = vpow.pop %v549
  %v551 = vmul.f32 %v544, 1.442695
  %v552 = vpow.pop %v551
  %v553 = vadd.f32 %v546, 1.0
  %v554 = vadd.f32 %v548, 1.0
  %v555 = vadd.f32 %v550, 1.0
  %v556 = vadd.f32 %v552, 1.0
  %v557 = vrcp.pop %v553
  %v558 = vmul.f32 1.0, %v557
  %v559 = vrcp.pop %v554
  %v560 = vmul.f32 1.0, %v559
  %v561 = vrcp.pop %v555
  %v562 = vmul.f32 1.0, %v561
  %v563 = vrcp.pop %v556
  %v564 = vmul.f32 1.0, %v563
  %569 = vrot.lane.b32.xlu0 %v558, 64
  %v570 = vpop.permute.xlu0 %569
  %571 = vrot.lane.b32.xlu0 %v560, 64
  %v572 = vpop.permute.xlu0 %571
  %573 = vrot.lane.b32.xlu0 %v562, 64
  %v574 = vpop.permute.xlu0 %573
  %575 = vrot.lane.b32.xlu0 %v564, 64
  %v576 = vpop.permute.xlu0 %575
  %v581 = vmul.f32 %v537, %v570
  %v582 = vmul.f32 %v538, %v572
  %v583 = vmul.f32 %v539, %v574
  %v584 = vmul.f32 %v540, %v576
  %v585 = vld [vmem:[%s3] sm:$0xf]
  %v586 = vld [vmem:[%s3 + $0x4] sm:$0xf]
  %v587 = vld [vmem:[%s3 + $0x8] sm:$0xf]
  %v588 = vld [vmem:[%s3 + $0xc] sm:$0xf]
  %v589 = vunpack.c.l.bf16 %v585
  %v590 = vunpack.c.l.bf16 %v586
  %v591 = vunpack.c.l.bf16 %v587
  %v592 = vunpack.c.l.bf16 %v588
  %v593 = vadd.f32 %v581, %v589
  %v594 = vadd.f32 %v582, %v590
  %v595 = vadd.f32 %v583, %v591
  %v596 = vadd.f32 %v584, %v592
  %v597 = vpack.c.bf16 %v594, %v593
  %v598 = vpack.c.bf16 %v596, %v595
  %v601 = vunpack.c.l.b16 %v597
  %v602 = vunpack.c.h.b16 %v597
  %v603 = vunpack.c.l.b16 %v598
  %v604 = vunpack.c.h.b16 %v598
  %v605 = vpack.c.b16 %v601, %v601
  %v606 = vpack.c.b16 %v602, %v602
  %v607 = vpack.c.b16 %v603, %v603
  %v608 = vpack.c.b16 %v604, %v604
  %vm613 = vcmask 519168
  %614 = vst.msk [vmem:[%s4] sm:$0xf] %vm613, %v605
  %615 = vst.msk [vmem:[%s4 + $0x4] sm:$0xf] %vm613, %v606
  %616 = vst.msk [vmem:[%s4 + $0x8] sm:$0xf] %vm613, %v607
  %617 = vst.msk [vmem:[%s4 + $0xc] sm:$0xf] %vm613, %v608
  // Predicated region
  $region18: #{coarse_forward.31} parent=0 // pred_check
    _
  $region19: #{coarse_forward.31} parent=0 // pred_check_branch
    %619 = sbr.rel (0) target = $region21
  $region20: #{coarse_forward.31} parent=0 // pred_region
    _
  $region21: #{coarse_forward.31} parent=0 // pred_fallthru
    _
  // Predicated region
  $region22: #{coarse_forward.31} parent=0 // pred_check
    _
  $region23: #{coarse_forward.31} parent=0 // pred_check_branch
    %621 = sbr.rel (0) target = $region25
  $region24: #{coarse_forward.31} parent=0 // pred_region
    _
  $region25: #{coarse_forward.31} parent=0 // pred_fallthru
    _

// kernel: coarse_forward.29
$region0: #{coarse_forward.29}
  #allocation0 [shape = 'u32[]', space=smem, size = 0x4, offset = 0x4, fixed_abs, tag = 'smem constant byte address 0x4 - core index']
  #allocation1 [shape = 'u32[144,128]{1,0:T(1,128)}', space=vmem, size = 0x12000, scoped, tag = 'internal scratch']
  %s0 = inlined_call_operand.vmem [shape: bf16[32,576], index: 0, kind: input, shape index: {}]
  %s1 = inlined_call_operand.vmem [shape: bf16[576,128], index: 1, kind: input, shape index: {}]
  %s2 = inlined_call_operand.vmem [shape: f32[1,128], index: 2, kind: input, shape index: {}]
  %s3 = inlined_call_operand.vmem [shape: bf16[32,64], index: 3, kind: output, shape index: {}]
  %s4 = sld [smem:[#allocation0]]
  $region22: #{coarse_forward.29} parent=0
    _
  %s6 = ssub.s32 1, %s4
  %s7 = scalar_select 0, %s6, %s4
  // Predicated region
  $region2: #{coarse_forward.29} parent=0 // pred_check
    _
  $region3: #{coarse_forward.29} parent=0 // pred_check_branch
    %9 = sbr.rel (0) target = $region5
  $region4: #{coarse_forward.29} parent=0 // pred_region
    _
  $region5: #{coarse_forward.29} parent=0 // pred_fallthru
    _
  // Predicated region
  $region6: #{coarse_forward.29} parent=0 // pred_check
    _
  $region7: #{coarse_forward.29} parent=0 // pred_check_branch
    %11 = sbr.rel (0) target = $region9
  $region8: #{coarse_forward.29} parent=0 // pred_region
    _
  $region9: #{coarse_forward.29} parent=0 // pred_fallthru
    _
  // Predicated region
  $region10: #{coarse_forward.29} parent=0 // pred_check
    _
  $region11: #{coarse_forward.29} parent=0 // pred_check_branch
    %13 = sbr.rel (0) target = $region13
  $region12: #{coarse_forward.29} parent=0 // pred_region
    _
  $region13: #{coarse_forward.29} parent=0 // pred_fallthru
    _
  %v15 = vld [vmem:[%s0] sm:$0xff]
  %v16 = vld [vmem:[%s0 + $0x8] sm:$0xff]
  %v17 = vld [vmem:[%s0 + $0x10] sm:$0xf]
  %v18 = vld [vmem:[%s0 + $0x14] sm:$0xff]
  %v19 = vld [vmem:[%s0 + $0x1c] sm:$0xff]
  %v20 = vld [vmem:[%s0 + $0x24] sm:$0xf]
  %v21 = vld [vmem:[%s0 + $0x28] sm:$0xff]
  %v22 = vld [vmem:[%s0 + $0x30] sm:$0xff]
  %v23 = vld [vmem:[%s0 + $0x38] sm:$0xf]
  %v24 = vld [vmem:[%s0 + $0x3c] sm:$0xff]
  %v25 = vld [vmem:[%s0 + $0x44] sm:$0xff]
  %v26 = vld [vmem:[%s0 + $0x4c] sm:$0xf]
  %v27 = vld [vmem:[%s1] sm:$0xf]
  %v28 = vld [vmem:[%s1 + $0x4] sm:$0xf]
  %v29 = vld [vmem:[%s1 + $0x8] sm:$0xf]
  %v30 = vld [vmem:[%s1 + $0xc] sm:$0xf]
  %v31 = vld [vmem:[%s1 + $0x10] sm:$0xf]
  %v32 = vld [vmem:[%s1 + $0x14] sm:$0xf]
  %v33 = vld [vmem:[%s1 + $0x18] sm:$0xf]
  %v34 = vld [vmem:[%s1 + $0x1c] sm:$0xf]
  %v35 = vld [vmem:[%s1 + $0x20] sm:$0xf]
  %v36 = vld [vmem:[%s1 + $0x24] sm:$0xf]
  %v37 = vld [vmem:[%s1 + $0x28] sm:$0xf]
  %v38 = vld [vmem:[%s1 + $0x2c] sm:$0xf]
  %v39 = vld [vmem:[%s1 + $0x30] sm:$0xf]
  %v40 = vld [vmem:[%s1 + $0x34] sm:$0xf]
  %v41 = vld [vmem:[%s1 + $0x38] sm:$0xf]
  %v42 = vld [vmem:[%s1 + $0x3c] sm:$0xf]
  %v43 = vld [vmem:[%s1 + $0x40] sm:$0xf]
  %v44 = vld [vmem:[%s1 + $0x44] sm:$0xf]
  %v45 = vld [vmem:[%s1 + $0x48] sm:$0xf]
  %v46 = vld [vmem:[%s1 + $0x4c] sm:$0xf]
  %v47 = vld [vmem:[%s1 + $0x50] sm:$0xf]
  %v48 = vld [vmem:[%s1 + $0x54] sm:$0xf]
  %v49 = vld [vmem:[%s1 + $0x58] sm:$0xf]
  %v50 = vld [vmem:[%s1 + $0x5c] sm:$0xf]
  %v51 = vld [vmem:[%s1 + $0x60] sm:$0xf]
  %v52 = vld [vmem:[%s1 + $0x64] sm:$0xf]
  %v53 = vld [vmem:[%s1 + $0x68] sm:$0xf]
  %v54 = vld [vmem:[%s1 + $0x6c] sm:$0xf]
  %v55 = vld [vmem:[%s1 + $0x70] sm:$0xf]
  %v56 = vld [vmem:[%s1 + $0x74] sm:$0xf]
  %v57 = vld [vmem:[%s1 + $0x78] sm:$0xf]
  %v58 = vld [vmem:[%s1 + $0x7c] sm:$0xf]
  %v59 = vld [vmem:[%s1 + $0x80] sm:$0xf]
  %v60 = vld [vmem:[%s1 + $0x84] sm:$0xf]
  %v61 = vld [vmem:[%s1 + $0x88] sm:$0xf]
  %v62 = vld [vmem:[%s1 + $0x8c] sm:$0xf]
  %v63 = vld [vmem:[%s1 + $0x90] sm:$0xf]
  %v64 = vld [vmem:[%s1 + $0x94] sm:$0xf]
  %v65 = vld [vmem:[%s1 + $0x98] sm:$0xf]
  %v66 = vld [vmem:[%s1 + $0x9c] sm:$0xf]
  %v67 = vld [vmem:[%s1 + $0xa0] sm:$0xf]
  %v68 = vld [vmem:[%s1 + $0xa4] sm:$0xf]
  %v69 = vld [vmem:[%s1 + $0xa8] sm:$0xf]
  %v70 = vld [vmem:[%s1 + $0xac] sm:$0xf]
  %v71 = vld [vmem:[%s1 + $0xb0] sm:$0xf]
  %v72 = vld [vmem:[%s1 + $0xb4] sm:$0xf]
  %v73 = vld [vmem:[%s1 + $0xb8] sm:$0xf]
  %v74 = vld [vmem:[%s1 + $0xbc] sm:$0xf]
  %v75 = vld [vmem:[%s1 + $0xc0] sm:$0xf]
  %v76 = vld [vmem:[%s1 + $0xc4] sm:$0xf]
  %v77 = vld [vmem:[%s1 + $0xc8] sm:$0xf]
  %v78 = vld [vmem:[%s1 + $0xcc] sm:$0xf]
  %v79 = vld [vmem:[%s1 + $0xd0] sm:$0xf]
  %v80 = vld [vmem:[%s1 + $0xd4] sm:$0xf]
  %v81 = vld [vmem:[%s1 + $0xd8] sm:$0xf]
  %v82 = vld [vmem:[%s1 + $0xdc] sm:$0xf]
  %v83 = vld [vmem:[%s1 + $0xe0] sm:$0xf]
  %v84 = vld [vmem:[%s1 + $0xe4] sm:$0xf]
  %v85 = vld [vmem:[%s1 + $0xe8] sm:$0xf]
  %v86 = vld [vmem:[%s1 + $0xec] sm:$0xf]
  %v87 = vld [vmem:[%s1 + $0xf0] sm:$0xf]
  %v88 = vld [vmem:[%s1 + $0xf4] sm:$0xf]
  %v89 = vld [vmem:[%s1 + $0xf8] sm:$0xf]
  %v90 = vld [vmem:[%s1 + $0xfc] sm:$0xf]
  %v91 = vld [vmem:[%s1 + $0x100] sm:$0xf]
  %v92 = vld [vmem:[%s1 + $0x104] sm:$0xf]
  %v93 = vld [vmem:[%s1 + $0x108] sm:$0xf]
  %v94 = vld [vmem:[%s1 + $0x10c] sm:$0xf]
  %v95 = vld [vmem:[%s1 + $0x110] sm:$0xf]
  %v96 = vld [vmem:[%s1 + $0x114] sm:$0xf]
  %v97 = vld [vmem:[%s1 + $0x118] sm:$0xf]
  %v98 = vld [vmem:[%s1 + $0x11c] sm:$0xf]
  %v99 = vld [vmem:[%s2] sm:$0x1]
  %v101 = vlaneseq
  %v102 = vshrl.u32 %v101, 7
  %v103 = vsub.s32 0, %v102
  %v104 = vrot.slane %v99, %v103
  %v118 = vunpack.c.l.b16 %v15
  %v119 = vunpack.c.h.b16 %v15
  %v120 = vunpack.c.l.b16 %v16
  %v121 = vunpack.c.h.b16 %v16
  %v122 = vunpack.c.l.b16 %v17
  %v123 = vunpack.c.l.b16 %v18
  %v124 = vunpack.c.h.b16 %v18
  %v125 = vunpack.c.l.b16 %v19
  %v126 = vunpack.c.h.b16 %v19
  %v127 = vunpack.c.l.b16 %v20
  %v128 = vunpack.c.l.b16 %v21
  %v129 = vunpack.c.h.b16 %v21
  %v130 = vunpack.c.l.b16 %v22
  %v131 = vunpack.c.h.b16 %v22
  %v132 = vunpack.c.l.b16 %v23
  %v133 = vunpack.c.l.b16 %v24
  %v134 = vunpack.c.h.b16 %v24
  %v135 = vunpack.c.l.b16 %v25
  %v136 = vunpack.c.h.b16 %v25
  %v137 = vunpack.c.l.b16 %v26
  %v138 = vpack.c.b16 %v123, %v118
  %v139 = vpack.c.b16 %v124, %v119
  %v140 = vpack.c.b16 %v125, %v120
  %v141 = vpack.c.b16 %v126, %v121
  %v142 = vpack.c.b16 %v127, %v122
  %v143 = vpack.c.b16 %v133, %v128
  %v144 = vpack.c.b16 %v134, %v129
  %v145 = vpack.c.b16 %v135, %v130
  %v146 = vpack.c.b16 %v136, %v131
  %v147 = vpack.c.b16 %v137, %v132
  %v228 = vunpack.c.l.b16 %v27
  %v229 = vunpack.c.l.b16 %v28
  %v230 = vunpack.c.l.b16 %v29
  %v231 = vunpack.c.l.b16 %v30
  %v232 = vunpack.c.l.b16 %v31
  %v233 = vunpack.c.l.b16 %v32
  %v234 = vunpack.c.l.b16 %v33
  %v235 = vunpack.c.l.b16 %v34
  %v236 = vunpack.c.l.b16 %v35
  %v237 = vunpack.c.l.b16 %v36
  %v238 = vunpack.c.l.b16 %v37
  %v239 = vunpack.c.l.b16 %v38
  %v240 = vunpack.c.l.b16 %v39
  %v241 = vunpack.c.l.b16 %v40
  %v242 = vunpack.c.l.b16 %v41
  %v243 = vunpack.c.l.b16 %v42
  %v244 = vunpack.c.l.b16 %v43
  %v245 = vunpack.c.l.b16 %v44
  %v246 = vunpack.c.l.b16 %v45
  %v247 = vunpack.c.l.b16 %v46
  %v248 = vunpack.c.l.b16 %v47
  %v249 = vunpack.c.l.b16 %v48
  %v250 = vunpack.c.l.b16 %v49
  %v251 = vunpack.c.l.b16 %v50
  %v252 = vunpack.c.l.b16 %v51
  %v253 = vunpack.c.l.b16 %v52
  %v254 = vunpack.c.l.b16 %v53
  %v255 = vunpack.c.l.b16 %v54
  %v256 = vunpack.c.l.b16 %v55
  %v257 = vunpack.c.l.b16 %v56
  %v258 = vunpack.c.l.b16 %v57
  %v259 = vunpack.c.l.b16 %v58
  %v260 = vunpack.c.l.b16 %v59
  %v261 = vunpack.c.l.b16 %v60
  %v262 = vunpack.c.l.b16 %v61
  %v263 = vunpack.c.l.b16 %v62
  %v264 = vunpack.c.l.b16 %v63
  %v265 = vunpack.c.l.b16 %v64
  %v266 = vunpack.c.l.b16 %v65
  %v267 = vunpack.c.l.b16 %v66
  %v268 = vunpack.c.l.b16 %v67
  %v269 = vunpack.c.l.b16 %v68
  %v270 = vunpack.c.l.b16 %v69
  %v271 = vunpack.c.l.b16 %v70
  %v272 = vunpack.c.l.b16 %v71
  %v273 = vunpack.c.l.b16 %v72
  %v274 = vunpack.c.l.b16 %v73
  %v275 = vunpack.c.l.b16 %v74
  %v276 = vunpack.c.l.b16 %v75
  %v277 = vunpack.c.l.b16 %v76
  %v278 = vunpack.c.l.b16 %v77
  %v279 = vunpack.c.l.b16 %v78
  %v280 = vunpack.c.l.b16 %v79
  %v281 = vunpack.c.l.b16 %v80
  %v282 = vunpack.c.l.b16 %v81
  %v283 = vunpack.c.l.b16 %v82
  %v284 = vunpack.c.l.b16 %v83
  %v285 = vunpack.c.l.b16 %v84
  %v286 = vunpack.c.l.b16 %v85
  %v287 = vunpack.c.l.b16 %v86
  %v288 = vunpack.c.l.b16 %v87
  %v289 = vunpack.c.l.b16 %v88
  %v290 = vunpack.c.l.b16 %v89
  %v291 = vunpack.c.l.b16 %v90
  %v292 = vunpack.c.l.b16 %v91
  %v293 = vunpack.c.l.b16 %v92
  %v294 = vunpack.c.l.b16 %v93
  %v295 = vunpack.c.l.b16 %v94
  %v296 = vunpack.c.l.b16 %v95
  %v297 = vunpack.c.l.b16 %v96
  %v298 = vunpack.c.l.b16 %v97
  %v299 = vunpack.c.l.b16 %v98
  %v300 = vpack.c.b16 %v229, %v228
  %v301 = vpack.c.b16 %v231, %v230
  %v302 = vpack.c.b16 %v233, %v232
  %v303 = vpack.c.b16 %v235, %v234
  %v304 = vpack.c.b16 %v237, %v236
  %v305 = vpack.c.b16 %v239, %v238
  %v306 = vpack.c.b16 %v241, %v240
  %v307 = vpack.c.b16 %v243, %v242
  %v308 = vpack.c.b16 %v245, %v244
  %v309 = vpack.c.b16 %v247, %v246
  %v310 = vpack.c.b16 %v249, %v248
  %v311 = vpack.c.b16 %v251, %v250
  %v312 = vpack.c.b16 %v253, %v252
  %v313 = vpack.c.b16 %v255, %v254
  %v314 = vpack.c.b16 %v257, %v256
  %v315 = vpack.c.b16 %v259, %v258
  %v316 = vpack.c.b16 %v261, %v260
  %v317 = vpack.c.b16 %v263, %v262
  %v318 = vpack.c.b16 %v265, %v264
  %v319 = vpack.c.b16 %v267, %v266
  %v320 = vpack.c.b16 %v269, %v268
  %v321 = vpack.c.b16 %v271, %v270
  %v322 = vpack.c.b16 %v273, %v272
  %v323 = vpack.c.b16 %v275, %v274
  %v324 = vpack.c.b16 %v277, %v276
  %v325 = vpack.c.b16 %v279, %v278
  %v326 = vpack.c.b16 %v281, %v280
  %v327 = vpack.c.b16 %v283, %v282
  %v328 = vpack.c.b16 %v285, %v284
  %v329 = vpack.c.b16 %v287, %v286
  %v330 = vpack.c.b16 %v289, %v288
  %v331 = vpack.c.b16 %v291, %v290
  %v332 = vpack.c.b16 %v293, %v292
  %v333 = vpack.c.b16 %v295, %v294
  %v334 = vpack.c.b16 %v297, %v296
  %v335 = vpack.c.b16 %v299, %v298
  %vm372 = vcmask 523264
  %v374 = vsel %vm372, %v142, 0
  %v377 = vsel %vm372, %v147, 0
  %379 = vmatprep.subr.bf16.mxu0 0
  %380 = vmatpush1.bf16.msra.mxu0 %v307
  %381 = vmatprep.subr.bf16.mxu0 0
  %382 = vmatpush1.bf16.msra.mxu0 %v306
  %383 = vmatprep.subr.bf16.mxu0 0
  %384 = vmatpush1.bf16.msra.mxu0 %v305
  %385 = vmatprep.subr.bf16.mxu0 0
  %386 = vmatpush1.bf16.msra.mxu0 %v304
  %387 = vmatprep.subr.bf16.mxu0 0
  %388 = vmatpush1.bf16.msra.mxu0 %v303
  %389 = vmatprep.subr.bf16.mxu0 0
  %390 = vmatpush1.bf16.msra.mxu0 %v302
  %391 = vmatprep.subr.bf16.mxu0 0
  %392 = vmatpush1.bf16.msra.mxu0 %v301
  %393 = vmatprep.subr.bf16.mxu0 0
  %394 = vmatpush1.bf16.msra.mxu0 %v300
  %395 = vmatprep.subr.bf16.mxu0 0
  %396 = vmatpush2.bf16.msra.mxu0 %v315
  %397 = vmatprep.subr.bf16.mxu0 0
  %398 = vmatpush2.bf16.msra.mxu0 %v314
  %399 = vmatprep.subr.bf16.mxu0 0
  %400 = vmatpush2.bf16.msra.mxu0 %v313
  %401 = vmatprep.subr.bf16.mxu0 0
  %402 = vmatpush2.bf16.msra.mxu0 %v312
  %403 = vmatprep.subr.bf16.mxu0 0
  %404 = vmatpush2.bf16.msra.mxu0 %v311
  %405 = vmatprep.subr.bf16.mxu0 0
  %406 = vmatpush2.bf16.msra.mxu0 %v310
  %407 = vmatprep.subr.bf16.mxu0 0
  %408 = vmatpush2.bf16.msra.mxu0 %v309
  %409 = vmatprep.subr.bf16.mxu0 0
  %410 = vmatpush2.bf16.msra.mxu0 %v308
  %411 = vmatprep.mubr.bf16.mxu0 %v139
  %412 = vmatmul.mubr.bf16.gmra.mxu0 %v138
  %v413 = vpop.f32.mrf.mxu0
  %v414 = vadd.f32 %v104, %v413
  %v415 = vpop.f32.mrf.mxu0
  %v416 = vpop.f32.mrf.mxu0
  %v417 = vadd.f32 %v104, %v416
  %v418 = vpop.f32.mrf.mxu0
  %419 = vmatprep.mubr.bf16.mxu0 %v144
  %420 = vmatmul.mubr.bf16.gmra.mxu0 %v143
  %v421 = vpop.f32.mrf.mxu0
  %v422 = vadd.f32 %v104, %v421
  %v423 = vpop.f32.mrf.mxu0
  %v424 = vpop.f32.mrf.mxu0
  %v425 = vadd.f32 %v104, %v424
  %v426 = vpop.f32.mrf.mxu0
  %427 = vdwg.mxu0
  %428 = vmatprep.subr.bf16.mxu0 0
  %429 = vmatpush1.bf16.msra.mxu0 %v323
  %430 = vmatprep.subr.bf16.mxu0 0
  %431 = vmatpush1.bf16.msra.mxu0 %v322
  %432 = vmatprep.subr.bf16.mxu0 0
  %433 = vmatpush1.bf16.msra.mxu0 %v321
  %434 = vmatprep.subr.bf16.mxu0 0
  %435 = vmatpush1.bf16.msra.mxu0 %v320
  %436 = vmatprep.subr.bf16.mxu0 0
  %437 = vmatpush1.bf16.msra.mxu0 %v319
  %438 = vmatprep.subr.bf16.mxu0 0
  %439 = vmatpush1.bf16.msra.mxu0 %v318
  %440 = vmatprep.subr.bf16.mxu0 0
  %441 = vmatpush1.bf16.msra.mxu0 %v317
  %442 = vmatprep.subr.bf16.mxu0 0
  %443 = vmatpush1.bf16.msra.mxu0 %v316
  %444 = vmatprep.subr.bf16.mxu0 0
  %445 = vmatpush2.bf16.msra.mxu0 %v331
  %446 = vmatprep.subr.bf16.mxu0 0
  %447 = vmatpush2.bf16.msra.mxu0 %v330
  %448 = vmatprep.subr.bf16.mxu0 0
  %449 = vmatpush2.bf16.msra.mxu0 %v329
  %450 = vmatprep.subr.bf16.mxu0 0
  %451 = vmatpush2.bf16.msra.mxu0 %v328
  %452 = vmatprep.subr.bf16.mxu0 0
  %453 = vmatpush2.bf16.msra.mxu0 %v327
  %454 = vmatprep.subr.bf16.mxu0 0
  %455 = vmatpush2.bf16.msra.mxu0 %v326
  %456 = vmatprep.subr.bf16.mxu0 0
  %457 = vmatpush2.bf16.msra.mxu0 %v325
  %458 = vmatprep.subr.bf16.mxu0 0
  %459 = vmatpush2.bf16.msra.mxu0 %v324
  %460 = vmatprep.mubr.bf16.mxu0 %v141
  %461 = vmatmul.mubr.bf16.gmra.mxu0 %v140
  %v462 = vpop.f32.mrf.mxu0
  %v463 = vadd.f32 %v414, %v462
  %v464 = vpop.f32.mrf.mxu0
  %v465 = vpop.f32.mrf.mxu0
  %v466 = vadd.f32 %v417, %v465
  %v467 = vpop.f32.mrf.mxu0
  %468 = vmatprep.mubr.bf16.mxu0 %v146
  %469 = vmatmul.mubr.bf16.gmra.mxu0 %v145
  %v470 = vpop.f32.mrf.mxu0
  %v471 = vadd.f32 %v422, %v470
  %v472 = vpop.f32.mrf.mxu0
  %v473 = vpop.f32.mrf.mxu0
  %v474 = vadd.f32 %v425, %v473
  %v475 = vpop.f32.mrf.mxu0
  %476 = vdwg.mxu0
  %477 = vmatprep.subr.bf16.mxu0 0
  %478 = vmatpush1.bf16.msra.mxu0 0
  %479 = vmatprep.subr.bf16.mxu0 0
  %480 = vmatpush1.bf16.msra.mxu0 0
  %481 = vmatprep.subr.bf16.mxu0 0
  %482 = vmatpush1.bf16.msra.mxu0 0
  %483 = vmatprep.subr.bf16.mxu0 0
  %484 = vmatpush1.bf16.msra.mxu0 0
  %485 = vmatprep.subr.bf16.mxu0 0
  %486 = vmatpush1.bf16.msra.mxu0 %v335
  %487 = vmatprep.subr.bf16.mxu0 0
  %488 = vmatpush1.bf16.msra.mxu0 %v334
  %489 = vmatprep.subr.bf16.mxu0 0
  %490 = vmatpush1.bf16.msra.mxu0 %v333
  %491 = vmatprep.subr.bf16.mxu0 0
  %492 = vmatpush1.bf16.msra.mxu0 %v332
  %493 = vmatprep.subr.bf16.mxu0 0
  %494 = vmatpush2.bf16.msra.mxu0 0
  %495 = vmatprep.subr.bf16.mxu0 0
  %496 = vmatpush2.bf16.msra.mxu0 0
  %497 = vmatprep.subr.bf16.mxu0 0
  %498 = vmatpush2.bf16.msra.mxu0 0
  %499 = vmatprep.subr.bf16.mxu0 0
  %500 = vmatpush2.bf16.msra.mxu0 0
  %501 = vmatprep.subr.bf16.mxu0 0
  %502 = vmatpush2.bf16.msra.mxu0 0
  %503 = vmatprep.subr.bf16.mxu0 0
  %504 = vmatpush2.bf16.msra.mxu0 0
  %505 = vmatprep.subr.bf16.mxu0 0
  %506 = vmatpush2.bf16.msra.mxu0 0
  %507 = vmatprep.subr.bf16.mxu0 0
  %508 = vmatpush2.bf16.msra.mxu0 0
  %509 = vmatprep.mubr.bf16.mxu0 0
  %510 = vmatmul.mubr.bf16.gmra.mxu0 %v374
  %v511 = vpop.f32.mrf.mxu0
  %v512 = vadd.f32 %v463, %v511
  %v513 = vpop.f32.mrf.mxu0
  %v514 = vpop.f32.mrf.mxu0
  %v515 = vadd.f32 %v466, %v514
  %v516 = vpop.f32.mrf.mxu0
  %517 = vmatprep.mubr.bf16.mxu0 0
  %518 = vmatmul.mubr.bf16.gmra.mxu0 %v377
  %v519 = vpop.f32.mrf.mxu0
  %v520 = vadd.f32 %v471, %v519
  %v521 = vpop.f32.mrf.mxu0
  %v522 = vpop.f32.mrf.mxu0
  %v523 = vadd.f32 %v474, %v522
  %v524 = vpop.f32.mrf.mxu0
  %525 = vdwg.mxu0
  %vm526 = vcmp.ge.f32.partialorder %v512, 0.0
  %vm527 = vcmp.ge.f32.partialorder %v515, 0.0
  %vm528 = vcmp.ge.f32.partialorder %v520, 0.0
  %vm529 = vcmp.ge.f32.partialorder %v523, 0.0
  %v530 = vmul.f32 %v512, 0.2
  %v531 = vmul.f32 %v515, 0.2
  %v532 = vmul.f32 %v520, 0.2
  %v533 = vmul.f32 %v523, 0.2
  %v534 = vsel %vm526, %v512, %v530
  %v535 = vsel %vm527, %v515, %v531
  %v536 = vsel %vm528, %v520, %v532
  %v537 = vsel %vm529, %v523, %v533
  %v538 = vxor.u32 %v512, 2147483648
  %v539 = vxor.u32 %v515, 2147483648
  %v540 = vxor.u32 %v520, 2147483648
  %v541 = vxor.u32 %v523, 2147483648
  %v542 = vmul.f32 %v538, 1.442695
  %v543 = vpow.pop %v542
  %v544 = vmul.f32 %v539, 1.442695
  %v545 = vpow.pop %v544
  %v546 = vmul.f32 %v540, 1.442695
  %v547 = vpow.pop %v546
  %v548 = vmul.f32 %v541, 1.442695
  %v549 = vpow.pop %v548
  %v550 = vadd.f32 %v543, 1.0
  %v551 = vadd.f32 %v545, 1.0
  %v552 = vadd.f32 %v547, 1.0
  %v553 = vadd.f32 %v549, 1.0
  %v554 = vrcp.pop %v550
  %v555 = vmul.f32 1.0, %v554
  %v556 = vrcp.pop %v551
  %v557 = vmul.f32 1.0, %v556
  %v558 = vrcp.pop %v552
  %v559 = vmul.f32 1.0, %v558
  %v560 = vrcp.pop %v553
  %v561 = vmul.f32 1.0, %v560
  %566 = vrot.lane.b32.xlu0 %v555, 64
  %v567 = vpop.permute.xlu0 %566
  %568 = vrot.lane.b32.xlu0 %v557, 64
  %v569 = vpop.permute.xlu0 %568
  %570 = vrot.lane.b32.xlu0 %v559, 64
  %v571 = vpop.permute.xlu0 %570
  %572 = vrot.lane.b32.xlu0 %v561, 64
  %v573 = vpop.permute.xlu0 %572
  %v578 = vmul.f32 %v534, %v567
  %v579 = vmul.f32 %v535, %v569
  %v580 = vmul.f32 %v536, %v571
  %v581 = vmul.f32 %v537, %v573
  %v582 = vpack.c.bf16 %v579, %v578
  %v583 = vpack.c.bf16 %v581, %v580
  %v586 = vunpack.c.l.b16 %v582
  %v587 = vunpack.c.h.b16 %v582
  %v588 = vunpack.c.l.b16 %v583
  %v589 = vunpack.c.h.b16 %v583
  %v590 = vpack.c.b16 %v586, %v586
  %v591 = vpack.c.b16 %v587, %v587
  %v592 = vpack.c.b16 %v588, %v588
  %v593 = vpack.c.b16 %v589, %v589
  %vm598 = vcmask 519168
  %599 = vst.msk [vmem:[%s3] sm:$0xf] %vm598, %v590
  %600 = vst.msk [vmem:[%s3 + $0x4] sm:$0xf] %vm598, %v591
  %601 = vst.msk [vmem:[%s3 + $0x8] sm:$0xf] %vm598, %v592
  %602 = vst.msk [vmem:[%s3 + $0xc] sm:$0xf] %vm598, %v593
  // Predicated region
  $region14: #{coarse_forward.29} parent=0 // pred_check
    _
  $region15: #{coarse_forward.29} parent=0 // pred_check_branch
    %604 = sbr.rel (0) target = $region17
  $region16: #{coarse_forward.29} parent=0 // pred_region
    _
  $region17: #{coarse_forward.29} parent=0 // pred_fallthru
    _
  // Predicated region
  $region18: #{coarse_forward.29} parent=0 // pred_check
    _
  $region19: #{coarse_forward.29} parent=0 // pred_check_branch
    %606 = sbr.rel (0) target = $region21
  $region20: #{coarse_forward.29} parent=0 // pred_region
    _
  $region21: #{coarse_forward.29} parent=0 // pred_fallthru
    _

// kernel: coarse_forward.49
$region0: #{coarse_forward.49}
  #allocation0 [shape = 'u32[]', space=smem, size = 0x4, offset = 0x4, fixed_abs, tag = 'smem constant byte address 0x4 - core index']
  #allocation1 [shape = 'u32[144,128]{1,0:T(1,128)}', space=vmem, size = 0x12000, scoped, tag = 'internal scratch']
  %s0 = inlined_call_operand.vmem [shape: bf16[128,576], index: 0, kind: input, shape index: {}]
  %s1 = inlined_call_operand.vmem [shape: bf16[576,128], index: 1, kind: input, shape index: {}]
  %s2 = inlined_call_operand.vmem [shape: f32[1,128], index: 2, kind: input, shape index: {}]
  %s3 = inlined_call_operand.vmem [shape: bf16[128,64], index: 3, kind: output, shape index: {}]
  %s4 = sld [smem:[#allocation0]]
  $region22: #{coarse_forward.49} parent=0
    _
  %s6 = ssub.s32 1, %s4
  %s7 = scalar_select 0, %s6, %s4
  // Predicated region
  $region2: #{coarse_forward.49} parent=0 // pred_check
    _
  $region3: #{coarse_forward.49} parent=0 // pred_check_branch
    %9 = sbr.rel (0) target = $region5
  $region4: #{coarse_forward.49} parent=0 // pred_region
    _
  $region5: #{coarse_forward.49} parent=0 // pred_fallthru
    _
  // Predicated region
  $region6: #{coarse_forward.49} parent=0 // pred_check
    _
  $region7: #{coarse_forward.49} parent=0 // pred_check_branch
    %11 = sbr.rel (0) target = $region9
  $region8: #{coarse_forward.49} parent=0 // pred_region
    _
  $region9: #{coarse_forward.49} parent=0 // pred_fallthru
    _
  // Predicated region
  $region10: #{coarse_forward.49} parent=0 // pred_check
    _
  $region11: #{coarse_forward.49} parent=0 // pred_check_branch
    %13 = sbr.rel (0) target = $region13
  $region12: #{coarse_forward.49} parent=0 // pred_region
    _
  $region13: #{coarse_forward.49} parent=0 // pred_fallthru
    _
  %v15 = vld [vmem:[%s0] sm:$0xff]
  %v16 = vld [vmem:[%s0 + $0x8] sm:$0xff]
  %v17 = vld [vmem:[%s0 + $0x10] sm:$0xf]
  %v18 = vld [vmem:[%s0 + $0x14] sm:$0xff]
  %v19 = vld [vmem:[%s0 + $0x1c] sm:$0xff]
  %v20 = vld [vmem:[%s0 + $0x24] sm:$0xf]
  %v21 = vld [vmem:[%s0 + $0x28] sm:$0xff]
  %v22 = vld [vmem:[%s0 + $0x30] sm:$0xff]
  %v23 = vld [vmem:[%s0 + $0x38] sm:$0xf]
  %v24 = vld [vmem:[%s0 + $0x3c] sm:$0xff]
  %v25 = vld [vmem:[%s0 + $0x44] sm:$0xff]
  %v26 = vld [vmem:[%s0 + $0x4c] sm:$0xf]
  %v27 = vld [vmem:[%s0 + $0x50] sm:$0xff]
  %v28 = vld [vmem:[%s0 + $0x58] sm:$0xff]
  %v29 = vld [vmem:[%s0 + $0x60] sm:$0xf]
  %v30 = vld [vmem:[%s0 + $0x64] sm:$0xff]
  %v31 = vld [vmem:[%s0 + $0x6c] sm:$0xff]
  %v32 = vld [vmem:[%s0 + $0x74] sm:$0xf]
  %v33 = vld [vmem:[%s0 + $0x78] sm:$0xff]
  %v34 = vld [vmem:[%s0 + $0x80] sm:$0xff]
  %v35 = vld [vmem:[%s0 + $0x88] sm:$0xf]
  %v36 = vld [vmem:[%s0 + $0x8c] sm:$0xff]
  %v37 = vld [vmem:[%s0 + $0x94] sm:$0xff]
  %v38 = vld [vmem:[%s0 + $0x9c] sm:$0xf]
  %v39 = vld [vmem:[%s0 + $0xa0] sm:$0xff]
  %v40 = vld [vmem:[%s0 + $0xa8] sm:$0xff]
  %v41 = vld [vmem:[%s0 + $0xb0] sm:$0xf]
  %v42 = vld [vmem:[%s0 + $0xb4] sm:$0xff]
  %v43 = vld [vmem:[%s0 + $0xbc] sm:$0xff]
  %v44 = vld [vmem:[%s0 + $0xc4] sm:$0xf]
  %v45 = vld [vmem:[%s0 + $0xc8] sm:$0xff]
  %v46 = vld [vmem:[%s0 + $0xd0] sm:$0xff]
  %v47 = vld [vmem:[%s0 + $0xd8] sm:$0xf]
  %v48 = vld [vmem:[%s0 + $0xdc] sm:$0xff]
  %v49 = vld [vmem:[%s0 + $0xe4] sm:$0xff]
  %v50 = vld [vmem:[%s0 + $0xec] sm:$0xf]
  %v51 = vld [vmem:[%s0 + $0xf0] sm:$0xff]
  %v52 = vld [vmem:[%s0 + $0xf8] sm:$0xff]
  %v53 = vld [vmem:[%s0 + $0x100] sm:$0xf]
  %v54 = vld [vmem:[%s0 + $0x104] sm:$0xff]
  %v55 = vld [vmem:[%s0 + $0x10c] sm:$0xff]
  %v56 = vld [vmem:[%s0 + $0x114] sm:$0xf]
  %v57 = vld [vmem:[%s0 + $0x118] sm:$0xff]
  %v58 = vld [vmem:[%s0 + $0x120] sm:$0xff]
  %v59 = vld [vmem:[%s0 + $0x128] sm:$0xf]
  %v60 = vld [vmem:[%s0 + $0x12c] sm:$0xff]
  %v61 = vld [vmem:[%s0 + $0x134] sm:$0xff]
  %v62 = vld [vmem:[%s0 + $0x13c] sm:$0xf]
  %v63 = vld [vmem:[%s1] sm:$0xf]
  %v64 = vld [vmem:[%s1 + $0x4] sm:$0xf]
  %v65 = vld [vmem:[%s1 + $0x8] sm:$0xf]
  %v66 = vld [vmem:[%s1 + $0xc] sm:$0xf]
  %v67 = vld [vmem:[%s1 + $0x10] sm:$0xf]
  %v68 = vld [vmem:[%s1 + $0x14] sm:$0xf]
  %v69 = vld [vmem:[%s1 + $0x18] sm:$0xf]
  %v70 = vld [vmem:[%s1 + $0x1c] sm:$0xf]
  %v71 = vld [vmem:[%s1 + $0x20] sm:$0xf]
  %v72 = vld [vmem:[%s1 + $0x24] sm:$0xf]
  %v73 = vld [vmem:[%s1 + $0x28] sm:$0xf]
  %v74 = vld [vmem:[%s1 + $0x2c] sm:$0xf]
  %v75 = vld [vmem:[%s1 + $0x30] sm:$0xf]
  %v76 = vld [vmem:[%s1 + $0x34] sm:$0xf]
  %v77 = vld [vmem:[%s1 + $0x38] sm:$0xf]
  %v78 = vld [vmem:[%s1 + $0x3c] sm:$0xf]
  %v79 = vld [vmem:[%s1 + $0x40] sm:$0xf]
  %v80 = vld [vmem:[%s1 + $0x44] sm:$0xf]
  %v81 = vld [vmem:[%s1 + $0x48] sm:$0xf]
  %v82 = vld [vmem:[%s1 + $0x4c] sm:$0xf]
  %v83 = vld [vmem:[%s1 + $0x50] sm:$0xf]
  %v84 = vld [vmem:[%s1 + $0x54] sm:$0xf]
  %v85 = vld [vmem:[%s1 + $0x58] sm:$0xf]
  %v86 = vld [vmem:[%s1 + $0x5c] sm:$0xf]
  %v87 = vld [vmem:[%s1 + $0x60] sm:$0xf]
  %v88 = vld [vmem:[%s1 + $0x64] sm:$0xf]
  %v89 = vld [vmem:[%s1 + $0x68] sm:$0xf]
  %v90 = vld [vmem:[%s1 + $0x6c] sm:$0xf]
  %v91 = vld [vmem:[%s1 + $0x70] sm:$0xf]
  %v92 = vld [vmem:[%s1 + $0x74] sm:$0xf]
  %v93 = vld [vmem:[%s1 + $0x78] sm:$0xf]
  %v94 = vld [vmem:[%s1 + $0x7c] sm:$0xf]
  %v95 = vld [vmem:[%s1 + $0x80] sm:$0xf]
  %v96 = vld [vmem:[%s1 + $0x84] sm:$0xf]
  %v97 = vld [vmem:[%s1 + $0x88] sm:$0xf]
  %v98 = vld [vmem:[%s1 + $0x8c] sm:$0xf]
  %v99 = vld [vmem:[%s1 + $0x90] sm:$0xf]
  %v100 = vld [vmem:[%s1 + $0x94] sm:$0xf]
  %v101 = vld [vmem:[%s1 + $0x98] sm:$0xf]
  %v102 = vld [vmem:[%s1 + $0x9c] sm:$0xf]
  %v103 = vld [vmem:[%s1 + $0xa0] sm:$0xf]
  %v104 = vld [vmem:[%s1 + $0xa4] sm:$0xf]
  %v105 = vld [vmem:[%s1 + $0xa8] sm:$0xf]
  %v106 = vld [vmem:[%s1 + $0xac] sm:$0xf]
  %v107 = vld [vmem:[%s1 + $0xb0] sm:$0xf]
  %v108 = vld [vmem:[%s1 + $0xb4] sm:$0xf]
  %v109 = vld [vmem:[%s1 + $0xb8] sm:$0xf]
  %v110 = vld [vmem:[%s1 + $0xbc] sm:$0xf]
  %v111 = vld [vmem:[%s1 + $0xc0] sm:$0xf]
  %v112 = vld [vmem:[%s1 + $0xc4] sm:$0xf]
  %v113 = vld [vmem:[%s1 + $0xc8] sm:$0xf]
  %v114 = vld [vmem:[%s1 + $0xcc] sm:$0xf]
  %v115 = vld [vmem:[%s1 + $0xd0] sm:$0xf]
  %v116 = vld [vmem:[%s1 + $0xd4] sm:$0xf]
  %v117 = vld [vmem:[%s1 + $0xd8] sm:$0xf]
  %v118 = vld [vmem:[%s1 + $0xdc] sm:$0xf]
  %v119 = vld [vmem:[%s1 + $0xe0] sm:$0xf]
  %v120 = vld [vmem:[%s1 + $0xe4] sm:$0xf]
  %v121 = vld [vmem:[%s1 + $0xe8] sm:$0xf]
  %v122 = vld [vmem:[%s1 + $0xec] sm:$0xf]
  %v123 = vld [vmem:[%s1 + $0xf0] sm:$0xf]
  %v124 = vld [vmem:[%s1 + $0xf4] sm:$0xf]
  %v125 = vld [vmem:[%s1 + $0xf8] sm:$0xf]
  %v126 = vld [vmem:[%s1 + $0xfc] sm:$0xf]
  %v127 = vld [vmem:[%s1 + $0x100] sm:$0xf]
  %v128 = vld [vmem:[%s1 + $0x104] sm:$0xf]
  %v129 = vld [vmem:[%s1 + $0x108] sm:$0xf]
  %v130 = vld [vmem:[%s1 + $0x10c] sm:$0xf]
  %v131 = vld [vmem:[%s1 + $0x110] sm:$0xf]
  %v132 = vld [vmem:[%s1 + $0x114] sm:$0xf]
  %v133 = vld [vmem:[%s1 + $0x118] sm:$0xf]
  %v134 = vld [vmem:[%s1 + $0x11c] sm:$0xf]
  %v135 = vld [vmem:[%s2] sm:$0x1]
  %v137 = vlaneseq
  %v138 = vshrl.u32 %v137, 7
  %v139 = vsub.s32 0, %v138
  %v140 = vrot.slane %v135, %v139
  %v190 = vunpack.c.l.b16 %v15
  %v191 = vunpack.c.h.b16 %v15
  %v192 = vunpack.c.l.b16 %v16
  %v193 = vunpack.c.h.b16 %v16
  %v194 = vunpack.c.l.b16 %v17
  %v195 = vunpack.c.l.b16 %v18
  %v196 = vunpack.c.h.b16 %v18
  %v197 = vunpack.c.l.b16 %v19
  %v198 = vunpack.c.h.b16 %v19
  %v199 = vunpack.c.l.b16 %v20
  %v200 = vunpack.c.l.b16 %v21
  %v201 = vunpack.c.h.b16 %v21
  %v202 = vunpack.c.l.b16 %v22
  %v203 = vunpack.c.h.b16 %v22
  %v204 = vunpack.c.l.b16 %v23
  %v205 = vunpack.c.l.b16 %v24
  %v206 = vunpack.c.h.b16 %v24
  %v207 = vunpack.c.l.b16 %v25
  %v208 = vunpack.c.h.b16 %v25
  %v209 = vunpack.c.l.b16 %v26
  %v210 = vunpack.c.l.b16 %v27
  %v211 = vunpack.c.h.b16 %v27
  %v212 = vunpack.c.l.b16 %v28
  %v213 = vunpack.c.h.b16 %v28
  %v214 = vunpack.c.l.b16 %v29
  %v215 = vunpack.c.l.b16 %v30
  %v216 = vunpack.c.h.b16 %v30
  %v217 = vunpack.c.l.b16 %v31
  %v218 = vunpack.c.h.b16 %v31
  %v219 = vunpack.c.l.b16 %v32
  %v220 = vunpack.c.l.b16 %v33
  %v221 = vunpack.c.h.b16 %v33
  %v222 = vunpack.c.l.b16 %v34
  %v223 = vunpack.c.h.b16 %v34
  %v224 = vunpack.c.l.b16 %v35
  %v225 = vunpack.c.l.b16 %v36
  %v226 = vunpack.c.h.b16 %v36
  %v227 = vunpack.c.l.b16 %v37
  %v228 = vunpack.c.h.b16 %v37
  %v229 = vunpack.c.l.b16 %v38
  %v230 = vunpack.c.l.b16 %v39
  %v231 = vunpack.c.h.b16 %v39
  %v232 = vunpack.c.l.b16 %v40
  %v233 = vunpack.c.h.b16 %v40
  %v234 = vunpack.c.l.b16 %v41
  %v235 = vunpack.c.l.b16 %v42
  %v236 = vunpack.c.h.b16 %v42
  %v237 = vunpack.c.l.b16 %v43
  %v238 = vunpack.c.h.b16 %v43
  %v239 = vunpack.c.l.b16 %v44
  %v240 = vunpack.c.l.b16 %v45
  %v241 = vunpack.c.h.b16 %v45
  %v242 = vunpack.c.l.b16 %v46
  %v243 = vunpack.c.h.b16 %v46
  %v244 = vunpack.c.l.b16 %v47
  %v245 = vunpack.c.l.b16 %v48
  %v246 = vunpack.c.h.b16 %v48
  %v247 = vunpack.c.l.b16 %v49
  %v248 = vunpack.c.h.b16 %v49
  %v249 = vunpack.c.l.b16 %v50
  %v250 = vunpack.c.l.b16 %v51
  %v251 = vunpack.c.h.b16 %v51
  %v252 = vunpack.c.l.b16 %v52
  %v253 = vunpack.c.h.b16 %v52
  %v254 = vunpack.c.l.b16 %v53
  %v255 = vunpack.c.l.b16 %v54
  %v256 = vunpack.c.h.b16 %v54
  %v257 = vunpack.c.l.b16 %v55
  %v258 = vunpack.c.h.b16 %v55
  %v259 = vunpack.c.l.b16 %v56
  %v260 = vunpack.c.l.b16 %v57
  %v261 = vunpack.c.h.b16 %v57
  %v262 = vunpack.c.l.b16 %v58
  %v263 = vunpack.c.h.b16 %v58
  %v264 = vunpack.c.l.b16 %v59
  %v265 = vunpack.c.l.b16 %v60
  %v266 = vunpack.c.h.b16 %v60
  %v267 = vunpack.c.l.b16 %v61
  %v268 = vunpack.c.h.b16 %v61
  %v269 = vunpack.c.l.b16 %v62
  %v270 = vpack.c.b16 %v195, %v190
  %v271 = vpack.c.b16 %v196, %v191
  %v272 = vpack.c.b16 %v197, %v192
  %v273 = vpack.c.b16 %v198, %v193
  %v274 = vpack.c.b16 %v199, %v194
  %v275 = vpack.c.b16 %v205, %v200
  %v276 = vpack.c.b16 %v206, %v201
  %v277 = vpack.c.b16 %v207, %v202
  %v278 = vpack.c.b16 %v208, %v203
  %v279 = vpack.c.b16 %v209, %v204
  %v280 = vpack.c.b16 %v215, %v210
  %v281 = vpack.c.b16 %v216, %v211
  %v282 = vpack.c.b16 %v217, %v212
  %v283 = vpack.c.b16 %v218, %v213
  %v284 = vpack.c.b16 %v219, %v214
  %v285 = vpack.c.b16 %v225, %v220
  %v286 = vpack.c.b16 %v226, %v221
  %v287 = vpack.c.b16 %v227, %v222
  %v288 = vpack.c.b16 %v228, %v223
  %v289 = vpack.c.b16 %v229, %v224
  %v290 = vpack.c.b16 %v235, %v230
  %v291 = vpack.c.b16 %v236, %v231
  %v292 = vpack.c.b16 %v237, %v232
  %v293 = vpack.c.b16 %v238, %v233
  %v294 = vpack.c.b16 %v239, %v234
  %v295 = vpack.c.b16 %v245, %v240
  %v296 = vpack.c.b16 %v246, %v241
  %v297 = vpack.c.b16 %v247, %v242
  %v298 = vpack.c.b16 %v248, %v243
  %v299 = vpack.c.b16 %v249, %v244
  %v300 = vpack.c.b16 %v255, %v250
  %v301 = vpack.c.b16 %v256, %v251
  %v302 = vpack.c.b16 %v257, %v252
  %v303 = vpack.c.b16 %v258, %v253
  %v304 = vpack.c.b16 %v259, %v254
  %v305 = vpack.c.b16 %v265, %v260
  %v306 = vpack.c.b16 %v266, %v261
  %v307 = vpack.c.b16 %v267, %v262
  %v308 = vpack.c.b16 %v268, %v263
  %v309 = vpack.c.b16 %v269, %v264
  %v414 = vunpack.c.l.b16 %v63
  %v415 = vunpack.c.l.b16 %v64
  %v416 = vunpack.c.l.b16 %v65
  %v417 = vunpack.c.l.b16 %v66
  %v418 = vunpack.c.l.b16 %v67
  %v419 = vunpack.c.l.b16 %v68
  %v420 = vunpack.c.l.b16 %v69
  %v421 = vunpack.c.l.b16 %v70
  %v422 = vunpack.c.l.b16 %v71
  %v423 = vunpack.c.l.b16 %v72
  %v424 = vunpack.c.l.b16 %v73
  %v425 = vunpack.c.l.b16 %v74
  %v426 = vunpack.c.l.b16 %v75
  %v427 = vunpack.c.l.b16 %v76
  %v428 = vunpack.c.l.b16 %v77
  %v429 = vunpack.c.l.b16 %v78
  %v430 = vunpack.c.l.b16 %v79
  %v431 = vunpack.c.l.b16 %v80
  %v432 = vunpack.c.l.b16 %v81
  %v433 = vunpack.c.l.b16 %v82
  %v434 = vunpack.c.l.b16 %v83
  %v435 = vunpack.c.l.b16 %v84
  %v436 = vunpack.c.l.b16 %v85
  %v437 = vunpack.c.l.b16 %v86
  %v438 = vunpack.c.l.b16 %v87
  %v439 = vunpack.c.l.b16 %v88
  %v440 = vunpack.c.l.b16 %v89
  %v441 = vunpack.c.l.b16 %v90
  %v442 = vunpack.c.l.b16 %v91
  %v443 = vunpack.c.l.b16 %v92
  %v444 = vunpack.c.l.b16 %v93
  %v445 = vunpack.c.l.b16 %v94
  %v446 = vunpack.c.l.b16 %v95
  %v447 = vunpack.c.l.b16 %v96
  %v448 = vunpack.c.l.b16 %v97
  %v449 = vunpack.c.l.b16 %v98
  %v450 = vunpack.c.l.b16 %v99
  %v451 = vunpack.c.l.b16 %v100
  %v452 = vunpack.c.l.b16 %v101
  %v453 = vunpack.c.l.b16 %v102
  %v454 = vunpack.c.l.b16 %v103
  %v455 = vunpack.c.l.b16 %v104
  %v456 = vunpack.c.l.b16 %v105
  %v457 = vunpack.c.l.b16 %v106
  %v458 = vunpack.c.l.b16 %v107
  %v459 = vunpack.c.l.b16 %v108
  %v460 = vunpack.c.l.b16 %v109
  %v461 = vunpack.c.l.b16 %v110
  %v462 = vunpack.c.l.b16 %v111
  %v463 = vunpack.c.l.b16 %v112
  %v464 = vunpack.c.l.b16 %v113
  %v465 = vunpack.c.l.b16 %v114
  %v466 = vunpack.c.l.b16 %v115
  %v467 = vunpack.c.l.b16 %v116
  %v468 = vunpack.c.l.b16 %v117
  %v469 = vunpack.c.l.b16 %v118
  %v470 = vunpack.c.l.b16 %v119
  %v471 = vunpack.c.l.b16 %v120
  %v472 = vunpack.c.l.b16 %v121
  %v473 = vunpack.c.l.b16 %v122
  %v474 = vunpack.c.l.b16 %v123
  %v475 = vunpack.c.l.b16 %v124
  %v476 = vunpack.c.l.b16 %v125
  %v477 = vunpack.c.l.b16 %v126
  %v478 = vunpack.c.l.b16 %v127
  %v479 = vunpack.c.l.b16 %v128
  %v480 = vunpack.c.l.b16 %v129
  %v481 = vunpack.c.l.b16 %v130
  %v482 = vunpack.c.l.b16 %v131
  %v483 = vunpack.c.l.b16 %v132
  %v484 = vunpack.c.l.b16 %v133
  %v485 = vunpack.c.l.b16 %v134
  %v486 = vpack.c.b16 %v415, %v414
  %v487 = vpack.c.b16 %v417, %v416
  %v488 = vpack.c.b16 %v419, %v418
  %v489 = vpack.c.b16 %v421, %v420
  %v490 = vpack.c.b16 %v423, %v422
  %v491 = vpack.c.b16 %v425, %v424
  %v492 = vpack.c.b16 %v427, %v426
  %v493 = vpack.c.b16 %v429, %v428
  %v494 = vpack.c.b16 %v431, %v430
  %v495 = vpack.c.b16 %v433, %v432
  %v496 = vpack.c.b16 %v435, %v434
  %v497 = vpack.c.b16 %v437, %v436
  %v498 = vpack.c.b16 %v439, %v438
  %v499 = vpack.c.b16 %v441, %v440
  %v500 = vpack.c.b16 %v443, %v442
  %v501 = vpack.c.b16 %v445, %v444
  %v502 = vpack.c.b16 %v447, %v446
  %v503 = vpack.c.b16 %v449, %v448
  %v504 = vpack.c.b16 %v451, %v450
  %v505 = vpack.c.b16 %v453, %v452
  %v506 = vpack.c.b16 %v455, %v454
  %v507 = vpack.c.b16 %v457, %v456
  %v508 = vpack.c.b16 %v459, %v458
  %v509 = vpack.c.b16 %v461, %v460
  %v510 = vpack.c.b16 %v463, %v462
  %v511 = vpack.c.b16 %v465, %v464
  %v512 = vpack.c.b16 %v467, %v466
  %v513 = vpack.c.b16 %v469, %v468
  %v514 = vpack.c.b16 %v471, %v470
  %v515 = vpack.c.b16 %v473, %v472
  %v516 = vpack.c.b16 %v475, %v474
  %v517 = vpack.c.b16 %v477, %v476
  %v518 = vpack.c.b16 %v479, %v478
  %v519 = vpack.c.b16 %v481, %v480
  %v520 = vpack.c.b16 %v483, %v482
  %v521 = vpack.c.b16 %v485, %v484
  %vm558 = vcmask 523264
  %v560 = vsel %vm558, %v274, 0
  %v563 = vsel %vm558, %v279, 0
  %v566 = vsel %vm558, %v284, 0
  %v569 = vsel %vm558, %v289, 0
  %v572 = vsel %vm558, %v294, 0
  %v575 = vsel %vm558, %v299, 0
  %v578 = vsel %vm558, %v304, 0
  %v581 = vsel %vm558, %v309, 0
  %583 = vmatprep.subr.bf16.mxu0 0
  %584 = vmatpush1.bf16.msra.mxu0 %v493
  %585 = vmatprep.subr.bf16.mxu0 0
  %586 = vmatpush1.bf16.msra.mxu0 %v492
  %587 = vmatprep.subr.bf16.mxu0 0
  %588 = vmatpush1.bf16.msra.mxu0 %v491
  %589 = vmatprep.subr.bf16.mxu0 0
  %590 = vmatpush1.bf16.msra.mxu0 %v490
  %591 = vmatprep.subr.bf16.mxu0 0
  %592 = vmatpush1.bf16.msra.mxu0 %v489
  %593 = vmatprep.subr.bf16.mxu0 0
  %594 = vmatpush1.bf16.msra.mxu0 %v488
  %595 = vmatprep.subr.bf16.mxu0 0
  %596 = vmatpush1.bf16.msra.mxu0 %v487
  %597 = vmatprep.subr.bf16.mxu0 0
  %598 = vmatpush1.bf16.msra.mxu0 %v486
  %599 = vmatprep.subr.bf16.mxu0 0
  %600 = vmatpush2.bf16.msra.mxu0 %v501
  %601 = vmatprep.subr.bf16.mxu0 0
  %602 = vmatpush2.bf16.msra.mxu0 %v500
  %603 = vmatprep.subr.bf16.mxu0 0
  %604 = vmatpush2.bf16.msra.mxu0 %v499
  %605 = vmatprep.subr.bf16.mxu0 0
  %606 = vmatpush2.bf16.msra.mxu0 %v498
  %607 = vmatprep.subr.bf16.mxu0 0
  %608 = vmatpush2.bf16.msra.mxu0 %v497
  %609 = vmatprep.subr.bf16.mxu0 0
  %610 = vmatpush2.bf16.msra.mxu0 %v496
  %611 = vmatprep.subr.bf16.mxu0 0
  %612 = vmatpush2.bf16.msra.mxu0 %v495
  %613 = vmatprep.subr.bf16.mxu0 0
  %614 = vmatpush2.bf16.msra.mxu0 %v494
  %615 = vmatprep.mubr.bf16.mxu0 %v271
  %616 = vmatmul.mubr.bf16.gmra.mxu0 %v270
  %v617 = vpop.f32.mrf.mxu0
  %v618 = vadd.f32 %v140, %v617
  %v619 = vpop.f32.mrf.mxu0
  %v620 = vpop.f32.mrf.mxu0
  %v621 = vadd.f32 %v140, %v620
  %v622 = vpop.f32.mrf.mxu0
  %623 = vmatprep.mubr.bf16.mxu0 %v276
  %624 = vmatmul.mubr.bf16.gmra.mxu0 %v275
  %v625 = vpop.f32.mrf.mxu0
  %v626 = vadd.f32 %v140, %v625
  %v627 = vpop.f32.mrf.mxu0
  %v628 = vpop.f32.mrf.mxu0
  %v629 = vadd.f32 %v140, %v628
  %v630 = vpop.f32.mrf.mxu0
  %631 = vmatprep.mubr.bf16.mxu0 %v281
  %632 = vmatmul.mubr.bf16.gmra.mxu0 %v280
  %v633 = vpop.f32.mrf.mxu0
  %v634 = vadd.f32 %v140, %v633
  %v635 = vpop.f32.mrf.mxu0
  %v636 = vpop.f32.mrf.mxu0
  %v637 = vadd.f32 %v140, %v636
  %v638 = vpop.f32.mrf.mxu0
  %639 = vmatprep.mubr.bf16.mxu0 %v286
  %640 = vmatmul.mubr.bf16.gmra.mxu0 %v285
  %v641 = vpop.f32.mrf.mxu0
  %v642 = vadd.f32 %v140, %v641
  %v643 = vpop.f32.mrf.mxu0
  %v644 = vpop.f32.mrf.mxu0
  %v645 = vadd.f32 %v140, %v644
  %v646 = vpop.f32.mrf.mxu0
  %647 = vmatprep.mubr.bf16.mxu0 %v291
  %648 = vmatmul.mubr.bf16.gmra.mxu0 %v290
  %v649 = vpop.f32.mrf.mxu0
  %v650 = vadd.f32 %v140, %v649
  %v651 = vpop.f32.mrf.mxu0
  %v652 = vpop.f32.mrf.mxu0
  %v653 = vadd.f32 %v140, %v652
  %v654 = vpop.f32.mrf.mxu0
  %655 = vmatprep.mubr.bf16.mxu0 %v296
  %656 = vmatmul.mubr.bf16.gmra.mxu0 %v295
  %v657 = vpop.f32.mrf.mxu0
  %v658 = vadd.f32 %v140, %v657
  %v659 = vpop.f32.mrf.mxu0
  %v660 = vpop.f32.mrf.mxu0
  %v661 = vadd.f32 %v140, %v660
  %v662 = vpop.f32.mrf.mxu0
  %663 = vmatprep.mubr.bf16.mxu0 %v301
  %664 = vmatmul.mubr.bf16.gmra.mxu0 %v300
  %v665 = vpop.f32.mrf.mxu0
  %v666 = vadd.f32 %v140, %v665
  %v667 = vpop.f32.mrf.mxu0
  %v668 = vpop.f32.mrf.mxu0
  %v669 = vadd.f32 %v140, %v668
  %v670 = vpop.f32.mrf.mxu0
  %671 = vmatprep.mubr.bf16.mxu0 %v306
  %672 = vmatmul.mubr.bf16.gmra.mxu0 %v305
  %v673 = vpop.f32.mrf.mxu0
  %v674 = vadd.f32 %v140, %v673
  %v675 = vpop.f32.mrf.mxu0
  %v676 = vpop.f32.mrf.mxu0
  %v677 = vadd.f32 %v140, %v676
  %v678 = vpop.f32.mrf.mxu0
  %679 = vdwg.mxu0
  %680 = vmatprep.subr.bf16.mxu0 0
  %681 = vmatpush1.bf16.msra.mxu0 %v509
  %682 = vmatprep.subr.bf16.mxu0 0
  %683 = vmatpush1.bf16.msra.mxu0 %v508
  %684 = vmatprep.subr.bf16.mxu0 0
  %685 = vmatpush1.bf16.msra.mxu0 %v507
  %686 = vmatprep.subr.bf16.mxu0 0
  %687 = vmatpush1.bf16.msra.mxu0 %v506
  %688 = vmatprep.subr.bf16.mxu0 0
  %689 = vmatpush1.bf16.msra.mxu0 %v505
  %690 = vmatprep.subr.bf16.mxu0 0
  %691 = vmatpush1.bf16.msra.mxu0 %v504
  %692 = vmatprep.subr.bf16.mxu0 0
  %693 = vmatpush1.bf16.msra.mxu0 %v503
  %694 = vmatprep.subr.bf16.mxu0 0
  %695 = vmatpush1.bf16.msra.mxu0 %v502
  %696 = vmatprep.subr.bf16.mxu0 0
  %697 = vmatpush2.bf16.msra.mxu0 %v517
  %698 = vmatprep.subr.bf16.mxu0 0
  %699 = vmatpush2.bf16.msra.mxu0 %v516
  %700 = vmatprep.subr.bf16.mxu0 0
  %701 = vmatpush2.bf16.msra.mxu0 %v515
  %702 = vmatprep.subr.bf16.mxu0 0
  %703 = vmatpush2.bf16.msra.mxu0 %v514
  %704 = vmatprep.subr.bf16.mxu0 0
  %705 = vmatpush2.bf16.msra.mxu0 %v513
  %706 = vmatprep.subr.bf16.mxu0 0
  %707 = vmatpush2.bf16.msra.mxu0 %v512
  %708 = vmatprep.subr.bf16.mxu0 0
  %709 = vmatpush2.bf16.msra.mxu0 %v511
  %710 = vmatprep.subr.bf16.mxu0 0
  %711 = vmatpush2.bf16.msra.mxu0 %v510
  %712 = vmatprep.mubr.bf16.mxu0 %v273
  %713 = vmatmul.mubr.bf16.gmra.mxu0 %v272
  %v714 = vpop.f32.mrf.mxu0
  %v715 = vadd.f32 %v618, %v714
  %v716 = vpop.f32.mrf.mxu0
  %v717 = vpop.f32.mrf.mxu0
  %v718 = vadd.f32 %v621, %v717
  %v719 = vpop.f32.mrf.mxu0
  %720 = vmatprep.mubr.bf16.mxu0 %v278
  %721 = vmatmul.mubr.bf16.gmra.mxu0 %v277
  %v722 = vpop.f32.mrf.mxu0
  %v723 = vadd.f32 %v626, %v722
  %v724 = vpop.f32.mrf.mxu0
  %v725 = vpop.f32.mrf.mxu0
  %v726 = vadd.f32 %v629, %v725
  %v727 = vpop.f32.mrf.mxu0
  %728 = vmatprep.mubr.bf16.mxu0 %v283
  %729 = vmatmul.mubr.bf16.gmra.mxu0 %v282
  %v730 = vpop.f32.mrf.mxu0
  %v731 = vadd.f32 %v634, %v730
  %v732 = vpop.f32.mrf.mxu0
  %v733 = vpop.f32.mrf.mxu0
  %v734 = vadd.f32 %v637, %v733
  %v735 = vpop.f32.mrf.mxu0
  %736 = vmatprep.mubr.bf16.mxu0 %v288
  %737 = vmatmul.mubr.bf16.gmra.mxu0 %v287
  %v738 = vpop.f32.mrf.mxu0
  %v739 = vadd.f32 %v642, %v738
  %v740 = vpop.f32.mrf.mxu0
  %v741 = vpop.f32.mrf.mxu0
  %v742 = vadd.f32 %v645, %v741
  %v743 = vpop.f32.mrf.mxu0
  %744 = vmatprep.mubr.bf16.mxu0 %v293
  %745 = vmatmul.mubr.bf16.gmra.mxu0 %v292
  %v746 = vpop.f32.mrf.mxu0
  %v747 = vadd.f32 %v650, %v746
  %v748 = vpop.f32.mrf.mxu0
  %v749 = vpop.f32.mrf.mxu0
  %v750 = vadd.f32 %v653, %v749
  %v751 = vpop.f32.mrf.mxu0
  %752 = vmatprep.mubr.bf16.mxu0 %v298
  %753 = vmatmul.mubr.bf16.gmra.mxu0 %v297
  %v754 = vpop.f32.mrf.mxu0
  %v755 = vadd.f32 %v658, %v754
  %v756 = vpop.f32.mrf.mxu0
  %v757 = vpop.f32.mrf.mxu0
  %v758 = vadd.f32 %v661, %v757
  %v759 = vpop.f32.mrf.mxu0
  %760 = vmatprep.mubr.bf16.mxu0 %v303
  %761 = vmatmul.mubr.bf16.gmra.mxu0 %v302
  %v762 = vpop.f32.mrf.mxu0
  %v763 = vadd.f32 %v666, %v762
  %v764 = vpop.f32.mrf.mxu0
  %v765 = vpop.f32.mrf.mxu0
  %v766 = vadd.f32 %v669, %v765
  %v767 = vpop.f32.mrf.mxu0
  %768 = vmatprep.mubr.bf16.mxu0 %v308
  %769 = vmatmul.mubr.bf16.gmra.mxu0 %v307
  %v770 = vpop.f32.mrf.mxu0
  %v771 = vadd.f32 %v674, %v770
  %v772 = vpop.f32.mrf.mxu0
  %v773 = vpop.f32.mrf.mxu0
  %v774 = vadd.f32 %v677, %v773
  %v775 = vpop.f32.mrf.mxu0
  %776 = vdwg.mxu0
  %777 = vmatprep.subr.bf16.mxu0 0
  %778 = vmatpush1.bf16.msra.mxu0 0
  %779 = vmatprep.subr.bf16.mxu0 0
  %780 = vmatpush1.bf16.msra.mxu0 0
  %781 = vmatprep.subr.bf16.mxu0 0
  %782 = vmatpush1.bf16.msra.mxu0 0
  %783 = vmatprep.subr.bf16.mxu0 0
  %784 = vmatpush1.bf16.msra.mxu0 0
  %785 = vmatprep.subr.bf16.mxu0 0
  %786 = vmatpush1.bf16.msra.mxu0 %v521
  %787 = vmatprep.subr.bf16.mxu0 0
  %788 = vmatpush1.bf16.msra.mxu0 %v520
  %789 = vmatprep.subr.bf16.mxu0 0
  %790 = vmatpush1.bf16.msra.mxu0 %v519
  %791 = vmatprep.subr.bf16.mxu0 0
  %792 = vmatpush1.bf16.msra.mxu0 %v518
  %793 = vmatprep.subr.bf16.mxu0 0
  %794 = vmatpush2.bf16.msra.mxu0 0
  %795 = vmatprep.subr.bf16.mxu0 0
  %796 = vmatpush2.bf16.msra.mxu0 0
  %797 = vmatprep.subr.bf16.mxu0 0
  %798 = vmatpush2.bf16.msra.mxu0 0
  %799 = vmatprep.subr.bf16.mxu0 0
  %800 = vmatpush2.bf16.msra.mxu0 0
  %801 = vmatprep.subr.bf16.mxu0 0
  %802 = vmatpush2.bf16.msra.mxu0 0
  %803 = vmatprep.subr.bf16.mxu0 0
  %804 = vmatpush2.bf16.msra.mxu0 0
  %805 = vmatprep.subr.bf16.mxu0 0
  %806 = vmatpush2.bf16.msra.mxu0 0
  %807 = vmatprep.subr.bf16.mxu0 0
  %808 = vmatpush2.bf16.msra.mxu0 0
  %809 = vmatprep.mubr.bf16.mxu0 0
  %810 = vmatmul.mubr.bf16.gmra.mxu0 %v560
  %v811 = vpop.f32.mrf.mxu0
  %v812 = vadd.f32 %v715, %v811
  %v813 = vpop.f32.mrf.mxu0
  %v814 = vpop.f32.mrf.mxu0
  %v815 = vadd.f32 %v718, %v814
  %v816 = vpop.f32.mrf.mxu0
  %817 = vmatprep.mubr.bf16.mxu0 0
  %818 = vmatmul.mubr.bf16.gmra.mxu0 %v563
  %v819 = vpop.f32.mrf.mxu0
  %v820 = vadd.f32 %v723, %v819
  %v821 = vpop.f32.mrf.mxu0
  %v822 = vpop.f32.mrf.mxu0
  %v823 = vadd.f32 %v726, %v822
  %v824 = vpop.f32.mrf.mxu0
  %825 = vmatprep.mubr.bf16.mxu0 0
  %826 = vmatmul.mubr.bf16.gmra.mxu0 %v566
  %v827 = vpop.f32.mrf.mxu0
  %v828 = vadd.f32 %v731, %v827
  %v829 = vpop.f32.mrf.mxu0
  %v830 = vpop.f32.mrf.mxu0
  %v831 = vadd.f32 %v734, %v830
  %v832 = vpop.f32.mrf.mxu0
  %833 = vmatprep.mubr.bf16.mxu0 0
  %834 = vmatmul.mubr.bf16.gmra.mxu0 %v569
  %v835 = vpop.f32.mrf.mxu0
  %v836 = vadd.f32 %v739, %v835
  %v837 = vpop.f32.mrf.mxu0
  %v838 = vpop.f32.mrf.mxu0
  %v839 = vadd.f32 %v742, %v838
  %v840 = vpop.f32.mrf.mxu0
  %841 = vmatprep.mubr.bf16.mxu0 0
  %842 = vmatmul.mubr.bf16.gmra.mxu0 %v572
  %v843 = vpop.f32.mrf.mxu0
  %v844 = vadd.f32 %v747, %v843
  %v845 = vpop.f32.mrf.mxu0
  %v846 = vpop.f32.mrf.mxu0
  %v847 = vadd.f32 %v750, %v846
  %v848 = vpop.f32.mrf.mxu0
  %849 = vmatprep.mubr.bf16.mxu0 0
  %850 = vmatmul.mubr.bf16.gmra.mxu0 %v575
  %v851 = vpop.f32.mrf.mxu0
  %v852 = vadd.f32 %v755, %v851
  %v853 = vpop.f32.mrf.mxu0
  %v854 = vpop.f32.mrf.mxu0
  %v855 = vadd.f32 %v758, %v854
  %v856 = vpop.f32.mrf.mxu0
  %857 = vmatprep.mubr.bf16.mxu0 0
  %858 = vmatmul.mubr.bf16.gmra.mxu0 %v578
  %v859 = vpop.f32.mrf.mxu0
  %v860 = vadd.f32 %v763, %v859
  %v861 = vpop.f32.mrf.mxu0
  %v862 = vpop.f32.mrf.mxu0
  %v863 = vadd.f32 %v766, %v862
  %v864 = vpop.f32.mrf.mxu0
  %865 = vmatprep.mubr.bf16.mxu0 0
  %866 = vmatmul.mubr.bf16.gmra.mxu0 %v581
  %v867 = vpop.f32.mrf.mxu0
  %v868 = vadd.f32 %v771, %v867
  %v869 = vpop.f32.mrf.mxu0
  %v870 = vpop.f32.mrf.mxu0
  %v871 = vadd.f32 %v774, %v870
  %v872 = vpop.f32.mrf.mxu0
  %873 = vdwg.mxu0
  %vm874 = vcmp.ge.f32.partialorder %v812, 0.0
  %vm875 = vcmp.ge.f32.partialorder %v815, 0.0
  %vm876 = vcmp.ge.f32.partialorder %v820, 0.0
  %vm877 = vcmp.ge.f32.partialorder %v823, 0.0
  %vm878 = vcmp.ge.f32.partialorder %v828, 0.0
  %vm879 = vcmp.ge.f32.partialorder %v831, 0.0
  %vm880 = vcmp.ge.f32.partialorder %v836, 0.0
  %vm881 = vcmp.ge.f32.partialorder %v839, 0.0
  %vm882 = vcmp.ge.f32.partialorder %v844, 0.0
  %vm883 = vcmp.ge.f32.partialorder %v847, 0.0
  %vm884 = vcmp.ge.f32.partialorder %v852, 0.0
  %vm885 = vcmp.ge.f32.partialorder %v855, 0.0
  %vm886 = vcmp.ge.f32.partialorder %v860, 0.0
  %vm887 = vcmp.ge.f32.partialorder %v863, 0.0
  %vm888 = vcmp.ge.f32.partialorder %v868, 0.0
  %vm889 = vcmp.ge.f32.partialorder %v871, 0.0
  %v890 = vmul.f32 %v812, 0.2
  %v891 = vmul.f32 %v815, 0.2
  %v892 = vmul.f32 %v820, 0.2
  %v893 = vmul.f32 %v823, 0.2
  %v894 = vmul.f32 %v828, 0.2
  %v895 = vmul.f32 %v831, 0.2
  %v896 = vmul.f32 %v836, 0.2
  %v897 = vmul.f32 %v839, 0.2
  %v898 = vmul.f32 %v844, 0.2
  %v899 = vmul.f32 %v847, 0.2
  %v900 = vmul.f32 %v852, 0.2
  %v901 = vmul.f32 %v855, 0.2
  %v902 = vmul.f32 %v860, 0.2
  %v903 = vmul.f32 %v863, 0.2
  %v904 = vmul.f32 %v868, 0.2
  %v905 = vmul.f32 %v871, 0.2
  %v906 = vsel %vm874, %v812, %v890
  %v907 = vsel %vm875, %v815, %v891
  %v908 = vsel %vm876, %v820, %v892
  %v909 = vsel %vm877, %v823, %v893
  %v910 = vsel %vm878, %v828, %v894
  %v911 = vsel %vm879, %v831, %v895
  %v912 = vsel %vm880, %v836, %v896
  %v913 = vsel %vm881, %v839, %v897
  %v914 = vsel %vm882, %v844, %v898
  %v915 = vsel %vm883, %v847, %v899
  %v916 = vsel %vm884, %v852, %v900
  %v917 = vsel %vm885, %v855, %v901
  %v918 = vsel %vm886, %v860, %v902
  %v919 = vsel %vm887, %v863, %v903
  %v920 = vsel %vm888, %v868, %v904
  %v921 = vsel %vm889, %v871, %v905
  %v922 = vxor.u32 %v812, 2147483648
  %v923 = vxor.u32 %v815, 2147483648
  %v924 = vxor.u32 %v820, 2147483648
  %v925 = vxor.u32 %v823, 2147483648
  %v926 = vxor.u32 %v828, 2147483648
  %v927 = vxor.u32 %v831, 2147483648
  %v928 = vxor.u32 %v836, 2147483648
  %v929 = vxor.u32 %v839, 2147483648
  %v930 = vxor.u32 %v844, 2147483648
  %v931 = vxor.u32 %v847, 2147483648
  %v932 = vxor.u32 %v852, 2147483648
  %v933 = vxor.u32 %v855, 2147483648
  %v934 = vxor.u32 %v860, 2147483648
  %v935 = vxor.u32 %v863, 2147483648
  %v936 = vxor.u32 %v868, 2147483648
  %v937 = vxor.u32 %v871, 2147483648
  %v938 = vmul.f32 %v922, 1.442695
  %v939 = vpow.pop %v938
  %v940 = vmul.f32 %v923, 1.442695
  %v941 = vpow.pop %v940
  %v942 = vmul.f32 %v924, 1.442695
  %v943 = vpow.pop %v942
  %v944 = vmul.f32 %v925, 1.442695
  %v945 = vpow.pop %v944
  %v946 = vmul.f32 %v926, 1.442695
  %v947 = vpow.pop %v946
  %v948 = vmul.f32 %v927, 1.442695
  %v949 = vpow.pop %v948
  %v950 = vmul.f32 %v928, 1.442695
  %v951 = vpow.pop %v950
  %v952 = vmul.f32 %v929, 1.442695
  %v953 = vpow.pop %v952
  %v954 = vmul.f32 %v930, 1.442695
  %v955 = vpow.pop %v954
  %v956 = vmul.f32 %v931, 1.442695
  %v957 = vpow.pop %v956
  %v958 = vmul.f32 %v932, 1.442695
  %v959 = vpow.pop %v958
  %v960 = vmul.f32 %v933, 1.442695
  %v961 = vpow.pop %v960
  %v962 = vmul.f32 %v934, 1.442695
  %v963 = vpow.pop %v962
  %v964 = vmul.f32 %v935, 1.442695
  %v965 = vpow.pop %v964
  %v966 = vmul.f32 %v936, 1.442695
  %v967 = vpow.pop %v966
  %v968 = vmul.f32 %v937, 1.442695
  %v969 = vpow.pop %v968
  %v970 = vadd.f32 %v939, 1.0
  %v971 = vadd.f32 %v941, 1.0
  %v972 = vadd.f32 %v943, 1.0
  %v973 = vadd.f32 %v945, 1.0
  %v974 = vadd.f32 %v947, 1.0
  %v975 = vadd.f32 %v949, 1.0
  %v976 = vadd.f32 %v951, 1.0
  %v977 = vadd.f32 %v953, 1.0
  %v978 = vadd.f32 %v955, 1.0
  %v979 = vadd.f32 %v957, 1.0
  %v980 = vadd.f32 %v959, 1.0
  %v981 = vadd.f32 %v961, 1.0
  %v982 = vadd.f32 %v963, 1.0
  %v983 = vadd.f32 %v965, 1.0
  %v984 = vadd.f32 %v967, 1.0
  %v985 = vadd.f32 %v969, 1.0
  %v986 = vrcp.pop %v970
  %v987 = vmul.f32 1.0, %v986
  %v988 = vrcp.pop %v971
  %v989 = vmul.f32 1.0, %v988
  %v990 = vrcp.pop %v972
  %v991 = vmul.f32 1.0, %v990
  %v992 = vrcp.pop %v973
  %v993 = vmul.f32 1.0, %v992
  %v994 = vrcp.pop %v974
  %v995 = vmul.f32 1.0, %v994
  %v996 = vrcp.pop %v975
  %v997 = vmul.f32 1.0, %v996
  %v998 = vrcp.pop %v976
  %v999 = vmul.f32 1.0, %v998
  %v1000 = vrcp.pop %v977
  %v1001 = vmul.f32 1.0, %v1000
  %v1002 = vrcp.pop %v978
  %v1003 = vmul.f32 1.0, %v1002
  %v1004 = vrcp.pop %v979
  %v1005 = vmul.f32 1.0, %v1004
  %v1006 = vrcp.pop %v980
  %v1007 = vmul.f32 1.0, %v1006
  %v1008 = vrcp.pop %v981
  %v1009 = vmul.f32 1.0, %v1008
  %v1010 = vrcp.pop %v982
  %v1011 = vmul.f32 1.0, %v1010
  %v1012 = vrcp.pop %v983
  %v1013 = vmul.f32 1.0, %v1012
  %v1014 = vrcp.pop %v984
  %v1015 = vmul.f32 1.0, %v1014
  %v1016 = vrcp.pop %v985
  %v1017 = vmul.f32 1.0, %v1016
  %1034 = vrot.lane.b32.xlu0 %v987, 64
  %v1035 = vpop.permute.xlu0 %1034
  %1036 = vrot.lane.b32.xlu0 %v989, 64
  %v1037 = vpop.permute.xlu0 %1036
  %1038 = vrot.lane.b32.xlu0 %v991, 64
  %v1039 = vpop.permute.xlu0 %1038
  %1040 = vrot.lane.b32.xlu0 %v993, 64
  %v1041 = vpop.permute.xlu0 %1040
  %1042 = vrot.lane.b32.xlu0 %v995, 64
  %v1043 = vpop.permute.xlu0 %1042
  %1044 = vrot.lane.b32.xlu0 %v997, 64
  %v1045 = vpop.permute.xlu0 %1044
  %1046 = vrot.lane.b32.xlu0 %v999, 64
  %v1047 = vpop.permute.xlu0 %1046
  %1048 = vrot.lane.b32.xlu0 %v1001, 64
  %v1049 = vpop.permute.xlu0 %1048
  %1050 = vrot.lane.b32.xlu0 %v1003, 64
  %v1051 = vpop.permute.xlu0 %1050
  %1052 = vrot.lane.b32.xlu0 %v1005, 64
  %v1053 = vpop.permute.xlu0 %1052
  %1054 = vrot.lane.b32.xlu0 %v1007, 64
  %v1055 = vpop.permute.xlu0 %1054
  %1056 = vrot.lane.b32.xlu0 %v1009, 64
  %v1057 = vpop.permute.xlu0 %1056
  %1058 = vrot.lane.b32.xlu0 %v1011, 64
  %v1059 = vpop.permute.xlu0 %1058
  %1060 = vrot.lane.b32.xlu0 %v1013, 64
  %v1061 = vpop.permute.xlu0 %1060
  %1062 = vrot.lane.b32.xlu0 %v1015, 64
  %v1063 = vpop.permute.xlu0 %1062
  %1064 = vrot.lane.b32.xlu0 %v1017, 64
  %v1065 = vpop.permute.xlu0 %1064
  %v1082 = vmul.f32 %v906, %v1035
  %v1083 = vmul.f32 %v907, %v1037
  %v1084 = vmul.f32 %v908, %v1039
  %v1085 = vmul.f32 %v909, %v1041
  %v1086 = vmul.f32 %v910, %v1043
  %v1087 = vmul.f32 %v911, %v1045
  %v1088 = vmul.f32 %v912, %v1047
  %v1089 = vmul.f32 %v913, %v1049
  %v1090 = vmul.f32 %v914, %v1051
  %v1091 = vmul.f32 %v915, %v1053
  %v1092 = vmul.f32 %v916, %v1055
  %v1093 = vmul.f32 %v917, %v1057
  %v1094 = vmul.f32 %v918, %v1059
  %v1095 = vmul.f32 %v919, %v1061
  %v1096 = vmul.f32 %v920, %v1063
  %v1097 = vmul.f32 %v921, %v1065
  %v1098 = vpack.c.bf16 %v1083, %v1082
  %v1099 = vpack.c.bf16 %v1085, %v1084
  %v1100 = vpack.c.bf16 %v1087, %v1086
  %v1101 = vpack.c.bf16 %v1089, %v1088
  %v1102 = vpack.c.bf16 %v1091, %v1090
  %v1103 = vpack.c.bf16 %v1093, %v1092
  %v1104 = vpack.c.bf16 %v1095, %v1094
  %v1105 = vpack.c.bf16 %v1097, %v1096
  %v1114 = vunpack.c.l.b16 %v1098
  %v1115 = vunpack.c.h.b16 %v1098
  %v1116 = vunpack.c.l.b16 %v1099
  %v1117 = vunpack.c.h.b16 %v1099
  %v1118 = vunpack.c.l.b16 %v1100
  %v1119 = vunpack.c.h.b16 %v1100
  %v1120 = vunpack.c.l.b16 %v1101
  %v1121 = vunpack.c.h.b16 %v1101
  %v1122 = vunpack.c.l.b16 %v1102
  %v1123 = vunpack.c.h.b16 %v1102
  %v1124 = vunpack.c.l.b16 %v1103
  %v1125 = vunpack.c.h.b16 %v1103
  %v1126 = vunpack.c.l.b16 %v1104
  %v1127 = vunpack.c.h.b16 %v1104
  %v1128 = vunpack.c.l.b16 %v1105
  %v1129 = vunpack.c.h.b16 %v1105
  %v1130 = vpack.c.b16 %v1114, %v1114
  %v1131 = vpack.c.b16 %v1115, %v1115
  %v1132 = vpack.c.b16 %v1116, %v1116
  %v1133 = vpack.c.b16 %v1117, %v1117
  %v1134 = vpack.c.b16 %v1118, %v1118
  %v1135 = vpack.c.b16 %v1119, %v1119
  %v1136 = vpack.c.b16 %v1120, %v1120
  %v1137 = vpack.c.b16 %v1121, %v1121
  %v1138 = vpack.c.b16 %v1122, %v1122
  %v1139 = vpack.c.b16 %v1123, %v1123
  %v1140 = vpack.c.b16 %v1124, %v1124
  %v1141 = vpack.c.b16 %v1125, %v1125
  %v1142 = vpack.c.b16 %v1126, %v1126
  %v1143 = vpack.c.b16 %v1127, %v1127
  %v1144 = vpack.c.b16 %v1128, %v1128
  %v1145 = vpack.c.b16 %v1129, %v1129
  %vm1162 = vcmask 519168
  %1163 = vst.msk [vmem:[%s3] sm:$0xf] %vm1162, %v1130
  %1164 = vst.msk [vmem:[%s3 + $0x4] sm:$0xf] %vm1162, %v1131
  %1165 = vst.msk [vmem:[%s3 + $0x8] sm:$0xf] %vm1162, %v1132
  %1166 = vst.msk [vmem:[%s3 + $0xc] sm:$0xf] %vm1162, %v1133
  %1167 = vst.msk [vmem:[%s3 + $0x10] sm:$0xf] %vm1162, %v1134
  %1168 = vst.msk [vmem:[%s3 + $0x14] sm:$0xf] %vm1162, %v1135
  %1169 = vst.msk [vmem:[%s3 + $0x18] sm:$0xf] %vm1162, %v1136
  %1170 = vst.msk [vmem:[%s3 + $0x1c] sm:$0xf] %vm1162, %v1137
  %1171 = vst.msk [vmem:[%s3 + $0x20] sm:$0xf] %vm1162, %v1138
  %1172 = vst.msk [vmem:[%s3 + $0x24] sm:$0xf] %vm1162, %v1139
  %1173 = vst.msk [vmem:[%s3 + $0x28] sm:$0xf] %vm1162, %v1140
  %1174 = vst.msk [vmem:[%s3 + $0x2c] sm:$0xf] %vm1162, %v1141
  %1175 = vst.msk [vmem:[%s3 + $0x30] sm:$0xf] %vm1162, %v1142
  %1176 = vst.msk [vmem:[%s3 + $0x34] sm:$0xf] %vm1162, %v1143
  %1177 = vst.msk [vmem:[%s3 + $0x38] sm:$0xf] %vm1162, %v1144
  %1178 = vst.msk [vmem:[%s3 + $0x3c] sm:$0xf] %vm1162, %v1145
  // Predicated region
  $region14: #{coarse_forward.49} parent=0 // pred_check
    _
  $region15: #{coarse_forward.49} parent=0 // pred_check_branch
    %1180 = sbr.rel (0) target = $region17
  $region16: #{coarse_forward.49} parent=0 // pred_region
    _
  $region17: #{coarse_forward.49} parent=0 // pred_fallthru
    _
  // Predicated region
  $region18: #{coarse_forward.49} parent=0 // pred_check
    _
  $region19: #{coarse_forward.49} parent=0 // pred_check_branch
    %1182 = sbr.rel (0) target = $region21
  $region20: #{coarse_forward.49} parent=0 // pred_region
    _
  $region21: #{coarse_forward.49} parent=0 // pred_fallthru
    _

// kernel: coarse_forward.50
$region0: #{coarse_forward.50}
  #allocation0 [shape = 'u32[]', space=smem, size = 0x4, offset = 0x4, fixed_abs, tag = 'smem constant byte address 0x4 - core index']
  #allocation1 [shape = 'u32[144,128]{1,0:T(1,128)}', space=vmem, size = 0x12000, scoped, tag = 'internal scratch']
  %s0 = inlined_call_operand.vmem [shape: bf16[512,576], index: 0, kind: input, shape index: {}]
  %s1 = inlined_call_operand.vmem [shape: bf16[576,64], index: 1, kind: input, shape index: {}]
  %s2 = inlined_call_operand.vmem [shape: f32[1,64], index: 2, kind: input, shape index: {}]
  %s3 = inlined_call_operand.vmem [shape: bf16[512,32], index: 3, kind: output, shape index: {}]
  %s4 = sld [smem:[#allocation0]]
  $region22: #{coarse_forward.50} parent=0
    _
  %s6 = ssub.s32 1, %s4
  %s7 = scalar_select 0, %s6, %s4
  // Predicated region
  $region2: #{coarse_forward.50} parent=0 // pred_check
    _
  $region3: #{coarse_forward.50} parent=0 // pred_check_branch
    %9 = sbr.rel (0) target = $region5
  $region4: #{coarse_forward.50} parent=0 // pred_region
    _
  $region5: #{coarse_forward.50} parent=0 // pred_fallthru
    _
  // Predicated region
  $region6: #{coarse_forward.50} parent=0 // pred_check
    _
  $region7: #{coarse_forward.50} parent=0 // pred_check_branch
    %11 = sbr.rel (0) target = $region9
  $region8: #{coarse_forward.50} parent=0 // pred_region
    _
  $region9: #{coarse_forward.50} parent=0 // pred_fallthru
    _
  // Predicated region
  $region10: #{coarse_forward.50} parent=0 // pred_check
    _
  $region11: #{coarse_forward.50} parent=0 // pred_check_branch
    %13 = sbr.rel (0) target = $region13
  $region12: #{coarse_forward.50} parent=0 // pred_region
    _
  $region13: #{coarse_forward.50} parent=0 // pred_fallthru
    _
  %v15 = vld [vmem:[%s0] sm:$0xff]
  %v16 = vld [vmem:[%s0 + $0x8] sm:$0xff]
  %v17 = vld [vmem:[%s0 + $0x10] sm:$0xf]
  %v18 = vld [vmem:[%s0 + $0x14] sm:$0xff]
  %v19 = vld [vmem:[%s0 + $0x1c] sm:$0xff]
  %v20 = vld [vmem:[%s0 + $0x24] sm:$0xf]
  %v21 = vld [vmem:[%s0 + $0x28] sm:$0xff]
  %v22 = vld [vmem:[%s0 + $0x30] sm:$0xff]
  %v23 = vld [vmem:[%s0 + $0x38] sm:$0xf]
  %v24 = vld [vmem:[%s0 + $0x3c] sm:$0xff]
  %v25 = vld [vmem:[%s0 + $0x44] sm:$0xff]
  %v26 = vld [vmem:[%s0 + $0x4c] sm:$0xf]
  %v27 = vld [vmem:[%s0 + $0x50] sm:$0xff]
  %v28 = vld [vmem:[%s0 + $0x58] sm:$0xff]
  %v29 = vld [vmem:[%s0 + $0x60] sm:$0xf]
  %v30 = vld [vmem:[%s0 + $0x64] sm:$0xff]
  %v31 = vld [vmem:[%s0 + $0x6c] sm:$0xff]
  %v32 = vld [vmem:[%s0 + $0x74] sm:$0xf]
  %v33 = vld [vmem:[%s0 + $0x78] sm:$0xff]
  %v34 = vld [vmem:[%s0 + $0x80] sm:$0xff]
  %v35 = vld [vmem:[%s0 + $0x88] sm:$0xf]
  %v36 = vld [vmem:[%s0 + $0x8c] sm:$0xff]
  %v37 = vld [vmem:[%s0 + $0x94] sm:$0xff]
  %v38 = vld [vmem:[%s0 + $0x9c] sm:$0xf]
  %v39 = vld [vmem:[%s0 + $0xa0] sm:$0xff]
  %v40 = vld [vmem:[%s0 + $0xa8] sm:$0xff]
  %v41 = vld [vmem:[%s0 + $0xb0] sm:$0xf]
  %v42 = vld [vmem:[%s0 + $0xb4] sm:$0xff]
  %v43 = vld [vmem:[%s0 + $0xbc] sm:$0xff]
  %v44 = vld [vmem:[%s0 + $0xc4] sm:$0xf]
  %v45 = vld [vmem:[%s0 + $0xc8] sm:$0xff]
  %v46 = vld [vmem:[%s0 + $0xd0] sm:$0xff]
  %v47 = vld [vmem:[%s0 + $0xd8] sm:$0xf]
  %v48 = vld [vmem:[%s0 + $0xdc] sm:$0xff]
  %v49 = vld [vmem:[%s0 + $0xe4] sm:$0xff]
  %v50 = vld [vmem:[%s0 + $0xec] sm:$0xf]
  %v51 = vld [vmem:[%s0 + $0xf0] sm:$0xff]
  %v52 = vld [vmem:[%s0 + $0xf8] sm:$0xff]
  %v53 = vld [vmem:[%s0 + $0x100] sm:$0xf]
  %v54 = vld [vmem:[%s0 + $0x104] sm:$0xff]
  %v55 = vld [vmem:[%s0 + $0x10c] sm:$0xff]
  %v56 = vld [vmem:[%s0 + $0x114] sm:$0xf]
  %v57 = vld [vmem:[%s0 + $0x118] sm:$0xff]
  %v58 = vld [vmem:[%s0 + $0x120] sm:$0xff]
  %v59 = vld [vmem:[%s0 + $0x128] sm:$0xf]
  %v60 = vld [vmem:[%s0 + $0x12c] sm:$0xff]
  %v61 = vld [vmem:[%s0 + $0x134] sm:$0xff]
  %v62 = vld [vmem:[%s0 + $0x13c] sm:$0xf]
  %v63 = vld [vmem:[%s0 + $0x140] sm:$0xff]
  %v64 = vld [vmem:[%s0 + $0x148] sm:$0xff]
  %v65 = vld [vmem:[%s0 + $0x150] sm:$0xf]
  %v66 = vld [vmem:[%s0 + $0x154] sm:$0xff]
  %v67 = vld [vmem:[%s0 + $0x15c] sm:$0xff]
  %v68 = vld [vmem:[%s0 + $0x164] sm:$0xf]
  %v69 = vld [vmem:[%s0 + $0x168] sm:$0xff]
  %v70 = vld [vmem:[%s0 + $0x170] sm:$0xff]
  %v71 = vld [vmem:[%s0 + $0x178] sm:$0xf]
  %v72 = vld [vmem:[%s0 + $0x17c] sm:$0xff]
  %v73 = vld [vmem:[%s0 + $0x184] sm:$0xff]
  %v74 = vld [vmem:[%s0 + $0x18c] sm:$0xf]
  %v75 = vld [vmem:[%s0 + $0x190] sm:$0xff]
  %v76 = vld [vmem:[%s0 + $0x198] sm:$0xff]
  %v77 = vld [vmem:[%s0 + $0x1a0] sm:$0xf]
  %v78 = vld [vmem:[%s0 + $0x1a4] sm:$0xff]
  %v79 = vld [vmem:[%s0 + $0x1ac] sm:$0xff]
  %v80 = vld [vmem:[%s0 + $0x1b4] sm:$0xf]
  %v81 = vld [vmem:[%s0 + $0x1b8] sm:$0xff]
  %v82 = vld [vmem:[%s0 + $0x1c0] sm:$0xff]
  %v83 = vld [vmem:[%s0 + $0x1c8] sm:$0xf]
  %v84 = vld [vmem:[%s0 + $0x1cc] sm:$0xff]
  %v85 = vld [vmem:[%s0 + $0x1d4] sm:$0xff]
  %v86 = vld [vmem:[%s0 + $0x1dc] sm:$0xf]
  %v87 = vld [vmem:[%s0 + $0x1e0] sm:$0xff]
  %v88 = vld [vmem:[%s0 + $0x1e8] sm:$0xff]
  %v89 = vld [vmem:[%s0 + $0x1f0] sm:$0xf]
  %v90 = vld [vmem:[%s0 + $0x1f4] sm:$0xff]
  %v91 = vld [vmem:[%s0 + $0x1fc] sm:$0xff]
  %v92 = vld [vmem:[%s0 + $0x204] sm:$0xf]
  %v93 = vld [vmem:[%s0 + $0x208] sm:$0xff]
  %v94 = vld [vmem:[%s0 + $0x210] sm:$0xff]
  %v95 = vld [vmem:[%s0 + $0x218] sm:$0xf]
  %v96 = vld [vmem:[%s0 + $0x21c] sm:$0xff]
  %v97 = vld [vmem:[%s0 + $0x224] sm:$0xff]
  %v98 = vld [vmem:[%s0 + $0x22c] sm:$0xf]
  %v99 = vld [vmem:[%s0 + $0x230] sm:$0xff]
  %v100 = vld [vmem:[%s0 + $0x238] sm:$0xff]
  %v101 = vld [vmem:[%s0 + $0x240] sm:$0xf]
  %v102 = vld [vmem:[%s0 + $0x244] sm:$0xff]
  %v103 = vld [vmem:[%s0 + $0x24c] sm:$0xff]
  %v104 = vld [vmem:[%s0 + $0x254] sm:$0xf]
  %v105 = vld [vmem:[%s0 + $0x258] sm:$0xff]
  %v106 = vld [vmem:[%s0 + $0x260] sm:$0xff]
  %v107 = vld [vmem:[%s0 + $0x268] sm:$0xf]
  %v108 = vld [vmem:[%s0 + $0x26c] sm:$0xff]
  %v109 = vld [vmem:[%s0 + $0x274] sm:$0xff]
  %v110 = vld [vmem:[%s0 + $0x27c] sm:$0xf]
  %v111 = vld [vmem:[%s0 + $0x280] sm:$0xff]
  %v112 = vld [vmem:[%s0 + $0x288] sm:$0xff]
  %v113 = vld [vmem:[%s0 + $0x290] sm:$0xf]
  %v114 = vld [vmem:[%s0 + $0x294] sm:$0xff]
  %v115 = vld [vmem:[%s0 + $0x29c] sm:$0xff]
  %v116 = vld [vmem:[%s0 + $0x2a4] sm:$0xf]
  %v117 = vld [vmem:[%s0 + $0x2a8] sm:$0xff]
  %v118 = vld [vmem:[%s0 + $0x2b0] sm:$0xff]
  %v119 = vld [vmem:[%s0 + $0x2b8] sm:$0xf]
  %v120 = vld [vmem:[%s0 + $0x2bc] sm:$0xff]
  %v121 = vld [vmem:[%s0 + $0x2c4] sm:$0xff]
  %v122 = vld [vmem:[%s0 + $0x2cc] sm:$0xf]
  %v123 = vld [vmem:[%s0 + $0x2d0] sm:$0xff]
  %v124 = vld [vmem:[%s0 + $0x2d8] sm:$0xff]
  %v125 = vld [vmem:[%s0 + $0x2e0] sm:$0xf]
  %v126 = vld [vmem:[%s0 + $0x2e4] sm:$0xff]
  %v127 = vld [vmem:[%s0 + $0x2ec] sm:$0xff]
  %v128 = vld [vmem:[%s0 + $0x2f4] sm:$0xf]
  %v129 = vld [vmem:[%s0 + $0x2f8] sm:$0xff]
  %v130 = vld [vmem:[%s0 + $0x300] sm:$0xff]
  %v131 = vld [vmem:[%s0 + $0x308] sm:$0xf]
  %v132 = vld [vmem:[%s0 + $0x30c] sm:$0xff]
  %v133 = vld [vmem:[%s0 + $0x314] sm:$0xff]
  %v134 = vld [vmem:[%s0 + $0x31c] sm:$0xf]
  %v135 = vld [vmem:[%s0 + $0x320] sm:$0xff]
  %v136 = vld [vmem:[%s0 + $0x328] sm:$0xff]
  %v137 = vld [vmem:[%s0 + $0x330] sm:$0xf]
  %v138 = vld [vmem:[%s0 + $0x334] sm:$0xff]
  %v139 = vld [vmem:[%s0 + $0x33c] sm:$0xff]
  %v140 = vld [vmem:[%s0 + $0x344] sm:$0xf]
  %v141 = vld [vmem:[%s0 + $0x348] sm:$0xff]
  %v142 = vld [vmem:[%s0 + $0x350] sm:$0xff]
  %v143 = vld [vmem:[%s0 + $0x358] sm:$0xf]
  %v144 = vld [vmem:[%s0 + $0x35c] sm:$0xff]
  %v145 = vld [vmem:[%s0 + $0x364] sm:$0xff]
  %v146 = vld [vmem:[%s0 + $0x36c] sm:$0xf]
  %v147 = vld [vmem:[%s0 + $0x370] sm:$0xff]
  %v148 = vld [vmem:[%s0 + $0x378] sm:$0xff]
  %v149 = vld [vmem:[%s0 + $0x380] sm:$0xf]
  %v150 = vld [vmem:[%s0 + $0x384] sm:$0xff]
  %v151 = vld [vmem:[%s0 + $0x38c] sm:$0xff]
  %v152 = vld [vmem:[%s0 + $0x394] sm:$0xf]
  %v153 = vld [vmem:[%s0 + $0x398] sm:$0xff]
  %v154 = vld [vmem:[%s0 + $0x3a0] sm:$0xff]
  %v155 = vld [vmem:[%s0 + $0x3a8] sm:$0xf]
  %v156 = vld [vmem:[%s0 + $0x3ac] sm:$0xff]
  %v157 = vld [vmem:[%s0 + $0x3b4] sm:$0xff]
  %v158 = vld [vmem:[%s0 + $0x3bc] sm:$0xf]
  %v159 = vld [vmem:[%s0 + $0x3c0] sm:$0xff]
  %v160 = vld [vmem:[%s0 + $0x3c8] sm:$0xff]
  %v161 = vld [vmem:[%s0 + $0x3d0] sm:$0xf]
  %v162 = vld [vmem:[%s0 + $0x3d4] sm:$0xff]
  %v163 = vld [vmem:[%s0 + $0x3dc] sm:$0xff]
  %v164 = vld [vmem:[%s0 + $0x3e4] sm:$0xf]
  %v165 = vld [vmem:[%s0 + $0x3e8] sm:$0xff]
  %v166 = vld [vmem:[%s0 + $0x3f0] sm:$0xff]
  %v167 = vld [vmem:[%s0 + $0x3f8] sm:$0xf]
  %v168 = vld [vmem:[%s0 + $0x3fc] sm:$0xff]
  %v169 = vld [vmem:[%s0 + $0x404] sm:$0xff]
  %v170 = vld [vmem:[%s0 + $0x40c] sm:$0xf]
  %v171 = vld [vmem:[%s0 + $0x410] sm:$0xff]
  %v172 = vld [vmem:[%s0 + $0x418] sm:$0xff]
  %v173 = vld [vmem:[%s0 + $0x420] sm:$0xf]
  %v174 = vld [vmem:[%s0 + $0x424] sm:$0xff]
  %v175 = vld [vmem:[%s0 + $0x42c] sm:$0xff]
  %v176 = vld [vmem:[%s0 + $0x434] sm:$0xf]
  %v177 = vld [vmem:[%s0 + $0x438] sm:$0xff]
  %v178 = vld [vmem:[%s0 + $0x440] sm:$0xff]
  %v179 = vld [vmem:[%s0 + $0x448] sm:$0xf]
  %v180 = vld [vmem:[%s0 + $0x44c] sm:$0xff]
  %v181 = vld [vmem:[%s0 + $0x454] sm:$0xff]
  %v182 = vld [vmem:[%s0 + $0x45c] sm:$0xf]
  %v183 = vld [vmem:[%s0 + $0x460] sm:$0xff]
  %v184 = vld [vmem:[%s0 + $0x468] sm:$0xff]
  %v185 = vld [vmem:[%s0 + $0x470] sm:$0xf]
  %v186 = vld [vmem:[%s0 + $0x474] sm:$0xff]
  %v187 = vld [vmem:[%s0 + $0x47c] sm:$0xff]
  %v188 = vld [vmem:[%s0 + $0x484] sm:$0xf]
  %v189 = vld [vmem:[%s0 + $0x488] sm:$0xff]
  %v190 = vld [vmem:[%s0 + $0x490] sm:$0xff]
  %v191 = vld [vmem:[%s0 + $0x498] sm:$0xf]
  %v192 = vld [vmem:[%s0 + $0x49c] sm:$0xff]
  %v193 = vld [vmem:[%s0 + $0x4a4] sm:$0xff]
  %v194 = vld [vmem:[%s0 + $0x4ac] sm:$0xf]
  %v195 = vld [vmem:[%s0 + $0x4b0] sm:$0xff]
  %v196 = vld [vmem:[%s0 + $0x4b8] sm:$0xff]
  %v197 = vld [vmem:[%s0 + $0x4c0] sm:$0xf]
  %v198 = vld [vmem:[%s0 + $0x4c4] sm:$0xff]
  %v199 = vld [vmem:[%s0 + $0x4cc] sm:$0xff]
  %v200 = vld [vmem:[%s0 + $0x4d4] sm:$0xf]
  %v201 = vld [vmem:[%s0 + $0x4d8] sm:$0xff]
  %v202 = vld [vmem:[%s0 + $0x4e0] sm:$0xff]
  %v203 = vld [vmem:[%s0 + $0x4e8] sm:$0xf]
  %v204 = vld [vmem:[%s0 + $0x4ec] sm:$0xff]
  %v205 = vld [vmem:[%s0 + $0x4f4] sm:$0xff]
  %v206 = vld [vmem:[%s0 + $0x4fc] sm:$0xf]
  %v207 = vld [vmem:[%s1] sm:$0xf]
  %v208 = vld [vmem:[%s1 + $0x4] sm:$0xf]
  %v209 = vld [vmem:[%s1 + $0x8] sm:$0xf]
  %v210 = vld [vmem:[%s1 + $0xc] sm:$0xf]
  %v211 = vld [vmem:[%s1 + $0x10] sm:$0xf]
  %v212 = vld [vmem:[%s1 + $0x14] sm:$0xf]
  %v213 = vld [vmem:[%s1 + $0x18] sm:$0xf]
  %v214 = vld [vmem:[%s1 + $0x1c] sm:$0xf]
  %v215 = vld [vmem:[%s1 + $0x20] sm:$0xf]
  %v216 = vld [vmem:[%s1 + $0x24] sm:$0xf]
  %v217 = vld [vmem:[%s1 + $0x28] sm:$0xf]
  %v218 = vld [vmem:[%s1 + $0x2c] sm:$0xf]
  %v219 = vld [vmem:[%s1 + $0x30] sm:$0xf]
  %v220 = vld [vmem:[%s1 + $0x34] sm:$0xf]
  %v221 = vld [vmem:[%s1 + $0x38] sm:$0xf]
  %v222 = vld [vmem:[%s1 + $0x3c] sm:$0xf]
  %v223 = vld [vmem:[%s1 + $0x40] sm:$0xf]
  %v224 = vld [vmem:[%s1 + $0x44] sm:$0xf]
  %v225 = vld [vmem:[%s1 + $0x48] sm:$0xf]
  %v226 = vld [vmem:[%s1 + $0x4c] sm:$0xf]
  %v227 = vld [vmem:[%s1 + $0x50] sm:$0xf]
  %v228 = vld [vmem:[%s1 + $0x54] sm:$0xf]
  %v229 = vld [vmem:[%s1 + $0x58] sm:$0xf]
  %v230 = vld [vmem:[%s1 + $0x5c] sm:$0xf]
  %v231 = vld [vmem:[%s1 + $0x60] sm:$0xf]
  %v232 = vld [vmem:[%s1 + $0x64] sm:$0xf]
  %v233 = vld [vmem:[%s1 + $0x68] sm:$0xf]
  %v234 = vld [vmem:[%s1 + $0x6c] sm:$0xf]
  %v235 = vld [vmem:[%s1 + $0x70] sm:$0xf]
  %v236 = vld [vmem:[%s1 + $0x74] sm:$0xf]
  %v237 = vld [vmem:[%s1 + $0x78] sm:$0xf]
  %v238 = vld [vmem:[%s1 + $0x7c] sm:$0xf]
  %v239 = vld [vmem:[%s1 + $0x80] sm:$0xf]
  %v240 = vld [vmem:[%s1 + $0x84] sm:$0xf]
  %v241 = vld [vmem:[%s1 + $0x88] sm:$0xf]
  %v242 = vld [vmem:[%s1 + $0x8c] sm:$0xf]
  %v243 = vld [vmem:[%s1 + $0x90] sm:$0xf]
  %v244 = vld [vmem:[%s1 + $0x94] sm:$0xf]
  %v245 = vld [vmem:[%s1 + $0x98] sm:$0xf]
  %v246 = vld [vmem:[%s1 + $0x9c] sm:$0xf]
  %v247 = vld [vmem:[%s1 + $0xa0] sm:$0xf]
  %v248 = vld [vmem:[%s1 + $0xa4] sm:$0xf]
  %v249 = vld [vmem:[%s1 + $0xa8] sm:$0xf]
  %v250 = vld [vmem:[%s1 + $0xac] sm:$0xf]
  %v251 = vld [vmem:[%s1 + $0xb0] sm:$0xf]
  %v252 = vld [vmem:[%s1 + $0xb4] sm:$0xf]
  %v253 = vld [vmem:[%s1 + $0xb8] sm:$0xf]
  %v254 = vld [vmem:[%s1 + $0xbc] sm:$0xf]
  %v255 = vld [vmem:[%s1 + $0xc0] sm:$0xf]
  %v256 = vld [vmem:[%s1 + $0xc4] sm:$0xf]
  %v257 = vld [vmem:[%s1 + $0xc8] sm:$0xf]
  %v258 = vld [vmem:[%s1 + $0xcc] sm:$0xf]
  %v259 = vld [vmem:[%s1 + $0xd0] sm:$0xf]
  %v260 = vld [vmem:[%s1 + $0xd4] sm:$0xf]
  %v261 = vld [vmem:[%s1 + $0xd8] sm:$0xf]
  %v262 = vld [vmem:[%s1 + $0xdc] sm:$0xf]
  %v263 = vld [vmem:[%s1 + $0xe0] sm:$0xf]
  %v264 = vld [vmem:[%s1 + $0xe4] sm:$0xf]
  %v265 = vld [vmem:[%s1 + $0xe8] sm:$0xf]
  %v266 = vld [vmem:[%s1 + $0xec] sm:$0xf]
  %v267 = vld [vmem:[%s1 + $0xf0] sm:$0xf]
  %v268 = vld [vmem:[%s1 + $0xf4] sm:$0xf]
  %v269 = vld [vmem:[%s1 + $0xf8] sm:$0xf]
  %v270 = vld [vmem:[%s1 + $0xfc] sm:$0xf]
  %v271 = vld [vmem:[%s1 + $0x100] sm:$0xf]
  %v272 = vld [vmem:[%s1 + $0x104] sm:$0xf]
  %v273 = vld [vmem:[%s1 + $0x108] sm:$0xf]
  %v274 = vld [vmem:[%s1 + $0x10c] sm:$0xf]
  %v275 = vld [vmem:[%s1 + $0x110] sm:$0xf]
  %v276 = vld [vmem:[%s1 + $0x114] sm:$0xf]
  %v277 = vld [vmem:[%s1 + $0x118] sm:$0xf]
  %v278 = vld [vmem:[%s1 + $0x11c] sm:$0xf]
  %v279 = vld [vmem:[%s2] sm:$0x1]
  %v281 = vlaneseq
  %v282 = vshrl.u32 %v281, 7
  %v283 = vsub.s32 0, %v282
  %v284 = vrot.slane %v279, %v283
  %v478 = vunpack.c.l.b16 %v15
  %v479 = vunpack.c.h.b16 %v15
  %v480 = vunpack.c.l.b16 %v16
  %v481 = vunpack.c.h.b16 %v16
  %v482 = vunpack.c.l.b16 %v17
  %v483 = vunpack.c.l.b16 %v18
  %v484 = vunpack.c.h.b16 %v18
  %v485 = vunpack.c.l.b16 %v19
  %v486 = vunpack.c.h.b16 %v19
  %v487 = vunpack.c.l.b16 %v20
  %v488 = vunpack.c.l.b16 %v21
  %v489 = vunpack.c.h.b16 %v21
  %v490 = vunpack.c.l.b16 %v22
  %v491 = vunpack.c.h.b16 %v22
  %v492 = vunpack.c.l.b16 %v23
  %v493 = vunpack.c.l.b16 %v24
  %v494 = vunpack.c.h.b16 %v24
  %v495 = vunpack.c.l.b16 %v25
  %v496 = vunpack.c.h.b16 %v25
  %v497 = vunpack.c.l.b16 %v26
  %v498 = vunpack.c.l.b16 %v27
  %v499 = vunpack.c.h.b16 %v27
  %v500 = vunpack.c.l.b16 %v28
  %v501 = vunpack.c.h.b16 %v28
  %v502 = vunpack.c.l.b16 %v29
  %v503 = vunpack.c.l.b16 %v30
  %v504 = vunpack.c.h.b16 %v30
  %v505 = vunpack.c.l.b16 %v31
  %v506 = vunpack.c.h.b16 %v31
  %v507 = vunpack.c.l.b16 %v32
  %v508 = vunpack.c.l.b16 %v33
  %v509 = vunpack.c.h.b16 %v33
  %v510 = vunpack.c.l.b16 %v34
  %v511 = vunpack.c.h.b16 %v34
  %v512 = vunpack.c.l.b16 %v35
  %v513 = vunpack.c.l.b16 %v36
  %v514 = vunpack.c.h.b16 %v36
  %v515 = vunpack.c.l.b16 %v37
  %v516 = vunpack.c.h.b16 %v37
  %v517 = vunpack.c.l.b16 %v38
  %v518 = vunpack.c.l.b16 %v39
  %v519 = vunpack.c.h.b16 %v39
  %v520 = vunpack.c.l.b16 %v40
  %v521 = vunpack.c.h.b16 %v40
  %v522 = vunpack.c.l.b16 %v41
  %v523 = vunpack.c.l.b16 %v42
  %v524 = vunpack.c.h.b16 %v42
  %v525 = vunpack.c.l.b16 %v43
  %v526 = vunpack.c.h.b16 %v43
  %v527 = vunpack.c.l.b16 %v44
  %v528 = vunpack.c.l.b16 %v45
  %v529 = vunpack.c.h.b16 %v45
  %v530 = vunpack.c.l.b16 %v46
  %v531 = vunpack.c.h.b16 %v46
  %v532 = vunpack.c.l.b16 %v47
  %v533 = vunpack.c.l.b16 %v48
  %v534 = vunpack.c.h.b16 %v48
  %v535 = vunpack.c.l.b16 %v49
  %v536 = vunpack.c.h.b16 %v49
  %v537 = vunpack.c.l.b16 %v50
  %v538 = vunpack.c.l.b16 %v51
  %v539 = vunpack.c.h.b16 %v51
  %v540 = vunpack.c.l.b16 %v52
  %v541 = vunpack.c.h.b16 %v52
  %v542 = vunpack.c.l.b16 %v53
  %v543 = vunpack.c.l.b16 %v54
  %v544 = vunpack.c.h.b16 %v54
  %v545 = vunpack.c.l.b16 %v55
  %v546 = vunpack.c.h.b16 %v55
  %v547 = vunpack.c.l.b16 %v56
  %v548 = vunpack.c.l.b16 %v57
  %v549 = vunpack.c.h.b16 %v57
  %v550 = vunpack.c.l.b16 %v58
  %v551 = vunpack.c.h.b16 %v58
  %v552 = vunpack.c.l.b16 %v59
  %v553 = vunpack.c.l.b16 %v60
  %v554 = vunpack.c.h.b16 %v60
  %v555 = vunpack.c.l.b16 %v61
  %v556 = vunpack.c.h.b16 %v61
  %v557 = vunpack.c.l.b16 %v62
  %v558 = vunpack.c.l.b16 %v63
  %v559 = vunpack.c.h.b16 %v63
  %v560 = vunpack.c.l.b16 %v64
  %v561 = vunpack.c.h.b16 %v64
  %v562 = vunpack.c.l.b16 %v65
  %v563 = vunpack.c.l.b16 %v66
  %v564 = vunpack.c.h.b16 %v66
  %v565 = vunpack.c.l.b16 %v67
  %v566 = vunpack.c.h.b16 %v67
  %v567 = vunpack.c.l.b16 %v68
  %v568 = vunpack.c.l.b16 %v69
  %v569 = vunpack.c.h.b16 %v69
  %v570 = vunpack.c.l.b16 %v70
  %v571 = vunpack.c.h.b16 %v70
  %v572 = vunpack.c.l.b16 %v71
  %v573 = vunpack.c.l.b16 %v72
  %v574 = vunpack.c.h.b16 %v72
  %v575 = vunpack.c.l.b16 %v73
  %v576 = vunpack.c.h.b16 %v73
  %v577 = vunpack.c.l.b16 %v74
  %v578 = vunpack.c.l.b16 %v75
  %v579 = vunpack.c.h.b16 %v75
  %v580 = vunpack.c.l.b16 %v76
  %v581 = vunpack.c.h.b16 %v76
  %v582 = vunpack.c.l.b16 %v77
  %v583 = vunpack.c.l.b16 %v78
  %v584 = vunpack.c.h.b16 %v78
  %v585 = vunpack.c.l.b16 %v79
  %v586 = vunpack.c.h.b16 %v79
  %v587 = vunpack.c.l.b16 %v80
  %v588 = vunpack.c.l.b16 %v81
  %v589 = vunpack.c.h.b16 %v81
  %v590 = vunpack.c.l.b16 %v82
  %v591 = vunpack.c.h.b16 %v82
  %v592 = vunpack.c.l.b16 %v83
  %v593 = vunpack.c.l.b16 %v84
  %v594 = vunpack.c.h.b16 %v84
  %v595 = vunpack.c.l.b16 %v85
  %v596 = vunpack.c.h.b16 %v85
  %v597 = vunpack.c.l.b16 %v86
  %v598 = vunpack.c.l.b16 %v87
  %v599 = vunpack.c.h.b16 %v87
  %v600 = vunpack.c.l.b16 %v88
  %v601 = vunpack.c.h.b16 %v88
  %v602 = vunpack.c.l.b16 %v89
  %v603 = vunpack.c.l.b16 %v90
  %v604 = vunpack.c.h.b16 %v90
  %v605 = vunpack.c.l.b16 %v91
  %v606 = vunpack.c.h.b16 %v91
  %v607 = vunpack.c.l.b16 %v92
  %v608 = vunpack.c.l.b16 %v93
  %v609 = vunpack.c.h.b16 %v93
  %v610 = vunpack.c.l.b16 %v94
  %v611 = vunpack.c.h.b16 %v94
  %v612 = vunpack.c.l.b16 %v95
  %v613 = vunpack.c.l.b16 %v96
  %v614 = vunpack.c.h.b16 %v96
  %v615 = vunpack.c.l.b16 %v97
  %v616 = vunpack.c.h.b16 %v97
  %v617 = vunpack.c.l.b16 %v98
  %v618 = vunpack.c.l.b16 %v99
  %v619 = vunpack.c.h.b16 %v99
  %v620 = vunpack.c.l.b16 %v100
  %v621 = vunpack.c.h.b16 %v100
  %v622 = vunpack.c.l.b16 %v101
  %v623 = vunpack.c.l.b16 %v102
  %v624 = vunpack.c.h.b16 %v102
  %v625 = vunpack.c.l.b16 %v103
  %v626 = vunpack.c.h.b16 %v103
  %v627 = vunpack.c.l.b16 %v104
  %v628 = vunpack.c.l.b16 %v105
  %v629 = vunpack.c.h.b16 %v105
  %v630 = vunpack.c.l.b16 %v106
  %v631 = vunpack.c.h.b16 %v106
  %v632 = vunpack.c.l.b16 %v107
  %v633 = vunpack.c.l.b16 %v108
  %v634 = vunpack.c.h.b16 %v108
  %v635 = vunpack.c.l.b16 %v109
  %v636 = vunpack.c.h.b16 %v109
  %v637 = vunpack.c.l.b16 %v110
  %v638 = vunpack.c.l.b16 %v111
  %v639 = vunpack.c.h.b16 %v111
  %v640 = vunpack.c.l.b16 %v112
  %v641 = vunpack.c.h.b16 %v112
  %v642 = vunpack.c.l.b16 %v113
  %v643 = vunpack.c.l.b16 %v114
  %v644 = vunpack.c.h.b16 %v114
  %v645 = vunpack.c.l.b16 %v115
  %v646 = vunpack.c.h.b16 %v115
  %v647 = vunpack.c.l.b16 %v116
  %v648 = vunpack.c.l.b16 %v117
  %v649 = vunpack.c.h.b16 %v117
  %v650 = vunpack.c.l.b16 %v118
  %v651 = vunpack.c.h.b16 %v118
  %v652 = vunpack.c.l.b16 %v119
  %v653 = vunpack.c.l.b16 %v120
  %v654 = vunpack.c.h.b16 %v120
  %v655 = vunpack.c.l.b16 %v121
  %v656 = vunpack.c.h.b16 %v121
  %v657 = vunpack.c.l.b16 %v122
  %v658 = vunpack.c.l.b16 %v123
  %v659 = vunpack.c.h.b16 %v123
  %v660 = vunpack.c.l.b16 %v124
  %v661 = vunpack.c.h.b16 %v124
  %v662 = vunpack.c.l.b16 %v125
  %v663 = vunpack.c.l.b16 %v126
  %v664 = vunpack.c.h.b16 %v126
  %v665 = vunpack.c.l.b16 %v127
  %v666 = vunpack.c.h.b16 %v127
  %v667 = vunpack.c.l.b16 %v128
  %v668 = vunpack.c.l.b16 %v129
  %v669 = vunpack.c.h.b16 %v129
  %v670 = vunpack.c.l.b16 %v130
  %v671 = vunpack.c.h.b16 %v130
  %v672 = vunpack.c.l.b16 %v131
  %v673 = vunpack.c.l.b16 %v132
  %v674 = vunpack.c.h.b16 %v132
  %v675 = vunpack.c.l.b16 %v133
  %v676 = vunpack.c.h.b16 %v133
  %v677 = vunpack.c.l.b16 %v134
  %v678 = vunpack.c.l.b16 %v135
  %v679 = vunpack.c.h.b16 %v135
  %v680 = vunpack.c.l.b16 %v136
  %v681 = vunpack.c.h.b16 %v136
  %v682 = vunpack.c.l.b16 %v137
  %v683 = vunpack.c.l.b16 %v138
  %v684 = vunpack.c.h.b16 %v138
  %v685 = vunpack.c.l.b16 %v139
  %v686 = vunpack.c.h.b16 %v139
  %v687 = vunpack.c.l.b16 %v140
  %v688 = vunpack.c.l.b16 %v141
  %v689 = vunpack.c.h.b16 %v141
  %v690 = vunpack.c.l.b16 %v142
  %v691 = vunpack.c.h.b16 %v142
  %v692 = vunpack.c.l.b16 %v143
  %v693 = vunpack.c.l.b16 %v144
  %v694 = vunpack.c.h.b16 %v144
  %v695 = vunpack.c.l.b16 %v145
  %v696 = vunpack.c.h.b16 %v145
  %v697 = vunpack.c.l.b16 %v146
  %v698 = vunpack.c.l.b16 %v147
  %v699 = vunpack.c.h.b16 %v147
  %v700 = vunpack.c.l.b16 %v148
  %v701 = vunpack.c.h.b16 %v148
  %v702 = vunpack.c.l.b16 %v149
  %v703 = vunpack.c.l.b16 %v150
  %v704 = vunpack.c.h.b16 %v150
  %v705 = vunpack.c.l.b16 %v151
  %v706 = vunpack.c.h.b16 %v151
  %v707 = vunpack.c.l.b16 %v152
  %v708 = vunpack.c.l.b16 %v153
  %v709 = vunpack.c.h.b16 %v153
  %v710 = vunpack.c.l.b16 %v154
  %v711 = vunpack.c.h.b16 %v154
  %v712 = vunpack.c.l.b16 %v155
  %v713 = vunpack.c.l.b16 %v156
  %v714 = vunpack.c.h.b16 %v156
  %v715 = vunpack.c.l.b16 %v157
  %v716 = vunpack.c.h.b16 %v157
  %v717 = vunpack.c.l.b16 %v158
  %v718 = vunpack.c.l.b16 %v159
  %v719 = vunpack.c.h.b16 %v159
  %v720 = vunpack.c.l.b16 %v160
  %v721 = vunpack.c.h.b16 %v160
  %v722 = vunpack.c.l.b16 %v161
  %v723 = vunpack.c.l.b16 %v162
  %v724 = vunpack.c.h.b16 %v162
  %v725 = vunpack.c.l.b16 %v163
  %v726 = vunpack.c.h.b16 %v163
  %v727 = vunpack.c.l.b16 %v164
  %v728 = vunpack.c.l.b16 %v165
  %v729 = vunpack.c.h.b16 %v165
  %v730 = vunpack.c.l.b16 %v166
  %v731 = vunpack.c.h.b16 %v166
  %v732 = vunpack.c.l.b16 %v167
  %v733 = vunpack.c.l.b16 %v168
  %v734 = vunpack.c.h.b16 %v168
  %v735 = vunpack.c.l.b16 %v169
  %v736 = vunpack.c.h.b16 %v169
  %v737 = vunpack.c.l.b16 %v170
  %v738 = vunpack.c.l.b16 %v171
  %v739 = vunpack.c.h.b16 %v171
  %v740 = vunpack.c.l.b16 %v172
  %v741 = vunpack.c.h.b16 %v172
  %v742 = vunpack.c.l.b16 %v173
  %v743 = vunpack.c.l.b16 %v174
  %v744 = vunpack.c.h.b16 %v174
  %v745 = vunpack.c.l.b16 %v175
  %v746 = vunpack.c.h.b16 %v175
  %v747 = vunpack.c.l.b16 %v176
  %v748 = vunpack.c.l.b16 %v177
  %v749 = vunpack.c.h.b16 %v177
  %v750 = vunpack.c.l.b16 %v178
  %v751 = vunpack.c.h.b16 %v178
  %v752 = vunpack.c.l.b16 %v179
  %v753 = vunpack.c.l.b16 %v180
  %v754 = vunpack.c.h.b16 %v180
  %v755 = vunpack.c.l.b16 %v181
  %v756 = vunpack.c.h.b16 %v181
  %v757 = vunpack.c.l.b16 %v182
  %v758 = vunpack.c.l.b16 %v183
  %v759 = vunpack.c.h.b16 %v183
  %v760 = vunpack.c.l.b16 %v184
  %v761 = vunpack.c.h.b16 %v184
  %v762 = vunpack.c.l.b16 %v185
  %v763 = vunpack.c.l.b16 %v186
  %v764 = vunpack.c.h.b16 %v186
  %v765 = vunpack.c.l.b16 %v187
  %v766 = vunpack.c.h.b16 %v187
  %v767 = vunpack.c.l.b16 %v188
  %v768 = vunpack.c.l.b16 %v189
  %v769 = vunpack.c.h.b16 %v189
  %v770 = vunpack.c.l.b16 %v190
  %v771 = vunpack.c.h.b16 %v190
  %v772 = vunpack.c.l.b16 %v191
  %v773 = vunpack.c.l.b16 %v192
  %v774 = vunpack.c.h.b16 %v192
  %v775 = vunpack.c.l.b16 %v193
  %v776 = vunpack.c.h.b16 %v193
  %v777 = vunpack.c.l.b16 %v194
  %v778 = vunpack.c.l.b16 %v195
  %v779 = vunpack.c.h.b16 %v195
  %v780 = vunpack.c.l.b16 %v196
  %v781 = vunpack.c.h.b16 %v196
  %v782 = vunpack.c.l.b16 %v197
  %v783 = vunpack.c.l.b16 %v198
  %v784 = vunpack.c.h.b16 %v198
  %v785 = vunpack.c.l.b16 %v199
  %v786 = vunpack.c.h.b16 %v199
  %v787 = vunpack.c.l.b16 %v200
  %v788 = vunpack.c.l.b16 %v201
  %v789 = vunpack.c.h.b16 %v201
  %v790 = vunpack.c.l.b16 %v202
  %v791 = vunpack.c.h.b16 %v202
  %v792 = vunpack.c.l.b16 %v203
  %v793 = vunpack.c.l.b16 %v204
  %v794 = vunpack.c.h.b16 %v204
  %v795 = vunpack.c.l.b16 %v205
  %v796 = vunpack.c.h.b16 %v205
  %v797 = vunpack.c.l.b16 %v206
  %v798 = vpack.c.b16 %v483, %v478
  %v799 = vpack.c.b16 %v484, %v479
  %v800 = vpack.c.b16 %v485, %v480
  %v801 = vpack.c.b16 %v486, %v481
  %v802 = vpack.c.b16 %v487, %v482
  %v803 = vpack.c.b16 %v493, %v488
  %v804 = vpack.c.b16 %v494, %v489
  %v805 = vpack.c.b16 %v495, %v490
  %v806 = vpack.c.b16 %v496, %v491
  %v807 = vpack.c.b16 %v497, %v492
  %v808 = vpack.c.b16 %v503, %v498
  %v809 = vpack.c.b16 %v504, %v499
  %v810 = vpack.c.b16 %v505, %v500
  %v811 = vpack.c.b16 %v506, %v501
  %v812 = vpack.c.b16 %v507, %v502
  %v813 = vpack.c.b16 %v513, %v508
  %v814 = vpack.c.b16 %v514, %v509
  %v815 = vpack.c.b16 %v515, %v510
  %v816 = vpack.c.b16 %v516, %v511
  %v817 = vpack.c.b16 %v517, %v512
  %v818 = vpack.c.b16 %v523, %v518
  %v819 = vpack.c.b16 %v524, %v519
  %v820 = vpack.c.b16 %v525, %v520
  %v821 = vpack.c.b16 %v526, %v521
  %v822 = vpack.c.b16 %v527, %v522
  %v823 = vpack.c.b16 %v533, %v528
  %v824 = vpack.c.b16 %v534, %v529
  %v825 = vpack.c.b16 %v535, %v530
  %v826 = vpack.c.b16 %v536, %v531
  %v827 = vpack.c.b16 %v537, %v532
  %v828 = vpack.c.b16 %v543, %v538
  %v829 = vpack.c.b16 %v544, %v539
  %v830 = vpack.c.b16 %v545, %v540
  %v831 = vpack.c.b16 %v546, %v541
  %v832 = vpack.c.b16 %v547, %v542
  %v833 = vpack.c.b16 %v553, %v548
  %v834 = vpack.c.b16 %v554, %v549
  %v835 = vpack.c.b16 %v555, %v550
  %v836 = vpack.c.b16 %v556, %v551
  %v837 = vpack.c.b16 %v557, %v552
  %v838 = vpack.c.b16 %v563, %v558
  %v839 = vpack.c.b16 %v564, %v559
  %v840 = vpack.c.b16 %v565, %v560
  %v841 = vpack.c.b16 %v566, %v561
  %v842 = vpack.c.b16 %v567, %v562
  %v843 = vpack.c.b16 %v573, %v568
  %v844 = vpack.c.b16 %v574, %v569
  %v845 = vpack.c.b16 %v575, %v570
  %v846 = vpack.c.b16 %v576, %v571
  %v847 = vpack.c.b16 %v577, %v572
  %v848 = vpack.c.b16 %v583, %v578
  %v849 = vpack.c.b16 %v584, %v579
  %v850 = vpack.c.b16 %v585, %v580
  %v851 = vpack.c.b16 %v586, %v581
  %v852 = vpack.c.b16 %v587, %v582
  %v853 = vpack.c.b16 %v593, %v588
  %v854 = vpack.c.b16 %v594, %v589
  %v855 = vpack.c.b16 %v595, %v590
  %v856 = vpack.c.b16 %v596, %v591
  %v857 = vpack.c.b16 %v597, %v592
  %v858 = vpack.c.b16 %v603, %v598
  %v859 = vpack.c.b16 %v604, %v599
  %v860 = vpack.c.b16 %v605, %v600
  %v861 = vpack.c.b16 %v606, %v601
  %v862 = vpack.c.b16 %v607, %v602
  %v863 = vpack.c.b16 %v613, %v608
  %v864 = vpack.c.b16 %v614, %v609
  %v865 = vpack.c.b16 %v615, %v610
  %v866 = vpack.c.b16 %v616, %v611
  %v867 = vpack.c.b16 %v617, %v612
  %v868 = vpack.c.b16 %v623, %v618
  %v869 = vpack.c.b16 %v624, %v619
  %v870 = vpack.c.b16 %v625, %v620
  %v871 = vpack.c.b16 %v626, %v621
  %v872 = vpack.c.b16 %v627, %v622
  %v873 = vpack.c.b16 %v633, %v628
  %v874 = vpack.c.b16 %v634, %v629
  %v875 = vpack.c.b16 %v635, %v630
  %v876 = vpack.c.b16 %v636, %v631
  %v877 = vpack.c.b16 %v637, %v632
  %v878 = vpack.c.b16 %v643, %v638
  %v879 = vpack.c.b16 %v644, %v639
  %v880 = vpack.c.b16 %v645, %v640
  %v881 = vpack.c.b16 %v646, %v641
  %v882 = vpack.c.b16 %v647, %v642
  %v883 = vpack.c.b16 %v653, %v648
  %v884 = vpack.c.b16 %v654, %v649
  %v885 = vpack.c.b16 %v655, %v650
  %v886 = vpack.c.b16 %v656, %v651
  %v887 = vpack.c.b16 %v657, %v652
  %v888 = vpack.c.b16 %v663, %v658
  %v889 = vpack.c.b16 %v664, %v659
  %v890 = vpack.c.b16 %v665, %v660
  %v891 = vpack.c.b16 %v666, %v661
  %v892 = vpack.c.b16 %v667, %v662
  %v893 = vpack.c.b16 %v673, %v668
  %v894 = vpack.c.b16 %v674, %v669
  %v895 = vpack.c.b16 %v675, %v670
  %v896 = vpack.c.b16 %v676, %v671
  %v897 = vpack.c.b16 %v677, %v672
  %v898 = vpack.c.b16 %v683, %v678
  %v899 = vpack.c.b16 %v684, %v679
  %v900 = vpack.c.b16 %v685, %v680
  %v901 = vpack.c.b16 %v686, %v681
  %v902 = vpack.c.b16 %v687, %v682
  %v903 = vpack.c.b16 %v693, %v688
  %v904 = vpack.c.b16 %v694, %v689
  %v905 = vpack.c.b16 %v695, %v690
  %v906 = vpack.c.b16 %v696, %v691
  %v907 = vpack.c.b16 %v697, %v692
  %v908 = vpack.c.b16 %v703, %v698
  %v909 = vpack.c.b16 %v704, %v699
  %v910 = vpack.c.b16 %v705, %v700
  %v911 = vpack.c.b16 %v706, %v701
  %v912 = vpack.c.b16 %v707, %v702
  %v913 = vpack.c.b16 %v713, %v708
  %v914 = vpack.c.b16 %v714, %v709
  %v915 = vpack.c.b16 %v715, %v710
  %v916 = vpack.c.b16 %v716, %v711
  %v917 = vpack.c.b16 %v717, %v712
  %v918 = vpack.c.b16 %v723, %v718
  %v919 = vpack.c.b16 %v724, %v719
  %v920 = vpack.c.b16 %v725, %v720
  %v921 = vpack.c.b16 %v726, %v721
  %v922 = vpack.c.b16 %v727, %v722
  %v923 = vpack.c.b16 %v733, %v728
  %v924 = vpack.c.b16 %v734, %v729
  %v925 = vpack.c.b16 %v735, %v730
  %v926 = vpack.c.b16 %v736, %v731
  %v927 = vpack.c.b16 %v737, %v732
  %v928 = vpack.c.b16 %v743, %v738
  %v929 = vpack.c.b16 %v744, %v739
  %v930 = vpack.c.b16 %v745, %v740
  %v931 = vpack.c.b16 %v746, %v741
  %v932 = vpack.c.b16 %v747, %v742
  %v933 = vpack.c.b16 %v753, %v748
  %v934 = vpack.c.b16 %v754, %v749
  %v935 = vpack.c.b16 %v755, %v750
  %v936 = vpack.c.b16 %v756, %v751
  %v937 = vpack.c.b16 %v757, %v752
  %v938 = vpack.c.b16 %v763, %v758
  %v939 = vpack.c.b16 %v764, %v759
  %v940 = vpack.c.b16 %v765, %v760
  %v941 = vpack.c.b16 %v766, %v761
  %v942 = vpack.c.b16 %v767, %v762
  %v943 = vpack.c.b16 %v773, %v768
  %v944 = vpack.c.b16 %v774, %v769
  %v945 = vpack.c.b16 %v775, %v770
  %v946 = vpack.c.b16 %v776, %v771
  %v947 = vpack.c.b16 %v777, %v772
  %v948 = vpack.c.b16 %v783, %v778
  %v949 = vpack.c.b16 %v784, %v779
  %v950 = vpack.c.b16 %v785, %v780
  %v951 = vpack.c.b16 %v786, %v781
  %v952 = vpack.c.b16 %v787, %v782
  %v953 = vpack.c.b16 %v793, %v788
  %v954 = vpack.c.b16 %v794, %v789
  %v955 = vpack.c.b16 %v795, %v790
  %v956 = vpack.c.b16 %v796, %v791
  %v957 = vpack.c.b16 %v797, %v792
  %v1158 = vunpack.c.l.b16 %v207
  %v1159 = vunpack.c.l.b16 %v208
  %v1160 = vunpack.c.l.b16 %v209
  %v1161 = vunpack.c.l.b16 %v210
  %v1162 = vunpack.c.l.b16 %v211
  %v1163 = vunpack.c.l.b16 %v212
  %v1164 = vunpack.c.l.b16 %v213
  %v1165 = vunpack.c.l.b16 %v214
  %v1166 = vunpack.c.l.b16 %v215
  %v1167 = vunpack.c.l.b16 %v216
  %v1168 = vunpack.c.l.b16 %v217
  %v1169 = vunpack.c.l.b16 %v218
  %v1170 = vunpack.c.l.b16 %v219
  %v1171 = vunpack.c.l.b16 %v220
  %v1172 = vunpack.c.l.b16 %v221
  %v1173 = vunpack.c.l.b16 %v222
  %v1174 = vunpack.c.l.b16 %v223
  %v1175 = vunpack.c.l.b16 %v224
  %v1176 = vunpack.c.l.b16 %v225
  %v1177 = vunpack.c.l.b16 %v226
  %v1178 = vunpack.c.l.b16 %v227
  %v1179 = vunpack.c.l.b16 %v228
  %v1180 = vunpack.c.l.b16 %v229
  %v1181 = vunpack.c.l.b16 %v230
  %v1182 = vunpack.c.l.b16 %v231
  %v1183 = vunpack.c.l.b16 %v232
  %v1184 = vunpack.c.l.b16 %v233
  %v1185 = vunpack.c.l.b16 %v234
  %v1186 = vunpack.c.l.b16 %v235
  %v1187 = vunpack.c.l.b16 %v236
  %v1188 = vunpack.c.l.b16 %v237
  %v1189 = vunpack.c.l.b16 %v238
  %v1190 = vunpack.c.l.b16 %v239
  %v1191 = vunpack.c.l.b16 %v240
  %v1192 = vunpack.c.l.b16 %v241
  %v1193 = vunpack.c.l.b16 %v242
  %v1194 = vunpack.c.l.b16 %v243
  %v1195 = vunpack.c.l.b16 %v244
  %v1196 = vunpack.c.l.b16 %v245
  %v1197 = vunpack.c.l.b16 %v246
  %v1198 = vunpack.c.l.b16 %v247
  %v1199 = vunpack.c.l.b16 %v248
  %v1200 = vunpack.c.l.b16 %v249
  %v1201 = vunpack.c.l.b16 %v250
  %v1202 = vunpack.c.l.b16 %v251
  %v1203 = vunpack.c.l.b16 %v252
  %v1204 = vunpack.c.l.b16 %v253
  %v1205 = vunpack.c.l.b16 %v254
  %v1206 = vunpack.c.l.b16 %v255
  %v1207 = vunpack.c.l.b16 %v256
  %v1208 = vunpack.c.l.b16 %v257
  %v1209 = vunpack.c.l.b16 %v258
  %v1210 = vunpack.c.l.b16 %v259
  %v1211 = vunpack.c.l.b16 %v260
  %v1212 = vunpack.c.l.b16 %v261
  %v1213 = vunpack.c.l.b16 %v262
  %v1214 = vunpack.c.l.b16 %v263
  %v1215 = vunpack.c.l.b16 %v264
  %v1216 = vunpack.c.l.b16 %v265
  %v1217 = vunpack.c.l.b16 %v266
  %v1218 = vunpack.c.l.b16 %v267
  %v1219 = vunpack.c.l.b16 %v268
  %v1220 = vunpack.c.l.b16 %v269
  %v1221 = vunpack.c.l.b16 %v270
  %v1222 = vunpack.c.l.b16 %v271
  %v1223 = vunpack.c.l.b16 %v272
  %v1224 = vunpack.c.l.b16 %v273
  %v1225 = vunpack.c.l.b16 %v274
  %v1226 = vunpack.c.l.b16 %v275
  %v1227 = vunpack.c.l.b16 %v276
  %v1228 = vunpack.c.l.b16 %v277
  %v1229 = vunpack.c.l.b16 %v278
  %v1230 = vpack.c.b16 %v1159, %v1158
  %v1231 = vpack.c.b16 %v1161, %v1160
  %v1232 = vpack.c.b16 %v1163, %v1162
  %v1233 = vpack.c.b16 %v1165, %v1164
  %v1234 = vpack.c.b16 %v1167, %v1166
  %v1235 = vpack.c.b16 %v1169, %v1168
  %v1236 = vpack.c.b16 %v1171, %v1170
  %v1237 = vpack.c.b16 %v1173, %v1172
  %v1238 = vpack.c.b16 %v1175, %v1174
  %v1239 = vpack.c.b16 %v1177, %v1176
  %v1240 = vpack.c.b16 %v1179, %v1178
  %v1241 = vpack.c.b16 %v1181, %v1180
  %v1242 = vpack.c.b16 %v1183, %v1182
  %v1243 = vpack.c.b16 %v1185, %v1184
  %v1244 = vpack.c.b16 %v1187, %v1186
  %v1245 = vpack.c.b16 %v1189, %v1188
  %v1246 = vpack.c.b16 %v1191, %v1190
  %v1247 = vpack.c.b16 %v1193, %v1192
  %v1248 = vpack.c.b16 %v1195, %v1194
  %v1249 = vpack.c.b16 %v1197, %v1196
  %v1250 = vpack.c.b16 %v1199, %v1198
  %v1251 = vpack.c.b16 %v1201, %v1200
  %v1252 = vpack.c.b16 %v1203, %v1202
  %v1253 = vpack.c.b16 %v1205, %v1204
  %v1254 = vpack.c.b16 %v1207, %v1206
  %v1255 = vpack.c.b16 %v1209, %v1208
  %v1256 = vpack.c.b16 %v1211, %v1210
  %v1257 = vpack.c.b16 %v1213, %v1212
  %v1258 = vpack.c.b16 %v1215, %v1214
  %v1259 = vpack.c.b16 %v1217, %v1216
  %v1260 = vpack.c.b16 %v1219, %v1218
  %v1261 = vpack.c.b16 %v1221, %v1220
  %v1262 = vpack.c.b16 %v1223, %v1222
  %v1263 = vpack.c.b16 %v1225, %v1224
  %v1264 = vpack.c.b16 %v1227, %v1226
  %v1265 = vpack.c.b16 %v1229, %v1228
  %vm1302 = vcmask 523264
  %v1304 = vsel %vm1302, %v802, 0
  %v1307 = vsel %vm1302, %v807, 0
  %v1310 = vsel %vm1302, %v812, 0
  %v1313 = vsel %vm1302, %v817, 0
  %v1316 = vsel %vm1302, %v822, 0
  %v1319 = vsel %vm1302, %v827, 0
  %v1322 = vsel %vm1302, %v832, 0
  %v1325 = vsel %vm1302, %v837, 0
  %v1328 = vsel %vm1302, %v842, 0
  %v1331 = vsel %vm1302, %v847, 0
  %v1334 = vsel %vm1302, %v852, 0
  %v1337 = vsel %vm1302, %v857, 0
  %v1340 = vsel %vm1302, %v862, 0
  %v1343 = vsel %vm1302, %v867, 0
  %v1346 = vsel %vm1302, %v872, 0
  %v1349 = vsel %vm1302, %v877, 0
  %v1352 = vsel %vm1302, %v882, 0
  %v1355 = vsel %vm1302, %v887, 0
  %v1358 = vsel %vm1302, %v892, 0
  %v1361 = vsel %vm1302, %v897, 0
  %v1364 = vsel %vm1302, %v902, 0
  %v1367 = vsel %vm1302, %v907, 0
  %v1370 = vsel %vm1302, %v912, 0
  %v1373 = vsel %vm1302, %v917, 0
  %v1376 = vsel %vm1302, %v922, 0
  %v1379 = vsel %vm1302, %v927, 0
  %v1382 = vsel %vm1302, %v932, 0
  %v1385 = vsel %vm1302, %v937, 0
  %v1388 = vsel %vm1302, %v942, 0
  %v1391 = vsel %vm1302, %v947, 0
  %v1394 = vsel %vm1302, %v952, 0
  %v1397 = vsel %vm1302, %v957, 0
  %1399 = vmatprep.subr.bf16.mxu0 0
  %1400 = vmatpush1.bf16.msra.mxu0 %v1237
  %1401 = vmatprep.subr.bf16.mxu0 0
  %1402 = vmatpush1.bf16.msra.mxu0 %v1236
  %1403 = vmatprep.subr.bf16.mxu0 0
  %1404 = vmatpush1.bf16.msra.mxu0 %v1235
  %1405 = vmatprep.subr.bf16.mxu0 0
  %1406 = vmatpush1.bf16.msra.mxu0 %v1234
  %1407 = vmatprep.subr.bf16.mxu0 0
  %1408 = vmatpush1.bf16.msra.mxu0 %v1233
  %1409 = vmatprep.subr.bf16.mxu0 0
  %1410 = vmatpush1.bf16.msra.mxu0 %v1232
  %1411 = vmatprep.subr.bf16.mxu0 0
  %1412 = vmatpush1.bf16.msra.mxu0 %v1231
  %1413 = vmatprep.subr.bf16.mxu0 0
  %1414 = vmatpush1.bf16.msra.mxu0 %v1230
  %1415 = vmatprep.subr.bf16.mxu0 0
  %1416 = vmatpush2.bf16.msra.mxu0 %v1245
  %1417 = vmatprep.subr.bf16.mxu0 0
  %1418 = vmatpush2.bf16.msra.mxu0 %v1244
  %1419 = vmatprep.subr.bf16.mxu0 0
  %1420 = vmatpush2.bf16.msra.mxu0 %v1243
  %1421 = vmatprep.subr.bf16.mxu0 0
  %1422 = vmatpush2.bf16.msra.mxu0 %v1242
  %1423 = vmatprep.subr.bf16.mxu0 0
  %1424 = vmatpush2.bf16.msra.mxu0 %v1241
  %1425 = vmatprep.subr.bf16.mxu0 0
  %1426 = vmatpush2.bf16.msra.mxu0 %v1240
  %1427 = vmatprep.subr.bf16.mxu0 0
  %1428 = vmatpush2.bf16.msra.mxu0 %v1239
  %1429 = vmatprep.subr.bf16.mxu0 0
  %1430 = vmatpush2.bf16.msra.mxu0 %v1238
  %1431 = vmatprep.mubr.bf16.mxu0 %v799
  %1432 = vmatmul.mubr.bf16.gmra.mxu0 %v798
  %v1433 = vpop.f32.mrf.mxu0
  %v1434 = vadd.f32 %v284, %v1433
  %v1435 = vpop.f32.mrf.mxu0
  %v1436 = vpop.f32.mrf.mxu0
  %v1437 = vadd.f32 %v284, %v1436
  %v1438 = vpop.f32.mrf.mxu0
  %1439 = vmatprep.mubr.bf16.mxu0 %v804
  %1440 = vmatmul.mubr.bf16.gmra.mxu0 %v803
  %v1441 = vpop.f32.mrf.mxu0
  %v1442 = vadd.f32 %v284, %v1441
  %v1443 = vpop.f32.mrf.mxu0
  %v1444 = vpop.f32.mrf.mxu0
  %v1445 = vadd.f32 %v284, %v1444
  %v1446 = vpop.f32.mrf.mxu0
  %1447 = vmatprep.mubr.bf16.mxu0 %v809
  %1448 = vmatmul.mubr.bf16.gmra.mxu0 %v808
  %v1449 = vpop.f32.mrf.mxu0
  %v1450 = vadd.f32 %v284, %v1449
  %v1451 = vpop.f32.mrf.mxu0
  %v1452 = vpop.f32.mrf.mxu0
  %v1453 = vadd.f32 %v284, %v1452
  %v1454 = vpop.f32.mrf.mxu0
  %1455 = vmatprep.mubr.bf16.mxu0 %v814
  %1456 = vmatmul.mubr.bf16.gmra.mxu0 %v813
  %v1457 = vpop.f32.mrf.mxu0
  %v1458 = vadd.f32 %v284, %v1457
  %v1459 = vpop.f32.mrf.mxu0
  %v1460 = vpop.f32.mrf.mxu0
  %v1461 = vadd.f32 %v284, %v1460
  %v1462 = vpop.f32.mrf.mxu0
  %1463 = vmatprep.mubr.bf16.mxu0 %v819
  %1464 = vmatmul.mubr.bf16.gmra.mxu0 %v818
  %v1465 = vpop.f32.mrf.mxu0
  %v1466 = vadd.f32 %v284, %v1465
  %v1467 = vpop.f32.mrf.mxu0
  %v1468 = vpop.f32.mrf.mxu0
  %v1469 = vadd.f32 %v284, %v1468
  %v1470 = vpop.f32.mrf.mxu0
  %1471 = vmatprep.mubr.bf16.mxu0 %v824
  %1472 = vmatmul.mubr.bf16.gmra.mxu0 %v823
  %v1473 = vpop.f32.mrf.mxu0
  %v1474 = vadd.f32 %v284, %v1473
  %v1475 = vpop.f32.mrf.mxu0
  %v1476 = vpop.f32.mrf.mxu0
  %v1477 = vadd.f32 %v284, %v1476
  %v1478 = vpop.f32.mrf.mxu0
  %1479 = vmatprep.mubr.bf16.mxu0 %v829
  %1480 = vmatmul.mubr.bf16.gmra.mxu0 %v828
  %v1481 = vpop.f32.mrf.mxu0
  %v1482 = vadd.f32 %v284, %v1481
  %v1483 = vpop.f32.mrf.mxu0
  %v1484 = vpop.f32.mrf.mxu0
  %v1485 = vadd.f32 %v284, %v1484
  %v1486 = vpop.f32.mrf.mxu0
  %1487 = vmatprep.mubr.bf16.mxu0 %v834
  %1488 = vmatmul.mubr.bf16.gmra.mxu0 %v833
  %v1489 = vpop.f32.mrf.mxu0
  %v1490 = vadd.f32 %v284, %v1489
  %v1491 = vpop.f32.mrf.mxu0
  %v1492 = vpop.f32.mrf.mxu0
  %v1493 = vadd.f32 %v284, %v1492
  %v1494 = vpop.f32.mrf.mxu0
  %1495 = vmatprep.mubr.bf16.mxu0 %v839
  %1496 = vmatmul.mubr.bf16.gmra.mxu0 %v838
  %v1497 = vpop.f32.mrf.mxu0
  %v1498 = vadd.f32 %v284, %v1497
  %v1499 = vpop.f32.mrf.mxu0
  %v1500 = vpop.f32.mrf.mxu0
  %v1501 = vadd.f32 %v284, %v1500
  %v1502 = vpop.f32.mrf.mxu0
  %1503 = vmatprep.mubr.bf16.mxu0 %v844
  %1504 = vmatmul.mubr.bf16.gmra.mxu0 %v843
  %v1505 = vpop.f32.mrf.mxu0
  %v1506 = vadd.f32 %v284, %v1505
  %v1507 = vpop.f32.mrf.mxu0
  %v1508 = vpop.f32.mrf.mxu0
  %v1509 = vadd.f32 %v284, %v1508
  %v1510 = vpop.f32.mrf.mxu0
  %1511 = vmatprep.mubr.bf16.mxu0 %v849
  %1512 = vmatmul.mubr.bf16.gmra.mxu0 %v848
  %v1513 = vpop.f32.mrf.mxu0
  %v1514 = vadd.f32 %v284, %v1513
  %v1515 = vpop.f32.mrf.mxu0
  %v1516 = vpop.f32.mrf.mxu0
  %v1517 = vadd.f32 %v284, %v1516
  %v1518 = vpop.f32.mrf.mxu0
  %1519 = vmatprep.mubr.bf16.mxu0 %v854
  %1520 = vmatmul.mubr.bf16.gmra.mxu0 %v853
  %v1521 = vpop.f32.mrf.mxu0
  %v1522 = vadd.f32 %v284, %v1521
  %v1523 = vpop.f32.mrf.mxu0
  %v1524 = vpop.f32.mrf.mxu0
  %v1525 = vadd.f32 %v284, %v1524
  %v1526 = vpop.f32.mrf.mxu0
  %1527 = vmatprep.mubr.bf16.mxu0 %v859
  %1528 = vmatmul.mubr.bf16.gmra.mxu0 %v858
  %v1529 = vpop.f32.mrf.mxu0
  %v1530 = vadd.f32 %v284, %v1529
  %v1531 = vpop.f32.mrf.mxu0
  %v1532 = vpop.f32.mrf.mxu0
  %v1533 = vadd.f32 %v284, %v1532
  %v1534 = vpop.f32.mrf.mxu0
  %1535 = vmatprep.mubr.bf16.mxu0 %v864
  %1536 = vmatmul.mubr.bf16.gmra.mxu0 %v863
  %v1537 = vpop.f32.mrf.mxu0
  %v1538 = vadd.f32 %v284, %v1537
  %v1539 = vpop.f32.mrf.mxu0
  %v1540 = vpop.f32.mrf.mxu0
  %v1541 = vadd.f32 %v284, %v1540
  %v1542 = vpop.f32.mrf.mxu0
  %1543 = vmatprep.mubr.bf16.mxu0 %v869
  %1544 = vmatmul.mubr.bf16.gmra.mxu0 %v868
  %v1545 = vpop.f32.mrf.mxu0
  %v1546 = vadd.f32 %v284, %v1545
  %v1547 = vpop.f32.mrf.mxu0
  %v1548 = vpop.f32.mrf.mxu0
  %v1549 = vadd.f32 %v284, %v1548
  %v1550 = vpop.f32.mrf.mxu0
  %1551 = vmatprep.mubr.bf16.mxu0 %v874
  %1552 = vmatmul.mubr.bf16.gmra.mxu0 %v873
  %v1553 = vpop.f32.mrf.mxu0
  %v1554 = vadd.f32 %v284, %v1553
  %v1555 = vpop.f32.mrf.mxu0
  %v1556 = vpop.f32.mrf.mxu0
  %v1557 = vadd.f32 %v284, %v1556
  %v1558 = vpop.f32.mrf.mxu0
  %1559 = vmatprep.mubr.bf16.mxu0 %v879
  %1560 = vmatmul.mubr.bf16.gmra.mxu0 %v878
  %v1561 = vpop.f32.mrf.mxu0
  %v1562 = vadd.f32 %v284, %v1561
  %v1563 = vpop.f32.mrf.mxu0
  %v1564 = vpop.f32.mrf.mxu0
  %v1565 = vadd.f32 %v284, %v1564
  %v1566 = vpop.f32.mrf.mxu0
  %1567 = vmatprep.mubr.bf16.mxu0 %v884
  %1568 = vmatmul.mubr.bf16.gmra.mxu0 %v883
  %v1569 = vpop.f32.mrf.mxu0
  %v1570 = vadd.f32 %v284, %v1569
  %v1571 = vpop.f32.mrf.mxu0
  %v1572 = vpop.f32.mrf.mxu0
  %v1573 = vadd.f32 %v284, %v1572
  %v1574 = vpop.f32.mrf.mxu0
  %1575 = vmatprep.mubr.bf16.mxu0 %v889
  %1576 = vmatmul.mubr.bf16.gmra.mxu0 %v888
  %v1577 = vpop.f32.mrf.mxu0
  %v1578 = vadd.f32 %v284, %v1577
  %v1579 = vpop.f32.mrf.mxu0
  %v1580 = vpop.f32.mrf.mxu0
  %v1581 = vadd.f32 %v284, %v1580
  %v1582 = vpop.f32.mrf.mxu0
  %1583 = vmatprep.mubr.bf16.mxu0 %v894
  %1584 = vmatmul.mubr.bf16.gmra.mxu0 %v893
  %v1585 = vpop.f32.mrf.mxu0
  %v1586 = vadd.f32 %v284, %v1585
  %v1587 = vpop.f32.mrf.mxu0
  %v1588 = vpop.f32.mrf.mxu0
  %v1589 = vadd.f32 %v284, %v1588
  %v1590 = vpop.f32.mrf.mxu0
  %1591 = vmatprep.mubr.bf16.mxu0 %v899
  %1592 = vmatmul.mubr.bf16.gmra.mxu0 %v898
  %v1593 = vpop.f32.mrf.mxu0
  %v1594 = vadd.f32 %v284, %v1593
  %v1595 = vpop.f32.mrf.mxu0
  %v1596 = vpop.f32.mrf.mxu0
  %v1597 = vadd.f32 %v284, %v1596
  %v1598 = vpop.f32.mrf.mxu0
  %1599 = vmatprep.mubr.bf16.mxu0 %v904
  %1600 = vmatmul.mubr.bf16.gmra.mxu0 %v903
  %v1601 = vpop.f32.mrf.mxu0
  %v1602 = vadd.f32 %v284, %v1601
  %v1603 = vpop.f32.mrf.mxu0
  %v1604 = vpop.f32.mrf.mxu0
  %v1605 = vadd.f32 %v284, %v1604
  %v1606 = vpop.f32.mrf.mxu0
  %1607 = vmatprep.mubr.bf16.mxu0 %v909
  %1608 = vmatmul.mubr.bf16.gmra.mxu0 %v908
  %v1609 = vpop.f32.mrf.mxu0
  %v1610 = vadd.f32 %v284, %v1609
  %v1611 = vpop.f32.mrf.mxu0
  %v1612 = vpop.f32.mrf.mxu0
  %v1613 = vadd.f32 %v284, %v1612
  %v1614 = vpop.f32.mrf.mxu0
  %1615 = vmatprep.mubr.bf16.mxu0 %v914
  %1616 = vmatmul.mubr.bf16.gmra.mxu0 %v913
  %v1617 = vpop.f32.mrf.mxu0
  %v1618 = vadd.f32 %v284, %v1617
  %v1619 = vpop.f32.mrf.mxu0
  %v1620 = vpop.f32.mrf.mxu0
  %v1621 = vadd.f32 %v284, %v1620
  %v1622 = vpop.f32.mrf.mxu0
  %1623 = vmatprep.mubr.bf16.mxu0 %v919
  %1624 = vmatmul.mubr.bf16.gmra.mxu0 %v918
  %v1625 = vpop.f32.mrf.mxu0
  %v1626 = vadd.f32 %v284, %v1625
  %v1627 = vpop.f32.mrf.mxu0
  %v1628 = vpop.f32.mrf.mxu0
  %v1629 = vadd.f32 %v284, %v1628
  %v1630 = vpop.f32.mrf.mxu0
  %1631 = vmatprep.mubr.bf16.mxu0 %v924
  %1632 = vmatmul.mubr.bf16.gmra.mxu0 %v923
  %v1633 = vpop.f32.mrf.mxu0
  %v1634 = vadd.f32 %v284, %v1633
  %v1635 = vpop.f32.mrf.mxu0
  %v1636 = vpop.f32.mrf.mxu0
  %v1637 = vadd.f32 %v284, %v1636
  %v1638 = vpop.f32.mrf.mxu0
  %1639 = vmatprep.mubr.bf16.mxu0 %v929
  %1640 = vmatmul.mubr.bf16.gmra.mxu0 %v928
  %v1641 = vpop.f32.mrf.mxu0
  %v1642 = vadd.f32 %v284, %v1641
  %v1643 = vpop.f32.mrf.mxu0
  %v1644 = vpop.f32.mrf.mxu0
  %v1645 = vadd.f32 %v284, %v1644
  %v1646 = vpop.f32.mrf.mxu0
  %1647 = vmatprep.mubr.bf16.mxu0 %v934
  %1648 = vmatmul.mubr.bf16.gmra.mxu0 %v933
  %v1649 = vpop.f32.mrf.mxu0
  %v1650 = vadd.f32 %v284, %v1649
  %v1651 = vpop.f32.mrf.mxu0
  %v1652 = vpop.f32.mrf.mxu0
  %v1653 = vadd.f32 %v284, %v1652
  %v1654 = vpop.f32.mrf.mxu0
  %1655 = vmatprep.mubr.bf16.mxu0 %v939
  %1656 = vmatmul.mubr.bf16.gmra.mxu0 %v938
  %v1657 = vpop.f32.mrf.mxu0
  %v1658 = vadd.f32 %v284, %v1657
  %v1659 = vpop.f32.mrf.mxu0
  %v1660 = vpop.f32.mrf.mxu0
  %v1661 = vadd.f32 %v284, %v1660
  %v1662 = vpop.f32.mrf.mxu0
  %1663 = vmatprep.mubr.bf16.mxu0 %v944
  %1664 = vmatmul.mubr.bf16.gmra.mxu0 %v943
  %v1665 = vpop.f32.mrf.mxu0
  %v1666 = vadd.f32 %v284, %v1665
  %v1667 = vpop.f32.mrf.mxu0
  %v1668 = vpop.f32.mrf.mxu0
  %v1669 = vadd.f32 %v284, %v1668
  %v1670 = vpop.f32.mrf.mxu0
  %1671 = vmatprep.mubr.bf16.mxu0 %v949
  %1672 = vmatmul.mubr.bf16.gmra.mxu0 %v948
  %v1673 = vpop.f32.mrf.mxu0
  %v1674 = vadd.f32 %v284, %v1673
  %v1675 = vpop.f32.mrf.mxu0
  %v1676 = vpop.f32.mrf.mxu0
  %v1677 = vadd.f32 %v284, %v1676
  %v1678 = vpop.f32.mrf.mxu0
  %1679 = vmatprep.mubr.bf16.mxu0 %v954
  %1680 = vmatmul.mubr.bf16.gmra.mxu0 %v953
  %v1681 = vpop.f32.mrf.mxu0
  %v1682 = vadd.f32 %v284, %v1681
  %v1683 = vpop.f32.mrf.mxu0
  %v1684 = vpop.f32.mrf.mxu0
  %v1685 = vadd.f32 %v284, %v1684
  %v1686 = vpop.f32.mrf.mxu0
  %1687 = vdwg.mxu0
  %1688 = vmatprep.subr.bf16.mxu0 0
  %1689 = vmatpush1.bf16.msra.mxu0 %v1253
  %1690 = vmatprep.subr.bf16.mxu0 0
  %1691 = vmatpush1.bf16.msra.mxu0 %v1252
  %1692 = vmatprep.subr.bf16.mxu0 0
  %1693 = vmatpush1.bf16.msra.mxu0 %v1251
  %1694 = vmatprep.subr.bf16.mxu0 0
  %1695 = vmatpush1.bf16.msra.mxu0 %v1250
  %1696 = vmatprep.subr.bf16.mxu0 0
  %1697 = vmatpush1.bf16.msra.mxu0 %v1249
  %1698 = vmatprep.subr.bf16.mxu0 0
  %1699 = vmatpush1.bf16.msra.mxu0 %v1248
  %1700 = vmatprep.subr.bf16.mxu0 0
  %1701 = vmatpush1.bf16.msra.mxu0 %v1247
  %1702 = vmatprep.subr.bf16.mxu0 0
  %1703 = vmatpush1.bf16.msra.mxu0 %v1246
  %1704 = vmatprep.subr.bf16.mxu0 0
  %1705 = vmatpush2.bf16.msra.mxu0 %v1261
  %1706 = vmatprep.subr.bf16.mxu0 0
  %1707 = vmatpush2.bf16.msra.mxu0 %v1260
  %1708 = vmatprep.subr.bf16.mxu0 0
  %1709 = vmatpush2.bf16.msra.mxu0 %v1259
  %1710 = vmatprep.subr.bf16.mxu0 0
  %1711 = vmatpush2.bf16.msra.mxu0 %v1258
  %1712 = vmatprep.subr.bf16.mxu0 0
  %1713 = vmatpush2.bf16.msra.mxu0 %v1257
  %1714 = vmatprep.subr.bf16.mxu0 0
  %1715 = vmatpush2.bf16.msra.mxu0 %v1256
  %1716 = vmatprep.subr.bf16.mxu0 0
  %1717 = vmatpush2.bf16.msra.mxu0 %v1255
  %1718 = vmatprep.subr.bf16.mxu0 0
  %1719 = vmatpush2.bf16.msra.mxu0 %v1254
  %1720 = vmatprep.mubr.bf16.mxu0 %v801
  %1721 = vmatmul.mubr.bf16.gmra.mxu0 %v800
  %v1722 = vpop.f32.mrf.mxu0
  %v1723 = vadd.f32 %v1434, %v1722
  %v1724 = vpop.f32.mrf.mxu0
  %v1725 = vpop.f32.mrf.mxu0
  %v1726 = vadd.f32 %v1437, %v1725
  %v1727 = vpop.f32.mrf.mxu0
  %1728 = vmatprep.mubr.bf16.mxu0 %v806
  %1729 = vmatmul.mubr.bf16.gmra.mxu0 %v805
  %v1730 = vpop.f32.mrf.mxu0
  %v1731 = vadd.f32 %v1442, %v1730
  %v1732 = vpop.f32.mrf.mxu0
  %v1733 = vpop.f32.mrf.mxu0
  %v1734 = vadd.f32 %v1445, %v1733
  %v1735 = vpop.f32.mrf.mxu0
  %1736 = vmatprep.mubr.bf16.mxu0 %v811
  %1737 = vmatmul.mubr.bf16.gmra.mxu0 %v810
  %v1738 = vpop.f32.mrf.mxu0
  %v1739 = vadd.f32 %v1450, %v1738
  %v1740 = vpop.f32.mrf.mxu0
  %v1741 = vpop.f32.mrf.mxu0
  %v1742 = vadd.f32 %v1453, %v1741
  %v1743 = vpop.f32.mrf.mxu0
  %1744 = vmatprep.mubr.bf16.mxu0 %v816
  %1745 = vmatmul.mubr.bf16.gmra.mxu0 %v815
  %v1746 = vpop.f32.mrf.mxu0
  %v1747 = vadd.f32 %v1458, %v1746
  %v1748 = vpop.f32.mrf.mxu0
  %v1749 = vpop.f32.mrf.mxu0
  %v1750 = vadd.f32 %v1461, %v1749
  %v1751 = vpop.f32.mrf.mxu0
  %1752 = vmatprep.mubr.bf16.mxu0 %v821
  %1753 = vmatmul.mubr.bf16.gmra.mxu0 %v820
  %v1754 = vpop.f32.mrf.mxu0
  %v1755 = vadd.f32 %v1466, %v1754
  %v1756 = vpop.f32.mrf.mxu0
  %v1757 = vpop.f32.mrf.mxu0
  %v1758 = vadd.f32 %v1469, %v1757
  %v1759 = vpop.f32.mrf.mxu0
  %1760 = vmatprep.mubr.bf16.mxu0 %v826
  %1761 = vmatmul.mubr.bf16.gmra.mxu0 %v825
  %v1762 = vpop.f32.mrf.mxu0
  %v1763 = vadd.f32 %v1474, %v1762
  %v1764 = vpop.f32.mrf.mxu0
  %v1765 = vpop.f32.mrf.mxu0
  %v1766 = vadd.f32 %v1477, %v1765
  %v1767 = vpop.f32.mrf.mxu0
  %1768 = vmatprep.mubr.bf16.mxu0 %v831
  %1769 = vmatmul.mubr.bf16.gmra.mxu0 %v830
  %v1770 = vpop.f32.mrf.mxu0
  %v1771 = vadd.f32 %v1482, %v1770
  %v1772 = vpop.f32.mrf.mxu0
  %v1773 = vpop.f32.mrf.mxu0
  %v1774 = vadd.f32 %v1485, %v1773
  %v1775 = vpop.f32.mrf.mxu0
  %1776 = vmatprep.mubr.bf16.mxu0 %v836
  %1777 = vmatmul.mubr.bf16.gmra.mxu0 %v835
  %v1778 = vpop.f32.mrf.mxu0
  %v1779 = vadd.f32 %v1490, %v1778
  %v1780 = vpop.f32.mrf.mxu0
  %v1781 = vpop.f32.mrf.mxu0
  %v1782 = vadd.f32 %v1493, %v1781
  %v1783 = vpop.f32.mrf.mxu0
  %1784 = vmatprep.mubr.bf16.mxu0 %v841
  %1785 = vmatmul.mubr.bf16.gmra.mxu0 %v840
  %v1786 = vpop.f32.mrf.mxu0
  %v1787 = vadd.f32 %v1498, %v1786
  %v1788 = vpop.f32.mrf.mxu0
  %v1789 = vpop.f32.mrf.mxu0
  %v1790 = vadd.f32 %v1501, %v1789
  %v1791 = vpop.f32.mrf.mxu0
  %1792 = vmatprep.mubr.bf16.mxu0 %v846
  %1793 = vmatmul.mubr.bf16.gmra.mxu0 %v845
  %v1794 = vpop.f32.mrf.mxu0
  %v1795 = vadd.f32 %v1506, %v1794
  %v1796 = vpop.f32.mrf.mxu0
  %v1797 = vpop.f32.mrf.mxu0
  %v1798 = vadd.f32 %v1509, %v1797
  %v1799 = vpop.f32.mrf.mxu0
  %1800 = vmatprep.mubr.bf16.mxu0 %v851
  %1801 = vmatmul.mubr.bf16.gmra.mxu0 %v850
  %v1802 = vpop.f32.mrf.mxu0
  %v1803 = vadd.f32 %v1514, %v1802
  %v1804 = vpop.f32.mrf.mxu0
  %v1805 = vpop.f32.mrf.mxu0
  %v1806 = vadd.f32 %v1517, %v1805
  %v1807 = vpop.f32.mrf.mxu0
  %1808 = vmatprep.mubr.bf16.mxu0 %v856
  %1809 = vmatmul.mubr.bf16.gmra.mxu0 %v855
  %v1810 = vpop.f32.mrf.mxu0
  %v1811 = vadd.f32 %v1522, %v1810
  %v1812 = vpop.f32.mrf.mxu0
  %v1813 = vpop.f32.mrf.mxu0
  %v1814 = vadd.f32 %v1525, %v1813
  %v1815 = vpop.f32.mrf.mxu0
  %1816 = vmatprep.mubr.bf16.mxu0 %v861
  %1817 = vmatmul.mubr.bf16.gmra.mxu0 %v860
  %v1818 = vpop.f32.mrf.mxu0
  %v1819 = vadd.f32 %v1530, %v1818
  %v1820 = vpop.f32.mrf.mxu0
  %v1821 = vpop.f32.mrf.mxu0
  %v1822 = vadd.f32 %v1533, %v1821
  %v1823 = vpop.f32.mrf.mxu0
  %1824 = vmatprep.mubr.bf16.mxu0 %v866
  %1825 = vmatmul.mubr.bf16.gmra.mxu0 %v865
  %v1826 = vpop.f32.mrf.mxu0
  %v1827 = vadd.f32 %v1538, %v1826
  %v1828 = vpop.f32.mrf.mxu0
  %v1829 = vpop.f32.mrf.mxu0
  %v1830 = vadd.f32 %v1541, %v1829
  %v1831 = vpop.f32.mrf.mxu0
  %1832 = vmatprep.mubr.bf16.mxu0 %v871
  %1833 = vmatmul.mubr.bf16.gmra.mxu0 %v870
  %v1834 = vpop.f32.mrf.mxu0
  %v1835 = vadd.f32 %v1546, %v1834
  %v1836 = vpop.f32.mrf.mxu0
  %v1837 = vpop.f32.mrf.mxu0
  %v1838 = vadd.f32 %v1549, %v1837
  %v1839 = vpop.f32.mrf.mxu0
  %1840 = vmatprep.mubr.bf16.mxu0 %v876
  %1841 = vmatmul.mubr.bf16.gmra.mxu0 %v875
  %v1842 = vpop.f32.mrf.mxu0
  %v1843 = vadd.f32 %v1554, %v1842
  %v1844 = vpop.f32.mrf.mxu0
  %v1845 = vpop.f32.mrf.mxu0
  %v1846 = vadd.f32 %v1557, %v1845
  %v1847 = vpop.f32.mrf.mxu0
  %1848 = vmatprep.mubr.bf16.mxu0 %v881
  %1849 = vmatmul.mubr.bf16.gmra.mxu0 %v880
  %v1850 = vpop.f32.mrf.mxu0
  %v1851 = vadd.f32 %v1562, %v1850
  %v1852 = vpop.f32.mrf.mxu0
  %v1853 = vpop.f32.mrf.mxu0
  %v1854 = vadd.f32 %v1565, %v1853
  %v1855 = vpop.f32.mrf.mxu0
  %1856 = vmatprep.mubr.bf16.mxu0 %v886
  %1857 = vmatmul.mubr.bf16.gmra.mxu0 %v885
  %v1858 = vpop.f32.mrf.mxu0
  %v1859 = vadd.f32 %v1570, %v1858
  %v1860 = vpop.f32.mrf.mxu0
  %v1861 = vpop.f32.mrf.mxu0
  %v1862 = vadd.f32 %v1573, %v1861
  %v1863 = vpop.f32.mrf.mxu0
  %1864 = vmatprep.mubr.bf16.mxu0 %v891
  %1865 = vmatmul.mubr.bf16.gmra.mxu0 %v890
  %v1866 = vpop.f32.mrf.mxu0
  %v1867 = vadd.f32 %v1578, %v1866
  %v1868 = vpop.f32.mrf.mxu0
  %v1869 = vpop.f32.mrf.mxu0
  %v1870 = vadd.f32 %v1581, %v1869
  %v1871 = vpop.f32.mrf.mxu0
  %1872 = vmatprep.mubr.bf16.mxu0 %v896
  %1873 = vmatmul.mubr.bf16.gmra.mxu0 %v895
  %v1874 = vpop.f32.mrf.mxu0
  %v1875 = vadd.f32 %v1586, %v1874
  %v1876 = vpop.f32.mrf.mxu0
  %v1877 = vpop.f32.mrf.mxu0
  %v1878 = vadd.f32 %v1589, %v1877
  %v1879 = vpop.f32.mrf.mxu0
  %1880 = vmatprep.mubr.bf16.mxu0 %v901
  %1881 = vmatmul.mubr.bf16.gmra.mxu0 %v900
  %v1882 = vpop.f32.mrf.mxu0
  %v1883 = vadd.f32 %v1594, %v1882
  %v1884 = vpop.f32.mrf.mxu0
  %v1885 = vpop.f32.mrf.mxu0
  %v1886 = vadd.f32 %v1597, %v1885
  %v1887 = vpop.f32.mrf.mxu0
  %1888 = vmatprep.mubr.bf16.mxu0 %v906
  %1889 = vmatmul.mubr.bf16.gmra.mxu0 %v905
  %v1890 = vpop.f32.mrf.mxu0
  %v1891 = vadd.f32 %v1602, %v1890
  %v1892 = vpop.f32.mrf.mxu0
  %v1893 = vpop.f32.mrf.mxu0
  %v1894 = vadd.f32 %v1605, %v1893
  %v1895 = vpop.f32.mrf.mxu0
  %1896 = vmatprep.mubr.bf16.mxu0 %v911
  %1897 = vmatmul.mubr.bf16.gmra.mxu0 %v910
  %v1898 = vpop.f32.mrf.mxu0
  %v1899 = vadd.f32 %v1610, %v1898
  %v1900 = vpop.f32.mrf.mxu0
  %v1901 = vpop.f32.mrf.mxu0
  %v1902 = vadd.f32 %v1613, %v1901
  %v1903 = vpop.f32.mrf.mxu0
  %1904 = vmatprep.mubr.bf16.mxu0 %v916
  %1905 = vmatmul.mubr.bf16.gmra.mxu0 %v915
  %v1906 = vpop.f32.mrf.mxu0
  %v1907 = vadd.f32 %v1618, %v1906
  %v1908 = vpop.f32.mrf.mxu0
  %v1909 = vpop.f32.mrf.mxu0
  %v1910 = vadd.f32 %v1621, %v1909
  %v1911 = vpop.f32.mrf.mxu0
  %1912 = vmatprep.mubr.bf16.mxu0 %v921
  %1913 = vmatmul.mubr.bf16.gmra.mxu0 %v920
  %v1914 = vpop.f32.mrf.mxu0
  %v1915 = vadd.f32 %v1626, %v1914
  %v1916 = vpop.f32.mrf.mxu0
  %v1917 = vpop.f32.mrf.mxu0
  %v1918 = vadd.f32 %v1629, %v1917
  %v1919 = vpop.f32.mrf.mxu0
  %1920 = vmatprep.mubr.bf16.mxu0 %v926
  %1921 = vmatmul.mubr.bf16.gmra.mxu0 %v925
  %v1922 = vpop.f32.mrf.mxu0
  %v1923 = vadd.f32 %v1634, %v1922
  %v1924 = vpop.f32.mrf.mxu0
  %v1925 = vpop.f32.mrf.mxu0
  %v1926 = vadd.f32 %v1637, %v1925
  %v1927 = vpop.f32.mrf.mxu0
  %1928 = vmatprep.mubr.bf16.mxu0 %v931
  %1929 = vmatmul.mubr.bf16.gmra.mxu0 %v930
  %v1930 = vpop.f32.mrf.mxu0
  %v1931 = vadd.f32 %v1642, %v1930
  %v1932 = vpop.f32.mrf.mxu0
  %v1933 = vpop.f32.mrf.mxu0
  %v1934 = vadd.f32 %v1645, %v1933
  %v1935 = vpop.f32.mrf.mxu0
  %1936 = vmatprep.mubr.bf16.mxu0 %v936
  %1937 = vmatmul.mubr.bf16.gmra.mxu0 %v935
  %v1938 = vpop.f32.mrf.mxu0
  %v1939 = vadd.f32 %v1650, %v1938
  %v1940 = vpop.f32.mrf.mxu0
  %v1941 = vpop.f32.mrf.mxu0
  %v1942 = vadd.f32 %v1653, %v1941
  %v1943 = vpop.f32.mrf.mxu0
  %1944 = vmatprep.mubr.bf16.mxu0 %v941
  %1945 = vmatmul.mubr.bf16.gmra.mxu0 %v940
  %v1946 = vpop.f32.mrf.mxu0
  %v1947 = vadd.f32 %v1658, %v1946
  %v1948 = vpop.f32.mrf.mxu0
  %v1949 = vpop.f32.mrf.mxu0
  %v1950 = vadd.f32 %v1661, %v1949
  %v1951 = vpop.f32.mrf.mxu0
  %1952 = vmatprep.mubr.bf16.mxu0 %v946
  %1953 = vmatmul.mubr.bf16.gmra.mxu0 %v945
  %v1954 = vpop.f32.mrf.mxu0
  %v1955 = vadd.f32 %v1666, %v1954
  %v1956 = vpop.f32.mrf.mxu0
  %v1957 = vpop.f32.mrf.mxu0
  %v1958 = vadd.f32 %v1669, %v1957
  %v1959 = vpop.f32.mrf.mxu0
  %1960 = vmatprep.mubr.bf16.mxu0 %v951
  %1961 = vmatmul.mubr.bf16.gmra.mxu0 %v950
  %v1962 = vpop.f32.mrf.mxu0
  %v1963 = vadd.f32 %v1674, %v1962
  %v1964 = vpop.f32.mrf.mxu0
  %v1965 = vpop.f32.mrf.mxu0
  %v1966 = vadd.f32 %v1677, %v1965
  %v1967 = vpop.f32.mrf.mxu0
  %1968 = vmatprep.mubr.bf16.mxu0 %v956
  %1969 = vmatmul.mubr.bf16.gmra.mxu0 %v955
  %v1970 = vpop.f32.mrf.mxu0
  %v1971 = vadd.f32 %v1682, %v1970
  %v1972 = vpop.f32.mrf.mxu0
  %v1973 = vpop.f32.mrf.mxu0
  %v1974 = vadd.f32 %v1685, %v1973
  %v1975 = vpop.f32.mrf.mxu0
  %1976 = vdwg.mxu0
  %1977 = vmatprep.subr.bf16.mxu0 0
  %1978 = vmatpush1.bf16.msra.mxu0 0
  %1979 = vmatprep.subr.bf16.mxu0 0
  %1980 = vmatpush1.bf16.msra.mxu0 0
  %1981 = vmatprep.subr.bf16.mxu0 0
  %1982 = vmatpush1.bf16.msra.mxu0 0
  %1983 = vmatprep.subr.bf16.mxu0 0
  %1984 = vmatpush1.bf16.msra.mxu0 0
  %1985 = vmatprep.subr.bf16.mxu0 0
  %1986 = vmatpush1.bf16.msra.mxu0 %v1265
  %1987 = vmatprep.subr.bf16.mxu0 0
  %1988 = vmatpush1.bf16.msra.mxu0 %v1264
  %1989 = vmatprep.subr.bf16.mxu0 0
  %1990 = vmatpush1.bf16.msra.mxu0 %v1263
  %1991 = vmatprep.subr.bf16.mxu0 0
  %1992 = vmatpush1.bf16.msra.mxu0 %v1262
  %1993 = vmatprep.subr.bf16.mxu0 0
  %1994 = vmatpush2.bf16.msra.mxu0 0
  %1995 = vmatprep.subr.bf16.mxu0 0
  %1996 = vmatpush2.bf16.msra.mxu0 0
  %1997 = vmatprep.subr.bf16.mxu0 0
  %1998 = vmatpush2.bf16.msra.mxu0 0
  %1999 = vmatprep.subr.bf16.mxu0 0
  %2000 = vmatpush2.bf16.msra.mxu0 0
  %2001 = vmatprep.subr.bf16.mxu0 0
  %2002 = vmatpush2.bf16.msra.mxu0 0
  %2003 = vmatprep.subr.bf16.mxu0 0
  %2004 = vmatpush2.bf16.msra.mxu0 0
  %2005 = vmatprep.subr.bf16.mxu0 0
  %2006 = vmatpush2.bf16.msra.mxu0 0
  %2007 = vmatprep.subr.bf16.mxu0 0
  %2008 = vmatpush2.bf16.msra.mxu0 0
  %2009 = vmatprep.mubr.bf16.mxu0 0
  %2010 = vmatmul.mubr.bf16.gmra.mxu0 %v1304
  %v2011 = vpop.f32.mrf.mxu0
  %v2012 = vadd.f32 %v1723, %v2011
  %v2013 = vpop.f32.mrf.mxu0
  %v2014 = vpop.f32.mrf.mxu0
  %v2015 = vadd.f32 %v1726, %v2014
  %v2016 = vpop.f32.mrf.mxu0
  %2017 = vmatprep.mubr.bf16.mxu0 0
  %2018 = vmatmul.mubr.bf16.gmra.mxu0 %v1307
  %v2019 = vpop.f32.mrf.mxu0
  %v2020 = vadd.f32 %v1731, %v2019
  %v2021 = vpop.f32.mrf.mxu0
  %v2022 = vpop.f32.mrf.mxu0
  %v2023 = vadd.f32 %v1734, %v2022
  %v2024 = vpop.f32.mrf.mxu0
  %2025 = vmatprep.mubr.bf16.mxu0 0
  %2026 = vmatmul.mubr.bf16.gmra.mxu0 %v1310
  %v2027 = vpop.f32.mrf.mxu0
  %v2028 = vadd.f32 %v1739, %v2027
  %v2029 = vpop.f32.mrf.mxu0
  %v2030 = vpop.f32.mrf.mxu0
  %v2031 = vadd.f32 %v1742, %v2030
  %v2032 = vpop.f32.mrf.mxu0
  %2033 = vmatprep.mubr.bf16.mxu0 0
  %2034 = vmatmul.mubr.bf16.gmra.mxu0 %v1313
  %v2035 = vpop.f32.mrf.mxu0
  %v2036 = vadd.f32 %v1747, %v2035
  %v2037 = vpop.f32.mrf.mxu0
  %v2038 = vpop.f32.mrf.mxu0
  %v2039 = vadd.f32 %v1750, %v2038
  %v2040 = vpop.f32.mrf.mxu0
  %2041 = vmatprep.mubr.bf16.mxu0 0
  %2042 = vmatmul.mubr.bf16.gmra.mxu0 %v1316
  %v2043 = vpop.f32.mrf.mxu0
  %v2044 = vadd.f32 %v1755, %v2043
  %v2045 = vpop.f32.mrf.mxu0
  %v2046 = vpop.f32.mrf.mxu0
  %v2047 = vadd.f32 %v1758, %v2046
  %v2048 = vpop.f32.mrf.mxu0
  %2049 = vmatprep.mubr.bf16.mxu0 0
  %2050 = vmatmul.mubr.bf16.gmra.mxu0 %v1319
  %v2051 = vpop.f32.mrf.mxu0
  %v2052 = vadd.f32 %v1763, %v2051
  %v2053 = vpop.f32.mrf.mxu0
  %v2054 = vpop.f32.mrf.mxu0
  %v2055 = vadd.f32 %v1766, %v2054
  %v2056 = vpop.f32.mrf.mxu0
  %2057 = vmatprep.mubr.bf16.mxu0 0
  %2058 = vmatmul.mubr.bf16.gmra.mxu0 %v1322
  %v2059 = vpop.f32.mrf.mxu0
  %v2060 = vadd.f32 %v1771, %v2059
  %v2061 = vpop.f32.mrf.mxu0
  %v2062 = vpop.f32.mrf.mxu0
  %v2063 = vadd.f32 %v1774, %v2062
  %v2064 = vpop.f32.mrf.mxu0
  %2065 = vmatprep.mubr.bf16.mxu0 0
  %2066 = vmatmul.mubr.bf16.gmra.mxu0 %v1325
  %v2067 = vpop.f32.mrf.mxu0
  %v2068 = vadd.f32 %v1779, %v2067
  %v2069 = vpop.f32.mrf.mxu0
  %v2070 = vpop.f32.mrf.mxu0
  %v2071 = vadd.f32 %v1782, %v2070
  %v2072 = vpop.f32.mrf.mxu0
  %2073 = vmatprep.mubr.bf16.mxu0 0
  %2074 = vmatmul.mubr.bf16.gmra.mxu0 %v1328
  %v2075 = vpop.f32.mrf.mxu0
  %v2076 = vadd.f32 %v1787, %v2075
  %v2077 = vpop.f32.mrf.mxu0
  %v2078 = vpop.f32.mrf.mxu0
  %v2079 = vadd.f32 %v1790, %v2078
  %v2080 = vpop.f32.mrf.mxu0
  %2081 = vmatprep.mubr.bf16.mxu0 0
  %2082 = vmatmul.mubr.bf16.gmra.mxu0 %v1331
  %v2083 = vpop.f32.mrf.mxu0
  %v2084 = vadd.f32 %v1795, %v2083
  %v2085 = vpop.f32.mrf.mxu0
  %v2086 = vpop.f32.mrf.mxu0
  %v2087 = vadd.f32 %v1798, %v2086
  %v2088 = vpop.f32.mrf.mxu0
  %2089 = vmatprep.mubr.bf16.mxu0 0
  %2090 = vmatmul.mubr.bf16.gmra.mxu0 %v1334
  %v2091 = vpop.f32.mrf.mxu0
  %v2092 = vadd.f32 %v1803, %v2091
  %v2093 = vpop.f32.mrf.mxu0
  %v2094 = vpop.f32.mrf.mxu0
  %v2095 = vadd.f32 %v1806, %v2094
  %v2096 = vpop.f32.mrf.mxu0
  %2097 = vmatprep.mubr.bf16.mxu0 0
  %2098 = vmatmul.mubr.bf16.gmra.mxu0 %v1337
  %v2099 = vpop.f32.mrf.mxu0
  %v2100 = vadd.f32 %v1811, %v2099
  %v2101 = vpop.f32.mrf.mxu0
  %v2102 = vpop.f32.mrf.mxu0
  %v2103 = vadd.f32 %v1814, %v2102
  %v2104 = vpop.f32.mrf.mxu0
  %2105 = vmatprep.mubr.bf16.mxu0 0
  %2106 = vmatmul.mubr.bf16.gmra.mxu0 %v1340
  %v2107 = vpop.f32.mrf.mxu0
  %v2108 = vadd.f32 %v1819, %v2107
  %v2109 = vpop.f32.mrf.mxu0
  %v2110 = vpop.f32.mrf.mxu0
  %v2111 = vadd.f32 %v1822, %v2110
  %v2112 = vpop.f32.mrf.mxu0
  %2113 = vmatprep.mubr.bf16.mxu0 0
  %2114 = vmatmul.mubr.bf16.gmra.mxu0 %v1343
  %v2115 = vpop.f32.mrf.mxu0
  %v2116 = vadd.f32 %v1827, %v2115
  %v2117 = vpop.f32.mrf.mxu0
  %v2118 = vpop.f32.mrf.mxu0
  %v2119 = vadd.f32 %v1830, %v2118
  %v2120 = vpop.f32.mrf.mxu0
  %2121 = vmatprep.mubr.bf16.mxu0 0
  %2122 = vmatmul.mubr.bf16.gmra.mxu0 %v1346
  %v2123 = vpop.f32.mrf.mxu0
  %v2124 = vadd.f32 %v1835, %v2123
  %v2125 = vpop.f32.mrf.mxu0
  %v2126 = vpop.f32.mrf.mxu0
  %v2127 = vadd.f32 %v1838, %v2126
  %v2128 = vpop.f32.mrf.mxu0
  %2129 = vmatprep.mubr.bf16.mxu0 0
  %2130 = vmatmul.mubr.bf16.gmra.mxu0 %v1349
  %v2131 = vpop.f32.mrf.mxu0
  %v2132 = vadd.f32 %v1843, %v2131
  %v2133 = vpop.f32.mrf.mxu0
  %v2134 = vpop.f32.mrf.mxu0
  %v2135 = vadd.f32 %v1846, %v2134
  %v2136 = vpop.f32.mrf.mxu0
  %2137 = vmatprep.mubr.bf16.mxu0 0
  %2138 = vmatmul.mubr.bf16.gmra.mxu0 %v1352
  %v2139 = vpop.f32.mrf.mxu0
  %v2140 = vadd.f32 %v1851, %v2139
  %v2141 = vpop.f32.mrf.mxu0
  %v2142 = vpop.f32.mrf.mxu0
  %v2143 = vadd.f32 %v1854, %v2142
  %v2144 = vpop.f32.mrf.mxu0
  %2145 = vmatprep.mubr.bf16.mxu0 0
  %2146 = vmatmul.mubr.bf16.gmra.mxu0 %v1355
  %v2147 = vpop.f32.mrf.mxu0
  %v2148 = vadd.f32 %v1859, %v2147
  %v2149 = vpop.f32.mrf.mxu0
  %v2150 = vpop.f32.mrf.mxu0
  %v2151 = vadd.f32 %v1862, %v2150
  %v2152 = vpop.f32.mrf.mxu0
  %2153 = vmatprep.mubr.bf16.mxu0 0
  %2154 = vmatmul.mubr.bf16.gmra.mxu0 %v1358
  %v2155 = vpop.f32.mrf.mxu0
  %v2156 = vadd.f32 %v1867, %v2155
  %v2157 = vpop.f32.mrf.mxu0
  %v2158 = vpop.f32.mrf.mxu0
  %v2159 = vadd.f32 %v1870, %v2158
  %v2160 = vpop.f32.mrf.mxu0
  %2161 = vmatprep.mubr.bf16.mxu0 0
  %2162 = vmatmul.mubr.bf16.gmra.mxu0 %v1361
  %v2163 = vpop.f32.mrf.mxu0
  %v2164 = vadd.f32 %v1875, %v2163
  %v2165 = vpop.f32.mrf.mxu0
  %v2166 = vpop.f32.mrf.mxu0
  %v2167 = vadd.f32 %v1878, %v2166
  %v2168 = vpop.f32.mrf.mxu0
  %2169 = vmatprep.mubr.bf16.mxu0 0
  %2170 = vmatmul.mubr.bf16.gmra.mxu0 %v1364
  %v2171 = vpop.f32.mrf.mxu0
  %v2172 = vadd.f32 %v1883, %v2171
  %v2173 = vpop.f32.mrf.mxu0
  %v2174 = vpop.f32.mrf.mxu0
  %v2175 = vadd.f32 %v1886, %v2174
  %v2176 = vpop.f32.mrf.mxu0
  %2177 = vmatprep.mubr.bf16.mxu0 0
  %2178 = vmatmul.mubr.bf16.gmra.mxu0 %v1367
  %v2179 = vpop.f32.mrf.mxu0
  %v2180 = vadd.f32 %v1891, %v2179
  %v2181 = vpop.f32.mrf.mxu0
  %v2182 = vpop.f32.mrf.mxu0
  %v2183 = vadd.f32 %v1894, %v2182
  %v2184 = vpop.f32.mrf.mxu0
  %2185 = vmatprep.mubr.bf16.mxu0 0
  %2186 = vmatmul.mubr.bf16.gmra.mxu0 %v1370
  %v2187 = vpop.f32.mrf.mxu0
  %v2188 = vadd.f32 %v1899, %v2187
  %v2189 = vpop.f32.mrf.mxu0
  %v2190 = vpop.f32.mrf.mxu0
  %v2191 = vadd.f32 %v1902, %v2190
  %v2192 = vpop.f32.mrf.mxu0
  %2193 = vmatprep.mubr.bf16.mxu0 0
  %2194 = vmatmul.mubr.bf16.gmra.mxu0 %v1373
  %v2195 = vpop.f32.mrf.mxu0
  %v2196 = vadd.f32 %v1907, %v2195
  %v2197 = vpop.f32.mrf.mxu0
  %v2198 = vpop.f32.mrf.mxu0
  %v2199 = vadd.f32 %v1910, %v2198
  %v2200 = vpop.f32.mrf.mxu0
  %2201 = vmatprep.mubr.bf16.mxu0 0
  %2202 = vmatmul.mubr.bf16.gmra.mxu0 %v1376
  %v2203 = vpop.f32.mrf.mxu0
  %v2204 = vadd.f32 %v1915, %v2203
  %v2205 = vpop.f32.mrf.mxu0
  %v2206 = vpop.f32.mrf.mxu0
  %v2207 = vadd.f32 %v1918, %v2206
  %v2208 = vpop.f32.mrf.mxu0
  %2209 = vmatprep.mubr.bf16.mxu0 0
  %2210 = vmatmul.mubr.bf16.gmra.mxu0 %v1379
  %v2211 = vpop.f32.mrf.mxu0
  %v2212 = vadd.f32 %v1923, %v2211
  %v2213 = vpop.f32.mrf.mxu0
  %v2214 = vpop.f32.mrf.mxu0
  %v2215 = vadd.f32 %v1926, %v2214
  %v2216 = vpop.f32.mrf.mxu0
  %2217 = vmatprep.mubr.bf16.mxu0 0
  %2218 = vmatmul.mubr.bf16.gmra.mxu0 %v1382
  %v2219 = vpop.f32.mrf.mxu0
  %v2220 = vadd.f32 %v1931, %v2219
  %v2221 = vpop.f32.mrf.mxu0
  %v2222 = vpop.f32.mrf.mxu0
  %v2223 = vadd.f32 %v1934, %v2222
  %v2224 = vpop.f32.mrf.mxu0
  %2225 = vmatprep.mubr.bf16.mxu0 0
  %2226 = vmatmul.mubr.bf16.gmra.mxu0 %v1385
  %v2227 = vpop.f32.mrf.mxu0
  %v2228 = vadd.f32 %v1939, %v2227
  %v2229 = vpop.f32.mrf.mxu0
  %v2230 = vpop.f32.mrf.mxu0
  %v2231 = vadd.f32 %v1942, %v2230
  %v2232 = vpop.f32.mrf.mxu0
  %2233 = vmatprep.mubr.bf16.mxu0 0
  %2234 = vmatmul.mubr.bf16.gmra.mxu0 %v1388
  %v2235 = vpop.f32.mrf.mxu0
  %v2236 = vadd.f32 %v1947, %v2235
  %v2237 = vpop.f32.mrf.mxu0
  %v2238 = vpop.f32.mrf.mxu0
  %v2239 = vadd.f32 %v1950, %v2238
  %v2240 = vpop.f32.mrf.mxu0
  %2241 = vmatprep.mubr.bf16.mxu0 0
  %2242 = vmatmul.mubr.bf16.gmra.mxu0 %v1391
  %v2243 = vpop.f32.mrf.mxu0
  %v2244 = vadd.f32 %v1955, %v2243
  %v2245 = vpop.f32.mrf.mxu0
  %v2246 = vpop.f32.mrf.mxu0
  %v2247 = vadd.f32 %v1958, %v2246
  %v2248 = vpop.f32.mrf.mxu0
  %2249 = vmatprep.mubr.bf16.mxu0 0
  %2250 = vmatmul.mubr.bf16.gmra.mxu0 %v1394
  %v2251 = vpop.f32.mrf.mxu0
  %v2252 = vadd.f32 %v1963, %v2251
  %v2253 = vpop.f32.mrf.mxu0
  %v2254 = vpop.f32.mrf.mxu0
  %v2255 = vadd.f32 %v1966, %v2254
  %v2256 = vpop.f32.mrf.mxu0
  %2257 = vmatprep.mubr.bf16.mxu0 0
  %2258 = vmatmul.mubr.bf16.gmra.mxu0 %v1397
  %v2259 = vpop.f32.mrf.mxu0
  %v2260 = vadd.f32 %v1971, %v2259
  %v2261 = vpop.f32.mrf.mxu0
  %v2262 = vpop.f32.mrf.mxu0
  %v2263 = vadd.f32 %v1974, %v2262
  %v2264 = vpop.f32.mrf.mxu0
  %2265 = vdwg.mxu0
  %vm2266 = vcmp.ge.f32.partialorder %v2012, 0.0
  %vm2267 = vcmp.ge.f32.partialorder %v2015, 0.0
  %vm2268 = vcmp.ge.f32.partialorder %v2020, 0.0
  %vm2269 = vcmp.ge.f32.partialorder %v2023, 0.0
  %vm2270 = vcmp.ge.f32.partialorder %v2028, 0.0
  %vm2271 = vcmp.ge.f32.partialorder %v2031, 0.0
  %vm2272 = vcmp.ge.f32.partialorder %v2036, 0.0
  %vm2273 = vcmp.ge.f32.partialorder %v2039, 0.0
  %vm2274 = vcmp.ge.f32.partialorder %v2044, 0.0
  %vm2275 = vcmp.ge.f32.partialorder %v2047, 0.0
  %vm2276 = vcmp.ge.f32.partialorder %v2052, 0.0
  %vm2277 = vcmp.ge.f32.partialorder %v2055, 0.0
  %vm2278 = vcmp.ge.f32.partialorder %v2060, 0.0
  %vm2279 = vcmp.ge.f32.partialorder %v2063, 0.0
  %vm2280 = vcmp.ge.f32.partialorder %v2068, 0.0
  %vm2281 = vcmp.ge.f32.partialorder %v2071, 0.0
  %vm2282 = vcmp.ge.f32.partialorder %v2076, 0.0
  %vm2283 = vcmp.ge.f32.partialorder %v2079, 0.0
  %vm2284 = vcmp.ge.f32.partialorder %v2084, 0.0
  %vm2285 = vcmp.ge.f32.partialorder %v2087, 0.0
  %vm2286 = vcmp.ge.f32.partialorder %v2092, 0.0
  %vm2287 = vcmp.ge.f32.partialorder %v2095, 0.0
  %vm2288 = vcmp.ge.f32.partialorder %v2100, 0.0
  %vm2289 = vcmp.ge.f32.partialorder %v2103, 0.0
  %vm2290 = vcmp.ge.f32.partialorder %v2108, 0.0
  %vm2291 = vcmp.ge.f32.partialorder %v2111, 0.0
  %vm2292 = vcmp.ge.f32.partialorder %v2116, 0.0
  %vm2293 = vcmp.ge.f32.partialorder %v2119, 0.0
  %vm2294 = vcmp.ge.f32.partialorder %v2124, 0.0
  %vm2295 = vcmp.ge.f32.partialorder %v2127, 0.0
  %vm2296 = vcmp.ge.f32.partialorder %v2132, 0.0
  %vm2297 = vcmp.ge.f32.partialorder %v2135, 0.0
  %vm2298 = vcmp.ge.f32.partialorder %v2140, 0.0
  %vm2299 = vcmp.ge.f32.partialorder %v2143, 0.0
  %vm2300 = vcmp.ge.f32.partialorder %v2148, 0.0
  %vm2301 = vcmp.ge.f32.partialorder %v2151, 0.0
  %vm2302 = vcmp.ge.f32.partialorder %v2156, 0.0
  %vm2303 = vcmp.ge.f32.partialorder %v2159, 0.0
  %vm2304 = vcmp.ge.f32.partialorder %v2164, 0.0
  %vm2305 = vcmp.ge.f32.partialorder %v2167, 0.0
  %vm2306 = vcmp.ge.f32.partialorder %v2172, 0.0
  %vm2307 = vcmp.ge.f32.partialorder %v2175, 0.0
  %vm2308 = vcmp.ge.f32.partialorder %v2180, 0.0
  %vm2309 = vcmp.ge.f32.partialorder %v2183, 0.0
  %vm2310 = vcmp.ge.f32.partialorder %v2188, 0.0
  %vm2311 = vcmp.ge.f32.partialorder %v2191, 0.0
  %vm2312 = vcmp.ge.f32.partialorder %v2196, 0.0
  %vm2313 = vcmp.ge.f32.partialorder %v2199, 0.0
  %vm2314 = vcmp.ge.f32.partialorder %v2204, 0.0
  %vm2315 = vcmp.ge.f32.partialorder %v2207, 0.0
  %vm2316 = vcmp.ge.f32.partialorder %v2212, 0.0
  %vm2317 = vcmp.ge.f32.partialorder %v2215, 0.0
  %vm2318 = vcmp.ge.f32.partialorder %v2220, 0.0
  %vm2319 = vcmp.ge.f32.partialorder %v2223, 0.0
  %vm2320 = vcmp.ge.f32.partialorder %v2228, 0.0
  %vm2321 = vcmp.ge.f32.partialorder %v2231, 0.0
  %vm2322 = vcmp.ge.f32.partialorder %v2236, 0.0
  %vm2323 = vcmp.ge.f32.partialorder %v2239, 0.0
  %vm2324 = vcmp.ge.f32.partialorder %v2244, 0.0
  %vm2325 = vcmp.ge.f32.partialorder %v2247, 0.0
  %vm2326 = vcmp.ge.f32.partialorder %v2252, 0.0
  %vm2327 = vcmp.ge.f32.partialorder %v2255, 0.0
  %vm2328 = vcmp.ge.f32.partialorder %v2260, 0.0
  %vm2329 = vcmp.ge.f32.partialorder %v2263, 0.0
  %v2330 = vmul.f32 %v2012, 0.2
  %v2331 = vmul.f32 %v2015, 0.2
  %v2332 = vmul.f32 %v2020, 0.2
  %v2333 = vmul.f32 %v2023, 0.2
  %v2334 = vmul.f32 %v2028, 0.2
  %v2335 = vmul.f32 %v2031, 0.2
  %v2336 = vmul.f32 %v2036, 0.2
  %v2337 = vmul.f32 %v2039, 0.2
  %v2338 = vmul.f32 %v2044, 0.2
  %v2339 = vmul.f32 %v2047, 0.2
  %v2340 = vmul.f32 %v2052, 0.2
  %v2341 = vmul.f32 %v2055, 0.2
  %v2342 = vmul.f32 %v2060, 0.2
  %v2343 = vmul.f32 %v2063, 0.2
  %v2344 = vmul.f32 %v2068, 0.2
  %v2345 = vmul.f32 %v2071, 0.2
  %v2346 = vmul.f32 %v2076, 0.2
  %v2347 = vmul.f32 %v2079, 0.2
  %v2348 = vmul.f32 %v2084, 0.2
  %v2349 = vmul.f32 %v2087, 0.2
  %v2350 = vmul.f32 %v2092, 0.2
  %v2351 = vmul.f32 %v2095, 0.2
  %v2352 = vmul.f32 %v2100, 0.2
  %v2353 = vmul.f32 %v2103, 0.2
  %v2354 = vmul.f32 %v2108, 0.2
  %v2355 = vmul.f32 %v2111, 0.2
  %v2356 = vmul.f32 %v2116, 0.2
  %v2357 = vmul.f32 %v2119, 0.2
  %v2358 = vmul.f32 %v2124, 0.2
  %v2359 = vmul.f32 %v2127, 0.2
  %v2360 = vmul.f32 %v2132, 0.2
  %v2361 = vmul.f32 %v2135, 0.2
  %v2362 = vmul.f32 %v2140, 0.2
  %v2363 = vmul.f32 %v2143, 0.2
  %v2364 = vmul.f32 %v2148, 0.2
  %v2365 = vmul.f32 %v2151, 0.2
  %v2366 = vmul.f32 %v2156, 0.2
  %v2367 = vmul.f32 %v2159, 0.2
  %v2368 = vmul.f32 %v2164, 0.2
  %v2369 = vmul.f32 %v2167, 0.2
  %v2370 = vmul.f32 %v2172, 0.2
  %v2371 = vmul.f32 %v2175, 0.2
  %v2372 = vmul.f32 %v2180, 0.2
  %v2373 = vmul.f32 %v2183, 0.2
  %v2374 = vmul.f32 %v2188, 0.2
  %v2375 = vmul.f32 %v2191, 0.2
  %v2376 = vmul.f32 %v2196, 0.2
  %v2377 = vmul.f32 %v2199, 0.2
  %v2378 = vmul.f32 %v2204, 0.2
  %v2379 = vmul.f32 %v2207, 0.2
  %v2380 = vmul.f32 %v2212, 0.2
  %v2381 = vmul.f32 %v2215, 0.2
  %v2382 = vmul.f32 %v2220, 0.2
  %v2383 = vmul.f32 %v2223, 0.2
  %v2384 = vmul.f32 %v2228, 0.2
  %v2385 = vmul.f32 %v2231, 0.2
  %v2386 = vmul.f32 %v2236, 0.2
  %v2387 = vmul.f32 %v2239, 0.2
  %v2388 = vmul.f32 %v2244, 0.2
  %v2389 = vmul.f32 %v2247, 0.2
  %v2390 = vmul.f32 %v2252, 0.2
  %v2391 = vmul.f32 %v2255, 0.2
  %v2392 = vmul.f32 %v2260, 0.2
  %v2393 = vmul.f32 %v2263, 0.2
  %v2394 = vsel %vm2266, %v2012, %v2330
  %v2395 = vsel %vm2267, %v2015, %v2331
  %v2396 = vsel %vm2268, %v2020, %v2332
  %v2397 = vsel %vm2269, %v2023, %v2333
  %v2398 = vsel %vm2270, %v2028, %v2334
  %v2399 = vsel %vm2271, %v2031, %v2335
  %v2400 = vsel %vm2272, %v2036, %v2336
  %v2401 = vsel %vm2273, %v2039, %v2337
  %v2402 = vsel %vm2274, %v2044, %v2338
  %v2403 = vsel %vm2275, %v2047, %v2339
  %v2404 = vsel %vm2276, %v2052, %v2340
  %v2405 = vsel %vm2277, %v2055, %v2341
  %v2406 = vsel %vm2278, %v2060, %v2342
  %v2407 = vsel %vm2279, %v2063, %v2343
  %v2408 = vsel %vm2280, %v2068, %v2344
  %v2409 = vsel %vm2281, %v2071, %v2345
  %v2410 = vsel %vm2282, %v2076, %v2346
  %v2411 = vsel %vm2283, %v2079, %v2347
  %v2412 = vsel %vm2284, %v2084, %v2348
  %v2413 = vsel %vm2285, %v2087, %v2349
  %v2414 = vsel %vm2286, %v2092, %v2350
  %v2415 = vsel %vm2287, %v2095, %v2351
  %v2416 = vsel %vm2288, %v2100, %v2352
  %v2417 = vsel %vm2289, %v2103, %v2353
  %v2418 = vsel %vm2290, %v2108, %v2354
  %v2419 = vsel %vm2291, %v2111, %v2355
  %v2420 = vsel %vm2292, %v2116, %v2356
  %v2421 = vsel %vm2293, %v2119, %v2357
  %v2422 = vsel %vm2294, %v2124, %v2358
  %v2423 = vsel %vm2295, %v2127, %v2359
  %v2424 = vsel %vm2296, %v2132, %v2360
  %v2425 = vsel %vm2297, %v2135, %v2361
  %v2426 = vsel %vm2298, %v2140, %v2362
  %v2427 = vsel %vm2299, %v2143, %v2363
  %v2428 = vsel %vm2300, %v2148, %v2364
  %v2429 = vsel %vm2301, %v2151, %v2365
  %v2430 = vsel %vm2302, %v2156, %v2366
  %v2431 = vsel %vm2303, %v2159, %v2367
  %v2432 = vsel %vm2304, %v2164, %v2368
  %v2433 = vsel %vm2305, %v2167, %v2369
  %v2434 = vsel %vm2306, %v2172, %v2370
  %v2435 = vsel %vm2307, %v2175, %v2371
  %v2436 = vsel %vm2308, %v2180, %v2372
  %v2437 = vsel %vm2309, %v2183, %v2373
  %v2438 = vsel %vm2310, %v2188, %v2374
  %v2439 = vsel %vm2311, %v2191, %v2375
  %v2440 = vsel %vm2312, %v2196, %v2376
  %v2441 = vsel %vm2313, %v2199, %v2377
  %v2442 = vsel %vm2314, %v2204, %v2378
  %v2443 = vsel %vm2315, %v2207, %v2379
  %v2444 = vsel %vm2316, %v2212, %v2380
  %v2445 = vsel %vm2317, %v2215, %v2381
  %v2446 = vsel %vm2318, %v2220, %v2382
  %v2447 = vsel %vm2319, %v2223, %v2383
  %v2448 = vsel %vm2320, %v2228, %v2384
  %v2449 = vsel %vm2321, %v2231, %v2385
  %v2450 = vsel %vm2322, %v2236, %v2386
  %v2451 = vsel %vm2323, %v2239, %v2387
  %v2452 = vsel %vm2324, %v2244, %v2388
  %v2453 = vsel %vm2325, %v2247, %v2389
  %v2454 = vsel %vm2326, %v2252, %v2390
  %v2455 = vsel %vm2327, %v2255, %v2391
  %v2456 = vsel %vm2328, %v2260, %v2392
  %v2457 = vsel %vm2329, %v2263, %v2393
  %v2458 = vxor.u32 %v2012, 2147483648
  %v2459 = vxor.u32 %v2015, 2147483648
  %v2460 = vxor.u32 %v2020, 2147483648
  %v2461 = vxor.u32 %v2023, 2147483648
  %v2462 = vxor.u32 %v2028, 2147483648
  %v2463 = vxor.u32 %v2031, 2147483648
  %v2464 = vxor.u32 %v2036, 2147483648
  %v2465 = vxor.u32 %v2039, 2147483648
  %v2466 = vxor.u32 %v2044, 2147483648
  %v2467 = vxor.u32 %v2047, 2147483648
  %v2468 = vxor.u32 %v2052, 2147483648
  %v2469 = vxor.u32 %v2055, 2147483648
  %v2470 = vxor.u32 %v2060, 2147483648
  %v2471 = vxor.u32 %v2063, 2147483648
  %v2472 = vxor.u32 %v2068, 2147483648
  %v2473 = vxor.u32 %v2071, 2147483648
  %v2474 = vxor.u32 %v2076, 2147483648
  %v2475 = vxor.u32 %v2079, 2147483648
  %v2476 = vxor.u32 %v2084, 2147483648
  %v2477 = vxor.u32 %v2087, 2147483648
  %v2478 = vxor.u32 %v2092, 2147483648
  %v2479 = vxor.u32 %v2095, 2147483648
  %v2480 = vxor.u32 %v2100, 2147483648
  %v2481 = vxor.u32 %v2103, 2147483648
  %v2482 = vxor.u32 %v2108, 2147483648
  %v2483 = vxor.u32 %v2111, 2147483648
  %v2484 = vxor.u32 %v2116, 2147483648
  %v2485 = vxor.u32 %v2119, 2147483648
  %v2486 = vxor.u32 %v2124, 2147483648
  %v2487 = vxor.u32 %v2127, 2147483648
  %v2488 = vxor.u32 %v2132, 2147483648
  %v2489 = vxor.u32 %v2135, 2147483648
  %v2490 = vxor.u32 %v2140, 2147483648
  %v2491 = vxor.u32 %v2143, 2147483648
  %v2492 = vxor.u32 %v2148, 2147483648
  %v2493 = vxor.u32 %v2151, 2147483648
  %v2494 = vxor.u32 %v2156, 2147483648
  %v2495 = vxor.u32 %v2159, 2147483648
  %v2496 = vxor.u32 %v2164, 2147483648
  %v2497 = vxor.u32 %v2167, 2147483648
  %v2498 = vxor.u32 %v2172, 2147483648
  %v2499 = vxor.u32 %v2175, 2147483648
  %v2500 = vxor.u32 %v2180, 2147483648
  %v2501 = vxor.u32 %v2183, 2147483648
  %v2502 = vxor.u32 %v2188, 2147483648
  %v2503 = vxor.u32 %v2191, 2147483648
  %v2504 = vxor.u32 %v2196, 2147483648
  %v2505 = vxor.u32 %v2199, 2147483648
  %v2506 = vxor.u32 %v2204, 2147483648
  %v2507 = vxor.u32 %v2207, 2147483648
  %v2508 = vxor.u32 %v2212, 2147483648
  %v2509 = vxor.u32 %v2215, 2147483648
  %v2510 = vxor.u32 %v2220, 2147483648
  %v2511 = vxor.u32 %v2223, 2147483648
  %v2512 = vxor.u32 %v2228, 2147483648
  %v2513 = vxor.u32 %v2231, 2147483648
  %v2514 = vxor.u32 %v2236, 2147483648
  %v2515 = vxor.u32 %v2239, 2147483648
  %v2516 = vxor.u32 %v2244, 2147483648
  %v2517 = vxor.u32 %v2247, 2147483648
  %v2518 = vxor.u32 %v2252, 2147483648
  %v2519 = vxor.u32 %v2255, 2147483648
  %v2520 = vxor.u32 %v2260, 2147483648
  %v2521 = vxor.u32 %v2263, 2147483648
  %v2522 = vmul.f32 %v2458, 1.442695
  %v2523 = vpow.pop %v2522
  %v2524 = vmul.f32 %v2459, 1.442695
  %v2525 = vpow.pop %v2524
  %v2526 = vmul.f32 %v2460, 1.442695
  %v2527 = vpow.pop %v2526
  %v2528 = vmul.f32 %v2461, 1.442695
  %v2529 = vpow.pop %v2528
  %v2530 = vmul.f32 %v2462, 1.442695
  %v2531 = vpow.pop %v2530
  %v2532 = vmul.f32 %v2463, 1.442695
  %v2533 = vpow.pop %v2532
  %v2534 = vmul.f32 %v2464, 1.442695
  %v2535 = vpow.pop %v2534
  %v2536 = vmul.f32 %v2465, 1.442695
  %v2537 = vpow.pop %v2536
  %v2538 = vmul.f32 %v2466, 1.442695
  %v2539 = vpow.pop %v2538
  %v2540 = vmul.f32 %v2467, 1.442695
  %v2541 = vpow.pop %v2540
  %v2542 = vmul.f32 %v2468, 1.442695
  %v2543 = vpow.pop %v2542
  %v2544 = vmul.f32 %v2469, 1.442695
  %v2545 = vpow.pop %v2544
  %v2546 = vmul.f32 %v2470, 1.442695
  %v2547 = vpow.pop %v2546
  %v2548 = vmul.f32 %v2471, 1.442695
  %v2549 = vpow.pop %v2548
  %v2550 = vmul.f32 %v2472, 1.442695
  %v2551 = vpow.pop %v2550
  %v2552 = vmul.f32 %v2473, 1.442695
  %v2553 = vpow.pop %v2552
  %v2554 = vmul.f32 %v2474, 1.442695
  %v2555 = vpow.pop %v2554
  %v2556 = vmul.f32 %v2475, 1.442695
  %v2557 = vpow.pop %v2556
  %v2558 = vmul.f32 %v2476, 1.442695
  %v2559 = vpow.pop %v2558
  %v2560 = vmul.f32 %v2477, 1.442695
  %v2561 = vpow.pop %v2560
  %v2562 = vmul.f32 %v2478, 1.442695
  %v2563 = vpow.pop %v2562
  %v2564 = vmul.f32 %v2479, 1.442695
  %v2565 = vpow.pop %v2564
  %v2566 = vmul.f32 %v2480, 1.442695
  %v2567 = vpow.pop %v2566
  %v2568 = vmul.f32 %v2481, 1.442695
  %v2569 = vpow.pop %v2568
  %v2570 = vmul.f32 %v2482, 1.442695
  %v2571 = vpow.pop %v2570
  %v2572 = vmul.f32 %v2483, 1.442695
  %v2573 = vpow.pop %v2572
  %v2574 = vmul.f32 %v2484, 1.442695
  %v2575 = vpow.pop %v2574
  %v2576 = vmul.f32 %v2485, 1.442695
  %v2577 = vpow.pop %v2576
  %v2578 = vmul.f32 %v2486, 1.442695
  %v2579 = vpow.pop %v2578
  %v2580 = vmul.f32 %v2487, 1.442695
  %v2581 = vpow.pop %v2580
  %v2582 = vmul.f32 %v2488, 1.442695
  %v2583 = vpow.pop %v2582
  %v2584 = vmul.f32 %v2489, 1.442695
  %v2585 = vpow.pop %v2584
  %v2586 = vmul.f32 %v2490, 1.442695
  %v2587 = vpow.pop %v2586
  %v2588 = vmul.f32 %v2491, 1.442695
  %v2589 = vpow.pop %v2588
  %v2590 = vmul.f32 %v2492, 1.442695
  %v2591 = vpow.pop %v2590
  %v2592 = vmul.f32 %v2493, 1.442695
  %v2593 = vpow.pop %v2592
  %v2594 = vmul.f32 %v2494, 1.442695
  %v2595 = vpow.pop %v2594
  %v2596 = vmul.f32 %v2495, 1.442695
  %v2597 = vpow.pop %v2596
  %v2598 = vmul.f32 %v2496, 1.442695
  %v2599 = vpow.pop %v2598
  %v2600 = vmul.f32 %v2497, 1.442695
  %v2601 = vpow.pop %v2600
  %v2602 = vmul.f32 %v2498, 1.442695
  %v2603 = vpow.pop %v2602
  %v2604 = vmul.f32 %v2499, 1.442695
  %v2605 = vpow.pop %v2604
  %v2606 = vmul.f32 %v2500, 1.442695
  %v2607 = vpow.pop %v2606
  %v2608 = vmul.f32 %v2501, 1.442695
  %v2609 = vpow.pop %v2608
  %v2610 = vmul.f32 %v2502, 1.442695
  %v2611 = vpow.pop %v2610
  %v2612 = vmul.f32 %v2503, 1.442695
  %v2613 = vpow.pop %v2612
  %v2614 = vmul.f32 %v2504, 1.442695
  %v2615 = vpow.pop %v2614
  %v2616 = vmul.f32 %v2505, 1.442695
  %v2617 = vpow.pop %v2616
  %v2618 = vmul.f32 %v2506, 1.442695
  %v2619 = vpow.pop %v2618
  %v2620 = vmul.f32 %v2507, 1.442695
  %v2621 = vpow.pop %v2620
  %v2622 = vmul.f32 %v2508, 1.442695
  %v2623 = vpow.pop %v2622
  %v2624 = vmul.f32 %v2509, 1.442695
  %v2625 = vpow.pop %v2624
  %v2626 = vmul.f32 %v2510, 1.442695
  %v2627 = vpow.pop %v2626
  %v2628 = vmul.f32 %v2511, 1.442695
  %v2629 = vpow.pop %v2628
  %v2630 = vmul.f32 %v2512, 1.442695
  %v2631 = vpow.pop %v2630
  %v2632 = vmul.f32 %v2513, 1.442695
  %v2633 = vpow.pop %v2632
  %v2634 = vmul.f32 %v2514, 1.442695
  %v2635 = vpow.pop %v2634
  %v2636 = vmul.f32 %v2515, 1.442695
  %v2637 = vpow.pop %v2636
  %v2638 = vmul.f32 %v2516, 1.442695
  %v2639 = vpow.pop %v2638
  %v2640 = vmul.f32 %v2517, 1.442695
  %v2641 = vpow.pop %v2640
  %v2642 = vmul.f32 %v2518, 1.442695
  %v2643 = vpow.pop %v2642
  %v2644 = vmul.f32 %v2519, 1.442695
  %v2645 = vpow.pop %v2644
  %v2646 = vmul.f32 %v2520, 1.442695
  %v2647 = vpow.pop %v2646
  %v2648 = vmul.f32 %v2521, 1.442695
  %v2649 = vpow.pop %v2648
  %v2650 = vadd.f32 %v2523, 1.0
  %v2651 = vadd.f32 %v2525, 1.0
  %v2652 = vadd.f32 %v2527, 1.0
  %v2653 = vadd.f32 %v2529, 1.0
  %v2654 = vadd.f32 %v2531, 1.0
  %v2655 = vadd.f32 %v2533, 1.0
  %v2656 = vadd.f32 %v2535, 1.0
  %v2657 = vadd.f32 %v2537, 1.0
  %v2658 = vadd.f32 %v2539, 1.0
  %v2659 = vadd.f32 %v2541, 1.0
  %v2660 = vadd.f32 %v2543, 1.0
  %v2661 = vadd.f32 %v2545, 1.0
  %v2662 = vadd.f32 %v2547, 1.0
  %v2663 = vadd.f32 %v2549, 1.0
  %v2664 = vadd.f32 %v2551, 1.0
  %v2665 = vadd.f32 %v2553, 1.0
  %v2666 = vadd.f32 %v2555, 1.0
  %v2667 = vadd.f32 %v2557, 1.0
  %v2668 = vadd.f32 %v2559, 1.0
  %v2669 = vadd.f32 %v2561, 1.0
  %v2670 = vadd.f32 %v2563, 1.0
  %v2671 = vadd.f32 %v2565, 1.0
  %v2672 = vadd.f32 %v2567, 1.0
  %v2673 = vadd.f32 %v2569, 1.0
  %v2674 = vadd.f32 %v2571, 1.0
  %v2675 = vadd.f32 %v2573, 1.0
  %v2676 = vadd.f32 %v2575, 1.0
  %v2677 = vadd.f32 %v2577, 1.0
  %v2678 = vadd.f32 %v2579, 1.0
  %v2679 = vadd.f32 %v2581, 1.0
  %v2680 = vadd.f32 %v2583, 1.0
  %v2681 = vadd.f32 %v2585, 1.0
  %v2682 = vadd.f32 %v2587, 1.0
  %v2683 = vadd.f32 %v2589, 1.0
  %v2684 = vadd.f32 %v2591, 1.0
  %v2685 = vadd.f32 %v2593, 1.0
  %v2686 = vadd.f32 %v2595, 1.0
  %v2687 = vadd.f32 %v2597, 1.0
  %v2688 = vadd.f32 %v2599, 1.0
  %v2689 = vadd.f32 %v2601, 1.0
  %v2690 = vadd.f32 %v2603, 1.0
  %v2691 = vadd.f32 %v2605, 1.0
  %v2692 = vadd.f32 %v2607, 1.0
  %v2693 = vadd.f32 %v2609, 1.0
  %v2694 = vadd.f32 %v2611, 1.0
  %v2695 = vadd.f32 %v2613, 1.0
  %v2696 = vadd.f32 %v2615, 1.0
  %v2697 = vadd.f32 %v2617, 1.0
  %v2698 = vadd.f32 %v2619, 1.0
  %v2699 = vadd.f32 %v2621, 1.0
  %v2700 = vadd.f32 %v2623, 1.0
  %v2701 = vadd.f32 %v2625, 1.0
  %v2702 = vadd.f32 %v2627, 1.0
  %v2703 = vadd.f32 %v2629, 1.0
  %v2704 = vadd.f32 %v2631, 1.0
  %v2705 = vadd.f32 %v2633, 1.0
  %v2706 = vadd.f32 %v2635, 1.0
  %v2707 = vadd.f32 %v2637, 1.0
  %v2708 = vadd.f32 %v2639, 1.0
  %v2709 = vadd.f32 %v2641, 1.0
  %v2710 = vadd.f32 %v2643, 1.0
  %v2711 = vadd.f32 %v2645, 1.0
  %v2712 = vadd.f32 %v2647, 1.0
  %v2713 = vadd.f32 %v2649, 1.0
  %v2714 = vrcp.pop %v2650
  %v2715 = vmul.f32 1.0, %v2714
  %v2716 = vrcp.pop %v2651
  %v2717 = vmul.f32 1.0, %v2716
  %v2718 = vrcp.pop %v2652
  %v2719 = vmul.f32 1.0, %v2718
  %v2720 = vrcp.pop %v2653
  %v2721 = vmul.f32 1.0, %v2720
  %v2722 = vrcp.pop %v2654
  %v2723 = vmul.f32 1.0, %v2722
  %v2724 = vrcp.pop %v2655
  %v2725 = vmul.f32 1.0, %v2724
  %v2726 = vrcp.pop %v2656
  %v2727 = vmul.f32 1.0, %v2726
  %v2728 = vrcp.pop %v2657
  %v2729 = vmul.f32 1.0, %v2728
  %v2730 = vrcp.pop %v2658
  %v2731 = vmul.f32 1.0, %v2730
  %v2732 = vrcp.pop %v2659
  %v2733 = vmul.f32 1.0, %v2732
  %v2734 = vrcp.pop %v2660
  %v2735 = vmul.f32 1.0, %v2734
  %v2736 = vrcp.pop %v2661
  %v2737 = vmul.f32 1.0, %v2736
  %v2738 = vrcp.pop %v2662
  %v2739 = vmul.f32 1.0, %v2738
  %v2740 = vrcp.pop %v2663
  %v2741 = vmul.f32 1.0, %v2740
  %v2742 = vrcp.pop %v2664
  %v2743 = vmul.f32 1.0, %v2742
  %v2744 = vrcp.pop %v2665
  %v2745 = vmul.f32 1.0, %v2744
  %v2746 = vrcp.pop %v2666
  %v2747 = vmul.f32 1.0, %v2746
  %v2748 = vrcp.pop %v2667
  %v2749 = vmul.f32 1.0, %v2748
  %v2750 = vrcp.pop %v2668
  %v2751 = vmul.f32 1.0, %v2750
  %v2752 = vrcp.pop %v2669
  %v2753 = vmul.f32 1.0, %v2752
  %v2754 = vrcp.pop %v2670
  %v2755 = vmul.f32 1.0, %v2754
  %v2756 = vrcp.pop %v2671
  %v2757 = vmul.f32 1.0, %v2756
  %v2758 = vrcp.pop %v2672
  %v2759 = vmul.f32 1.0, %v2758
  %v2760 = vrcp.pop %v2673
  %v2761 = vmul.f32 1.0, %v2760
  %v2762 = vrcp.pop %v2674
  %v2763 = vmul.f32 1.0, %v2762
  %v2764 = vrcp.pop %v2675
  %v2765 = vmul.f32 1.0, %v2764
  %v2766 = vrcp.pop %v2676
  %v2767 = vmul.f32 1.0, %v2766
  %v2768 = vrcp.pop %v2677
  %v2769 = vmul.f32 1.0, %v2768
  %v2770 = vrcp.pop %v2678
  %v2771 = vmul.f32 1.0, %v2770
  %v2772 = vrcp.pop %v2679
  %v2773 = vmul.f32 1.0, %v2772
  %v2774 = vrcp.pop %v2680
  %v2775 = vmul.f32 1.0, %v2774
  %v2776 = vrcp.pop %v2681
  %v2777 = vmul.f32 1.0, %v2776
  %v2778 = vrcp.pop %v2682
  %v2779 = vmul.f32 1.0, %v2778
  %v2780 = vrcp.pop %v2683
  %v2781 = vmul.f32 1.0, %v2780
  %v2782 = vrcp.pop %v2684
  %v2783 = vmul.f32 1.0, %v2782
  %v2784 = vrcp.pop %v2685
  %v2785 = vmul.f32 1.0, %v2784
  %v2786 = vrcp.pop %v2686
  %v2787 = vmul.f32 1.0, %v2786
  %v2788 = vrcp.pop %v2687
  %v2789 = vmul.f32 1.0, %v2788
  %v2790 = vrcp.pop %v2688
  %v2791 = vmul.f32 1.0, %v2790
  %v2792 = vrcp.pop %v2689
  %v2793 = vmul.f32 1.0, %v2792
  %v2794 = vrcp.pop %v2690
  %v2795 = vmul.f32 1.0, %v2794
  %v2796 = vrcp.pop %v2691
  %v2797 = vmul.f32 1.0, %v2796
  %v2798 = vrcp.pop %v2692
  %v2799 = vmul.f32 1.0, %v2798
  %v2800 = vrcp.pop %v2693
  %v2801 = vmul.f32 1.0, %v2800
  %v2802 = vrcp.pop %v2694
  %v2803 = vmul.f32 1.0, %v2802
  %v2804 = vrcp.pop %v2695
  %v2805 = vmul.f32 1.0, %v2804
  %v2806 = vrcp.pop %v2696
  %v2807 = vmul.f32 1.0, %v2806
  %v2808 = vrcp.pop %v2697
  %v2809 = vmul.f32 1.0, %v2808
  %v2810 = vrcp.pop %v2698
  %v2811 = vmul.f32 1.0, %v2810
  %v2812 = vrcp.pop %v2699
  %v2813 = vmul.f32 1.0, %v2812
  %v2814 = vrcp.pop %v2700
  %v2815 = vmul.f32 1.0, %v2814
  %v2816 = vrcp.pop %v2701
  %v2817 = vmul.f32 1.0, %v2816
  %v2818 = vrcp.pop %v2702
  %v2819 = vmul.f32 1.0, %v2818
  %v2820 = vrcp.pop %v2703
  %v2821 = vmul.f32 1.0, %v2820
  %v2822 = vrcp.pop %v2704
  %v2823 = vmul.f32 1.0, %v2822
  %v2824 = vrcp.pop %v2705
  %v2825 = vmul.f32 1.0, %v2824
  %v2826 = vrcp.pop %v2706
  %v2827 = vmul.f32 1.0, %v2826
  %v2828 = vrcp.pop %v2707
  %v2829 = vmul.f32 1.0, %v2828
  %v2830 = vrcp.pop %v2708
  %v2831 = vmul.f32 1.0, %v2830
  %v2832 = vrcp.pop %v2709
  %v2833 = vmul.f32 1.0, %v2832
  %v2834 = vrcp.pop %v2710
  %v2835 = vmul.f32 1.0, %v2834
  %v2836 = vrcp.pop %v2711
  %v2837 = vmul.f32 1.0, %v2836
  %v2838 = vrcp.pop %v2712
  %v2839 = vmul.f32 1.0, %v2838
  %v2840 = vrcp.pop %v2713
  %v2841 = vmul.f32 1.0, %v2840
  %2906 = vrot.lane.b32.xlu0 %v2715, 96
  %v2907 = vpop.permute.xlu0 %2906
  %2908 = vrot.lane.b32.xlu0 %v2717, 96
  %v2909 = vpop.permute.xlu0 %2908
  %2910 = vrot.lane.b32.xlu0 %v2719, 96
  %v2911 = vpop.permute.xlu0 %2910
  %2912 = vrot.lane.b32.xlu0 %v2721, 96
  %v2913 = vpop.permute.xlu0 %2912
  %2914 = vrot.lane.b32.xlu0 %v2723, 96
  %v2915 = vpop.permute.xlu0 %2914
  %2916 = vrot.lane.b32.xlu0 %v2725, 96
  %v2917 = vpop.permute.xlu0 %2916
  %2918 = vrot.lane.b32.xlu0 %v2727, 96
  %v2919 = vpop.permute.xlu0 %2918
  %2920 = vrot.lane.b32.xlu0 %v2729, 96
  %v2921 = vpop.permute.xlu0 %2920
  %2922 = vrot.lane.b32.xlu0 %v2731, 96
  %v2923 = vpop.permute.xlu0 %2922
  %2924 = vrot.lane.b32.xlu0 %v2733, 96
  %v2925 = vpop.permute.xlu0 %2924
  %2926 = vrot.lane.b32.xlu0 %v2735, 96
  %v2927 = vpop.permute.xlu0 %2926
  %2928 = vrot.lane.b32.xlu0 %v2737, 96
  %v2929 = vpop.permute.xlu0 %2928
  %2930 = vrot.lane.b32.xlu0 %v2739, 96
  %v2931 = vpop.permute.xlu0 %2930
  %2932 = vrot.lane.b32.xlu0 %v2741, 96
  %v2933 = vpop.permute.xlu0 %2932
  %2934 = vrot.lane.b32.xlu0 %v2743, 96
  %v2935 = vpop.permute.xlu0 %2934
  %2936 = vrot.lane.b32.xlu0 %v2745, 96
  %v2937 = vpop.permute.xlu0 %2936
  %2938 = vrot.lane.b32.xlu0 %v2747, 96
  %v2939 = vpop.permute.xlu0 %2938
  %2940 = vrot.lane.b32.xlu0 %v2749, 96
  %v2941 = vpop.permute.xlu0 %2940
  %2942 = vrot.lane.b32.xlu0 %v2751, 96
  %v2943 = vpop.permute.xlu0 %2942
  %2944 = vrot.lane.b32.xlu0 %v2753, 96
  %v2945 = vpop.permute.xlu0 %2944
  %2946 = vrot.lane.b32.xlu0 %v2755, 96
  %v2947 = vpop.permute.xlu0 %2946
  %2948 = vrot.lane.b32.xlu0 %v2757, 96
  %v2949 = vpop.permute.xlu0 %2948
  %2950 = vrot.lane.b32.xlu0 %v2759, 96
  %v2951 = vpop.permute.xlu0 %2950
  %2952 = vrot.lane.b32.xlu0 %v2761, 96
  %v2953 = vpop.permute.xlu0 %2952
  %2954 = vrot.lane.b32.xlu0 %v2763, 96
  %v2955 = vpop.permute.xlu0 %2954
  %2956 = vrot.lane.b32.xlu0 %v2765, 96
  %v2957 = vpop.permute.xlu0 %2956
  %2958 = vrot.lane.b32.xlu0 %v2767, 96
  %v2959 = vpop.permute.xlu0 %2958
  %2960 = vrot.lane.b32.xlu0 %v2769, 96
  %v2961 = vpop.permute.xlu0 %2960
  %2962 = vrot.lane.b32.xlu0 %v2771, 96
  %v2963 = vpop.permute.xlu0 %2962
  %2964 = vrot.lane.b32.xlu0 %v2773, 96
  %v2965 = vpop.permute.xlu0 %2964
  %2966 = vrot.lane.b32.xlu0 %v2775, 96
  %v2967 = vpop.permute.xlu0 %2966
  %2968 = vrot.lane.b32.xlu0 %v2777, 96
  %v2969 = vpop.permute.xlu0 %2968
  %2970 = vrot.lane.b32.xlu0 %v2779, 96
  %v2971 = vpop.permute.xlu0 %2970
  %2972 = vrot.lane.b32.xlu0 %v2781, 96
  %v2973 = vpop.permute.xlu0 %2972
  %2974 = vrot.lane.b32.xlu0 %v2783, 96
  %v2975 = vpop.permute.xlu0 %2974
  %2976 = vrot.lane.b32.xlu0 %v2785, 96
  %v2977 = vpop.permute.xlu0 %2976
  %2978 = vrot.lane.b32.xlu0 %v2787, 96
  %v2979 = vpop.permute.xlu0 %2978
  %2980 = vrot.lane.b32.xlu0 %v2789, 96
  %v2981 = vpop.permute.xlu0 %2980
  %2982 = vrot.lane.b32.xlu0 %v2791, 96
  %v2983 = vpop.permute.xlu0 %2982
  %2984 = vrot.lane.b32.xlu0 %v2793, 96
  %v2985 = vpop.permute.xlu0 %2984
  %2986 = vrot.lane.b32.xlu0 %v2795, 96
  %v2987 = vpop.permute.xlu0 %2986
  %2988 = vrot.lane.b32.xlu0 %v2797, 96
  %v2989 = vpop.permute.xlu0 %2988
  %2990 = vrot.lane.b32.xlu0 %v2799, 96
  %v2991 = vpop.permute.xlu0 %2990
  %2992 = vrot.lane.b32.xlu0 %v2801, 96
  %v2993 = vpop.permute.xlu0 %2992
  %2994 = vrot.lane.b32.xlu0 %v2803, 96
  %v2995 = vpop.permute.xlu0 %2994
  %2996 = vrot.lane.b32.xlu0 %v2805, 96
  %v2997 = vpop.permute.xlu0 %2996
  %2998 = vrot.lane.b32.xlu0 %v2807, 96
  %v2999 = vpop.permute.xlu0 %2998
  %3000 = vrot.lane.b32.xlu0 %v2809, 96
  %v3001 = vpop.permute.xlu0 %3000
  %3002 = vrot.lane.b32.xlu0 %v2811, 96
  %v3003 = vpop.permute.xlu0 %3002
  %3004 = vrot.lane.b32.xlu0 %v2813, 96
  %v3005 = vpop.permute.xlu0 %3004
  %3006 = vrot.lane.b32.xlu0 %v2815, 96
  %v3007 = vpop.permute.xlu0 %3006
  %3008 = vrot.lane.b32.xlu0 %v2817, 96
  %v3009 = vpop.permute.xlu0 %3008
  %3010 = vrot.lane.b32.xlu0 %v2819, 96
  %v3011 = vpop.permute.xlu0 %3010
  %3012 = vrot.lane.b32.xlu0 %v2821, 96
  %v3013 = vpop.permute.xlu0 %3012
  %3014 = vrot.lane.b32.xlu0 %v2823, 96
  %v3015 = vpop.permute.xlu0 %3014
  %3016 = vrot.lane.b32.xlu0 %v2825, 96
  %v3017 = vpop.permute.xlu0 %3016
  %3018 = vrot.lane.b32.xlu0 %v2827, 96
  %v3019 = vpop.permute.xlu0 %3018
  %3020 = vrot.lane.b32.xlu0 %v2829, 96
  %v3021 = vpop.permute.xlu0 %3020
  %3022 = vrot.lane.b32.xlu0 %v2831, 96
  %v3023 = vpop.permute.xlu0 %3022
  %3024 = vrot.lane.b32.xlu0 %v2833, 96
  %v3025 = vpop.permute.xlu0 %3024
  %3026 = vrot.lane.b32.xlu0 %v2835, 96
  %v3027 = vpop.permute.xlu0 %3026
  %3028 = vrot.lane.b32.xlu0 %v2837, 96
  %v3029 = vpop.permute.xlu0 %3028
  %3030 = vrot.lane.b32.xlu0 %v2839, 96
  %v3031 = vpop.permute.xlu0 %3030
  %3032 = vrot.lane.b32.xlu0 %v2841, 96
  %v3033 = vpop.permute.xlu0 %3032
  %v3098 = vmul.f32 %v2394, %v2907
  %v3099 = vmul.f32 %v2395, %v2909
  %v3100 = vmul.f32 %v2396, %v2911
  %v3101 = vmul.f32 %v2397, %v2913
  %v3102 = vmul.f32 %v2398, %v2915
  %v3103 = vmul.f32 %v2399, %v2917
  %v3104 = vmul.f32 %v2400, %v2919
  %v3105 = vmul.f32 %v2401, %v2921
  %v3106 = vmul.f32 %v2402, %v2923
  %v3107 = vmul.f32 %v2403, %v2925
  %v3108 = vmul.f32 %v2404, %v2927
  %v3109 = vmul.f32 %v2405, %v2929
  %v3110 = vmul.f32 %v2406, %v2931
  %v3111 = vmul.f32 %v2407, %v2933
  %v3112 = vmul.f32 %v2408, %v2935
  %v3113 = vmul.f32 %v2409, %v2937
  %v3114 = vmul.f32 %v2410, %v2939
  %v3115 = vmul.f32 %v2411, %v2941
  %v3116 = vmul.f32 %v2412, %v2943
  %v3117 = vmul.f32 %v2413, %v2945
  %v3118 = vmul.f32 %v2414, %v2947
  %v3119 = vmul.f32 %v2415, %v2949
  %v3120 = vmul.f32 %v2416, %v2951
  %v3121 = vmul.f32 %v2417, %v2953
  %v3122 = vmul.f32 %v2418, %v2955
  %v3123 = vmul.f32 %v2419, %v2957
  %v3124 = vmul.f32 %v2420, %v2959
  %v3125 = vmul.f32 %v2421, %v2961
  %v3126 = vmul.f32 %v2422, %v2963
  %v3127 = vmul.f32 %v2423, %v2965
  %v3128 = vmul.f32 %v2424, %v2967
  %v3129 = vmul.f32 %v2425, %v2969
  %v3130 = vmul.f32 %v2426, %v2971
  %v3131 = vmul.f32 %v2427, %v2973
  %v3132 = vmul.f32 %v2428, %v2975
  %v3133 = vmul.f32 %v2429, %v2977
  %v3134 = vmul.f32 %v2430, %v2979
  %v3135 = vmul.f32 %v2431, %v2981
  %v3136 = vmul.f32 %v2432, %v2983
  %v3137 = vmul.f32 %v2433, %v2985
  %v3138 = vmul.f32 %v2434, %v2987
  %v3139 = vmul.f32 %v2435, %v2989
  %v3140 = vmul.f32 %v2436, %v2991
  %v3141 = vmul.f32 %v2437, %v2993
  %v3142 = vmul.f32 %v2438, %v2995
  %v3143 = vmul.f32 %v2439, %v2997
  %v3144 = vmul.f32 %v2440, %v2999
  %v3145 = vmul.f32 %v2441, %v3001
  %v3146 = vmul.f32 %v2442, %v3003
  %v3147 = vmul.f32 %v2443, %v3005
  %v3148 = vmul.f32 %v2444, %v3007
  %v3149 = vmul.f32 %v2445, %v3009
  %v3150 = vmul.f32 %v2446, %v3011
  %v3151 = vmul.f32 %v2447, %v3013
  %v3152 = vmul.f32 %v2448, %v3015
  %v3153 = vmul.f32 %v2449, %v3017
  %v3154 = vmul.f32 %v2450, %v3019
  %v3155 = vmul.f32 %v2451, %v3021
  %v3156 = vmul.f32 %v2452, %v3023
  %v3157 = vmul.f32 %v2453, %v3025
  %v3158 = vmul.f32 %v2454, %v3027
  %v3159 = vmul.f32 %v2455, %v3029
  %v3160 = vmul.f32 %v2456, %v3031
  %v3161 = vmul.f32 %v2457, %v3033
  %v3162 = vpack.c.bf16 %v3099, %v3098
  %v3163 = vpack.c.bf16 %v3101, %v3100
  %v3164 = vpack.c.bf16 %v3103, %v3102
  %v3165 = vpack.c.bf16 %v3105, %v3104
  %v3166 = vpack.c.bf16 %v3107, %v3106
  %v3167 = vpack.c.bf16 %v3109, %v3108
  %v3168 = vpack.c.bf16 %v3111, %v3110
  %v3169 = vpack.c.bf16 %v3113, %v3112
  %v3170 = vpack.c.bf16 %v3115, %v3114
  %v3171 = vpack.c.bf16 %v3117, %v3116
  %v3172 = vpack.c.bf16 %v3119, %v3118
  %v3173 = vpack.c.bf16 %v3121, %v3120
  %v3174 = vpack.c.bf16 %v3123, %v3122
  %v3175 = vpack.c.bf16 %v3125, %v3124
  %v3176 = vpack.c.bf16 %v3127, %v3126
  %v3177 = vpack.c.bf16 %v3129, %v3128
  %v3178 = vpack.c.bf16 %v3131, %v3130
  %v3179 = vpack.c.bf16 %v3133, %v3132
  %v3180 = vpack.c.bf16 %v3135, %v3134
  %v3181 = vpack.c.bf16 %v3137, %v3136
  %v3182 = vpack.c.bf16 %v3139, %v3138
  %v3183 = vpack.c.bf16 %v3141, %v3140
  %v3184 = vpack.c.bf16 %v3143, %v3142
  %v3185 = vpack.c.bf16 %v3145, %v3144
  %v3186 = vpack.c.bf16 %v3147, %v3146
  %v3187 = vpack.c.bf16 %v3149, %v3148
  %v3188 = vpack.c.bf16 %v3151, %v3150
  %v3189 = vpack.c.bf16 %v3153, %v3152
  %v3190 = vpack.c.bf16 %v3155, %v3154
  %v3191 = vpack.c.bf16 %v3157, %v3156
  %v3192 = vpack.c.bf16 %v3159, %v3158
  %v3193 = vpack.c.bf16 %v3161, %v3160
  %v3226 = vunpack.c.l.b16 %v3162
  %v3227 = vunpack.c.h.b16 %v3162
  %v3228 = vunpack.c.l.b16 %v3163
  %v3229 = vunpack.c.h.b16 %v3163
  %v3230 = vunpack.c.l.b16 %v3164
  %v3231 = vunpack.c.h.b16 %v3164
  %v3232 = vunpack.c.l.b16 %v3165
  %v3233 = vunpack.c.h.b16 %v3165
  %v3234 = vunpack.c.l.b16 %v3166
  %v3235 = vunpack.c.h.b16 %v3166
  %v3236 = vunpack.c.l.b16 %v3167
  %v3237 = vunpack.c.h.b16 %v3167
  %v3238 = vunpack.c.l.b16 %v3168
  %v3239 = vunpack.c.h.b16 %v3168
  %v3240 = vunpack.c.l.b16 %v3169
  %v3241 = vunpack.c.h.b16 %v3169
  %v3242 = vunpack.c.l.b16 %v3170
  %v3243 = vunpack.c.h.b16 %v3170
  %v3244 = vunpack.c.l.b16 %v3171
  %v3245 = vunpack.c.h.b16 %v3171
  %v3246 = vunpack.c.l.b16 %v3172
  %v3247 = vunpack.c.h.b16 %v3172
  %v3248 = vunpack.c.l.b16 %v3173
  %v3249 = vunpack.c.h.b16 %v3173
  %v3250 = vunpack.c.l.b16 %v3174
  %v3251 = vunpack.c.h.b16 %v3174
  %v3252 = vunpack.c.l.b16 %v3175
  %v3253 = vunpack.c.h.b16 %v3175
  %v3254 = vunpack.c.l.b16 %v3176
  %v3255 = vunpack.c.h.b16 %v3176
  %v3256 = vunpack.c.l.b16 %v3177
  %v3257 = vunpack.c.h.b16 %v3177
  %v3258 = vunpack.c.l.b16 %v3178
  %v3259 = vunpack.c.h.b16 %v3178
  %v3260 = vunpack.c.l.b16 %v3179
  %v3261 = vunpack.c.h.b16 %v3179
  %v3262 = vunpack.c.l.b16 %v3180
  %v3263 = vunpack.c.h.b16 %v3180
  %v3264 = vunpack.c.l.b16 %v3181
  %v3265 = vunpack.c.h.b16 %v3181
  %v3266 = vunpack.c.l.b16 %v3182
  %v3267 = vunpack.c.h.b16 %v3182
  %v3268 = vunpack.c.l.b16 %v3183
  %v3269 = vunpack.c.h.b16 %v3183
  %v3270 = vunpack.c.l.b16 %v3184
  %v3271 = vunpack.c.h.b16 %v3184
  %v3272 = vunpack.c.l.b16 %v3185
  %v3273 = vunpack.c.h.b16 %v3185
  %v3274 = vunpack.c.l.b16 %v3186
  %v3275 = vunpack.c.h.b16 %v3186
  %v3276 = vunpack.c.l.b16 %v3187
  %v3277 = vunpack.c.h.b16 %v3187
  %v3278 = vunpack.c.l.b16 %v3188
  %v3279 = vunpack.c.h.b16 %v3188
  %v3280 = vunpack.c.l.b16 %v3189
  %v3281 = vunpack.c.h.b16 %v3189
  %v3282 = vunpack.c.l.b16 %v3190
  %v3283 = vunpack.c.h.b16 %v3190
  %v3284 = vunpack.c.l.b16 %v3191
  %v3285 = vunpack.c.h.b16 %v3191
  %v3286 = vunpack.c.l.b16 %v3192
  %v3287 = vunpack.c.h.b16 %v3192
  %v3288 = vunpack.c.l.b16 %v3193
  %v3289 = vunpack.c.h.b16 %v3193
  %v3290 = vpack.c.b16 %v3226, %v3226
  %v3291 = vpack.c.b16 %v3227, %v3227
  %v3292 = vpack.c.b16 %v3228, %v3228
  %v3293 = vpack.c.b16 %v3229, %v3229
  %v3294 = vpack.c.b16 %v3230, %v3230
  %v3295 = vpack.c.b16 %v3231, %v3231
  %v3296 = vpack.c.b16 %v3232, %v3232
  %v3297 = vpack.c.b16 %v3233, %v3233
  %v3298 = vpack.c.b16 %v3234, %v3234
  %v3299 = vpack.c.b16 %v3235, %v3235
  %v3300 = vpack.c.b16 %v3236, %v3236
  %v3301 = vpack.c.b16 %v3237, %v3237
  %v3302 = vpack.c.b16 %v3238, %v3238
  %v3303 = vpack.c.b16 %v3239, %v3239
  %v3304 = vpack.c.b16 %v3240, %v3240
  %v3305 = vpack.c.b16 %v3241, %v3241
  %v3306 = vpack.c.b16 %v3242, %v3242
  %v3307 = vpack.c.b16 %v3243, %v3243
  %v3308 = vpack.c.b16 %v3244, %v3244
  %v3309 = vpack.c.b16 %v3245, %v3245
  %v3310 = vpack.c.b16 %v3246, %v3246
  %v3311 = vpack.c.b16 %v3247, %v3247
  %v3312 = vpack.c.b16 %v3248, %v3248
  %v3313 = vpack.c.b16 %v3249, %v3249
  %v3314 = vpack.c.b16 %v3250, %v3250
  %v3315 = vpack.c.b16 %v3251, %v3251
  %v3316 = vpack.c.b16 %v3252, %v3252
  %v3317 = vpack.c.b16 %v3253, %v3253
  %v3318 = vpack.c.b16 %v3254, %v3254
  %v3319 = vpack.c.b16 %v3255, %v3255
  %v3320 = vpack.c.b16 %v3256, %v3256
  %v3321 = vpack.c.b16 %v3257, %v3257
  %v3322 = vpack.c.b16 %v3258, %v3258
  %v3323 = vpack.c.b16 %v3259, %v3259
  %v3324 = vpack.c.b16 %v3260, %v3260
  %v3325 = vpack.c.b16 %v3261, %v3261
  %v3326 = vpack.c.b16 %v3262, %v3262
  %v3327 = vpack.c.b16 %v3263, %v3263
  %v3328 = vpack.c.b16 %v3264, %v3264
  %v3329 = vpack.c.b16 %v3265, %v3265
  %v3330 = vpack.c.b16 %v3266, %v3266
  %v3331 = vpack.c.b16 %v3267, %v3267
  %v3332 = vpack.c.b16 %v3268, %v3268
  %v3333 = vpack.c.b16 %v3269, %v3269
  %v3334 = vpack.c.b16 %v3270, %v3270
  %v3335 = vpack.c.b16 %v3271, %v3271
  %v3336 = vpack.c.b16 %v3272, %v3272
  %v3337 = vpack.c.b16 %v3273, %v3273
  %v3338 = vpack.c.b16 %v3274, %v3274
  %v3339 = vpack.c.b16 %v3275, %v3275
  %v3340 = vpack.c.b16 %v3276, %v3276
  %v3341 = vpack.c.b16 %v3277, %v3277
  %v3342 = vpack.c.b16 %v3278, %v3278
  %v3343 = vpack.c.b16 %v3279, %v3279
  %v3344 = vpack.c.b16 %v3280, %v3280
  %v3345 = vpack.c.b16 %v3281, %v3281
  %v3346 = vpack.c.b16 %v3282, %v3282
  %v3347 = vpack.c.b16 %v3283, %v3283
  %v3348 = vpack.c.b16 %v3284, %v3284
  %v3349 = vpack.c.b16 %v3285, %v3285
  %v3350 = vpack.c.b16 %v3286, %v3286
  %v3351 = vpack.c.b16 %v3287, %v3287
  %v3352 = vpack.c.b16 %v3288, %v3288
  %v3353 = vpack.c.b16 %v3289, %v3289
  %vm3418 = vcmask 257024
  %3419 = vst.msk [vmem:[%s3] sm:$0xf] %vm3418, %v3290
  %3420 = vst.msk [vmem:[%s3 + $0x4] sm:$0xf] %vm3418, %v3291
  %3421 = vst.msk [vmem:[%s3 + $0x8] sm:$0xf] %vm3418, %v3292
  %3422 = vst.msk [vmem:[%s3 + $0xc] sm:$0xf] %vm3418, %v3293
  %3423 = vst.msk [vmem:[%s3 + $0x10] sm:$0xf] %vm3418, %v3294
  %3424 = vst.msk [vmem:[%s3 + $0x14] sm:$0xf] %vm3418, %v3295
  %3425 = vst.msk [vmem:[%s3 + $0x18] sm:$0xf] %vm3418, %v3296
  %3426 = vst.msk [vmem:[%s3 + $0x1c] sm:$0xf] %vm3418, %v3297
  %3427 = vst.msk [vmem:[%s3 + $0x20] sm:$0xf] %vm3418, %v3298
  %3428 = vst.msk [vmem:[%s3 + $0x24] sm:$0xf] %vm3418, %v3299
  %3429 = vst.msk [vmem:[%s3 + $0x28] sm:$0xf] %vm3418, %v3300
  %3430 = vst.msk [vmem:[%s3 + $0x2c] sm:$0xf] %vm3418, %v3301
  %3431 = vst.msk [vmem:[%s3 + $0x30] sm:$0xf] %vm3418, %v3302
  %3432 = vst.msk [vmem:[%s3 + $0x34] sm:$0xf] %vm3418, %v3303
  %3433 = vst.msk [vmem:[%s3 + $0x38] sm:$0xf] %vm3418, %v3304
  %3434 = vst.msk [vmem:[%s3 + $0x3c] sm:$0xf] %vm3418, %v3305
  %3435 = vst.msk [vmem:[%s3 + $0x40] sm:$0xf] %vm3418, %v3306
  %3436 = vst.msk [vmem:[%s3 + $0x44] sm:$0xf] %vm3418, %v3307
  %3437 = vst.msk [vmem:[%s3 + $0x48] sm:$0xf] %vm3418, %v3308
  %3438 = vst.msk [vmem:[%s3 + $0x4c] sm:$0xf] %vm3418, %v3309
  %3439 = vst.msk [vmem:[%s3 + $0x50] sm:$0xf] %vm3418, %v3310
  %3440 = vst.msk [vmem:[%s3 + $0x54] sm:$0xf] %vm3418, %v3311
  %3441 = vst.msk [vmem:[%s3 + $0x58] sm:$0xf] %vm3418, %v3312
  %3442 = vst.msk [vmem:[%s3 + $0x5c] sm:$0xf] %vm3418, %v3313
  %3443 = vst.msk [vmem:[%s3 + $0x60] sm:$0xf] %vm3418, %v3314
  %3444 = vst.msk [vmem:[%s3 + $0x64] sm:$0xf] %vm3418, %v3315
  %3445 = vst.msk [vmem:[%s3 + $0x68] sm:$0xf] %vm3418, %v3316
  %3446 = vst.msk [vmem:[%s3 + $0x6c] sm:$0xf] %vm3418, %v3317
  %3447 = vst.msk [vmem:[%s3 + $0x70] sm:$0xf] %vm3418, %v3318
  %3448 = vst.msk [vmem:[%s3 + $0x74] sm:$0xf] %vm3418, %v3319
  %3449 = vst.msk [vmem:[%s3 + $0x78] sm:$0xf] %vm3418, %v3320
  %3450 = vst.msk [vmem:[%s3 + $0x7c] sm:$0xf] %vm3418, %v3321
  %3451 = vst.msk [vmem:[%s3 + $0x80] sm:$0xf] %vm3418, %v3322
  %3452 = vst.msk [vmem:[%s3 + $0x84] sm:$0xf] %vm3418, %v3323
  %3453 = vst.msk [vmem:[%s3 + $0x88] sm:$0xf] %vm3418, %v3324
  %3454 = vst.msk [vmem:[%s3 + $0x8c] sm:$0xf] %vm3418, %v3325
  %3455 = vst.msk [vmem:[%s3 + $0x90] sm:$0xf] %vm3418, %v3326
  %3456 = vst.msk [vmem:[%s3 + $0x94] sm:$0xf] %vm3418, %v3327
  %3457 = vst.msk [vmem:[%s3 + $0x98] sm:$0xf] %vm3418, %v3328
  %3458 = vst.msk [vmem:[%s3 + $0x9c] sm:$0xf] %vm3418, %v3329
  %3459 = vst.msk [vmem:[%s3 + $0xa0] sm:$0xf] %vm3418, %v3330
  %3460 = vst.msk [vmem:[%s3 + $0xa4] sm:$0xf] %vm3418, %v3331
  %3461 = vst.msk [vmem:[%s3 + $0xa8] sm:$0xf] %vm3418, %v3332
  %3462 = vst.msk [vmem:[%s3 + $0xac] sm:$0xf] %vm3418, %v3333
  %3463 = vst.msk [vmem:[%s3 + $0xb0] sm:$0xf] %vm3418, %v3334
  %3464 = vst.msk [vmem:[%s3 + $0xb4] sm:$0xf] %vm3418, %v3335
  %3465 = vst.msk [vmem:[%s3 + $0xb8] sm:$0xf] %vm3418, %v3336
  %3466 = vst.msk [vmem:[%s3 + $0xbc] sm:$0xf] %vm3418, %v3337
  %3467 = vst.msk [vmem:[%s3 + $0xc0] sm:$0xf] %vm3418, %v3338
  %3468 = vst.msk [vmem:[%s3 + $0xc4] sm:$0xf] %vm3418, %v3339
  %3469 = vst.msk [vmem:[%s3 + $0xc8] sm:$0xf] %vm3418, %v3340
  %3470 = vst.msk [vmem:[%s3 + $0xcc] sm:$0xf] %vm3418, %v3341
  %3471 = vst.msk [vmem:[%s3 + $0xd0] sm:$0xf] %vm3418, %v3342
  %3472 = vst.msk [vmem:[%s3 + $0xd4] sm:$0xf] %vm3418, %v3343
  %3473 = vst.msk [vmem:[%s3 + $0xd8] sm:$0xf] %vm3418, %v3344
  %3474 = vst.msk [vmem:[%s3 + $0xdc] sm:$0xf] %vm3418, %v3345
  %3475 = vst.msk [vmem:[%s3 + $0xe0] sm:$0xf] %vm3418, %v3346
  %3476 = vst.msk [vmem:[%s3 + $0xe4] sm:$0xf] %vm3418, %v3347
  %3477 = vst.msk [vmem:[%s3 + $0xe8] sm:$0xf] %vm3418, %v3348
  %3478 = vst.msk [vmem:[%s3 + $0xec] sm:$0xf] %vm3418, %v3349
  %3479 = vst.msk [vmem:[%s3 + $0xf0] sm:$0xf] %vm3418, %v3350
  %3480 = vst.msk [vmem:[%s3 + $0xf4] sm:$0xf] %vm3418, %v3351
  %3481 = vst.msk [vmem:[%s3 + $0xf8] sm:$0xf] %vm3418, %v3352
  %3482 = vst.msk [vmem:[%s3 + $0xfc] sm:$0xf] %vm3418, %v3353
  // Predicated region
  $region14: #{coarse_forward.50} parent=0 // pred_check
    _
  $region15: #{coarse_forward.50} parent=0 // pred_check_branch
    %3484 = sbr.rel (0) target = $region17
  $region16: #{coarse_forward.50} parent=0 // pred_region
    _
  $region17: #{coarse_forward.50} parent=0 // pred_fallthru
    _
  // Predicated region
  $region18: #{coarse_forward.50} parent=0 // pred_check
    _
  $region19: #{coarse_forward.50} parent=0 // pred_check_branch
    %3486 = sbr.rel (0) target = $region21
  $region20: #{coarse_forward.50} parent=0 // pred_region
    _
  $region21: #{coarse_forward.50} parent=0 // pred_fallthru
    _

// kernel: coarse_forward.51
$region0: #{coarse_forward.51}
  #allocation0 [shape = 'u32[]', space=smem, size = 0x4, offset = 0x4, fixed_abs, tag = 'smem constant byte address 0x4 - core index']
  #allocation1 [shape = 'u32[144,128]{1,0:T(1,128)}', space=vmem, size = 0x12000, scoped, tag = 'internal scratch']
  %s0 = inlined_call_operand.vmem [shape: bf16[512,288], index: 0, kind: input, shape index: {}]
  %s1 = inlined_call_operand.vmem [shape: bf16[288,6], index: 1, kind: input, shape index: {}]
  %s2 = inlined_call_operand.vmem [shape: f32[1,6], index: 2, kind: input, shape index: {}]
  %s3 = inlined_call_operand.vmem [shape: f32[512,3], index: 3, kind: output, shape index: {}]
  %s4 = sld [smem:[#allocation0]]
  $region22: #{coarse_forward.51} parent=0
    _
  %s6 = ssub.s32 1, %s4
  %s7 = scalar_select 0, %s6, %s4
  // Predicated region
  $region2: #{coarse_forward.51} parent=0 // pred_check
    _
  $region3: #{coarse_forward.51} parent=0 // pred_check_branch
    %9 = sbr.rel (0) target = $region5
  $region4: #{coarse_forward.51} parent=0 // pred_region
    _
  $region5: #{coarse_forward.51} parent=0 // pred_fallthru
    _
  // Predicated region
  $region6: #{coarse_forward.51} parent=0 // pred_check
    _
  $region7: #{coarse_forward.51} parent=0 // pred_check_branch
    %11 = sbr.rel (0) target = $region9
  $region8: #{coarse_forward.51} parent=0 // pred_region
    _
  $region9: #{coarse_forward.51} parent=0 // pred_fallthru
    _
  // Predicated region
  $region10: #{coarse_forward.51} parent=0 // pred_check
    _
  $region11: #{coarse_forward.51} parent=0 // pred_check_branch
    %13 = sbr.rel (0) target = $region13
  $region12: #{coarse_forward.51} parent=0 // pred_region
    _
  $region13: #{coarse_forward.51} parent=0 // pred_fallthru
    _
  %v15 = vld [vmem:[%s0] sm:$0xff]
  %v16 = vld [vmem:[%s0 + $0x8] sm:$0xf]
  %v17 = vld [vmem:[%s0 + $0xc] sm:$0xff]
  %v18 = vld [vmem:[%s0 + $0x14] sm:$0xf]
  %v19 = vld [vmem:[%s0 + $0x18] sm:$0xff]
  %v20 = vld [vmem:[%s0 + $0x20] sm:$0xf]
  %v21 = vld [vmem:[%s0 + $0x24] sm:$0xff]
  %v22 = vld [vmem:[%s0 + $0x2c] sm:$0xf]
  %v23 = vld [vmem:[%s0 + $0x30] sm:$0xff]
  %v24 = vld [vmem:[%s0 + $0x38] sm:$0xf]
  %v25 = vld [vmem:[%s0 + $0x3c] sm:$0xff]
  %v26 = vld [vmem:[%s0 + $0x44] sm:$0xf]
  %v27 = vld [vmem:[%s0 + $0x48] sm:$0xff]
  %v28 = vld [vmem:[%s0 + $0x50] sm:$0xf]
  %v29 = vld [vmem:[%s0 + $0x54] sm:$0xff]
  %v30 = vld [vmem:[%s0 + $0x5c] sm:$0xf]
  %v31 = vld [vmem:[%s0 + $0x60] sm:$0xff]
  %v32 = vld [vmem:[%s0 + $0x68] sm:$0xf]
  %v33 = vld [vmem:[%s0 + $0x6c] sm:$0xff]
  %v34 = vld [vmem:[%s0 + $0x74] sm:$0xf]
  %v35 = vld [vmem:[%s0 + $0x78] sm:$0xff]
  %v36 = vld [vmem:[%s0 + $0x80] sm:$0xf]
  %v37 = vld [vmem:[%s0 + $0x84] sm:$0xff]
  %v38 = vld [vmem:[%s0 + $0x8c] sm:$0xf]
  %v39 = vld [vmem:[%s0 + $0x90] sm:$0xff]
  %v40 = vld [vmem:[%s0 + $0x98] sm:$0xf]
  %v41 = vld [vmem:[%s0 + $0x9c] sm:$0xff]
  %v42 = vld [vmem:[%s0 + $0xa4] sm:$0xf]
  %v43 = vld [vmem:[%s0 + $0xa8] sm:$0xff]
  %v44 = vld [vmem:[%s0 + $0xb0] sm:$0xf]
  %v45 = vld [vmem:[%s0 + $0xb4] sm:$0xff]
  %v46 = vld [vmem:[%s0 + $0xbc] sm:$0xf]
  %v47 = vld [vmem:[%s0 + $0xc0] sm:$0xff]
  %v48 = vld [vmem:[%s0 + $0xc8] sm:$0xf]
  %v49 = vld [vmem:[%s0 + $0xcc] sm:$0xff]
  %v50 = vld [vmem:[%s0 + $0xd4] sm:$0xf]
  %v51 = vld [vmem:[%s0 + $0xd8] sm:$0xff]
  %v52 = vld [vmem:[%s0 + $0xe0] sm:$0xf]
  %v53 = vld [vmem:[%s0 + $0xe4] sm:$0xff]
  %v54 = vld [vmem:[%s0 + $0xec] sm:$0xf]
  %v55 = vld [vmem:[%s0 + $0xf0] sm:$0xff]
  %v56 = vld [vmem:[%s0 + $0xf8] sm:$0xf]
  %v57 = vld [vmem:[%s0 + $0xfc] sm:$0xff]
  %v58 = vld [vmem:[%s0 + $0x104] sm:$0xf]
  %v59 = vld [vmem:[%s0 + $0x108] sm:$0xff]
  %v60 = vld [vmem:[%s0 + $0x110] sm:$0xf]
  %v61 = vld [vmem:[%s0 + $0x114] sm:$0xff]
  %v62 = vld [vmem:[%s0 + $0x11c] sm:$0xf]
  %v63 = vld [vmem:[%s0 + $0x120] sm:$0xff]
  %v64 = vld [vmem:[%s0 + $0x128] sm:$0xf]
  %v65 = vld [vmem:[%s0 + $0x12c] sm:$0xff]
  %v66 = vld [vmem:[%s0 + $0x134] sm:$0xf]
  %v67 = vld [vmem:[%s0 + $0x138] sm:$0xff]
  %v68 = vld [vmem:[%s0 + $0x140] sm:$0xf]
  %v69 = vld [vmem:[%s0 + $0x144] sm:$0xff]
  %v70 = vld [vmem:[%s0 + $0x14c] sm:$0xf]
  %v71 = vld [vmem:[%s0 + $0x150] sm:$0xff]
  %v72 = vld [vmem:[%s0 + $0x158] sm:$0xf]
  %v73 = vld [vmem:[%s0 + $0x15c] sm:$0xff]
  %v74 = vld [vmem:[%s0 + $0x164] sm:$0xf]
  %v75 = vld [vmem:[%s0 + $0x168] sm:$0xff]
  %v76 = vld [vmem:[%s0 + $0x170] sm:$0xf]
  %v77 = vld [vmem:[%s0 + $0x174] sm:$0xff]
  %v78 = vld [vmem:[%s0 + $0x17c] sm:$0xf]
  %v79 = vld [vmem:[%s0 + $0x180] sm:$0xff]
  %v80 = vld [vmem:[%s0 + $0x188] sm:$0xf]
  %v81 = vld [vmem:[%s0 + $0x18c] sm:$0xff]
  %v82 = vld [vmem:[%s0 + $0x194] sm:$0xf]
  %v83 = vld [vmem:[%s0 + $0x198] sm:$0xff]
  %v84 = vld [vmem:[%s0 + $0x1a0] sm:$0xf]
  %v85 = vld [vmem:[%s0 + $0x1a4] sm:$0xff]
  %v86 = vld [vmem:[%s0 + $0x1ac] sm:$0xf]
  %v87 = vld [vmem:[%s0 + $0x1b0] sm:$0xff]
  %v88 = vld [vmem:[%s0 + $0x1b8] sm:$0xf]
  %v89 = vld [vmem:[%s0 + $0x1bc] sm:$0xff]
  %v90 = vld [vmem:[%s0 + $0x1c4] sm:$0xf]
  %v91 = vld [vmem:[%s0 + $0x1c8] sm:$0xff]
  %v92 = vld [vmem:[%s0 + $0x1d0] sm:$0xf]
  %v93 = vld [vmem:[%s0 + $0x1d4] sm:$0xff]
  %v94 = vld [vmem:[%s0 + $0x1dc] sm:$0xf]
  %v95 = vld [vmem:[%s0 + $0x1e0] sm:$0xff]
  %v96 = vld [vmem:[%s0 + $0x1e8] sm:$0xf]
  %v97 = vld [vmem:[%s0 + $0x1ec] sm:$0xff]
  %v98 = vld [vmem:[%s0 + $0x1f4] sm:$0xf]
  %v99 = vld [vmem:[%s0 + $0x1f8] sm:$0xff]
  %v100 = vld [vmem:[%s0 + $0x200] sm:$0xf]
  %v101 = vld [vmem:[%s0 + $0x204] sm:$0xff]
  %v102 = vld [vmem:[%s0 + $0x20c] sm:$0xf]
  %v103 = vld [vmem:[%s0 + $0x210] sm:$0xff]
  %v104 = vld [vmem:[%s0 + $0x218] sm:$0xf]
  %v105 = vld [vmem:[%s0 + $0x21c] sm:$0xff]
  %v106 = vld [vmem:[%s0 + $0x224] sm:$0xf]
  %v107 = vld [vmem:[%s0 + $0x228] sm:$0xff]
  %v108 = vld [vmem:[%s0 + $0x230] sm:$0xf]
  %v109 = vld [vmem:[%s0 + $0x234] sm:$0xff]
  %v110 = vld [vmem:[%s0 + $0x23c] sm:$0xf]
  %v111 = vld [vmem:[%s0 + $0x240] sm:$0xff]
  %v112 = vld [vmem:[%s0 + $0x248] sm:$0xf]
  %v113 = vld [vmem:[%s0 + $0x24c] sm:$0xff]
  %v114 = vld [vmem:[%s0 + $0x254] sm:$0xf]
  %v115 = vld [vmem:[%s0 + $0x258] sm:$0xff]
  %v116 = vld [vmem:[%s0 + $0x260] sm:$0xf]
  %v117 = vld [vmem:[%s0 + $0x264] sm:$0xff]
  %v118 = vld [vmem:[%s0 + $0x26c] sm:$0xf]
  %v119 = vld [vmem:[%s0 + $0x270] sm:$0xff]
  %v120 = vld [vmem:[%s0 + $0x278] sm:$0xf]
  %v121 = vld [vmem:[%s0 + $0x27c] sm:$0xff]
  %v122 = vld [vmem:[%s0 + $0x284] sm:$0xf]
  %v123 = vld [vmem:[%s0 + $0x288] sm:$0xff]
  %v124 = vld [vmem:[%s0 + $0x290] sm:$0xf]
  %v125 = vld [vmem:[%s0 + $0x294] sm:$0xff]
  %v126 = vld [vmem:[%s0 + $0x29c] sm:$0xf]
  %v127 = vld [vmem:[%s0 + $0x2a0] sm:$0xff]
  %v128 = vld [vmem:[%s0 + $0x2a8] sm:$0xf]
  %v129 = vld [vmem:[%s0 + $0x2ac] sm:$0xff]
  %v130 = vld [vmem:[%s0 + $0x2b4] sm:$0xf]
  %v131 = vld [vmem:[%s0 + $0x2b8] sm:$0xff]
  %v132 = vld [vmem:[%s0 + $0x2c0] sm:$0xf]
  %v133 = vld [vmem:[%s0 + $0x2c4] sm:$0xff]
  %v134 = vld [vmem:[%s0 + $0x2cc] sm:$0xf]
  %v135 = vld [vmem:[%s0 + $0x2d0] sm:$0xff]
  %v136 = vld [vmem:[%s0 + $0x2d8] sm:$0xf]
  %v137 = vld [vmem:[%s0 + $0x2dc] sm:$0xff]
  %v138 = vld [vmem:[%s0 + $0x2e4] sm:$0xf]
  %v139 = vld [vmem:[%s0 + $0x2e8] sm:$0xff]
  %v140 = vld [vmem:[%s0 + $0x2f0] sm:$0xf]
  %v141 = vld [vmem:[%s0 + $0x2f4] sm:$0xff]
  %v142 = vld [vmem:[%s0 + $0x2fc] sm:$0xf]
  %v143 = vld [vmem:[%s1] sm:$0xf]
  %v144 = vld [vmem:[%s1 + $0x4] sm:$0xf]
  %v145 = vld [vmem:[%s1 + $0x8] sm:$0xf]
  %v146 = vld [vmem:[%s1 + $0xc] sm:$0xf]
  %v147 = vld [vmem:[%s1 + $0x10] sm:$0xf]
  %v148 = vld [vmem:[%s1 + $0x14] sm:$0xf]
  %v149 = vld [vmem:[%s1 + $0x18] sm:$0xf]
  %v150 = vld [vmem:[%s1 + $0x1c] sm:$0xf]
  %v151 = vld [vmem:[%s1 + $0x20] sm:$0xf]
  %v152 = vld [vmem:[%s1 + $0x24] sm:$0xf]
  %v153 = vld [vmem:[%s1 + $0x28] sm:$0xf]
  %v154 = vld [vmem:[%s1 + $0x2c] sm:$0xf]
  %v155 = vld [vmem:[%s1 + $0x30] sm:$0xf]
  %v156 = vld [vmem:[%s1 + $0x34] sm:$0xf]
  %v157 = vld [vmem:[%s1 + $0x38] sm:$0xf]
  %v158 = vld [vmem:[%s1 + $0x3c] sm:$0xf]
  %v159 = vld [vmem:[%s1 + $0x40] sm:$0xf]
  %v160 = vld [vmem:[%s1 + $0x44] sm:$0xf]
  %v161 = vld [vmem:[%s1 + $0x48] sm:$0xf]
  %v162 = vld [vmem:[%s1 + $0x4c] sm:$0xf]
  %v163 = vld [vmem:[%s1 + $0x50] sm:$0xf]
  %v164 = vld [vmem:[%s1 + $0x54] sm:$0xf]
  %v165 = vld [vmem:[%s1 + $0x58] sm:$0xf]
  %v166 = vld [vmem:[%s1 + $0x5c] sm:$0xf]
  %v167 = vld [vmem:[%s1 + $0x60] sm:$0xf]
  %v168 = vld [vmem:[%s1 + $0x64] sm:$0xf]
  %v169 = vld [vmem:[%s1 + $0x68] sm:$0xf]
  %v170 = vld [vmem:[%s1 + $0x6c] sm:$0xf]
  %v171 = vld [vmem:[%s1 + $0x70] sm:$0xf]
  %v172 = vld [vmem:[%s1 + $0x74] sm:$0xf]
  %v173 = vld [vmem:[%s1 + $0x78] sm:$0xf]
  %v174 = vld [vmem:[%s1 + $0x7c] sm:$0xf]
  %v175 = vld [vmem:[%s1 + $0x80] sm:$0xf]
  %v176 = vld [vmem:[%s1 + $0x84] sm:$0xf]
  %v177 = vld [vmem:[%s1 + $0x88] sm:$0xf]
  %v178 = vld [vmem:[%s1 + $0x8c] sm:$0xf]
  %v179 = vld [vmem:[%s2] sm:$0x1]
  %v181 = vlaneseq
  %v182 = vshrl.u32 %v181, 7
  %v183 = vsub.s32 0, %v182
  %v184 = vrot.slane %v179, %v183
  %v314 = vunpack.c.l.b16 %v15
  %v315 = vunpack.c.h.b16 %v15
  %v316 = vunpack.c.l.b16 %v16
  %v317 = vunpack.c.l.b16 %v17
  %v318 = vunpack.c.h.b16 %v17
  %v319 = vunpack.c.l.b16 %v18
  %v320 = vunpack.c.l.b16 %v19
  %v321 = vunpack.c.h.b16 %v19
  %v322 = vunpack.c.l.b16 %v20
  %v323 = vunpack.c.l.b16 %v21
  %v324 = vunpack.c.h.b16 %v21
  %v325 = vunpack.c.l.b16 %v22
  %v326 = vunpack.c.l.b16 %v23
  %v327 = vunpack.c.h.b16 %v23
  %v328 = vunpack.c.l.b16 %v24
  %v329 = vunpack.c.l.b16 %v25
  %v330 = vunpack.c.h.b16 %v25
  %v331 = vunpack.c.l.b16 %v26
  %v332 = vunpack.c.l.b16 %v27
  %v333 = vunpack.c.h.b16 %v27
  %v334 = vunpack.c.l.b16 %v28
  %v335 = vunpack.c.l.b16 %v29
  %v336 = vunpack.c.h.b16 %v29
  %v337 = vunpack.c.l.b16 %v30
  %v338 = vunpack.c.l.b16 %v31
  %v339 = vunpack.c.h.b16 %v31
  %v340 = vunpack.c.l.b16 %v32
  %v341 = vunpack.c.l.b16 %v33
  %v342 = vunpack.c.h.b16 %v33
  %v343 = vunpack.c.l.b16 %v34
  %v344 = vunpack.c.l.b16 %v35
  %v345 = vunpack.c.h.b16 %v35
  %v346 = vunpack.c.l.b16 %v36
  %v347 = vunpack.c.l.b16 %v37
  %v348 = vunpack.c.h.b16 %v37
  %v349 = vunpack.c.l.b16 %v38
  %v350 = vunpack.c.l.b16 %v39
  %v351 = vunpack.c.h.b16 %v39
  %v352 = vunpack.c.l.b16 %v40
  %v353 = vunpack.c.l.b16 %v41
  %v354 = vunpack.c.h.b16 %v41
  %v355 = vunpack.c.l.b16 %v42
  %v356 = vunpack.c.l.b16 %v43
  %v357 = vunpack.c.h.b16 %v43
  %v358 = vunpack.c.l.b16 %v44
  %v359 = vunpack.c.l.b16 %v45
  %v360 = vunpack.c.h.b16 %v45
  %v361 = vunpack.c.l.b16 %v46
  %v362 = vunpack.c.l.b16 %v47
  %v363 = vunpack.c.h.b16 %v47
  %v364 = vunpack.c.l.b16 %v48
  %v365 = vunpack.c.l.b16 %v49
  %v366 = vunpack.c.h.b16 %v49
  %v367 = vunpack.c.l.b16 %v50
  %v368 = vunpack.c.l.b16 %v51
  %v369 = vunpack.c.h.b16 %v51
  %v370 = vunpack.c.l.b16 %v52
  %v371 = vunpack.c.l.b16 %v53
  %v372 = vunpack.c.h.b16 %v53
  %v373 = vunpack.c.l.b16 %v54
  %v374 = vunpack.c.l.b16 %v55
  %v375 = vunpack.c.h.b16 %v55
  %v376 = vunpack.c.l.b16 %v56
  %v377 = vunpack.c.l.b16 %v57
  %v378 = vunpack.c.h.b16 %v57
  %v379 = vunpack.c.l.b16 %v58
  %v380 = vunpack.c.l.b16 %v59
  %v381 = vunpack.c.h.b16 %v59
  %v382 = vunpack.c.l.b16 %v60
  %v383 = vunpack.c.l.b16 %v61
  %v384 = vunpack.c.h.b16 %v61
  %v385 = vunpack.c.l.b16 %v62
  %v386 = vunpack.c.l.b16 %v63
  %v387 = vunpack.c.h.b16 %v63
  %v388 = vunpack.c.l.b16 %v64
  %v389 = vunpack.c.l.b16 %v65
  %v390 = vunpack.c.h.b16 %v65
  %v391 = vunpack.c.l.b16 %v66
  %v392 = vunpack.c.l.b16 %v67
  %v393 = vunpack.c.h.b16 %v67
  %v394 = vunpack.c.l.b16 %v68
  %v395 = vunpack.c.l.b16 %v69
  %v396 = vunpack.c.h.b16 %v69
  %v397 = vunpack.c.l.b16 %v70
  %v398 = vunpack.c.l.b16 %v71
  %v399 = vunpack.c.h.b16 %v71
  %v400 = vunpack.c.l.b16 %v72
  %v401 = vunpack.c.l.b16 %v73
  %v402 = vunpack.c.h.b16 %v73
  %v403 = vunpack.c.l.b16 %v74
  %v404 = vunpack.c.l.b16 %v75
  %v405 = vunpack.c.h.b16 %v75
  %v406 = vunpack.c.l.b16 %v76
  %v407 = vunpack.c.l.b16 %v77
  %v408 = vunpack.c.h.b16 %v77
  %v409 = vunpack.c.l.b16 %v78
  %v410 = vunpack.c.l.b16 %v79
  %v411 = vunpack.c.h.b16 %v79
  %v412 = vunpack.c.l.b16 %v80
  %v413 = vunpack.c.l.b16 %v81
  %v414 = vunpack.c.h.b16 %v81
  %v415 = vunpack.c.l.b16 %v82
  %v416 = vunpack.c.l.b16 %v83
  %v417 = vunpack.c.h.b16 %v83
  %v418 = vunpack.c.l.b16 %v84
  %v419 = vunpack.c.l.b16 %v85
  %v420 = vunpack.c.h.b16 %v85
  %v421 = vunpack.c.l.b16 %v86
  %v422 = vunpack.c.l.b16 %v87
  %v423 = vunpack.c.h.b16 %v87
  %v424 = vunpack.c.l.b16 %v88
  %v425 = vunpack.c.l.b16 %v89
  %v426 = vunpack.c.h.b16 %v89
  %v427 = vunpack.c.l.b16 %v90
  %v428 = vunpack.c.l.b16 %v91
  %v429 = vunpack.c.h.b16 %v91
  %v430 = vunpack.c.l.b16 %v92
  %v431 = vunpack.c.l.b16 %v93
  %v432 = vunpack.c.h.b16 %v93
  %v433 = vunpack.c.l.b16 %v94
  %v434 = vunpack.c.l.b16 %v95
  %v435 = vunpack.c.h.b16 %v95
  %v436 = vunpack.c.l.b16 %v96
  %v437 = vunpack.c.l.b16 %v97
  %v438 = vunpack.c.h.b16 %v97
  %v439 = vunpack.c.l.b16 %v98
  %v440 = vunpack.c.l.b16 %v99
  %v441 = vunpack.c.h.b16 %v99
  %v442 = vunpack.c.l.b16 %v100
  %v443 = vunpack.c.l.b16 %v101
  %v444 = vunpack.c.h.b16 %v101
  %v445 = vunpack.c.l.b16 %v102
  %v446 = vunpack.c.l.b16 %v103
  %v447 = vunpack.c.h.b16 %v103
  %v448 = vunpack.c.l.b16 %v104
  %v449 = vunpack.c.l.b16 %v105
  %v450 = vunpack.c.h.b16 %v105
  %v451 = vunpack.c.l.b16 %v106
  %v452 = vunpack.c.l.b16 %v107
  %v453 = vunpack.c.h.b16 %v107
  %v454 = vunpack.c.l.b16 %v108
  %v455 = vunpack.c.l.b16 %v109
  %v456 = vunpack.c.h.b16 %v109
  %v457 = vunpack.c.l.b16 %v110
  %v458 = vunpack.c.l.b16 %v111
  %v459 = vunpack.c.h.b16 %v111
  %v460 = vunpack.c.l.b16 %v112
  %v461 = vunpack.c.l.b16 %v113
  %v462 = vunpack.c.h.b16 %v113
  %v463 = vunpack.c.l.b16 %v114
  %v464 = vunpack.c.l.b16 %v115
  %v465 = vunpack.c.h.b16 %v115
  %v466 = vunpack.c.l.b16 %v116
  %v467 = vunpack.c.l.b16 %v117
  %v468 = vunpack.c.h.b16 %v117
  %v469 = vunpack.c.l.b16 %v118
  %v470 = vunpack.c.l.b16 %v119
  %v471 = vunpack.c.h.b16 %v119
  %v472 = vunpack.c.l.b16 %v120
  %v473 = vunpack.c.l.b16 %v121
  %v474 = vunpack.c.h.b16 %v121
  %v475 = vunpack.c.l.b16 %v122
  %v476 = vunpack.c.l.b16 %v123
  %v477 = vunpack.c.h.b16 %v123
  %v478 = vunpack.c.l.b16 %v124
  %v479 = vunpack.c.l.b16 %v125
  %v480 = vunpack.c.h.b16 %v125
  %v481 = vunpack.c.l.b16 %v126
  %v482 = vunpack.c.l.b16 %v127
  %v483 = vunpack.c.h.b16 %v127
  %v484 = vunpack.c.l.b16 %v128
  %v485 = vunpack.c.l.b16 %v129
  %v486 = vunpack.c.h.b16 %v129
  %v487 = vunpack.c.l.b16 %v130
  %v488 = vunpack.c.l.b16 %v131
  %v489 = vunpack.c.h.b16 %v131
  %v490 = vunpack.c.l.b16 %v132
  %v491 = vunpack.c.l.b16 %v133
  %v492 = vunpack.c.h.b16 %v133
  %v493 = vunpack.c.l.b16 %v134
  %v494 = vunpack.c.l.b16 %v135
  %v495 = vunpack.c.h.b16 %v135
  %v496 = vunpack.c.l.b16 %v136
  %v497 = vunpack.c.l.b16 %v137
  %v498 = vunpack.c.h.b16 %v137
  %v499 = vunpack.c.l.b16 %v138
  %v500 = vunpack.c.l.b16 %v139
  %v501 = vunpack.c.h.b16 %v139
  %v502 = vunpack.c.l.b16 %v140
  %v503 = vunpack.c.l.b16 %v141
  %v504 = vunpack.c.h.b16 %v141
  %v505 = vunpack.c.l.b16 %v142
  %v506 = vpack.c.b16 %v317, %v314
  %v507 = vpack.c.b16 %v318, %v315
  %v508 = vpack.c.b16 %v319, %v316
  %v509 = vpack.c.b16 %v323, %v320
  %v510 = vpack.c.b16 %v324, %v321
  %v511 = vpack.c.b16 %v325, %v322
  %v512 = vpack.c.b16 %v329, %v326
  %v513 = vpack.c.b16 %v330, %v327
  %v514 = vpack.c.b16 %v331, %v328
  %v515 = vpack.c.b16 %v335, %v332
  %v516 = vpack.c.b16 %v336, %v333
  %v517 = vpack.c.b16 %v337, %v334
  %v518 = vpack.c.b16 %v341, %v338
  %v519 = vpack.c.b16 %v342, %v339
  %v520 = vpack.c.b16 %v343, %v340
  %v521 = vpack.c.b16 %v347, %v344
  %v522 = vpack.c.b16 %v348, %v345
  %v523 = vpack.c.b16 %v349, %v346
  %v524 = vpack.c.b16 %v353, %v350
  %v525 = vpack.c.b16 %v354, %v351
  %v526 = vpack.c.b16 %v355, %v352
  %v527 = vpack.c.b16 %v359, %v356
  %v528 = vpack.c.b16 %v360, %v357
  %v529 = vpack.c.b16 %v361, %v358
  %v530 = vpack.c.b16 %v365, %v362
  %v531 = vpack.c.b16 %v366, %v363
  %v532 = vpack.c.b16 %v367, %v364
  %v533 = vpack.c.b16 %v371, %v368
  %v534 = vpack.c.b16 %v372, %v369
  %v535 = vpack.c.b16 %v373, %v370
  %v536 = vpack.c.b16 %v377, %v374
  %v537 = vpack.c.b16 %v378, %v375
  %v538 = vpack.c.b16 %v379, %v376
  %v539 = vpack.c.b16 %v383, %v380
  %v540 = vpack.c.b16 %v384, %v381
  %v541 = vpack.c.b16 %v385, %v382
  %v542 = vpack.c.b16 %v389, %v386
  %v543 = vpack.c.b16 %v390, %v387
  %v544 = vpack.c.b16 %v391, %v388
  %v545 = vpack.c.b16 %v395, %v392
  %v546 = vpack.c.b16 %v396, %v393
  %v547 = vpack.c.b16 %v397, %v394
  %v548 = vpack.c.b16 %v401, %v398
  %v549 = vpack.c.b16 %v402, %v399
  %v550 = vpack.c.b16 %v403, %v400
  %v551 = vpack.c.b16 %v407, %v404
  %v552 = vpack.c.b16 %v408, %v405
  %v553 = vpack.c.b16 %v409, %v406
  %v554 = vpack.c.b16 %v413, %v410
  %v555 = vpack.c.b16 %v414, %v411
  %v556 = vpack.c.b16 %v415, %v412
  %v557 = vpack.c.b16 %v419, %v416
  %v558 = vpack.c.b16 %v420, %v417
  %v559 = vpack.c.b16 %v421, %v418
  %v560 = vpack.c.b16 %v425, %v422
  %v561 = vpack.c.b16 %v426, %v423
  %v562 = vpack.c.b16 %v427, %v424
  %v563 = vpack.c.b16 %v431, %v428
  %v564 = vpack.c.b16 %v432, %v429
  %v565 = vpack.c.b16 %v433, %v430
  %v566 = vpack.c.b16 %v437, %v434
  %v567 = vpack.c.b16 %v438, %v435
  %v568 = vpack.c.b16 %v439, %v436
  %v569 = vpack.c.b16 %v443, %v440
  %v570 = vpack.c.b16 %v444, %v441
  %v571 = vpack.c.b16 %v445, %v442
  %v572 = vpack.c.b16 %v449, %v446
  %v573 = vpack.c.b16 %v450, %v447
  %v574 = vpack.c.b16 %v451, %v448
  %v575 = vpack.c.b16 %v455, %v452
  %v576 = vpack.c.b16 %v456, %v453
  %v577 = vpack.c.b16 %v457, %v454
  %v578 = vpack.c.b16 %v461, %v458
  %v579 = vpack.c.b16 %v462, %v459
  %v580 = vpack.c.b16 %v463, %v460
  %v581 = vpack.c.b16 %v467, %v464
  %v582 = vpack.c.b16 %v468, %v465
  %v583 = vpack.c.b16 %v469, %v466
  %v584 = vpack.c.b16 %v473, %v470
  %v585 = vpack.c.b16 %v474, %v471
  %v586 = vpack.c.b16 %v475, %v472
  %v587 = vpack.c.b16 %v479, %v476
  %v588 = vpack.c.b16 %v480, %v477
  %v589 = vpack.c.b16 %v481, %v478
  %v590 = vpack.c.b16 %v485, %v482
  %v591 = vpack.c.b16 %v486, %v483
  %v592 = vpack.c.b16 %v487, %v484
  %v593 = vpack.c.b16 %v491, %v488
  %v594 = vpack.c.b16 %v492, %v489
  %v595 = vpack.c.b16 %v493, %v490
  %v596 = vpack.c.b16 %v497, %v494
  %v597 = vpack.c.b16 %v498, %v495
  %v598 = vpack.c.b16 %v499, %v496
  %v599 = vpack.c.b16 %v503, %v500
  %v600 = vpack.c.b16 %v504, %v501
  %v601 = vpack.c.b16 %v505, %v502
  %v702 = vunpack.c.l.b16 %v143
  %v703 = vunpack.c.l.b16 %v144
  %v704 = vunpack.c.l.b16 %v145
  %v705 = vunpack.c.l.b16 %v146
  %v706 = vunpack.c.l.b16 %v147
  %v707 = vunpack.c.l.b16 %v148
  %v708 = vunpack.c.l.b16 %v149
  %v709 = vunpack.c.l.b16 %v150
  %v710 = vunpack.c.l.b16 %v151
  %v711 = vunpack.c.l.b16 %v152
  %v712 = vunpack.c.l.b16 %v153
  %v713 = vunpack.c.l.b16 %v154
  %v714 = vunpack.c.l.b16 %v155
  %v715 = vunpack.c.l.b16 %v156
  %v716 = vunpack.c.l.b16 %v157
  %v717 = vunpack.c.l.b16 %v158
  %v718 = vunpack.c.l.b16 %v159
  %v719 = vunpack.c.l.b16 %v160
  %v720 = vunpack.c.l.b16 %v161
  %v721 = vunpack.c.l.b16 %v162
  %v722 = vunpack.c.l.b16 %v163
  %v723 = vunpack.c.l.b16 %v164
  %v724 = vunpack.c.l.b16 %v165
  %v725 = vunpack.c.l.b16 %v166
  %v726 = vunpack.c.l.b16 %v167
  %v727 = vunpack.c.l.b16 %v168
  %v728 = vunpack.c.l.b16 %v169
  %v729 = vunpack.c.l.b16 %v170
  %v730 = vunpack.c.l.b16 %v171
  %v731 = vunpack.c.l.b16 %v172
  %v732 = vunpack.c.l.b16 %v173
  %v733 = vunpack.c.l.b16 %v174
  %v734 = vunpack.c.l.b16 %v175
  %v735 = vunpack.c.l.b16 %v176
  %v736 = vunpack.c.l.b16 %v177
  %v737 = vunpack.c.l.b16 %v178
  %v738 = vpack.c.b16 %v703, %v702
  %v739 = vpack.c.b16 %v705, %v704
  %v740 = vpack.c.b16 %v707, %v706
  %v741 = vpack.c.b16 %v709, %v708
  %v742 = vpack.c.b16 %v711, %v710
  %v743 = vpack.c.b16 %v713, %v712
  %v744 = vpack.c.b16 %v715, %v714
  %v745 = vpack.c.b16 %v717, %v716
  %v746 = vpack.c.b16 %v719, %v718
  %v747 = vpack.c.b16 %v721, %v720
  %v748 = vpack.c.b16 %v723, %v722
  %v749 = vpack.c.b16 %v725, %v724
  %v750 = vpack.c.b16 %v727, %v726
  %v751 = vpack.c.b16 %v729, %v728
  %v752 = vpack.c.b16 %v731, %v730
  %v753 = vpack.c.b16 %v733, %v732
  %v754 = vpack.c.b16 %v735, %v734
  %v755 = vpack.c.b16 %v737, %v736
  %vm774 = vcmask 261120
  %v776 = vsel %vm774, %v508, 0
  %v779 = vsel %vm774, %v511, 0
  %v782 = vsel %vm774, %v514, 0
  %v785 = vsel %vm774, %v517, 0
  %v788 = vsel %vm774, %v520, 0
  %v791 = vsel %vm774, %v523, 0
  %v794 = vsel %vm774, %v526, 0
  %v797 = vsel %vm774, %v529, 0
  %v800 = vsel %vm774, %v532, 0
  %v803 = vsel %vm774, %v535, 0
  %v806 = vsel %vm774, %v538, 0
  %v809 = vsel %vm774, %v541, 0
  %v812 = vsel %vm774, %v544, 0
  %v815 = vsel %vm774, %v547, 0
  %v818 = vsel %vm774, %v550, 0
  %v821 = vsel %vm774, %v553, 0
  %v824 = vsel %vm774, %v556, 0
  %v827 = vsel %vm774, %v559, 0
  %v830 = vsel %vm774, %v562, 0
  %v833 = vsel %vm774, %v565, 0
  %v836 = vsel %vm774, %v568, 0
  %v839 = vsel %vm774, %v571, 0
  %v842 = vsel %vm774, %v574, 0
  %v845 = vsel %vm774, %v577, 0
  %v848 = vsel %vm774, %v580, 0
  %v851 = vsel %vm774, %v583, 0
  %v854 = vsel %vm774, %v586, 0
  %v857 = vsel %vm774, %v589, 0
  %v860 = vsel %vm774, %v592, 0
  %v863 = vsel %vm774, %v595, 0
  %v866 = vsel %vm774, %v598, 0
  %v869 = vsel %vm774, %v601, 0
  %871 = vmatprep.subr.bf16.mxu0 0
  %872 = vmatpush1.bf16.msra.mxu0 %v745
  %873 = vmatprep.subr.bf16.mxu0 0
  %874 = vmatpush1.bf16.msra.mxu0 %v744
  %875 = vmatprep.subr.bf16.mxu0 0
  %876 = vmatpush1.bf16.msra.mxu0 %v743
  %877 = vmatprep.subr.bf16.mxu0 0
  %878 = vmatpush1.bf16.msra.mxu0 %v742
  %879 = vmatprep.subr.bf16.mxu0 0
  %880 = vmatpush1.bf16.msra.mxu0 %v741
  %881 = vmatprep.subr.bf16.mxu0 0
  %882 = vmatpush1.bf16.msra.mxu0 %v740
  %883 = vmatprep.subr.bf16.mxu0 0
  %884 = vmatpush1.bf16.msra.mxu0 %v739
  %885 = vmatprep.subr.bf16.mxu0 0
  %886 = vmatpush1.bf16.msra.mxu0 %v738
  %887 = vmatprep.subr.bf16.mxu0 0
  %888 = vmatpush2.bf16.msra.mxu0 %v753
  %889 = vmatprep.subr.bf16.mxu0 0
  %890 = vmatpush2.bf16.msra.mxu0 %v752
  %891 = vmatprep.subr.bf16.mxu0 0
  %892 = vmatpush2.bf16.msra.mxu0 %v751
  %893 = vmatprep.subr.bf16.mxu0 0
  %894 = vmatpush2.bf16.msra.mxu0 %v750
  %895 = vmatprep.subr.bf16.mxu0 0
  %896 = vmatpush2.bf16.msra.mxu0 %v749
  %897 = vmatprep.subr.bf16.mxu0 0
  %898 = vmatpush2.bf16.msra.mxu0 %v748
  %899 = vmatprep.subr.bf16.mxu0 0
  %900 = vmatpush2.bf16.msra.mxu0 %v747
  %901 = vmatprep.subr.bf16.mxu0 0
  %902 = vmatpush2.bf16.msra.mxu0 %v746
  %903 = vmatprep.mubr.bf16.mxu0 %v507
  %904 = vmatmul.mubr.bf16.gmra.mxu0 %v506
  %v905 = vpop.f32.mrf.mxu0
  %v906 = vadd.f32 %v184, %v905
  %v907 = vpop.f32.mrf.mxu0
  %v908 = vpop.f32.mrf.mxu0
  %v909 = vadd.f32 %v184, %v908
  %v910 = vpop.f32.mrf.mxu0
  %911 = vmatprep.mubr.bf16.mxu0 %v510
  %912 = vmatmul.mubr.bf16.gmra.mxu0 %v509
  %v913 = vpop.f32.mrf.mxu0
  %v914 = vadd.f32 %v184, %v913
  %v915 = vpop.f32.mrf.mxu0
  %v916 = vpop.f32.mrf.mxu0
  %v917 = vadd.f32 %v184, %v916
  %v918 = vpop.f32.mrf.mxu0
  %919 = vmatprep.mubr.bf16.mxu0 %v513
  %920 = vmatmul.mubr.bf16.gmra.mxu0 %v512
  %v921 = vpop.f32.mrf.mxu0
  %v922 = vadd.f32 %v184, %v921
  %v923 = vpop.f32.mrf.mxu0
  %v924 = vpop.f32.mrf.mxu0
  %v925 = vadd.f32 %v184, %v924
  %v926 = vpop.f32.mrf.mxu0
  %927 = vmatprep.mubr.bf16.mxu0 %v516
  %928 = vmatmul.mubr.bf16.gmra.mxu0 %v515
  %v929 = vpop.f32.mrf.mxu0
  %v930 = vadd.f32 %v184, %v929
  %v931 = vpop.f32.mrf.mxu0
  %v932 = vpop.f32.mrf.mxu0
  %v933 = vadd.f32 %v184, %v932
  %v934 = vpop.f32.mrf.mxu0
  %935 = vmatprep.mubr.bf16.mxu0 %v519
  %936 = vmatmul.mubr.bf16.gmra.mxu0 %v518
  %v937 = vpop.f32.mrf.mxu0
  %v938 = vadd.f32 %v184, %v937
  %v939 = vpop.f32.mrf.mxu0
  %v940 = vpop.f32.mrf.mxu0
  %v941 = vadd.f32 %v184, %v940
  %v942 = vpop.f32.mrf.mxu0
  %943 = vmatprep.mubr.bf16.mxu0 %v522
  %944 = vmatmul.mubr.bf16.gmra.mxu0 %v521
  %v945 = vpop.f32.mrf.mxu0
  %v946 = vadd.f32 %v184, %v945
  %v947 = vpop.f32.mrf.mxu0
  %v948 = vpop.f32.mrf.mxu0
  %v949 = vadd.f32 %v184, %v948
  %v950 = vpop.f32.mrf.mxu0
  %951 = vmatprep.mubr.bf16.mxu0 %v525
  %952 = vmatmul.mubr.bf16.gmra.mxu0 %v524
  %v953 = vpop.f32.mrf.mxu0
  %v954 = vadd.f32 %v184, %v953
  %v955 = vpop.f32.mrf.mxu0
  %v956 = vpop.f32.mrf.mxu0
  %v957 = vadd.f32 %v184, %v956
  %v958 = vpop.f32.mrf.mxu0
  %959 = vmatprep.mubr.bf16.mxu0 %v528
  %960 = vmatmul.mubr.bf16.gmra.mxu0 %v527
  %v961 = vpop.f32.mrf.mxu0
  %v962 = vadd.f32 %v184, %v961
  %v963 = vpop.f32.mrf.mxu0
  %v964 = vpop.f32.mrf.mxu0
  %v965 = vadd.f32 %v184, %v964
  %v966 = vpop.f32.mrf.mxu0
  %967 = vmatprep.mubr.bf16.mxu0 %v531
  %968 = vmatmul.mubr.bf16.gmra.mxu0 %v530
  %v969 = vpop.f32.mrf.mxu0
  %v970 = vadd.f32 %v184, %v969
  %v971 = vpop.f32.mrf.mxu0
  %v972 = vpop.f32.mrf.mxu0
  %v973 = vadd.f32 %v184, %v972
  %v974 = vpop.f32.mrf.mxu0
  %975 = vmatprep.mubr.bf16.mxu0 %v534
  %976 = vmatmul.mubr.bf16.gmra.mxu0 %v533
  %v977 = vpop.f32.mrf.mxu0
  %v978 = vadd.f32 %v184, %v977
  %v979 = vpop.f32.mrf.mxu0
  %v980 = vpop.f32.mrf.mxu0
  %v981 = vadd.f32 %v184, %v980
  %v982 = vpop.f32.mrf.mxu0
  %983 = vmatprep.mubr.bf16.mxu0 %v537
  %984 = vmatmul.mubr.bf16.gmra.mxu0 %v536
  %v985 = vpop.f32.mrf.mxu0
  %v986 = vadd.f32 %v184, %v985
  %v987 = vpop.f32.mrf.mxu0
  %v988 = vpop.f32.mrf.mxu0
  %v989 = vadd.f32 %v184, %v988
  %v990 = vpop.f32.mrf.mxu0
  %991 = vmatprep.mubr.bf16.mxu0 %v540
  %992 = vmatmul.mubr.bf16.gmra.mxu0 %v539
  %v993 = vpop.f32.mrf.mxu0
  %v994 = vadd.f32 %v184, %v993
  %v995 = vpop.f32.mrf.mxu0
  %v996 = vpop.f32.mrf.mxu0
  %v997 = vadd.f32 %v184, %v996
  %v998 = vpop.f32.mrf.mxu0
  %999 = vmatprep.mubr.bf16.mxu0 %v543
  %1000 = vmatmul.mubr.bf16.gmra.mxu0 %v542
  %v1001 = vpop.f32.mrf.mxu0
  %v1002 = vadd.f32 %v184, %v1001
  %v1003 = vpop.f32.mrf.mxu0
  %v1004 = vpop.f32.mrf.mxu0
  %v1005 = vadd.f32 %v184, %v1004
  %v1006 = vpop.f32.mrf.mxu0
  %1007 = vmatprep.mubr.bf16.mxu0 %v546
  %1008 = vmatmul.mubr.bf16.gmra.mxu0 %v545
  %v1009 = vpop.f32.mrf.mxu0
  %v1010 = vadd.f32 %v184, %v1009
  %v1011 = vpop.f32.mrf.mxu0
  %v1012 = vpop.f32.mrf.mxu0
  %v1013 = vadd.f32 %v184, %v1012
  %v1014 = vpop.f32.mrf.mxu0
  %1015 = vmatprep.mubr.bf16.mxu0 %v549
  %1016 = vmatmul.mubr.bf16.gmra.mxu0 %v548
  %v1017 = vpop.f32.mrf.mxu0
  %v1018 = vadd.f32 %v184, %v1017
  %v1019 = vpop.f32.mrf.mxu0
  %v1020 = vpop.f32.mrf.mxu0
  %v1021 = vadd.f32 %v184, %v1020
  %v1022 = vpop.f32.mrf.mxu0
  %1023 = vmatprep.mubr.bf16.mxu0 %v552
  %1024 = vmatmul.mubr.bf16.gmra.mxu0 %v551
  %v1025 = vpop.f32.mrf.mxu0
  %v1026 = vadd.f32 %v184, %v1025
  %v1027 = vpop.f32.mrf.mxu0
  %v1028 = vpop.f32.mrf.mxu0
  %v1029 = vadd.f32 %v184, %v1028
  %v1030 = vpop.f32.mrf.mxu0
  %1031 = vmatprep.mubr.bf16.mxu0 %v555
  %1032 = vmatmul.mubr.bf16.gmra.mxu0 %v554
  %v1033 = vpop.f32.mrf.mxu0
  %v1034 = vadd.f32 %v184, %v1033
  %v1035 = vpop.f32.mrf.mxu0
  %v1036 = vpop.f32.mrf.mxu0
  %v1037 = vadd.f32 %v184, %v1036
  %v1038 = vpop.f32.mrf.mxu0
  %1039 = vmatprep.mubr.bf16.mxu0 %v558
  %1040 = vmatmul.mubr.bf16.gmra.mxu0 %v557
  %v1041 = vpop.f32.mrf.mxu0
  %v1042 = vadd.f32 %v184, %v1041
  %v1043 = vpop.f32.mrf.mxu0
  %v1044 = vpop.f32.mrf.mxu0
  %v1045 = vadd.f32 %v184, %v1044
  %v1046 = vpop.f32.mrf.mxu0
  %1047 = vmatprep.mubr.bf16.mxu0 %v561
  %1048 = vmatmul.mubr.bf16.gmra.mxu0 %v560
  %v1049 = vpop.f32.mrf.mxu0
  %v1050 = vadd.f32 %v184, %v1049
  %v1051 = vpop.f32.mrf.mxu0
  %v1052 = vpop.f32.mrf.mxu0
  %v1053 = vadd.f32 %v184, %v1052
  %v1054 = vpop.f32.mrf.mxu0
  %1055 = vmatprep.mubr.bf16.mxu0 %v564
  %1056 = vmatmul.mubr.bf16.gmra.mxu0 %v563
  %v1057 = vpop.f32.mrf.mxu0
  %v1058 = vadd.f32 %v184, %v1057
  %v1059 = vpop.f32.mrf.mxu0
  %v1060 = vpop.f32.mrf.mxu0
  %v1061 = vadd.f32 %v184, %v1060
  %v1062 = vpop.f32.mrf.mxu0
  %1063 = vmatprep.mubr.bf16.mxu0 %v567
  %1064 = vmatmul.mubr.bf16.gmra.mxu0 %v566
  %v1065 = vpop.f32.mrf.mxu0
  %v1066 = vadd.f32 %v184, %v1065
  %v1067 = vpop.f32.mrf.mxu0
  %v1068 = vpop.f32.mrf.mxu0
  %v1069 = vadd.f32 %v184, %v1068
  %v1070 = vpop.f32.mrf.mxu0
  %1071 = vmatprep.mubr.bf16.mxu0 %v570
  %1072 = vmatmul.mubr.bf16.gmra.mxu0 %v569
  %v1073 = vpop.f32.mrf.mxu0
  %v1074 = vadd.f32 %v184, %v1073
  %v1075 = vpop.f32.mrf.mxu0
  %v1076 = vpop.f32.mrf.mxu0
  %v1077 = vadd.f32 %v184, %v1076
  %v1078 = vpop.f32.mrf.mxu0
  %1079 = vmatprep.mubr.bf16.mxu0 %v573
  %1080 = vmatmul.mubr.bf16.gmra.mxu0 %v572
  %v1081 = vpop.f32.mrf.mxu0
  %v1082 = vadd.f32 %v184, %v1081
  %v1083 = vpop.f32.mrf.mxu0
  %v1084 = vpop.f32.mrf.mxu0
  %v1085 = vadd.f32 %v184, %v1084
  %v1086 = vpop.f32.mrf.mxu0
  %1087 = vmatprep.mubr.bf16.mxu0 %v576
  %1088 = vmatmul.mubr.bf16.gmra.mxu0 %v575
  %v1089 = vpop.f32.mrf.mxu0
  %v1090 = vadd.f32 %v184, %v1089
  %v1091 = vpop.f32.mrf.mxu0
  %v1092 = vpop.f32.mrf.mxu0
  %v1093 = vadd.f32 %v184, %v1092
  %v1094 = vpop.f32.mrf.mxu0
  %1095 = vmatprep.mubr.bf16.mxu0 %v579
  %1096 = vmatmul.mubr.bf16.gmra.mxu0 %v578
  %v1097 = vpop.f32.mrf.mxu0
  %v1098 = vadd.f32 %v184, %v1097
  %v1099 = vpop.f32.mrf.mxu0
  %v1100 = vpop.f32.mrf.mxu0
  %v1101 = vadd.f32 %v184, %v1100
  %v1102 = vpop.f32.mrf.mxu0
  %1103 = vmatprep.mubr.bf16.mxu0 %v582
  %1104 = vmatmul.mubr.bf16.gmra.mxu0 %v581
  %v1105 = vpop.f32.mrf.mxu0
  %v1106 = vadd.f32 %v184, %v1105
  %v1107 = vpop.f32.mrf.mxu0
  %v1108 = vpop.f32.mrf.mxu0
  %v1109 = vadd.f32 %v184, %v1108
  %v1110 = vpop.f32.mrf.mxu0
  %1111 = vmatprep.mubr.bf16.mxu0 %v585
  %1112 = vmatmul.mubr.bf16.gmra.mxu0 %v584
  %v1113 = vpop.f32.mrf.mxu0
  %v1114 = vadd.f32 %v184, %v1113
  %v1115 = vpop.f32.mrf.mxu0
  %v1116 = vpop.f32.mrf.mxu0
  %v1117 = vadd.f32 %v184, %v1116
  %v1118 = vpop.f32.mrf.mxu0
  %1119 = vmatprep.mubr.bf16.mxu0 %v588
  %1120 = vmatmul.mubr.bf16.gmra.mxu0 %v587
  %v1121 = vpop.f32.mrf.mxu0
  %v1122 = vadd.f32 %v184, %v1121
  %v1123 = vpop.f32.mrf.mxu0
  %v1124 = vpop.f32.mrf.mxu0
  %v1125 = vadd.f32 %v184, %v1124
  %v1126 = vpop.f32.mrf.mxu0
  %1127 = vmatprep.mubr.bf16.mxu0 %v591
  %1128 = vmatmul.mubr.bf16.gmra.mxu0 %v590
  %v1129 = vpop.f32.mrf.mxu0
  %v1130 = vadd.f32 %v184, %v1129
  %v1131 = vpop.f32.mrf.mxu0
  %v1132 = vpop.f32.mrf.mxu0
  %v1133 = vadd.f32 %v184, %v1132
  %v1134 = vpop.f32.mrf.mxu0
  %1135 = vmatprep.mubr.bf16.mxu0 %v594
  %1136 = vmatmul.mubr.bf16.gmra.mxu0 %v593
  %v1137 = vpop.f32.mrf.mxu0
  %v1138 = vadd.f32 %v184, %v1137
  %v1139 = vpop.f32.mrf.mxu0
  %v1140 = vpop.f32.mrf.mxu0
  %v1141 = vadd.f32 %v184, %v1140
  %v1142 = vpop.f32.mrf.mxu0
  %1143 = vmatprep.mubr.bf16.mxu0 %v597
  %1144 = vmatmul.mubr.bf16.gmra.mxu0 %v596
  %v1145 = vpop.f32.mrf.mxu0
  %v1146 = vadd.f32 %v184, %v1145
  %v1147 = vpop.f32.mrf.mxu0
  %v1148 = vpop.f32.mrf.mxu0
  %v1149 = vadd.f32 %v184, %v1148
  %v1150 = vpop.f32.mrf.mxu0
  %1151 = vmatprep.mubr.bf16.mxu0 %v600
  %1152 = vmatmul.mubr.bf16.gmra.mxu0 %v599
  %v1153 = vpop.f32.mrf.mxu0
  %v1154 = vadd.f32 %v184, %v1153
  %v1155 = vpop.f32.mrf.mxu0
  %v1156 = vpop.f32.mrf.mxu0
  %v1157 = vadd.f32 %v184, %v1156
  %v1158 = vpop.f32.mrf.mxu0
  %1159 = vdwg.mxu0
  %1160 = vmatprep.subr.bf16.mxu0 0
  %1161 = vmatpush1.bf16.msra.mxu0 0
  %1162 = vmatprep.subr.bf16.mxu0 0
  %1163 = vmatpush1.bf16.msra.mxu0 0
  %1164 = vmatprep.subr.bf16.mxu0 0
  %1165 = vmatpush1.bf16.msra.mxu0 0
  %1166 = vmatprep.subr.bf16.mxu0 0
  %1167 = vmatpush1.bf16.msra.mxu0 0
  %1168 = vmatprep.subr.bf16.mxu0 0
  %1169 = vmatpush1.bf16.msra.mxu0 0
  %1170 = vmatprep.subr.bf16.mxu0 0
  %1171 = vmatpush1.bf16.msra.mxu0 0
  %1172 = vmatprep.subr.bf16.mxu0 0
  %1173 = vmatpush1.bf16.msra.mxu0 %v755
  %1174 = vmatprep.subr.bf16.mxu0 0
  %1175 = vmatpush1.bf16.msra.mxu0 %v754
  %1176 = vmatprep.subr.bf16.mxu0 0
  %1177 = vmatpush2.bf16.msra.mxu0 0
  %1178 = vmatprep.subr.bf16.mxu0 0
  %1179 = vmatpush2.bf16.msra.mxu0 0
  %1180 = vmatprep.subr.bf16.mxu0 0
  %1181 = vmatpush2.bf16.msra.mxu0 0
  %1182 = vmatprep.subr.bf16.mxu0 0
  %1183 = vmatpush2.bf16.msra.mxu0 0
  %1184 = vmatprep.subr.bf16.mxu0 0
  %1185 = vmatpush2.bf16.msra.mxu0 0
  %1186 = vmatprep.subr.bf16.mxu0 0
  %1187 = vmatpush2.bf16.msra.mxu0 0
  %1188 = vmatprep.subr.bf16.mxu0 0
  %1189 = vmatpush2.bf16.msra.mxu0 0
  %1190 = vmatprep.subr.bf16.mxu0 0
  %1191 = vmatpush2.bf16.msra.mxu0 0
  %1192 = vmatprep.mubr.bf16.mxu0 0
  %1193 = vmatmul.mubr.bf16.gmra.mxu0 %v776
  %v1194 = vpop.f32.mrf.mxu0
  %v1195 = vadd.f32 %v906, %v1194
  %v1196 = vpop.f32.mrf.mxu0
  %v1197 = vpop.f32.mrf.mxu0
  %v1198 = vadd.f32 %v909, %v1197
  %v1199 = vpop.f32.mrf.mxu0
  %1200 = vmatprep.mubr.bf16.mxu0 0
  %1201 = vmatmul.mubr.bf16.gmra.mxu0 %v779
  %v1202 = vpop.f32.mrf.mxu0
  %v1203 = vadd.f32 %v914, %v1202
  %v1204 = vpop.f32.mrf.mxu0
  %v1205 = vpop.f32.mrf.mxu0
  %v1206 = vadd.f32 %v917, %v1205
  %v1207 = vpop.f32.mrf.mxu0
  %1208 = vmatprep.mubr.bf16.mxu0 0
  %1209 = vmatmul.mubr.bf16.gmra.mxu0 %v782
  %v1210 = vpop.f32.mrf.mxu0
  %v1211 = vadd.f32 %v922, %v1210
  %v1212 = vpop.f32.mrf.mxu0
  %v1213 = vpop.f32.mrf.mxu0
  %v1214 = vadd.f32 %v925, %v1213
  %v1215 = vpop.f32.mrf.mxu0
  %1216 = vmatprep.mubr.bf16.mxu0 0
  %1217 = vmatmul.mubr.bf16.gmra.mxu0 %v785
  %v1218 = vpop.f32.mrf.mxu0
  %v1219 = vadd.f32 %v930, %v1218
  %v1220 = vpop.f32.mrf.mxu0
  %v1221 = vpop.f32.mrf.mxu0
  %v1222 = vadd.f32 %v933, %v1221
  %v1223 = vpop.f32.mrf.mxu0
  %1224 = vmatprep.mubr.bf16.mxu0 0
  %1225 = vmatmul.mubr.bf16.gmra.mxu0 %v788
  %v1226 = vpop.f32.mrf.mxu0
  %v1227 = vadd.f32 %v938, %v1226
  %v1228 = vpop.f32.mrf.mxu0
  %v1229 = vpop.f32.mrf.mxu0
  %v1230 = vadd.f32 %v941, %v1229
  %v1231 = vpop.f32.mrf.mxu0
  %1232 = vmatprep.mubr.bf16.mxu0 0
  %1233 = vmatmul.mubr.bf16.gmra.mxu0 %v791
  %v1234 = vpop.f32.mrf.mxu0
  %v1235 = vadd.f32 %v946, %v1234
  %v1236 = vpop.f32.mrf.mxu0
  %v1237 = vpop.f32.mrf.mxu0
  %v1238 = vadd.f32 %v949, %v1237
  %v1239 = vpop.f32.mrf.mxu0
  %1240 = vmatprep.mubr.bf16.mxu0 0
  %1241 = vmatmul.mubr.bf16.gmra.mxu0 %v794
  %v1242 = vpop.f32.mrf.mxu0
  %v1243 = vadd.f32 %v954, %v1242
  %v1244 = vpop.f32.mrf.mxu0
  %v1245 = vpop.f32.mrf.mxu0
  %v1246 = vadd.f32 %v957, %v1245
  %v1247 = vpop.f32.mrf.mxu0
  %1248 = vmatprep.mubr.bf16.mxu0 0
  %1249 = vmatmul.mubr.bf16.gmra.mxu0 %v797
  %v1250 = vpop.f32.mrf.mxu0
  %v1251 = vadd.f32 %v962, %v1250
  %v1252 = vpop.f32.mrf.mxu0
  %v1253 = vpop.f32.mrf.mxu0
  %v1254 = vadd.f32 %v965, %v1253
  %v1255 = vpop.f32.mrf.mxu0
  %1256 = vmatprep.mubr.bf16.mxu0 0
  %1257 = vmatmul.mubr.bf16.gmra.mxu0 %v800
  %v1258 = vpop.f32.mrf.mxu0
  %v1259 = vadd.f32 %v970, %v1258
  %v1260 = vpop.f32.mrf.mxu0
  %v1261 = vpop.f32.mrf.mxu0
  %v1262 = vadd.f32 %v973, %v1261
  %v1263 = vpop.f32.mrf.mxu0
  %1264 = vmatprep.mubr.bf16.mxu0 0
  %1265 = vmatmul.mubr.bf16.gmra.mxu0 %v803
  %v1266 = vpop.f32.mrf.mxu0
  %v1267 = vadd.f32 %v978, %v1266
  %v1268 = vpop.f32.mrf.mxu0
  %v1269 = vpop.f32.mrf.mxu0
  %v1270 = vadd.f32 %v981, %v1269
  %v1271 = vpop.f32.mrf.mxu0
  %1272 = vmatprep.mubr.bf16.mxu0 0
  %1273 = vmatmul.mubr.bf16.gmra.mxu0 %v806
  %v1274 = vpop.f32.mrf.mxu0
  %v1275 = vadd.f32 %v986, %v1274
  %v1276 = vpop.f32.mrf.mxu0
  %v1277 = vpop.f32.mrf.mxu0
  %v1278 = vadd.f32 %v989, %v1277
  %v1279 = vpop.f32.mrf.mxu0
  %1280 = vmatprep.mubr.bf16.mxu0 0
  %1281 = vmatmul.mubr.bf16.gmra.mxu0 %v809
  %v1282 = vpop.f32.mrf.mxu0
  %v1283 = vadd.f32 %v994, %v1282
  %v1284 = vpop.f32.mrf.mxu0
  %v1285 = vpop.f32.mrf.mxu0
  %v1286 = vadd.f32 %v997, %v1285
  %v1287 = vpop.f32.mrf.mxu0
  %1288 = vmatprep.mubr.bf16.mxu0 0
  %1289 = vmatmul.mubr.bf16.gmra.mxu0 %v812
  %v1290 = vpop.f32.mrf.mxu0
  %v1291 = vadd.f32 %v1002, %v1290
  %v1292 = vpop.f32.mrf.mxu0
  %v1293 = vpop.f32.mrf.mxu0
  %v1294 = vadd.f32 %v1005, %v1293
  %v1295 = vpop.f32.mrf.mxu0
  %1296 = vmatprep.mubr.bf16.mxu0 0
  %1297 = vmatmul.mubr.bf16.gmra.mxu0 %v815
  %v1298 = vpop.f32.mrf.mxu0
  %v1299 = vadd.f32 %v1010, %v1298
  %v1300 = vpop.f32.mrf.mxu0
  %v1301 = vpop.f32.mrf.mxu0
  %v1302 = vadd.f32 %v1013, %v1301
  %v1303 = vpop.f32.mrf.mxu0
  %1304 = vmatprep.mubr.bf16.mxu0 0
  %1305 = vmatmul.mubr.bf16.gmra.mxu0 %v818
  %v1306 = vpop.f32.mrf.mxu0
  %v1307 = vadd.f32 %v1018, %v1306
  %v1308 = vpop.f32.mrf.mxu0
  %v1309 = vpop.f32.mrf.mxu0
  %v1310 = vadd.f32 %v1021, %v1309
  %v1311 = vpop.f32.mrf.mxu0
  %1312 = vmatprep.mubr.bf16.mxu0 0
  %1313 = vmatmul.mubr.bf16.gmra.mxu0 %v821
  %v1314 = vpop.f32.mrf.mxu0
  %v1315 = vadd.f32 %v1026, %v1314
  %v1316 = vpop.f32.mrf.mxu0
  %v1317 = vpop.f32.mrf.mxu0
  %v1318 = vadd.f32 %v1029, %v1317
  %v1319 = vpop.f32.mrf.mxu0
  %1320 = vmatprep.mubr.bf16.mxu0 0
  %1321 = vmatmul.mubr.bf16.gmra.mxu0 %v824
  %v1322 = vpop.f32.mrf.mxu0
  %v1323 = vadd.f32 %v1034, %v1322
  %v1324 = vpop.f32.mrf.mxu0
  %v1325 = vpop.f32.mrf.mxu0
  %v1326 = vadd.f32 %v1037, %v1325
  %v1327 = vpop.f32.mrf.mxu0
  %1328 = vmatprep.mubr.bf16.mxu0 0
  %1329 = vmatmul.mubr.bf16.gmra.mxu0 %v827
  %v1330 = vpop.f32.mrf.mxu0
  %v1331 = vadd.f32 %v1042, %v1330
  %v1332 = vpop.f32.mrf.mxu0
  %v1333 = vpop.f32.mrf.mxu0
  %v1334 = vadd.f32 %v1045, %v1333
  %v1335 = vpop.f32.mrf.mxu0
  %1336 = vmatprep.mubr.bf16.mxu0 0
  %1337 = vmatmul.mubr.bf16.gmra.mxu0 %v830
  %v1338 = vpop.f32.mrf.mxu0
  %v1339 = vadd.f32 %v1050, %v1338
  %v1340 = vpop.f32.mrf.mxu0
  %v1341 = vpop.f32.mrf.mxu0
  %v1342 = vadd.f32 %v1053, %v1341
  %v1343 = vpop.f32.mrf.mxu0
  %1344 = vmatprep.mubr.bf16.mxu0 0
  %1345 = vmatmul.mubr.bf16.gmra.mxu0 %v833
  %v1346 = vpop.f32.mrf.mxu0
  %v1347 = vadd.f32 %v1058, %v1346
  %v1348 = vpop.f32.mrf.mxu0
  %v1349 = vpop.f32.mrf.mxu0
  %v1350 = vadd.f32 %v1061, %v1349
  %v1351 = vpop.f32.mrf.mxu0
  %1352 = vmatprep.mubr.bf16.mxu0 0
  %1353 = vmatmul.mubr.bf16.gmra.mxu0 %v836
  %v1354 = vpop.f32.mrf.mxu0
  %v1355 = vadd.f32 %v1066, %v1354
  %v1356 = vpop.f32.mrf.mxu0
  %v1357 = vpop.f32.mrf.mxu0
  %v1358 = vadd.f32 %v1069, %v1357
  %v1359 = vpop.f32.mrf.mxu0
  %1360 = vmatprep.mubr.bf16.mxu0 0
  %1361 = vmatmul.mubr.bf16.gmra.mxu0 %v839
  %v1362 = vpop.f32.mrf.mxu0
  %v1363 = vadd.f32 %v1074, %v1362
  %v1364 = vpop.f32.mrf.mxu0
  %v1365 = vpop.f32.mrf.mxu0
  %v1366 = vadd.f32 %v1077, %v1365
  %v1367 = vpop.f32.mrf.mxu0
  %1368 = vmatprep.mubr.bf16.mxu0 0
  %1369 = vmatmul.mubr.bf16.gmra.mxu0 %v842
  %v1370 = vpop.f32.mrf.mxu0
  %v1371 = vadd.f32 %v1082, %v1370
  %v1372 = vpop.f32.mrf.mxu0
  %v1373 = vpop.f32.mrf.mxu0
  %v1374 = vadd.f32 %v1085, %v1373
  %v1375 = vpop.f32.mrf.mxu0
  %1376 = vmatprep.mubr.bf16.mxu0 0
  %1377 = vmatmul.mubr.bf16.gmra.mxu0 %v845
  %v1378 = vpop.f32.mrf.mxu0
  %v1379 = vadd.f32 %v1090, %v1378
  %v1380 = vpop.f32.mrf.mxu0
  %v1381 = vpop.f32.mrf.mxu0
  %v1382 = vadd.f32 %v1093, %v1381
  %v1383 = vpop.f32.mrf.mxu0
  %1384 = vmatprep.mubr.bf16.mxu0 0
  %1385 = vmatmul.mubr.bf16.gmra.mxu0 %v848
  %v1386 = vpop.f32.mrf.mxu0
  %v1387 = vadd.f32 %v1098, %v1386
  %v1388 = vpop.f32.mrf.mxu0
  %v1389 = vpop.f32.mrf.mxu0
  %v1390 = vadd.f32 %v1101, %v1389
  %v1391 = vpop.f32.mrf.mxu0
  %1392 = vmatprep.mubr.bf16.mxu0 0
  %1393 = vmatmul.mubr.bf16.gmra.mxu0 %v851
  %v1394 = vpop.f32.mrf.mxu0
  %v1395 = vadd.f32 %v1106, %v1394
  %v1396 = vpop.f32.mrf.mxu0
  %v1397 = vpop.f32.mrf.mxu0
  %v1398 = vadd.f32 %v1109, %v1397
  %v1399 = vpop.f32.mrf.mxu0
  %1400 = vmatprep.mubr.bf16.mxu0 0
  %1401 = vmatmul.mubr.bf16.gmra.mxu0 %v854
  %v1402 = vpop.f32.mrf.mxu0
  %v1403 = vadd.f32 %v1114, %v1402
  %v1404 = vpop.f32.mrf.mxu0
  %v1405 = vpop.f32.mrf.mxu0
  %v1406 = vadd.f32 %v1117, %v1405
  %v1407 = vpop.f32.mrf.mxu0
  %1408 = vmatprep.mubr.bf16.mxu0 0
  %1409 = vmatmul.mubr.bf16.gmra.mxu0 %v857
  %v1410 = vpop.f32.mrf.mxu0
  %v1411 = vadd.f32 %v1122, %v1410
  %v1412 = vpop.f32.mrf.mxu0
  %v1413 = vpop.f32.mrf.mxu0
  %v1414 = vadd.f32 %v1125, %v1413
  %v1415 = vpop.f32.mrf.mxu0
  %1416 = vmatprep.mubr.bf16.mxu0 0
  %1417 = vmatmul.mubr.bf16.gmra.mxu0 %v860
  %v1418 = vpop.f32.mrf.mxu0
  %v1419 = vadd.f32 %v1130, %v1418
  %v1420 = vpop.f32.mrf.mxu0
  %v1421 = vpop.f32.mrf.mxu0
  %v1422 = vadd.f32 %v1133, %v1421
  %v1423 = vpop.f32.mrf.mxu0
  %1424 = vmatprep.mubr.bf16.mxu0 0
  %1425 = vmatmul.mubr.bf16.gmra.mxu0 %v863
  %v1426 = vpop.f32.mrf.mxu0
  %v1427 = vadd.f32 %v1138, %v1426
  %v1428 = vpop.f32.mrf.mxu0
  %v1429 = vpop.f32.mrf.mxu0
  %v1430 = vadd.f32 %v1141, %v1429
  %v1431 = vpop.f32.mrf.mxu0
  %1432 = vmatprep.mubr.bf16.mxu0 0
  %1433 = vmatmul.mubr.bf16.gmra.mxu0 %v866
  %v1434 = vpop.f32.mrf.mxu0
  %v1435 = vadd.f32 %v1146, %v1434
  %v1436 = vpop.f32.mrf.mxu0
  %v1437 = vpop.f32.mrf.mxu0
  %v1438 = vadd.f32 %v1149, %v1437
  %v1439 = vpop.f32.mrf.mxu0
  %1440 = vmatprep.mubr.bf16.mxu0 0
  %1441 = vmatmul.mubr.bf16.gmra.mxu0 %v869
  %v1442 = vpop.f32.mrf.mxu0
  %v1443 = vadd.f32 %v1154, %v1442
  %v1444 = vpop.f32.mrf.mxu0
  %v1445 = vpop.f32.mrf.mxu0
  %v1446 = vadd.f32 %v1157, %v1445
  %v1447 = vpop.f32.mrf.mxu0
  %1448 = vdwg.mxu0
  %v1449 = vxor.u32 %v1195, 2147483648
  %v1450 = vxor.u32 %v1198, 2147483648
  %v1451 = vxor.u32 %v1203, 2147483648
  %v1452 = vxor.u32 %v1206, 2147483648
  %v1453 = vxor.u32 %v1211, 2147483648
  %v1454 = vxor.u32 %v1214, 2147483648
  %v1455 = vxor.u32 %v1219, 2147483648
  %v1456 = vxor.u32 %v1222, 2147483648
  %v1457 = vxor.u32 %v1227, 2147483648
  %v1458 = vxor.u32 %v1230, 2147483648
  %v1459 = vxor.u32 %v1235, 2147483648
  %v1460 = vxor.u32 %v1238, 2147483648
  %v1461 = vxor.u32 %v1243, 2147483648
  %v1462 = vxor.u32 %v1246, 2147483648
  %v1463 = vxor.u32 %v1251, 2147483648
  %v1464 = vxor.u32 %v1254, 2147483648
  %v1465 = vxor.u32 %v1259, 2147483648
  %v1466 = vxor.u32 %v1262, 2147483648
  %v1467 = vxor.u32 %v1267, 2147483648
  %v1468 = vxor.u32 %v1270, 2147483648
  %v1469 = vxor.u32 %v1275, 2147483648
  %v1470 = vxor.u32 %v1278, 2147483648
  %v1471 = vxor.u32 %v1283, 2147483648
  %v1472 = vxor.u32 %v1286, 2147483648
  %v1473 = vxor.u32 %v1291, 2147483648
  %v1474 = vxor.u32 %v1294, 2147483648
  %v1475 = vxor.u32 %v1299, 2147483648
  %v1476 = vxor.u32 %v1302, 2147483648
  %v1477 = vxor.u32 %v1307, 2147483648
  %v1478 = vxor.u32 %v1310, 2147483648
  %v1479 = vxor.u32 %v1315, 2147483648
  %v1480 = vxor.u32 %v1318, 2147483648
  %v1481 = vxor.u32 %v1323, 2147483648
  %v1482 = vxor.u32 %v1326, 2147483648
  %v1483 = vxor.u32 %v1331, 2147483648
  %v1484 = vxor.u32 %v1334, 2147483648
  %v1485 = vxor.u32 %v1339, 2147483648
  %v1486 = vxor.u32 %v1342, 2147483648
  %v1487 = vxor.u32 %v1347, 2147483648
  %v1488 = vxor.u32 %v1350, 2147483648
  %v1489 = vxor.u32 %v1355, 2147483648
  %v1490 = vxor.u32 %v1358, 2147483648
  %v1491 = vxor.u32 %v1363, 2147483648
  %v1492 = vxor.u32 %v1366, 2147483648
  %v1493 = vxor.u32 %v1371, 2147483648
  %v1494 = vxor.u32 %v1374, 2147483648
  %v1495 = vxor.u32 %v1379, 2147483648
  %v1496 = vxor.u32 %v1382, 2147483648
  %v1497 = vxor.u32 %v1387, 2147483648
  %v1498 = vxor.u32 %v1390, 2147483648
  %v1499 = vxor.u32 %v1395, 2147483648
  %v1500 = vxor.u32 %v1398, 2147483648
  %v1501 = vxor.u32 %v1403, 2147483648
  %v1502 = vxor.u32 %v1406, 2147483648
  %v1503 = vxor.u32 %v1411, 2147483648
  %v1504 = vxor.u32 %v1414, 2147483648
  %v1505 = vxor.u32 %v1419, 2147483648
  %v1506 = vxor.u32 %v1422, 2147483648
  %v1507 = vxor.u32 %v1427, 2147483648
  %v1508 = vxor.u32 %v1430, 2147483648
  %v1509 = vxor.u32 %v1435, 2147483648
  %v1510 = vxor.u32 %v1438, 2147483648
  %v1511 = vxor.u32 %v1443, 2147483648
  %v1512 = vxor.u32 %v1446, 2147483648
  %v1513 = vmul.f32 %v1449, 1.442695
  %v1514 = vpow.pop %v1513
  %v1515 = vmul.f32 %v1450, 1.442695
  %v1516 = vpow.pop %v1515
  %v1517 = vmul.f32 %v1451, 1.442695
  %v1518 = vpow.pop %v1517
  %v1519 = vmul.f32 %v1452, 1.442695
  %v1520 = vpow.pop %v1519
  %v1521 = vmul.f32 %v1453, 1.442695
  %v1522 = vpow.pop %v1521
  %v1523 = vmul.f32 %v1454, 1.442695
  %v1524 = vpow.pop %v1523
  %v1525 = vmul.f32 %v1455, 1.442695
  %v1526 = vpow.pop %v1525
  %v1527 = vmul.f32 %v1456, 1.442695
  %v1528 = vpow.pop %v1527
  %v1529 = vmul.f32 %v1457, 1.442695
  %v1530 = vpow.pop %v1529
  %v1531 = vmul.f32 %v1458, 1.442695
  %v1532 = vpow.pop %v1531
  %v1533 = vmul.f32 %v1459, 1.442695
  %v1534 = vpow.pop %v1533
  %v1535 = vmul.f32 %v1460, 1.442695
  %v1536 = vpow.pop %v1535
  %v1537 = vmul.f32 %v1461, 1.442695
  %v1538 = vpow.pop %v1537
  %v1539 = vmul.f32 %v1462, 1.442695
  %v1540 = vpow.pop %v1539
  %v1541 = vmul.f32 %v1463, 1.442695
  %v1542 = vpow.pop %v1541
  %v1543 = vmul.f32 %v1464, 1.442695
  %v1544 = vpow.pop %v1543
  %v1545 = vmul.f32 %v1465, 1.442695
  %v1546 = vpow.pop %v1545
  %v1547 = vmul.f32 %v1466, 1.442695
  %v1548 = vpow.pop %v1547
  %v1549 = vmul.f32 %v1467, 1.442695
  %v1550 = vpow.pop %v1549
  %v1551 = vmul.f32 %v1468, 1.442695
  %v1552 = vpow.pop %v1551
  %v1553 = vmul.f32 %v1469, 1.442695
  %v1554 = vpow.pop %v1553
  %v1555 = vmul.f32 %v1470, 1.442695
  %v1556 = vpow.pop %v1555
  %v1557 = vmul.f32 %v1471, 1.442695
  %v1558 = vpow.pop %v1557
  %v1559 = vmul.f32 %v1472, 1.442695
  %v1560 = vpow.pop %v1559
  %v1561 = vmul.f32 %v1473, 1.442695
  %v1562 = vpow.pop %v1561
  %v1563 = vmul.f32 %v1474, 1.442695
  %v1564 = vpow.pop %v1563
  %v1565 = vmul.f32 %v1475, 1.442695
  %v1566 = vpow.pop %v1565
  %v1567 = vmul.f32 %v1476, 1.442695
  %v1568 = vpow.pop %v1567
  %v1569 = vmul.f32 %v1477, 1.442695
  %v1570 = vpow.pop %v1569
  %v1571 = vmul.f32 %v1478, 1.442695
  %v1572 = vpow.pop %v1571
  %v1573 = vmul.f32 %v1479, 1.442695
  %v1574 = vpow.pop %v1573
  %v1575 = vmul.f32 %v1480, 1.442695
  %v1576 = vpow.pop %v1575
  %v1577 = vmul.f32 %v1481, 1.442695
  %v1578 = vpow.pop %v1577
  %v1579 = vmul.f32 %v1482, 1.442695
  %v1580 = vpow.pop %v1579
  %v1581 = vmul.f32 %v1483, 1.442695
  %v1582 = vpow.pop %v1581
  %v1583 = vmul.f32 %v1484, 1.442695
  %v1584 = vpow.pop %v1583
  %v1585 = vmul.f32 %v1485, 1.442695
  %v1586 = vpow.pop %v1585
  %v1587 = vmul.f32 %v1486, 1.442695
  %v1588 = vpow.pop %v1587
  %v1589 = vmul.f32 %v1487, 1.442695
  %v1590 = vpow.pop %v1589
  %v1591 = vmul.f32 %v1488, 1.442695
  %v1592 = vpow.pop %v1591
  %v1593 = vmul.f32 %v1489, 1.442695
  %v1594 = vpow.pop %v1593
  %v1595 = vmul.f32 %v1490, 1.442695
  %v1596 = vpow.pop %v1595
  %v1597 = vmul.f32 %v1491, 1.442695
  %v1598 = vpow.pop %v1597
  %v1599 = vmul.f32 %v1492, 1.442695
  %v1600 = vpow.pop %v1599
  %v1601 = vmul.f32 %v1493, 1.442695
  %v1602 = vpow.pop %v1601
  %v1603 = vmul.f32 %v1494, 1.442695
  %v1604 = vpow.pop %v1603
  %v1605 = vmul.f32 %v1495, 1.442695
  %v1606 = vpow.pop %v1605
  %v1607 = vmul.f32 %v1496, 1.442695
  %v1608 = vpow.pop %v1607
  %v1609 = vmul.f32 %v1497, 1.442695
  %v1610 = vpow.pop %v1609
  %v1611 = vmul.f32 %v1498, 1.442695
  %v1612 = vpow.pop %v1611
  %v1613 = vmul.f32 %v1499, 1.442695
  %v1614 = vpow.pop %v1613
  %v1615 = vmul.f32 %v1500, 1.442695
  %v1616 = vpow.pop %v1615
  %v1617 = vmul.f32 %v1501, 1.442695
  %v1618 = vpow.pop %v1617
  %v1619 = vmul.f32 %v1502, 1.442695
  %v1620 = vpow.pop %v1619
  %v1621 = vmul.f32 %v1503, 1.442695
  %v1622 = vpow.pop %v1621
  %v1623 = vmul.f32 %v1504, 1.442695
  %v1624 = vpow.pop %v1623
  %v1625 = vmul.f32 %v1505, 1.442695
  %v1626 = vpow.pop %v1625
  %v1627 = vmul.f32 %v1506, 1.442695
  %v1628 = vpow.pop %v1627
  %v1629 = vmul.f32 %v1507, 1.442695
  %v1630 = vpow.pop %v1629
  %v1631 = vmul.f32 %v1508, 1.442695
  %v1632 = vpow.pop %v1631
  %v1633 = vmul.f32 %v1509, 1.442695
  %v1634 = vpow.pop %v1633
  %v1635 = vmul.f32 %v1510, 1.442695
  %v1636 = vpow.pop %v1635
  %v1637 = vmul.f32 %v1511, 1.442695
  %v1638 = vpow.pop %v1637
  %v1639 = vmul.f32 %v1512, 1.442695
  %v1640 = vpow.pop %v1639
  %v1641 = vadd.f32 %v1514, 1.0
  %v1642 = vadd.f32 %v1516, 1.0
  %v1643 = vadd.f32 %v1518, 1.0
  %v1644 = vadd.f32 %v1520, 1.0
  %v1645 = vadd.f32 %v1522, 1.0
  %v1646 = vadd.f32 %v1524, 1.0
  %v1647 = vadd.f32 %v1526, 1.0
  %v1648 = vadd.f32 %v1528, 1.0
  %v1649 = vadd.f32 %v1530, 1.0
  %v1650 = vadd.f32 %v1532, 1.0
  %v1651 = vadd.f32 %v1534, 1.0
  %v1652 = vadd.f32 %v1536, 1.0
  %v1653 = vadd.f32 %v1538, 1.0
  %v1654 = vadd.f32 %v1540, 1.0
  %v1655 = vadd.f32 %v1542, 1.0
  %v1656 = vadd.f32 %v1544, 1.0
  %v1657 = vadd.f32 %v1546, 1.0
  %v1658 = vadd.f32 %v1548, 1.0
  %v1659 = vadd.f32 %v1550, 1.0
  %v1660 = vadd.f32 %v1552, 1.0
  %v1661 = vadd.f32 %v1554, 1.0
  %v1662 = vadd.f32 %v1556, 1.0
  %v1663 = vadd.f32 %v1558, 1.0
  %v1664 = vadd.f32 %v1560, 1.0
  %v1665 = vadd.f32 %v1562, 1.0
  %v1666 = vadd.f32 %v1564, 1.0
  %v1667 = vadd.f32 %v1566, 1.0
  %v1668 = vadd.f32 %v1568, 1.0
  %v1669 = vadd.f32 %v1570, 1.0
  %v1670 = vadd.f32 %v1572, 1.0
  %v1671 = vadd.f32 %v1574, 1.0
  %v1672 = vadd.f32 %v1576, 1.0
  %v1673 = vadd.f32 %v1578, 1.0
  %v1674 = vadd.f32 %v1580, 1.0
  %v1675 = vadd.f32 %v1582, 1.0
  %v1676 = vadd.f32 %v1584, 1.0
  %v1677 = vadd.f32 %v1586, 1.0
  %v1678 = vadd.f32 %v1588, 1.0
  %v1679 = vadd.f32 %v1590, 1.0
  %v1680 = vadd.f32 %v1592, 1.0
  %v1681 = vadd.f32 %v1594, 1.0
  %v1682 = vadd.f32 %v1596, 1.0
  %v1683 = vadd.f32 %v1598, 1.0
  %v1684 = vadd.f32 %v1600, 1.0
  %v1685 = vadd.f32 %v1602, 1.0
  %v1686 = vadd.f32 %v1604, 1.0
  %v1687 = vadd.f32 %v1606, 1.0
  %v1688 = vadd.f32 %v1608, 1.0
  %v1689 = vadd.f32 %v1610, 1.0
  %v1690 = vadd.f32 %v1612, 1.0
  %v1691 = vadd.f32 %v1614, 1.0
  %v1692 = vadd.f32 %v1616, 1.0
  %v1693 = vadd.f32 %v1618, 1.0
  %v1694 = vadd.f32 %v1620, 1.0
  %v1695 = vadd.f32 %v1622, 1.0
  %v1696 = vadd.f32 %v1624, 1.0
  %v1697 = vadd.f32 %v1626, 1.0
  %v1698 = vadd.f32 %v1628, 1.0
  %v1699 = vadd.f32 %v1630, 1.0
  %v1700 = vadd.f32 %v1632, 1.0
  %v1701 = vadd.f32 %v1634, 1.0
  %v1702 = vadd.f32 %v1636, 1.0
  %v1703 = vadd.f32 %v1638, 1.0
  %v1704 = vadd.f32 %v1640, 1.0
  %v1705 = vrcp.pop %v1641
  %v1706 = vmul.f32 1.0, %v1705
  %v1707 = vrcp.pop %v1642
  %v1708 = vmul.f32 1.0, %v1707
  %v1709 = vrcp.pop %v1643
  %v1710 = vmul.f32 1.0, %v1709
  %v1711 = vrcp.pop %v1644
  %v1712 = vmul.f32 1.0, %v1711
  %v1713 = vrcp.pop %v1645
  %v1714 = vmul.f32 1.0, %v1713
  %v1715 = vrcp.pop %v1646
  %v1716 = vmul.f32 1.0, %v1715
  %v1717 = vrcp.pop %v1647
  %v1718 = vmul.f32 1.0, %v1717
  %v1719 = vrcp.pop %v1648
  %v1720 = vmul.f32 1.0, %v1719
  %v1721 = vrcp.pop %v1649
  %v1722 = vmul.f32 1.0, %v1721
  %v1723 = vrcp.pop %v1650
  %v1724 = vmul.f32 1.0, %v1723
  %v1725 = vrcp.pop %v1651
  %v1726 = vmul.f32 1.0, %v1725
  %v1727 = vrcp.pop %v1652
  %v1728 = vmul.f32 1.0, %v1727
  %v1729 = vrcp.pop %v1653
  %v1730 = vmul.f32 1.0, %v1729
  %v1731 = vrcp.pop %v1654
  %v1732 = vmul.f32 1.0, %v1731
  %v1733 = vrcp.pop %v1655
  %v1734 = vmul.f32 1.0, %v1733
  %v1735 = vrcp.pop %v1656
  %v1736 = vmul.f32 1.0, %v1735
  %v1737 = vrcp.pop %v1657
  %v1738 = vmul.f32 1.0, %v1737
  %v1739 = vrcp.pop %v1658
  %v1740 = vmul.f32 1.0, %v1739
  %v1741 = vrcp.pop %v1659
  %v1742 = vmul.f32 1.0, %v1741
  %v1743 = vrcp.pop %v1660
  %v1744 = vmul.f32 1.0, %v1743
  %v1745 = vrcp.pop %v1661
  %v1746 = vmul.f32 1.0, %v1745
  %v1747 = vrcp.pop %v1662
  %v1748 = vmul.f32 1.0, %v1747
  %v1749 = vrcp.pop %v1663
  %v1750 = vmul.f32 1.0, %v1749
  %v1751 = vrcp.pop %v1664
  %v1752 = vmul.f32 1.0, %v1751
  %v1753 = vrcp.pop %v1665
  %v1754 = vmul.f32 1.0, %v1753
  %v1755 = vrcp.pop %v1666
  %v1756 = vmul.f32 1.0, %v1755
  %v1757 = vrcp.pop %v1667
  %v1758 = vmul.f32 1.0, %v1757
  %v1759 = vrcp.pop %v1668
  %v1760 = vmul.f32 1.0, %v1759
  %v1761 = vrcp.pop %v1669
  %v1762 = vmul.f32 1.0, %v1761
  %v1763 = vrcp.pop %v1670
  %v1764 = vmul.f32 1.0, %v1763
  %v1765 = vrcp.pop %v1671
  %v1766 = vmul.f32 1.0, %v1765
  %v1767 = vrcp.pop %v1672
  %v1768 = vmul.f32 1.0, %v1767
  %v1769 = vrcp.pop %v1673
  %v1770 = vmul.f32 1.0, %v1769
  %v1771 = vrcp.pop %v1674
  %v1772 = vmul.f32 1.0, %v1771
  %v1773 = vrcp.pop %v1675
  %v1774 = vmul.f32 1.0, %v1773
  %v1775 = vrcp.pop %v1676
  %v1776 = vmul.f32 1.0, %v1775
  %v1777 = vrcp.pop %v1677
  %v1778 = vmul.f32 1.0, %v1777
  %v1779 = vrcp.pop %v1678
  %v1780 = vmul.f32 1.0, %v1779
  %v1781 = vrcp.pop %v1679
  %v1782 = vmul.f32 1.0, %v1781
  %v1783 = vrcp.pop %v1680
  %v1784 = vmul.f32 1.0, %v1783
  %v1785 = vrcp.pop %v1681
  %v1786 = vmul.f32 1.0, %v1785
  %v1787 = vrcp.pop %v1682
  %v1788 = vmul.f32 1.0, %v1787
  %v1789 = vrcp.pop %v1683
  %v1790 = vmul.f32 1.0, %v1789
  %v1791 = vrcp.pop %v1684
  %v1792 = vmul.f32 1.0, %v1791
  %v1793 = vrcp.pop %v1685
  %v1794 = vmul.f32 1.0, %v1793
  %v1795 = vrcp.pop %v1686
  %v1796 = vmul.f32 1.0, %v1795
  %v1797 = vrcp.pop %v1687
  %v1798 = vmul.f32 1.0, %v1797
  %v1799 = vrcp.pop %v1688
  %v1800 = vmul.f32 1.0, %v1799
  %v1801 = vrcp.pop %v1689
  %v1802 = vmul.f32 1.0, %v1801
  %v1803 = vrcp.pop %v1690
  %v1804 = vmul.f32 1.0, %v1803
  %v1805 = vrcp.pop %v1691
  %v1806 = vmul.f32 1.0, %v1805
  %v1807 = vrcp.pop %v1692
  %v1808 = vmul.f32 1.0, %v1807
  %v1809 = vrcp.pop %v1693
  %v1810 = vmul.f32 1.0, %v1809
  %v1811 = vrcp.pop %v1694
  %v1812 = vmul.f32 1.0, %v1811
  %v1813 = vrcp.pop %v1695
  %v1814 = vmul.f32 1.0, %v1813
  %v1815 = vrcp.pop %v1696
  %v1816 = vmul.f32 1.0, %v1815
  %v1817 = vrcp.pop %v1697
  %v1818 = vmul.f32 1.0, %v1817
  %v1819 = vrcp.pop %v1698
  %v1820 = vmul.f32 1.0, %v1819
  %v1821 = vrcp.pop %v1699
  %v1822 = vmul.f32 1.0, %v1821
  %v1823 = vrcp.pop %v1700
  %v1824 = vmul.f32 1.0, %v1823
  %v1825 = vrcp.pop %v1701
  %v1826 = vmul.f32 1.0, %v1825
  %v1827 = vrcp.pop %v1702
  %v1828 = vmul.f32 1.0, %v1827
  %v1829 = vrcp.pop %v1703
  %v1830 = vmul.f32 1.0, %v1829
  %v1831 = vrcp.pop %v1704
  %v1832 = vmul.f32 1.0, %v1831
  %1897 = vrot.lane.b32.xlu0 %v1706, 125
  %v1898 = vpop.permute.xlu0 %1897
  %1899 = vrot.lane.b32.xlu0 %v1708, 125
  %v1900 = vpop.permute.xlu0 %1899
  %1901 = vrot.lane.b32.xlu0 %v1710, 125
  %v1902 = vpop.permute.xlu0 %1901
  %1903 = vrot.lane.b32.xlu0 %v1712, 125
  %v1904 = vpop.permute.xlu0 %1903
  %1905 = vrot.lane.b32.xlu0 %v1714, 125
  %v1906 = vpop.permute.xlu0 %1905
  %1907 = vrot.lane.b32.xlu0 %v1716, 125
  %v1908 = vpop.permute.xlu0 %1907
  %1909 = vrot.lane.b32.xlu0 %v1718, 125
  %v1910 = vpop.permute.xlu0 %1909
  %1911 = vrot.lane.b32.xlu0 %v1720, 125
  %v1912 = vpop.permute.xlu0 %1911
  %1913 = vrot.lane.b32.xlu0 %v1722, 125
  %v1914 = vpop.permute.xlu0 %1913
  %1915 = vrot.lane.b32.xlu0 %v1724, 125
  %v1916 = vpop.permute.xlu0 %1915
  %1917 = vrot.lane.b32.xlu0 %v1726, 125
  %v1918 = vpop.permute.xlu0 %1917
  %1919 = vrot.lane.b32.xlu0 %v1728, 125
  %v1920 = vpop.permute.xlu0 %1919
  %1921 = vrot.lane.b32.xlu0 %v1730, 125
  %v1922 = vpop.permute.xlu0 %1921
  %1923 = vrot.lane.b32.xlu0 %v1732, 125
  %v1924 = vpop.permute.xlu0 %1923
  %1925 = vrot.lane.b32.xlu0 %v1734, 125
  %v1926 = vpop.permute.xlu0 %1925
  %1927 = vrot.lane.b32.xlu0 %v1736, 125
  %v1928 = vpop.permute.xlu0 %1927
  %1929 = vrot.lane.b32.xlu0 %v1738, 125
  %v1930 = vpop.permute.xlu0 %1929
  %1931 = vrot.lane.b32.xlu0 %v1740, 125
  %v1932 = vpop.permute.xlu0 %1931
  %1933 = vrot.lane.b32.xlu0 %v1742, 125
  %v1934 = vpop.permute.xlu0 %1933
  %1935 = vrot.lane.b32.xlu0 %v1744, 125
  %v1936 = vpop.permute.xlu0 %1935
  %1937 = vrot.lane.b32.xlu0 %v1746, 125
  %v1938 = vpop.permute.xlu0 %1937
  %1939 = vrot.lane.b32.xlu0 %v1748, 125
  %v1940 = vpop.permute.xlu0 %1939
  %1941 = vrot.lane.b32.xlu0 %v1750, 125
  %v1942 = vpop.permute.xlu0 %1941
  %1943 = vrot.lane.b32.xlu0 %v1752, 125
  %v1944 = vpop.permute.xlu0 %1943
  %1945 = vrot.lane.b32.xlu0 %v1754, 125
  %v1946 = vpop.permute.xlu0 %1945
  %1947 = vrot.lane.b32.xlu0 %v1756, 125
  %v1948 = vpop.permute.xlu0 %1947
  %1949 = vrot.lane.b32.xlu0 %v1758, 125
  %v1950 = vpop.permute.xlu0 %1949
  %1951 = vrot.lane.b32.xlu0 %v1760, 125
  %v1952 = vpop.permute.xlu0 %1951
  %1953 = vrot.lane.b32.xlu0 %v1762, 125
  %v1954 = vpop.permute.xlu0 %1953
  %1955 = vrot.lane.b32.xlu0 %v1764, 125
  %v1956 = vpop.permute.xlu0 %1955
  %1957 = vrot.lane.b32.xlu0 %v1766, 125
  %v1958 = vpop.permute.xlu0 %1957
  %1959 = vrot.lane.b32.xlu0 %v1768, 125
  %v1960 = vpop.permute.xlu0 %1959
  %1961 = vrot.lane.b32.xlu0 %v1770, 125
  %v1962 = vpop.permute.xlu0 %1961
  %1963 = vrot.lane.b32.xlu0 %v1772, 125
  %v1964 = vpop.permute.xlu0 %1963
  %1965 = vrot.lane.b32.xlu0 %v1774, 125
  %v1966 = vpop.permute.xlu0 %1965
  %1967 = vrot.lane.b32.xlu0 %v1776, 125
  %v1968 = vpop.permute.xlu0 %1967
  %1969 = vrot.lane.b32.xlu0 %v1778, 125
  %v1970 = vpop.permute.xlu0 %1969
  %1971 = vrot.lane.b32.xlu0 %v1780, 125
  %v1972 = vpop.permute.xlu0 %1971
  %1973 = vrot.lane.b32.xlu0 %v1782, 125
  %v1974 = vpop.permute.xlu0 %1973
  %1975 = vrot.lane.b32.xlu0 %v1784, 125
  %v1976 = vpop.permute.xlu0 %1975
  %1977 = vrot.lane.b32.xlu0 %v1786, 125
  %v1978 = vpop.permute.xlu0 %1977
  %1979 = vrot.lane.b32.xlu0 %v1788, 125
  %v1980 = vpop.permute.xlu0 %1979
  %1981 = vrot.lane.b32.xlu0 %v1790, 125
  %v1982 = vpop.permute.xlu0 %1981
  %1983 = vrot.lane.b32.xlu0 %v1792, 125
  %v1984 = vpop.permute.xlu0 %1983
  %1985 = vrot.lane.b32.xlu0 %v1794, 125
  %v1986 = vpop.permute.xlu0 %1985
  %1987 = vrot.lane.b32.xlu0 %v1796, 125
  %v1988 = vpop.permute.xlu0 %1987
  %1989 = vrot.lane.b32.xlu0 %v1798, 125
  %v1990 = vpop.permute.xlu0 %1989
  %1991 = vrot.lane.b32.xlu0 %v1800, 125
  %v1992 = vpop.permute.xlu0 %1991
  %1993 = vrot.lane.b32.xlu0 %v1802, 125
  %v1994 = vpop.permute.xlu0 %1993
  %1995 = vrot.lane.b32.xlu0 %v1804, 125
  %v1996 = vpop.permute.xlu0 %1995
  %1997 = vrot.lane.b32.xlu0 %v1806, 125
  %v1998 = vpop.permute.xlu0 %1997
  %1999 = vrot.lane.b32.xlu0 %v1808, 125
  %v2000 = vpop.permute.xlu0 %1999
  %2001 = vrot.lane.b32.xlu0 %v1810, 125
  %v2002 = vpop.permute.xlu0 %2001
  %2003 = vrot.lane.b32.xlu0 %v1812, 125
  %v2004 = vpop.permute.xlu0 %2003
  %2005 = vrot.lane.b32.xlu0 %v1814, 125
  %v2006 = vpop.permute.xlu0 %2005
  %2007 = vrot.lane.b32.xlu0 %v1816, 125
  %v2008 = vpop.permute.xlu0 %2007
  %2009 = vrot.lane.b32.xlu0 %v1818, 125
  %v2010 = vpop.permute.xlu0 %2009
  %2011 = vrot.lane.b32.xlu0 %v1820, 125
  %v2012 = vpop.permute.xlu0 %2011
  %2013 = vrot.lane.b32.xlu0 %v1822, 125
  %v2014 = vpop.permute.xlu0 %2013
  %2015 = vrot.lane.b32.xlu0 %v1824, 125
  %v2016 = vpop.permute.xlu0 %2015
  %2017 = vrot.lane.b32.xlu0 %v1826, 125
  %v2018 = vpop.permute.xlu0 %2017
  %2019 = vrot.lane.b32.xlu0 %v1828, 125
  %v2020 = vpop.permute.xlu0 %2019
  %2021 = vrot.lane.b32.xlu0 %v1830, 125
  %v2022 = vpop.permute.xlu0 %2021
  %2023 = vrot.lane.b32.xlu0 %v1832, 125
  %v2024 = vpop.permute.xlu0 %2023
  %v2089 = vmul.f32 %v1195, %v1898
  %v2090 = vmul.f32 %v1198, %v1900
  %v2091 = vmul.f32 %v1203, %v1902
  %v2092 = vmul.f32 %v1206, %v1904
  %v2093 = vmul.f32 %v1211, %v1906
  %v2094 = vmul.f32 %v1214, %v1908
  %v2095 = vmul.f32 %v1219, %v1910
  %v2096 = vmul.f32 %v1222, %v1912
  %v2097 = vmul.f32 %v1227, %v1914
  %v2098 = vmul.f32 %v1230, %v1916
  %v2099 = vmul.f32 %v1235, %v1918
  %v2100 = vmul.f32 %v1238, %v1920
  %v2101 = vmul.f32 %v1243, %v1922
  %v2102 = vmul.f32 %v1246, %v1924
  %v2103 = vmul.f32 %v1251, %v1926
  %v2104 = vmul.f32 %v1254, %v1928
  %v2105 = vmul.f32 %v1259, %v1930
  %v2106 = vmul.f32 %v1262, %v1932
  %v2107 = vmul.f32 %v1267, %v1934
  %v2108 = vmul.f32 %v1270, %v1936
  %v2109 = vmul.f32 %v1275, %v1938
  %v2110 = vmul.f32 %v1278, %v1940
  %v2111 = vmul.f32 %v1283, %v1942
  %v2112 = vmul.f32 %v1286, %v1944
  %v2113 = vmul.f32 %v1291, %v1946
  %v2114 = vmul.f32 %v1294, %v1948
  %v2115 = vmul.f32 %v1299, %v1950
  %v2116 = vmul.f32 %v1302, %v1952
  %v2117 = vmul.f32 %v1307, %v1954
  %v2118 = vmul.f32 %v1310, %v1956
  %v2119 = vmul.f32 %v1315, %v1958
  %v2120 = vmul.f32 %v1318, %v1960
  %v2121 = vmul.f32 %v1323, %v1962
  %v2122 = vmul.f32 %v1326, %v1964
  %v2123 = vmul.f32 %v1331, %v1966
  %v2124 = vmul.f32 %v1334, %v1968
  %v2125 = vmul.f32 %v1339, %v1970
  %v2126 = vmul.f32 %v1342, %v1972
  %v2127 = vmul.f32 %v1347, %v1974
  %v2128 = vmul.f32 %v1350, %v1976
  %v2129 = vmul.f32 %v1355, %v1978
  %v2130 = vmul.f32 %v1358, %v1980
  %v2131 = vmul.f32 %v1363, %v1982
  %v2132 = vmul.f32 %v1366, %v1984
  %v2133 = vmul.f32 %v1371, %v1986
  %v2134 = vmul.f32 %v1374, %v1988
  %v2135 = vmul.f32 %v1379, %v1990
  %v2136 = vmul.f32 %v1382, %v1992
  %v2137 = vmul.f32 %v1387, %v1994
  %v2138 = vmul.f32 %v1390, %v1996
  %v2139 = vmul.f32 %v1395, %v1998
  %v2140 = vmul.f32 %v1398, %v2000
  %v2141 = vmul.f32 %v1403, %v2002
  %v2142 = vmul.f32 %v1406, %v2004
  %v2143 = vmul.f32 %v1411, %v2006
  %v2144 = vmul.f32 %v1414, %v2008
  %v2145 = vmul.f32 %v1419, %v2010
  %v2146 = vmul.f32 %v1422, %v2012
  %v2147 = vmul.f32 %v1427, %v2014
  %v2148 = vmul.f32 %v1430, %v2016
  %v2149 = vmul.f32 %v1435, %v2018
  %v2150 = vmul.f32 %v1438, %v2020
  %v2151 = vmul.f32 %v1443, %v2022
  %v2152 = vmul.f32 %v1446, %v2024
  %v2153 = vtanh.pop %v2089
  %v2154 = vtanh.pop %v2090
  %v2155 = vtanh.pop %v2091
  %v2156 = vtanh.pop %v2092
  %v2157 = vtanh.pop %v2093
  %v2158 = vtanh.pop %v2094
  %v2159 = vtanh.pop %v2095
  %v2160 = vtanh.pop %v2096
  %v2161 = vtanh.pop %v2097
  %v2162 = vtanh.pop %v2098
  %v2163 = vtanh.pop %v2099
  %v2164 = vtanh.pop %v2100
  %v2165 = vtanh.pop %v2101
  %v2166 = vtanh.pop %v2102
  %v2167 = vtanh.pop %v2103
  %v2168 = vtanh.pop %v2104
  %v2169 = vtanh.pop %v2105
  %v2170 = vtanh.pop %v2106
  %v2171 = vtanh.pop %v2107
  %v2172 = vtanh.pop %v2108
  %v2173 = vtanh.pop %v2109
  %v2174 = vtanh.pop %v2110
  %v2175 = vtanh.pop %v2111
  %v2176 = vtanh.pop %v2112
  %v2177 = vtanh.pop %v2113
  %v2178 = vtanh.pop %v2114
  %v2179 = vtanh.pop %v2115
  %v2180 = vtanh.pop %v2116
  %v2181 = vtanh.pop %v2117
  %v2182 = vtanh.pop %v2118
  %v2183 = vtanh.pop %v2119
  %v2184 = vtanh.pop %v2120
  %v2185 = vtanh.pop %v2121
  %v2186 = vtanh.pop %v2122
  %v2187 = vtanh.pop %v2123
  %v2188 = vtanh.pop %v2124
  %v2189 = vtanh.pop %v2125
  %v2190 = vtanh.pop %v2126
  %v2191 = vtanh.pop %v2127
  %v2192 = vtanh.pop %v2128
  %v2193 = vtanh.pop %v2129
  %v2194 = vtanh.pop %v2130
  %v2195 = vtanh.pop %v2131
  %v2196 = vtanh.pop %v2132
  %v2197 = vtanh.pop %v2133
  %v2198 = vtanh.pop %v2134
  %v2199 = vtanh.pop %v2135
  %v2200 = vtanh.pop %v2136
  %v2201 = vtanh.pop %v2137
  %v2202 = vtanh.pop %v2138
  %v2203 = vtanh.pop %v2139
  %v2204 = vtanh.pop %v2140
  %v2205 = vtanh.pop %v2141
  %v2206 = vtanh.pop %v2142
  %v2207 = vtanh.pop %v2143
  %v2208 = vtanh.pop %v2144
  %v2209 = vtanh.pop %v2145
  %v2210 = vtanh.pop %v2146
  %v2211 = vtanh.pop %v2147
  %v2212 = vtanh.pop %v2148
  %v2213 = vtanh.pop %v2149
  %v2214 = vtanh.pop %v2150
  %v2215 = vtanh.pop %v2151
  %v2216 = vtanh.pop %v2152
  %v2217 = vmax.f32 %v2153, 0.0
  %v2218 = vmax.f32 %v2154, 0.0
  %v2219 = vmax.f32 %v2155, 0.0
  %v2220 = vmax.f32 %v2156, 0.0
  %v2221 = vmax.f32 %v2157, 0.0
  %v2222 = vmax.f32 %v2158, 0.0
  %v2223 = vmax.f32 %v2159, 0.0
  %v2224 = vmax.f32 %v2160, 0.0
  %v2225 = vmax.f32 %v2161, 0.0
  %v2226 = vmax.f32 %v2162, 0.0
  %v2227 = vmax.f32 %v2163, 0.0
  %v2228 = vmax.f32 %v2164, 0.0
  %v2229 = vmax.f32 %v2165, 0.0
  %v2230 = vmax.f32 %v2166, 0.0
  %v2231 = vmax.f32 %v2167, 0.0
  %v2232 = vmax.f32 %v2168, 0.0
  %v2233 = vmax.f32 %v2169, 0.0
  %v2234 = vmax.f32 %v2170, 0.0
  %v2235 = vmax.f32 %v2171, 0.0
  %v2236 = vmax.f32 %v2172, 0.0
  %v2237 = vmax.f32 %v2173, 0.0
  %v2238 = vmax.f32 %v2174, 0.0
  %v2239 = vmax.f32 %v2175, 0.0
  %v2240 = vmax.f32 %v2176, 0.0
  %v2241 = vmax.f32 %v2177, 0.0
  %v2242 = vmax.f32 %v2178, 0.0
  %v2243 = vmax.f32 %v2179, 0.0
  %v2244 = vmax.f32 %v2180, 0.0
  %v2245 = vmax.f32 %v2181, 0.0
  %v2246 = vmax.f32 %v2182, 0.0
  %v2247 = vmax.f32 %v2183, 0.0
  %v2248 = vmax.f32 %v2184, 0.0
  %v2249 = vmax.f32 %v2185, 0.0
  %v2250 = vmax.f32 %v2186, 0.0
  %v2251 = vmax.f32 %v2187, 0.0
  %v2252 = vmax.f32 %v2188, 0.0
  %v2253 = vmax.f32 %v2189, 0.0
  %v2254 = vmax.f32 %v2190, 0.0
  %v2255 = vmax.f32 %v2191, 0.0
  %v2256 = vmax.f32 %v2192, 0.0
  %v2257 = vmax.f32 %v2193, 0.0
  %v2258 = vmax.f32 %v2194, 0.0
  %v2259 = vmax.f32 %v2195, 0.0
  %v2260 = vmax.f32 %v2196, 0.0
  %v2261 = vmax.f32 %v2197, 0.0
  %v2262 = vmax.f32 %v2198, 0.0
  %v2263 = vmax.f32 %v2199, 0.0
  %v2264 = vmax.f32 %v2200, 0.0
  %v2265 = vmax.f32 %v2201, 0.0
  %v2266 = vmax.f32 %v2202, 0.0
  %v2267 = vmax.f32 %v2203, 0.0
  %v2268 = vmax.f32 %v2204, 0.0
  %v2269 = vmax.f32 %v2205, 0.0
  %v2270 = vmax.f32 %v2206, 0.0
  %v2271 = vmax.f32 %v2207, 0.0
  %v2272 = vmax.f32 %v2208, 0.0
  %v2273 = vmax.f32 %v2209, 0.0
  %v2274 = vmax.f32 %v2210, 0.0
  %v2275 = vmax.f32 %v2211, 0.0
  %v2276 = vmax.f32 %v2212, 0.0
  %v2277 = vmax.f32 %v2213, 0.0
  %v2278 = vmax.f32 %v2214, 0.0
  %v2279 = vmax.f32 %v2215, 0.0
  %v2280 = vmax.f32 %v2216, 0.0
  %v2281 = vmin.f32 %v2217, 1.0
  %v2282 = vmin.f32 %v2218, 1.0
  %v2283 = vmin.f32 %v2219, 1.0
  %v2284 = vmin.f32 %v2220, 1.0
  %v2285 = vmin.f32 %v2221, 1.0
  %v2286 = vmin.f32 %v2222, 1.0
  %v2287 = vmin.f32 %v2223, 1.0
  %v2288 = vmin.f32 %v2224, 1.0
  %v2289 = vmin.f32 %v2225, 1.0
  %v2290 = vmin.f32 %v2226, 1.0
  %v2291 = vmin.f32 %v2227, 1.0
  %v2292 = vmin.f32 %v2228, 1.0
  %v2293 = vmin.f32 %v2229, 1.0
  %v2294 = vmin.f32 %v2230, 1.0
  %v2295 = vmin.f32 %v2231, 1.0
  %v2296 = vmin.f32 %v2232, 1.0
  %v2297 = vmin.f32 %v2233, 1.0
  %v2298 = vmin.f32 %v2234, 1.0
  %v2299 = vmin.f32 %v2235, 1.0
  %v2300 = vmin.f32 %v2236, 1.0
  %v2301 = vmin.f32 %v2237, 1.0
  %v2302 = vmin.f32 %v2238, 1.0
  %v2303 = vmin.f32 %v2239, 1.0
  %v2304 = vmin.f32 %v2240, 1.0
  %v2305 = vmin.f32 %v2241, 1.0
  %v2306 = vmin.f32 %v2242, 1.0
  %v2307 = vmin.f32 %v2243, 1.0
  %v2308 = vmin.f32 %v2244, 1.0
  %v2309 = vmin.f32 %v2245, 1.0
  %v2310 = vmin.f32 %v2246, 1.0
  %v2311 = vmin.f32 %v2247, 1.0
  %v2312 = vmin.f32 %v2248, 1.0
  %v2313 = vmin.f32 %v2249, 1.0
  %v2314 = vmin.f32 %v2250, 1.0
  %v2315 = vmin.f32 %v2251, 1.0
  %v2316 = vmin.f32 %v2252, 1.0
  %v2317 = vmin.f32 %v2253, 1.0
  %v2318 = vmin.f32 %v2254, 1.0
  %v2319 = vmin.f32 %v2255, 1.0
  %v2320 = vmin.f32 %v2256, 1.0
  %v2321 = vmin.f32 %v2257, 1.0
  %v2322 = vmin.f32 %v2258, 1.0
  %v2323 = vmin.f32 %v2259, 1.0
  %v2324 = vmin.f32 %v2260, 1.0
  %v2325 = vmin.f32 %v2261, 1.0
  %v2326 = vmin.f32 %v2262, 1.0
  %v2327 = vmin.f32 %v2263, 1.0
  %v2328 = vmin.f32 %v2264, 1.0
  %v2329 = vmin.f32 %v2265, 1.0
  %v2330 = vmin.f32 %v2266, 1.0
  %v2331 = vmin.f32 %v2267, 1.0
  %v2332 = vmin.f32 %v2268, 1.0
  %v2333 = vmin.f32 %v2269, 1.0
  %v2334 = vmin.f32 %v2270, 1.0
  %v2335 = vmin.f32 %v2271, 1.0
  %v2336 = vmin.f32 %v2272, 1.0
  %v2337 = vmin.f32 %v2273, 1.0
  %v2338 = vmin.f32 %v2274, 1.0
  %v2339 = vmin.f32 %v2275, 1.0
  %v2340 = vmin.f32 %v2276, 1.0
  %v2341 = vmin.f32 %v2277, 1.0
  %v2342 = vmin.f32 %v2278, 1.0
  %v2343 = vmin.f32 %v2279, 1.0
  %v2344 = vmin.f32 %v2280, 1.0
  %vm2345 = vcmask 23552
  %2346 = vst.msk [vmem:[%s3] sm:$0xff] %vm2345, %v2281
  %2347 = vst.msk [vmem:[%s3 + $0x8] sm:$0xff] %vm2345, %v2282
  %2348 = vst.msk [vmem:[%s3 + $0x10] sm:$0xff] %vm2345, %v2283
  %2349 = vst.msk [vmem:[%s3 + $0x18] sm:$0xff] %vm2345, %v2284
  %2350 = vst.msk [vmem:[%s3 + $0x20] sm:$0xff] %vm2345, %v2285
  %2351 = vst.msk [vmem:[%s3 + $0x28] sm:$0xff] %vm2345, %v2286
  %2352 = vst.msk [vmem:[%s3 + $0x30] sm:$0xff] %vm2345, %v2287
  %2353 = vst.msk [vmem:[%s3 + $0x38] sm:$0xff] %vm2345, %v2288
  %2354 = vst.msk [vmem:[%s3 + $0x40] sm:$0xff] %vm2345, %v2289
  %2355 = vst.msk [vmem:[%s3 + $0x48] sm:$0xff] %vm2345, %v2290
  %2356 = vst.msk [vmem:[%s3 + $0x50] sm:$0xff] %vm2345, %v2291
  %2357 = vst.msk [vmem:[%s3 + $0x58] sm:$0xff] %vm2345, %v2292
  %2358 = vst.msk [vmem:[%s3 + $0x60] sm:$0xff] %vm2345, %v2293
  %2359 = vst.msk [vmem:[%s3 + $0x68] sm:$0xff] %vm2345, %v2294
  %2360 = vst.msk [vmem:[%s3 + $0x70] sm:$0xff] %vm2345, %v2295
  %2361 = vst.msk [vmem:[%s3 + $0x78] sm:$0xff] %vm2345, %v2296
  %2362 = vst.msk [vmem:[%s3 + $0x80] sm:$0xff] %vm2345, %v2297
  %2363 = vst.msk [vmem:[%s3 + $0x88] sm:$0xff] %vm2345, %v2298
  %2364 = vst.msk [vmem:[%s3 + $0x90] sm:$0xff] %vm2345, %v2299
  %2365 = vst.msk [vmem:[%s3 + $0x98] sm:$0xff] %vm2345, %v2300
  %2366 = vst.msk [vmem:[%s3 + $0xa0] sm:$0xff] %vm2345, %v2301
  %2367 = vst.msk [vmem:[%s3 + $0xa8] sm:$0xff] %vm2345, %v2302
  %2368 = vst.msk [vmem:[%s3 + $0xb0] sm:$0xff] %vm2345, %v2303
  %2369 = vst.msk [vmem:[%s3 + $0xb8] sm:$0xff] %vm2345, %v2304
  %2370 = vst.msk [vmem:[%s3 + $0xc0] sm:$0xff] %vm2345, %v2305
  %2371 = vst.msk [vmem:[%s3 + $0xc8] sm:$0xff] %vm2345, %v2306
  %2372 = vst.msk [vmem:[%s3 + $0xd0] sm:$0xff] %vm2345, %v2307
  %2373 = vst.msk [vmem:[%s3 + $0xd8] sm:$0xff] %vm2345, %v2308
  %2374 = vst.msk [vmem:[%s3 + $0xe0] sm:$0xff] %vm2345, %v2309
  %2375 = vst.msk [vmem:[%s3 + $0xe8] sm:$0xff] %vm2345, %v2310
  %2376 = vst.msk [vmem:[%s3 + $0xf0] sm:$0xff] %vm2345, %v2311
  %2377 = vst.msk [vmem:[%s3 + $0xf8] sm:$0xff] %vm2345, %v2312
  %2378 = vst.msk [vmem:[%s3 + $0x100] sm:$0xff] %vm2345, %v2313
  %2379 = vst.msk [vmem:[%s3 + $0x108] sm:$0xff] %vm2345, %v2314
  %2380 = vst.msk [vmem:[%s3 + $0x110] sm:$0xff] %vm2345, %v2315
  %2381 = vst.msk [vmem:[%s3 + $0x118] sm:$0xff] %vm2345, %v2316
  %2382 = vst.msk [vmem:[%s3 + $0x120] sm:$0xff] %vm2345, %v2317
  %2383 = vst.msk [vmem:[%s3 + $0x128] sm:$0xff] %vm2345, %v2318
  %2384 = vst.msk [vmem:[%s3 + $0x130] sm:$0xff] %vm2345, %v2319
  %2385 = vst.msk [vmem:[%s3 + $0x138] sm:$0xff] %vm2345, %v2320
  %2386 = vst.msk [vmem:[%s3 + $0x140] sm:$0xff] %vm2345, %v2321
  %2387 = vst.msk [vmem:[%s3 + $0x148] sm:$0xff] %vm2345, %v2322
  %2388 = vst.msk [vmem:[%s3 + $0x150] sm:$0xff] %vm2345, %v2323
  %2389 = vst.msk [vmem:[%s3 + $0x158] sm:$0xff] %vm2345, %v2324
  %2390 = vst.msk [vmem:[%s3 + $0x160] sm:$0xff] %vm2345, %v2325
  %2391 = vst.msk [vmem:[%s3 + $0x168] sm:$0xff] %vm2345, %v2326
  %2392 = vst.msk [vmem:[%s3 + $0x170] sm:$0xff] %vm2345, %v2327
  %2393 = vst.msk [vmem:[%s3 + $0x178] sm:$0xff] %vm2345, %v2328
  %2394 = vst.msk [vmem:[%s3 + $0x180] sm:$0xff] %vm2345, %v2329
  %2395 = vst.msk [vmem:[%s3 + $0x188] sm:$0xff] %vm2345, %v2330
  %2396 = vst.msk [vmem:[%s3 + $0x190] sm:$0xff] %vm2345, %v2331
  %2397 = vst.msk [vmem:[%s3 + $0x198] sm:$0xff] %vm2345, %v2332
  %2398 = vst.msk [vmem:[%s3 + $0x1a0] sm:$0xff] %vm2345, %v2333
  %2399 = vst.msk [vmem:[%s3 + $0x1a8] sm:$0xff] %vm2345, %v2334
  %2400 = vst.msk [vmem:[%s3 + $0x1b0] sm:$0xff] %vm2345, %v2335
  %2401 = vst.msk [vmem:[%s3 + $0x1b8] sm:$0xff] %vm2345, %v2336
  %2402 = vst.msk [vmem:[%s3 + $0x1c0] sm:$0xff] %vm2345, %v2337
  %2403 = vst.msk [vmem:[%s3 + $0x1c8] sm:$0xff] %vm2345, %v2338
  %2404 = vst.msk [vmem:[%s3 + $0x1d0] sm:$0xff] %vm2345, %v2339
  %2405 = vst.msk [vmem:[%s3 + $0x1d8] sm:$0xff] %vm2345, %v2340
  %2406 = vst.msk [vmem:[%s3 + $0x1e0] sm:$0xff] %vm2345, %v2341
  %2407 = vst.msk [vmem:[%s3 + $0x1e8] sm:$0xff] %vm2345, %v2342
  %2408 = vst.msk [vmem:[%s3 + $0x1f0] sm:$0xff] %vm2345, %v2343
  %2409 = vst.msk [vmem:[%s3 + $0x1f8] sm:$0xff] %vm2345, %v2344
  // Predicated region
  $region14: #{coarse_forward.51} parent=0 // pred_check
    _
  $region15: #{coarse_forward.51} parent=0 // pred_check_branch
    %2411 = sbr.rel (0) target = $region17
  $region16: #{coarse_forward.51} parent=0 // pred_region
    _
  $region17: #{coarse_forward.51} parent=0 // pred_fallthru
    _
  // Predicated region
  $region18: #{coarse_forward.51} parent=0 // pred_check
    _
  $region19: #{coarse_forward.51} parent=0 // pred_check_branch
    %2413 = sbr.rel (0) target = $region21
  $region20: #{coarse_forward.51} parent=0 // pred_region
    _
  $region21: #{coarse_forward.51} parent=0 // pred_fallthru
    _

</llo_original>
